<compile_context>
chip_gen: v6e
topology: v6e:2x2x1
jax: 0.10.0
libtpu: 0.0.40
codegen_flags: <defaults>
</compile_context>

<pallas_src>
import jax
import jax.numpy as jnp
from jax.experimental import pallas as pl
from jax.experimental.pallas import tpu as pltpu


# Encoder: input_dim -> 512 -> 256 -> 128 -> 64 -> latent_dim   (ReLU between)
# Decoder: latent_dim -> 64 -> 128 -> 256 -> 512 -> input_dim   (ReLU between)
# ReLU after every Linear EXCEPT the last encoder layer (idx 4) and the last
# decoder layer (idx 9).
_N_LAYERS = 10
_NO_RELU = (4, 9)


def _round_up(x, m):
    return ((x + m - 1) // m) * m


def _ae_kernel(x_ref, mu_ref, sig_ref, inv_sig_ref, *param_and_out_refs):
    """One batch tile: scale_in -> encoder MLP -> decoder MLP -> scale_out."""
    out_ref = param_and_out_refs[-1]
    params = param_and_out_refs[:-1]          # w0, b0, w1, b1, ..., w9, b9

    mu = mu_ref[...]                          # (1, input_dim), f32
    sig = sig_ref[...]                        # (1, input_dim), f32
    inv_sig = inv_sig_ref[...]                # (1, input_dim), f32 (exact)

    # scale_in (multiply by exact precomputed reciprocal)
    h = (x_ref[...] - mu) * inv_sig           # (TB, input_dim), f32

    for i in range(_N_LAYERS):
        w = params[2 * i][...]                # (in_i, out_i), bf16, VMEM-resident
        b = params[2 * i + 1][...]            # (1, out_i), f32
        # bf16 x bf16 MXU matmul with f32 accumulation; bias / ReLU in f32.
        h = jnp.dot(h.astype(w.dtype), w,
                    preferred_element_type=jnp.float32) + b
        if i not in _NO_RELU:
            h = jnp.maximum(h, 0.0)

    # scale_out
    out_ref[...] = h * sig + mu


def _pad_internal_dims(weights, biases, lane=128):
    """Zero-pad internal layer widths (64 / latent_dim) up to lane multiples.

    Extra weight columns/rows and bias entries are zero, so the padded
    activations carry exact zeros through the chain (ReLU(0)=0) -- numerics
    are bit-identical, but every intermediate activation becomes lane-dense.
    The input_dim boundaries (first in-dim, last out-dim) are left untouched.
    """
    dims = [weights[0].shape[0]] + [w.shape[1] for w in weights]
    pdims = list(dims)
    for j in range(1, len(dims) - 1):
        pdims[j] = _round_up(dims[j], lane)
    pw, pb = [], []
    for i, (w, b) in enumerate(zip(weights, biases)):
        pin, pout = pdims[i], pdims[i + 1]
        pw.append(jnp.pad(w, ((0, pin - w.shape[0]), (0, pout - w.shape[1]))))
        pb.append(jnp.pad(b, ((0, 0), (0, pout - b.shape[1]))))
    return pw, pb


def scaled_autoencoder_forward(x, mu_in, sig_in, weights, biases, *,
                               batch_tile=256):
    """x: (B, input_dim) f32. weights[i]: (in_i, out_i). biases[i]: (1, out_i).

    batch_tile: target batch rows per grid step (256 fills the v6e/v7x MXU;
    multiples of 128 are ideal on v5e). The actual tile is balanced so that
    the grid has >= 2 steps whenever the batch supports it (v7x dual-TC).
    """
    batch, input_dim = x.shape

    # --- grid shaping --------------------------------------------------------
    padded = _round_up(batch, 16)                # bf16 sublane packing => 16 rows
    n_tiles = max(1, pl.cdiv(padded, batch_tile))
    if n_tiles == 1 and padded >= 32:            # keep both v7x TCs busy
        n_tiles = 2
    tb = _round_up(pl.cdiv(padded, n_tiles), 16)
    padded = n_tiles * tb
    if padded != batch:
        x = jnp.pad(x, ((0, padded - batch), (0, 0)))
    grid = (n_tiles,)

    # --- parameter prep ------------------------------------------------------
    pw, pb = _pad_internal_dims(weights, biases)
    flat_params = []
    for w, b in zip(pw, pb):
        flat_params.append(w.astype(jnp.bfloat16))   # halve weight HBM traffic
        flat_params.append(b.astype(jnp.float32))

    inv_sig = (1.0 / sig_in).astype(jnp.float32)     # exact, once, host-side

    x_spec = pl.BlockSpec((tb, input_dim), lambda i: (i, 0))
    vec_spec = pl.BlockSpec((1, input_dim), lambda i: (0, 0))
    out_spec = pl.BlockSpec((tb, input_dim), lambda i: (i, 0))

    vmem_limit = (32 << 20) if tb >= 512 else (16 << 20)

    def _call(param_pipeline_mode):
        # Constant index_map + full-array block => each parameter is DMA'd once
        # and stays resident in VMEM across all batch tiles.
        param_specs = [
            pl.BlockSpec(p.shape, lambda i: (0, 0),
                         pipeline_mode=param_pipeline_mode)
            for p in flat_params
        ]
        grid_spec = pltpu.PrefetchScalarGridSpec(
            num_scalar_prefetch=0,
            grid=grid,
            in_specs=[x_spec, vec_spec, vec_spec, vec_spec, *param_specs],
            out_specs=out_spec,
        )
        return pl.pallas_call(
            _ae_kernel,
            out_shape=jax.ShapeDtypeStruct((padded, input_dim), jnp.float32),
            grid_spec=grid_spec,
            compiler_params=pltpu.CompilerParams(
                dimension_semantics=("parallel",),
                vmem_limit_bytes=vmem_limit,
            ),
        )(x, mu_in, sig_in, inv_sig, *flat_params)

    try:
        # Resident (constant-index) weights don't need double buffering.
        out = _call(pl.Buffered(1))
    except Exception:
        # Fallback: default double-buffered parameter specs (tiny VMEM cost).
        out = _call(None)

    return out[:batch]


def _reference_forward(x, mu_in, sig_in, weights, biases):
    """Pure-JAX reference mirroring the kernel's bf16-weight numerics."""
    h = (x - mu_in) * (1.0 / sig_in)
    for i, (w, b) in enumerate(zip(weights, biases)):
        h = jnp.dot(h.astype(jnp.bfloat16), w.astype(jnp.bfloat16),
                    preferred_element_type=jnp.float32) + b
        if i not in _NO_RELU:
            h = jnp.maximum(h, 0.0)
    return h * sig_in + mu_in


def _init_params(key, input_dim, latent_dim):
    """Deterministic synthetic parameter init (shapes match the nn.Linear stack)."""
    enc_dims = [input_dim, 512, 256, 128, 64, latent_dim]
    dec_dims = [latent_dim, 64, 128, 256, 512, input_dim]
    layer_shapes = list(zip(enc_dims[:-1], enc_dims[1:])) + \
                   list(zip(dec_dims[:-1], dec_dims[1:]))

    weights, biases = [], []
    for (fan_in, fan_out) in layer_shapes:
        key, kw, kb = jax.random.split(key, 3)
        bound = 1.0 / jnp.sqrt(fan_in)
        # weight stored as (in, out) == PyTorch weight (out, in) transposed
        w = jax.random.uniform(kw, (fan_in, fan_out), jnp.float32, -bound, bound)
        b = jax.random.uniform(kb, (1, fan_out), jnp.float32, -bound, bound)
        weights.append(w)
        biases.append(b)
    return key, weights, biases


if __name__ == "__main__":
    INPUT_DIM = 256
    LATENT_DIM = 16
    BATCH = 32          # small demo batch; grid shaping splits it into 2 tiles

    key = jax.random.PRNGKey(0)
    key, weights, biases = _init_params(key, INPUT_DIM, LATENT_DIM)

    key, kx, kmu, ksig = jax.random.split(key, 4)
    x = jax.random.normal(kx, (BATCH, INPUT_DIM), jnp.float32)
    mu_in = jax.random.normal(kmu, (1, INPUT_DIM), jnp.float32) * 0.1
    sig_in = jax.random.uniform(ksig, (1, INPUT_DIM), jnp.float32, 0.5, 1.5)

    out = scaled_autoencoder_forward(x, mu_in, sig_in, weights, biases)
    out = jax.block_until_ready(out)

    ref = _reference_forward(x, mu_in, sig_in, weights, biases)
    assert out.shape == (BATCH, INPUT_DIM)
    # bf16 weights in both paths; inv_sig is exact now, so only MXU accumulation
    # order differs from the XLA reference.
    assert jnp.allclose(out, ref, atol=1e-2, rtol=1e-2), "mismatch vs reference"

    print("KERNEL_OK")
</pallas_src>

<mosaic_0001>
module attributes {stable_mosaic.version = 11 : i64} {
  func.func @_ae_kernel(%arg0: i32, %arg1: memref<16x256xf32, #tpu.memory_space<vmem>>, %arg2: memref<1x256xf32, #tpu.memory_space<vmem>>, %arg3: memref<1x256xf32, #tpu.memory_space<vmem>>, %arg4: memref<1x256xf32, #tpu.memory_space<vmem>>, %arg5: memref<256x512xbf16, #tpu.memory_space<vmem>>, %arg6: memref<1x512xf32, #tpu.memory_space<vmem>>, %arg7: memref<512x256xbf16, #tpu.memory_space<vmem>>, %arg8: memref<1x256xf32, #tpu.memory_space<vmem>>, %arg9: memref<256x128xbf16, #tpu.memory_space<vmem>>, %arg10: memref<1x128xf32, #tpu.memory_space<vmem>>, %arg11: memref<128x128xbf16, #tpu.memory_space<vmem>>, %arg12: memref<1x128xf32, #tpu.memory_space<vmem>>, %arg13: memref<128x128xbf16, #tpu.memory_space<vmem>>, %arg14: memref<1x128xf32, #tpu.memory_space<vmem>>, %arg15: memref<128x128xbf16, #tpu.memory_space<vmem>>, %arg16: memref<1x128xf32, #tpu.memory_space<vmem>>, %arg17: memref<128x128xbf16, #tpu.memory_space<vmem>>, %arg18: memref<1x128xf32, #tpu.memory_space<vmem>>, %arg19: memref<128x256xbf16, #tpu.memory_space<vmem>>, %arg20: memref<1x256xf32, #tpu.memory_space<vmem>>, %arg21: memref<256x512xbf16, #tpu.memory_space<vmem>>, %arg22: memref<1x512xf32, #tpu.memory_space<vmem>>, %arg23: memref<512x256xbf16, #tpu.memory_space<vmem>>, %arg24: memref<1x256xf32, #tpu.memory_space<vmem>>, %arg25: memref<16x256xf32, #tpu.memory_space<vmem>>) attributes {dimension_semantics = [#tpu.dimension_semantics<parallel>], iteration_bounds = array<i64: 2>, scalar_prefetch = 0 : i64, scratch_operands = 0 : i64, tpu.core_type = #tpu.core_type<tc>, window_params = [{transform_indices = @transform_0, window_bounds = array<i64: 16, 256>}, {pipeline_mode = #tpu.pipeline_mode<synchronous>, transform_indices = @transform_1, window_bounds = array<i64: 1, 256>}, {pipeline_mode = #tpu.pipeline_mode<synchronous>, transform_indices = @transform_2, window_bounds = array<i64: 1, 256>}, {pipeline_mode = #tpu.pipeline_mode<synchronous>, transform_indices = @transform_3, window_bounds = array<i64: 1, 256>}, {pipeline_mode = #tpu.pipeline_mode<synchronous>, transform_indices = @transform_4, window_bounds = array<i64: 256, 512>}, {pipeline_mode = #tpu.pipeline_mode<synchronous>, transform_indices = @transform_5, window_bounds = array<i64: 1, 512>}, {pipeline_mode = #tpu.pipeline_mode<synchronous>, transform_indices = @transform_6, window_bounds = array<i64: 512, 256>}, {pipeline_mode = #tpu.pipeline_mode<synchronous>, transform_indices = @transform_7, window_bounds = array<i64: 1, 256>}, {pipeline_mode = #tpu.pipeline_mode<synchronous>, transform_indices = @transform_8, window_bounds = array<i64: 256, 128>}, {pipeline_mode = #tpu.pipeline_mode<synchronous>, transform_indices = @transform_9, window_bounds = array<i64: 1, 128>}, {pipeline_mode = #tpu.pipeline_mode<synchronous>, transform_indices = @transform_10, window_bounds = array<i64: 128, 128>}, {pipeline_mode = #tpu.pipeline_mode<synchronous>, transform_indices = @transform_11, window_bounds = array<i64: 1, 128>}, {pipeline_mode = #tpu.pipeline_mode<synchronous>, transform_indices = @transform_12, window_bounds = array<i64: 128, 128>}, {pipeline_mode = #tpu.pipeline_mode<synchronous>, transform_indices = @transform_13, window_bounds = array<i64: 1, 128>}, {pipeline_mode = #tpu.pipeline_mode<synchronous>, transform_indices = @transform_14, window_bounds = array<i64: 128, 128>}, {pipeline_mode = #tpu.pipeline_mode<synchronous>, transform_indices = @transform_15, window_bounds = array<i64: 1, 128>}, {pipeline_mode = #tpu.pipeline_mode<synchronous>, transform_indices = @transform_16, window_bounds = array<i64: 128, 128>}, {pipeline_mode = #tpu.pipeline_mode<synchronous>, transform_indices = @transform_17, window_bounds = array<i64: 1, 128>}, {pipeline_mode = #tpu.pipeline_mode<synchronous>, transform_indices = @transform_18, window_bounds = array<i64: 128, 256>}, {pipeline_mode = #tpu.pipeline_mode<synchronous>, transform_indices = @transform_19, window_bounds = array<i64: 1, 256>}, {pipeline_mode = #tpu.pipeline_mode<synchronous>, transform_indices = @transform_20, window_bounds = array<i64: 256, 512>}, {pipeline_mode = #tpu.pipeline_mode<synchronous>, transform_indices = @transform_21, window_bounds = array<i64: 1, 512>}, {pipeline_mode = #tpu.pipeline_mode<synchronous>, transform_indices = @transform_22, window_bounds = array<i64: 512, 256>}, {pipeline_mode = #tpu.pipeline_mode<synchronous>, transform_indices = @transform_23, window_bounds = array<i64: 1, 256>}, {transform_indices = @transform_24, window_bounds = array<i64: 16, 256>}]} {
    %c0 = arith.constant 0 : index
    %c0_0 = arith.constant 0 : index
    %0 = vector.load %arg2[%c0, %c0_0] : memref<1x256xf32, #tpu.memory_space<vmem>>, vector<1x256xf32>
    %c0_1 = arith.constant 0 : index
    %c0_2 = arith.constant 0 : index
    %1 = vector.load %arg3[%c0_1, %c0_2] : memref<1x256xf32, #tpu.memory_space<vmem>>, vector<1x256xf32>
    %c0_3 = arith.constant 0 : index
    %c0_4 = arith.constant 0 : index
    %2 = vector.load %arg4[%c0_3, %c0_4] : memref<1x256xf32, #tpu.memory_space<vmem>>, vector<1x256xf32>
    %c0_5 = arith.constant 0 : index
    %c0_6 = arith.constant 0 : index
    %3 = vector.load %arg1[%c0_5, %c0_6] : memref<16x256xf32, #tpu.memory_space<vmem>>, vector<16x256xf32>
    %4 = vector.broadcast %0 : vector<1x256xf32> to vector<16x256xf32>
    %5 = arith.subf %3, %4 : vector<16x256xf32>
    %6 = vector.broadcast %2 : vector<1x256xf32> to vector<16x256xf32>
    %7 = arith.mulf %5, %6 : vector<16x256xf32>
    %c0_7 = arith.constant 0 : index
    %c0_8 = arith.constant 0 : index
    %8 = vector.load %arg5[%c0_7, %c0_8] : memref<256x512xbf16, #tpu.memory_space<vmem>>, vector<256x512xbf16>
    %c0_9 = arith.constant 0 : index
    %c0_10 = arith.constant 0 : index
    %9 = vector.load %arg6[%c0_9, %c0_10] : memref<1x512xf32, #tpu.memory_space<vmem>>, vector<1x512xf32>
    %10 = arith.truncf %7 : vector<16x256xf32> to vector<16x256xbf16>
    %cst = arith.constant dense<0.000000e+00> : vector<16x512xf32>
    %11 = tpu.matmul %10, %8, %cst {dimension_numbers = #tpu.dot_dimension_numbers<[1], [0], [0], [1], [0, 0, 1, 1], [], []>} : vector<16x256xbf16>, vector<256x512xbf16>, vector<16x512xf32> -> vector<16x512xf32>
    %12 = vector.broadcast %9 : vector<1x512xf32> to vector<16x512xf32>
    %13 = arith.addf %11, %12 : vector<16x512xf32>
    %cst_11 = arith.constant 0.000000e+00 : f32
    %14 = vector.broadcast %cst_11 : f32 to vector<16x512xf32>
    %15 = arith.maximumf %13, %14 : vector<16x512xf32>
    %c0_12 = arith.constant 0 : index
    %c0_13 = arith.constant 0 : index
    %16 = vector.load %arg7[%c0_12, %c0_13] : memref<512x256xbf16, #tpu.memory_space<vmem>>, vector<512x256xbf16>
    %c0_14 = arith.constant 0 : index
    %c0_15 = arith.constant 0 : index
    %17 = vector.load %arg8[%c0_14, %c0_15] : memref<1x256xf32, #tpu.memory_space<vmem>>, vector<1x256xf32>
    %18 = arith.truncf %15 : vector<16x512xf32> to vector<16x512xbf16>
    %cst_16 = arith.constant dense<0.000000e+00> : vector<16x256xf32>
    %19 = tpu.matmul %18, %16, %cst_16 {dimension_numbers = #tpu.dot_dimension_numbers<[1], [0], [0], [1], [0, 0, 1, 1], [], []>} : vector<16x512xbf16>, vector<512x256xbf16>, vector<16x256xf32> -> vector<16x256xf32>
    %20 = vector.broadcast %17 : vector<1x256xf32> to vector<16x256xf32>
    %21 = arith.addf %19, %20 : vector<16x256xf32>
    %cst_17 = arith.constant 0.000000e+00 : f32
    %22 = vector.broadcast %cst_17 : f32 to vector<16x256xf32>
    %23 = arith.maximumf %21, %22 : vector<16x256xf32>
    %c0_18 = arith.constant 0 : index
    %c0_19 = arith.constant 0 : index
    %24 = vector.load %arg9[%c0_18, %c0_19] : memref<256x128xbf16, #tpu.memory_space<vmem>>, vector<256x128xbf16>
    %c0_20 = arith.constant 0 : index
    %c0_21 = arith.constant 0 : index
    %25 = vector.load %arg10[%c0_20, %c0_21] : memref<1x128xf32, #tpu.memory_space<vmem>>, vector<1x128xf32>
    %26 = arith.truncf %23 : vector<16x256xf32> to vector<16x256xbf16>
    %cst_22 = arith.constant dense<0.000000e+00> : vector<16x128xf32>
    %27 = tpu.matmul %26, %24, %cst_22 {dimension_numbers = #tpu.dot_dimension_numbers<[1], [0], [0], [1], [0, 0, 1, 1], [], []>} : vector<16x256xbf16>, vector<256x128xbf16>, vector<16x128xf32> -> vector<16x128xf32>
    %28 = vector.broadcast %25 : vector<1x128xf32> to vector<16x128xf32>
    %29 = arith.addf %27, %28 : vector<16x128xf32>
    %cst_23 = arith.constant 0.000000e+00 : f32
    %30 = vector.broadcast %cst_23 : f32 to vector<16x128xf32>
    %31 = arith.maximumf %29, %30 : vector<16x128xf32>
    %c0_24 = arith.constant 0 : index
    %c0_25 = arith.constant 0 : index
    %32 = vector.load %arg11[%c0_24, %c0_25] : memref<128x128xbf16, #tpu.memory_space<vmem>>, vector<128x128xbf16>
    %c0_26 = arith.constant 0 : index
    %c0_27 = arith.constant 0 : index
    %33 = vector.load %arg12[%c0_26, %c0_27] : memref<1x128xf32, #tpu.memory_space<vmem>>, vector<1x128xf32>
    %34 = arith.truncf %31 : vector<16x128xf32> to vector<16x128xbf16>
    %cst_28 = arith.constant dense<0.000000e+00> : vector<16x128xf32>
    %35 = tpu.matmul %34, %32, %cst_28 {dimension_numbers = #tpu.dot_dimension_numbers<[1], [0], [0], [1], [0, 0, 1, 1], [], []>} : vector<16x128xbf16>, vector<128x128xbf16>, vector<16x128xf32> -> vector<16x128xf32>
    %36 = vector.broadcast %33 : vector<1x128xf32> to vector<16x128xf32>
    %37 = arith.addf %35, %36 : vector<16x128xf32>
    %cst_29 = arith.constant 0.000000e+00 : f32
    %38 = vector.broadcast %cst_29 : f32 to vector<16x128xf32>
    %39 = arith.maximumf %37, %38 : vector<16x128xf32>
    %c0_30 = arith.constant 0 : index
    %c0_31 = arith.constant 0 : index
    %40 = vector.load %arg13[%c0_30, %c0_31] : memref<128x128xbf16, #tpu.memory_space<vmem>>, vector<128x128xbf16>
    %c0_32 = arith.constant 0 : index
    %c0_33 = arith.constant 0 : index
    %41 = vector.load %arg14[%c0_32, %c0_33] : memref<1x128xf32, #tpu.memory_space<vmem>>, vector<1x128xf32>
    %42 = arith.truncf %39 : vector<16x128xf32> to vector<16x128xbf16>
    %cst_34 = arith.constant dense<0.000000e+00> : vector<16x128xf32>
    %43 = tpu.matmul %42, %40, %cst_34 {dimension_numbers = #tpu.dot_dimension_numbers<[1], [0], [0], [1], [0, 0, 1, 1], [], []>} : vector<16x128xbf16>, vector<128x128xbf16>, vector<16x128xf32> -> vector<16x128xf32>
    %44 = vector.broadcast %41 : vector<1x128xf32> to vector<16x128xf32>
    %45 = arith.addf %43, %44 : vector<16x128xf32>
    %c0_35 = arith.constant 0 : index
    %c0_36 = arith.constant 0 : index
    %46 = vector.load %arg15[%c0_35, %c0_36] : memref<128x128xbf16, #tpu.memory_space<vmem>>, vector<128x128xbf16>
    %c0_37 = arith.constant 0 : index
    %c0_38 = arith.constant 0 : index
    %47 = vector.load %arg16[%c0_37, %c0_38] : memref<1x128xf32, #tpu.memory_space<vmem>>, vector<1x128xf32>
    %48 = arith.truncf %45 : vector<16x128xf32> to vector<16x128xbf16>
    %cst_39 = arith.constant dense<0.000000e+00> : vector<16x128xf32>
    %49 = tpu.matmul %48, %46, %cst_39 {dimension_numbers = #tpu.dot_dimension_numbers<[1], [0], [0], [1], [0, 0, 1, 1], [], []>} : vector<16x128xbf16>, vector<128x128xbf16>, vector<16x128xf32> -> vector<16x128xf32>
    %50 = vector.broadcast %47 : vector<1x128xf32> to vector<16x128xf32>
    %51 = arith.addf %49, %50 : vector<16x128xf32>
    %cst_40 = arith.constant 0.000000e+00 : f32
    %52 = vector.broadcast %cst_40 : f32 to vector<16x128xf32>
    %53 = arith.maximumf %51, %52 : vector<16x128xf32>
    %c0_41 = arith.constant 0 : index
    %c0_42 = arith.constant 0 : index
    %54 = vector.load %arg17[%c0_41, %c0_42] : memref<128x128xbf16, #tpu.memory_space<vmem>>, vector<128x128xbf16>
    %c0_43 = arith.constant 0 : index
    %c0_44 = arith.constant 0 : index
    %55 = vector.load %arg18[%c0_43, %c0_44] : memref<1x128xf32, #tpu.memory_space<vmem>>, vector<1x128xf32>
    %56 = arith.truncf %53 : vector<16x128xf32> to vector<16x128xbf16>
    %cst_45 = arith.constant dense<0.000000e+00> : vector<16x128xf32>
    %57 = tpu.matmul %56, %54, %cst_45 {dimension_numbers = #tpu.dot_dimension_numbers<[1], [0], [0], [1], [0, 0, 1, 1], [], []>} : vector<16x128xbf16>, vector<128x128xbf16>, vector<16x128xf32> -> vector<16x128xf32>
    %58 = vector.broadcast %55 : vector<1x128xf32> to vector<16x128xf32>
    %59 = arith.addf %57, %58 : vector<16x128xf32>
    %cst_46 = arith.constant 0.000000e+00 : f32
    %60 = vector.broadcast %cst_46 : f32 to vector<16x128xf32>
    %61 = arith.maximumf %59, %60 : vector<16x128xf32>
    %c0_47 = arith.constant 0 : index
    %c0_48 = arith.constant 0 : index
    %62 = vector.load %arg19[%c0_47, %c0_48] : memref<128x256xbf16, #tpu.memory_space<vmem>>, vector<128x256xbf16>
    %c0_49 = arith.constant 0 : index
    %c0_50 = arith.constant 0 : index
    %63 = vector.load %arg20[%c0_49, %c0_50] : memref<1x256xf32, #tpu.memory_space<vmem>>, vector<1x256xf32>
    %64 = arith.truncf %61 : vector<16x128xf32> to vector<16x128xbf16>
    %cst_51 = arith.constant dense<0.000000e+00> : vector<16x256xf32>
    %65 = tpu.matmul %64, %62, %cst_51 {dimension_numbers = #tpu.dot_dimension_numbers<[1], [0], [0], [1], [0, 0, 1, 1], [], []>} : vector<16x128xbf16>, vector<128x256xbf16>, vector<16x256xf32> -> vector<16x256xf32>
    %66 = vector.broadcast %63 : vector<1x256xf32> to vector<16x256xf32>
    %67 = arith.addf %65, %66 : vector<16x256xf32>
    %cst_52 = arith.constant 0.000000e+00 : f32
    %68 = vector.broadcast %cst_52 : f32 to vector<16x256xf32>
    %69 = arith.maximumf %67, %68 : vector<16x256xf32>
    %c0_53 = arith.constant 0 : index
    %c0_54 = arith.constant 0 : index
    %70 = vector.load %arg21[%c0_53, %c0_54] : memref<256x512xbf16, #tpu.memory_space<vmem>>, vector<256x512xbf16>
    %c0_55 = arith.constant 0 : index
    %c0_56 = arith.constant 0 : index
    %71 = vector.load %arg22[%c0_55, %c0_56] : memref<1x512xf32, #tpu.memory_space<vmem>>, vector<1x512xf32>
    %72 = arith.truncf %69 : vector<16x256xf32> to vector<16x256xbf16>
    %cst_57 = arith.constant dense<0.000000e+00> : vector<16x512xf32>
    %73 = tpu.matmul %72, %70, %cst_57 {dimension_numbers = #tpu.dot_dimension_numbers<[1], [0], [0], [1], [0, 0, 1, 1], [], []>} : vector<16x256xbf16>, vector<256x512xbf16>, vector<16x512xf32> -> vector<16x512xf32>
    %74 = vector.broadcast %71 : vector<1x512xf32> to vector<16x512xf32>
    %75 = arith.addf %73, %74 : vector<16x512xf32>
    %cst_58 = arith.constant 0.000000e+00 : f32
    %76 = vector.broadcast %cst_58 : f32 to vector<16x512xf32>
    %77 = arith.maximumf %75, %76 : vector<16x512xf32>
    %c0_59 = arith.constant 0 : index
    %c0_60 = arith.constant 0 : index
    %78 = vector.load %arg23[%c0_59, %c0_60] : memref<512x256xbf16, #tpu.memory_space<vmem>>, vector<512x256xbf16>
    %c0_61 = arith.constant 0 : index
    %c0_62 = arith.constant 0 : index
    %79 = vector.load %arg24[%c0_61, %c0_62] : memref<1x256xf32, #tpu.memory_space<vmem>>, vector<1x256xf32>
    %80 = arith.truncf %77 : vector<16x512xf32> to vector<16x512xbf16>
    %cst_63 = arith.constant dense<0.000000e+00> : vector<16x256xf32>
    %81 = tpu.matmul %80, %78, %cst_63 {dimension_numbers = #tpu.dot_dimension_numbers<[1], [0], [0], [1], [0, 0, 1, 1], [], []>} : vector<16x512xbf16>, vector<512x256xbf16>, vector<16x256xf32> -> vector<16x256xf32>
    %82 = vector.broadcast %79 : vector<1x256xf32> to vector<16x256xf32>
    %83 = arith.addf %81, %82 : vector<16x256xf32>
    %84 = vector.broadcast %1 : vector<1x256xf32> to vector<16x256xf32>
    %85 = arith.mulf %83, %84 : vector<16x256xf32>
    %86 = vector.broadcast %0 : vector<1x256xf32> to vector<16x256xf32>
    %87 = arith.addf %85, %86 : vector<16x256xf32>
    %c0_64 = arith.constant 0 : index
    %c0_65 = arith.constant 0 : index
    %88 = vector.load %arg25[%c0_64, %c0_65] : memref<16x256xf32, #tpu.memory_space<vmem>>, vector<16x256xf32>
    tpu.vector_store %arg25[%c0_64, %c0_65], %87 {strides = array<i32>} : memref<16x256xf32, #tpu.memory_space<vmem>>, vector<16x256xf32>,
    return
  }
  func.func @transform_0(%arg0: i32) -> (i32, i32) {
    %c0_i32 = arith.constant 0 : i32
    %c0_i32_0 = arith.constant 0 : i32
    return %arg0, %c0_i32 : i32, i32
  }
  func.func @transform_1(%arg0: i32) -> (i32, i32) {
    %c0_i32 = arith.constant 0 : i32
    %c0_i32_0 = arith.constant 0 : i32
    %c0_i32_1 = arith.constant 0 : i32
    return %c0_i32, %c0_i32_0 : i32, i32
  }
  func.func @transform_2(%arg0: i32) -> (i32, i32) {
    %c0_i32 = arith.constant 0 : i32
    %c0_i32_0 = arith.constant 0 : i32
    %c0_i32_1 = arith.constant 0 : i32
    return %c0_i32, %c0_i32_0 : i32, i32
  }
  func.func @transform_3(%arg0: i32) -> (i32, i32) {
    %c0_i32 = arith.constant 0 : i32
    %c0_i32_0 = arith.constant 0 : i32
    %c0_i32_1 = arith.constant 0 : i32
    return %c0_i32, %c0_i32_0 : i32, i32
  }
  func.func @transform_4(%arg0: i32) -> (i32, i32) {
    %c0_i32 = arith.constant 0 : i32
    %c0_i32_0 = arith.constant 0 : i32
    %c0_i32_1 = arith.constant 0 : i32
    return %c0_i32, %c0_i32_0 : i32, i32
  }
  func.func @transform_5(%arg0: i32) -> (i32, i32) {
    %c0_i32 = arith.constant 0 : i32
    %c0_i32_0 = arith.constant 0 : i32
    %c0_i32_1 = arith.constant 0 : i32
    return %c0_i32, %c0_i32_0 : i32, i32
  }
  func.func @transform_6(%arg0: i32) -> (i32, i32) {
    %c0_i32 = arith.constant 0 : i32
    %c0_i32_0 = arith.constant 0 : i32
    %c0_i32_1 = arith.constant 0 : i32
    return %c0_i32, %c0_i32_0 : i32, i32
  }
  func.func @transform_7(%arg0: i32) -> (i32, i32) {
    %c0_i32 = arith.constant 0 : i32
    %c0_i32_0 = arith.constant 0 : i32
    %c0_i32_1 = arith.constant 0 : i32
    return %c0_i32, %c0_i32_0 : i32, i32
  }
  func.func @transform_8(%arg0: i32) -> (i32, i32) {
    %c0_i32 = arith.constant 0 : i32
    %c0_i32_0 = arith.constant 0 : i32
    %c0_i32_1 = arith.constant 0 : i32
    return %c0_i32, %c0_i32_0 : i32, i32
  }
  func.func @transform_9(%arg0: i32) -> (i32, i32) {
    %c0_i32 = arith.constant 0 : i32
    %c0_i32_0 = arith.constant 0 : i32
    %c0_i32_1 = arith.constant 0 : i32
    return %c0_i32, %c0_i32_0 : i32, i32
  }
  func.func @transform_10(%arg0: i32) -> (i32, i32) {
    %c0_i32 = arith.constant 0 : i32
    %c0_i32_0 = arith.constant 0 : i32
    %c0_i32_1 = arith.constant 0 : i32
    return %c0_i32, %c0_i32_0 : i32, i32
  }
  func.func @transform_11(%arg0: i32) -> (i32, i32) {
    %c0_i32 = arith.constant 0 : i32
    %c0_i32_0 = arith.constant 0 : i32
    %c0_i32_1 = arith.constant 0 : i32
    return %c0_i32, %c0_i32_0 : i32, i32
  }
  func.func @transform_12(%arg0: i32) -> (i32, i32) {
    %c0_i32 = arith.constant 0 : i32
    %c0_i32_0 = arith.constant 0 : i32
    %c0_i32_1 = arith.constant 0 : i32
    return %c0_i32, %c0_i32_0 : i32, i32
  }
  func.func @transform_13(%arg0: i32) -> (i32, i32) {
    %c0_i32 = arith.constant 0 : i32
    %c0_i32_0 = arith.constant 0 : i32
    %c0_i32_1 = arith.constant 0 : i32
    return %c0_i32, %c0_i32_0 : i32, i32
  }
  func.func @transform_14(%arg0: i32) -> (i32, i32) {
    %c0_i32 = arith.constant 0 : i32
    %c0_i32_0 = arith.constant 0 : i32
    %c0_i32_1 = arith.constant 0 : i32
    return %c0_i32, %c0_i32_0 : i32, i32
  }
  func.func @transform_15(%arg0: i32) -> (i32, i32) {
    %c0_i32 = arith.constant 0 : i32
    %c0_i32_0 = arith.constant 0 : i32
    %c0_i32_1 = arith.constant 0 : i32
    return %c0_i32, %c0_i32_0 : i32, i32
  }
  func.func @transform_16(%arg0: i32) -> (i32, i32) {
    %c0_i32 = arith.constant 0 : i32
    %c0_i32_0 = arith.constant 0 : i32
    %c0_i32_1 = arith.constant 0 : i32
    return %c0_i32, %c0_i32_0 : i32, i32
  }
  func.func @transform_17(%arg0: i32) -> (i32, i32) {
    %c0_i32 = arith.constant 0 : i32
    %c0_i32_0 = arith.constant 0 : i32
    %c0_i32_1 = arith.constant 0 : i32
    return %c0_i32, %c0_i32_0 : i32, i32
  }
  func.func @transform_18(%arg0: i32) -> (i32, i32) {
    %c0_i32 = arith.constant 0 : i32
    %c0_i32_0 = arith.constant 0 : i32
    %c0_i32_1 = arith.constant 0 : i32
    return %c0_i32, %c0_i32_0 : i32, i32
  }
  func.func @transform_19(%arg0: i32) -> (i32, i32) {
    %c0_i32 = arith.constant 0 : i32
    %c0_i32_0 = arith.constant 0 : i32
    %c0_i32_1 = arith.constant 0 : i32
    return %c0_i32, %c0_i32_0 : i32, i32
  }
  func.func @transform_20(%arg0: i32) -> (i32, i32) {
    %c0_i32 = arith.constant 0 : i32
    %c0_i32_0 = arith.constant 0 : i32
    %c0_i32_1 = arith.constant 0 : i32
    return %c0_i32, %c0_i32_0 : i32, i32
  }
  func.func @transform_21(%arg0: i32) -> (i32, i32) {
    %c0_i32 = arith.constant 0 : i32
    %c0_i32_0 = arith.constant 0 : i32
    %c0_i32_1 = arith.constant 0 : i32
    return %c0_i32, %c0_i32_0 : i32, i32
  }
  func.func @transform_22(%arg0: i32) -> (i32, i32) {
    %c0_i32 = arith.constant 0 : i32
    %c0_i32_0 = arith.constant 0 : i32
    %c0_i32_1 = arith.constant 0 : i32
    return %c0_i32, %c0_i32_0 : i32, i32
  }
  func.func @transform_23(%arg0: i32) -> (i32, i32) {
    %c0_i32 = arith.constant 0 : i32
    %c0_i32_0 = arith.constant 0 : i32
    %c0_i32_1 = arith.constant 0 : i32
    return %c0_i32, %c0_i32_0 : i32, i32
  }
  func.func @transform_24(%arg0: i32) -> (i32, i32) {
    %c0_i32 = arith.constant 0 : i32
    %c0_i32_0 = arith.constant 0 : i32
    return %arg0, %c0_i32 : i32, i32
  }
}

module attributes {stable_mosaic.version = 11 : i64} {
  func.func @_ae_kernel(%arg0: i32, %arg1: memref<16x256xf32, #tpu.memory_space<vmem>>, %arg2: memref<1x256xf32, #tpu.memory_space<vmem>>, %arg3: memref<1x256xf32, #tpu.memory_space<vmem>>, %arg4: memref<1x256xf32, #tpu.memory_space<vmem>>, %arg5: memref<256x512xbf16, #tpu.memory_space<vmem>>, %arg6: memref<1x512xf32, #tpu.memory_space<vmem>>, %arg7: memref<512x256xbf16, #tpu.memory_space<vmem>>, %arg8: memref<1x256xf32, #tpu.memory_space<vmem>>, %arg9: memref<256x128xbf16, #tpu.memory_space<vmem>>, %arg10: memref<1x128xf32, #tpu.memory_space<vmem>>, %arg11: memref<128x128xbf16, #tpu.memory_space<vmem>>, %arg12: memref<1x128xf32, #tpu.memory_space<vmem>>, %arg13: memref<128x128xbf16, #tpu.memory_space<vmem>>, %arg14: memref<1x128xf32, #tpu.memory_space<vmem>>, %arg15: memref<128x128xbf16, #tpu.memory_space<vmem>>, %arg16: memref<1x128xf32, #tpu.memory_space<vmem>>, %arg17: memref<128x128xbf16, #tpu.memory_space<vmem>>, %arg18: memref<1x128xf32, #tpu.memory_space<vmem>>, %arg19: memref<128x256xbf16, #tpu.memory_space<vmem>>, %arg20: memref<1x256xf32, #tpu.memory_space<vmem>>, %arg21: memref<256x512xbf16, #tpu.memory_space<vmem>>, %arg22: memref<1x512xf32, #tpu.memory_space<vmem>>, %arg23: memref<512x256xbf16, #tpu.memory_space<vmem>>, %arg24: memref<1x256xf32, #tpu.memory_space<vmem>>, %arg25: memref<16x256xf32, #tpu.memory_space<vmem>>) attributes {dimension_semantics = [#tpu.dimension_semantics<parallel>], iteration_bounds = array<i64: 2>, scalar_prefetch = 0 : i64, scratch_operands = 0 : i64, tpu.core_type = #tpu.core_type<tc>, window_params = [{transform_indices = @transform_0, window_bounds = array<i64: 16, 256>}, {pipeline_mode = #tpu.pipeline_mode<synchronous>, transform_indices = @transform_1, window_bounds = array<i64: 1, 256>}, {pipeline_mode = #tpu.pipeline_mode<synchronous>, transform_indices = @transform_2, window_bounds = array<i64: 1, 256>}, {pipeline_mode = #tpu.pipeline_mode<synchronous>, transform_indices = @transform_3, window_bounds = array<i64: 1, 256>}, {pipeline_mode = #tpu.pipeline_mode<synchronous>, transform_indices = @transform_4, window_bounds = array<i64: 256, 512>}, {pipeline_mode = #tpu.pipeline_mode<synchronous>, transform_indices = @transform_5, window_bounds = array<i64: 1, 512>}, {pipeline_mode = #tpu.pipeline_mode<synchronous>, transform_indices = @transform_6, window_bounds = array<i64: 512, 256>}, {pipeline_mode = #tpu.pipeline_mode<synchronous>, transform_indices = @transform_7, window_bounds = array<i64: 1, 256>}, {pipeline_mode = #tpu.pipeline_mode<synchronous>, transform_indices = @transform_8, window_bounds = array<i64: 256, 128>}, {pipeline_mode = #tpu.pipeline_mode<synchronous>, transform_indices = @transform_9, window_bounds = array<i64: 1, 128>}, {pipeline_mode = #tpu.pipeline_mode<synchronous>, transform_indices = @transform_10, window_bounds = array<i64: 128, 128>}, {pipeline_mode = #tpu.pipeline_mode<synchronous>, transform_indices = @transform_11, window_bounds = array<i64: 1, 128>}, {pipeline_mode = #tpu.pipeline_mode<synchronous>, transform_indices = @transform_12, window_bounds = array<i64: 128, 128>}, {pipeline_mode = #tpu.pipeline_mode<synchronous>, transform_indices = @transform_13, window_bounds = array<i64: 1, 128>}, {pipeline_mode = #tpu.pipeline_mode<synchronous>, transform_indices = @transform_14, window_bounds = array<i64: 128, 128>}, {pipeline_mode = #tpu.pipeline_mode<synchronous>, transform_indices = @transform_15, window_bounds = array<i64: 1, 128>}, {pipeline_mode = #tpu.pipeline_mode<synchronous>, transform_indices = @transform_16, window_bounds = array<i64: 128, 128>}, {pipeline_mode = #tpu.pipeline_mode<synchronous>, transform_indices = @transform_17, window_bounds = array<i64: 1, 128>}, {pipeline_mode = #tpu.pipeline_mode<synchronous>, transform_indices = @transform_18, window_bounds = array<i64: 128, 256>}, {pipeline_mode = #tpu.pipeline_mode<synchronous>, transform_indices = @transform_19, window_bounds = array<i64: 1, 256>}, {pipeline_mode = #tpu.pipeline_mode<synchronous>, transform_indices = @transform_20, window_bounds = array<i64: 256, 512>}, {pipeline_mode = #tpu.pipeline_mode<synchronous>, transform_indices = @transform_21, window_bounds = array<i64: 1, 512>}, {pipeline_mode = #tpu.pipeline_mode<synchronous>, transform_indices = @transform_22, window_bounds = array<i64: 512, 256>}, {pipeline_mode = #tpu.pipeline_mode<synchronous>, transform_indices = @transform_23, window_bounds = array<i64: 1, 256>}, {transform_indices = @transform_24, window_bounds = array<i64: 16, 256>}]} {
    %c0 = arith.constant 0 : index
    %c0_0 = arith.constant 0 : index
    %0 = vector.load %arg2[%c0, %c0_0] : memref<1x256xf32, #tpu.memory_space<vmem>>, vector<1x256xf32>
    %c0_1 = arith.constant 0 : index
    %c0_2 = arith.constant 0 : index
    %1 = vector.load %arg3[%c0_1, %c0_2] : memref<1x256xf32, #tpu.memory_space<vmem>>, vector<1x256xf32>
    %c0_3 = arith.constant 0 : index
    %c0_4 = arith.constant 0 : index
    %2 = vector.load %arg4[%c0_3, %c0_4] : memref<1x256xf32, #tpu.memory_space<vmem>>, vector<1x256xf32>
    %c0_5 = arith.constant 0 : index
    %c0_6 = arith.constant 0 : index
    %3 = vector.load %arg1[%c0_5, %c0_6] : memref<16x256xf32, #tpu.memory_space<vmem>>, vector<16x256xf32>
    %4 = vector.broadcast %0 : vector<1x256xf32> to vector<16x256xf32>
    %5 = arith.subf %3, %4 : vector<16x256xf32>
    %6 = vector.broadcast %2 : vector<1x256xf32> to vector<16x256xf32>
    %7 = arith.mulf %5, %6 : vector<16x256xf32>
    %c0_7 = arith.constant 0 : index
    %c0_8 = arith.constant 0 : index
    %8 = vector.load %arg5[%c0_7, %c0_8] : memref<256x512xbf16, #tpu.memory_space<vmem>>, vector<256x512xbf16>
    %c0_9 = arith.constant 0 : index
    %c0_10 = arith.constant 0 : index
    %9 = vector.load %arg6[%c0_9, %c0_10] : memref<1x512xf32, #tpu.memory_space<vmem>>, vector<1x512xf32>
    %10 = arith.truncf %7 : vector<16x256xf32> to vector<16x256xbf16>
    %cst = arith.constant dense<0.000000e+00> : vector<16x512xf32>
    %11 = tpu.matmul %10, %8, %cst {dimension_numbers = #tpu.dot_dimension_numbers<[1], [0], [0], [1], [0, 0, 1, 1], [], []>} : vector<16x256xbf16>, vector<256x512xbf16>, vector<16x512xf32> -> vector<16x512xf32>
    %12 = vector.broadcast %9 : vector<1x512xf32> to vector<16x512xf32>
    %13 = arith.addf %11, %12 : vector<16x512xf32>
    %cst_11 = arith.constant 0.000000e+00 : f32
    %14 = vector.broadcast %cst_11 : f32 to vector<16x512xf32>
    %15 = arith.maximumf %13, %14 : vector<16x512xf32>
    %c0_12 = arith.constant 0 : index
    %c0_13 = arith.constant 0 : index
    %16 = vector.load %arg7[%c0_12, %c0_13] : memref<512x256xbf16, #tpu.memory_space<vmem>>, vector<512x256xbf16>
    %c0_14 = arith.constant 0 : index
    %c0_15 = arith.constant 0 : index
    %17 = vector.load %arg8[%c0_14, %c0_15] : memref<1x256xf32, #tpu.memory_space<vmem>>, vector<1x256xf32>
    %18 = arith.truncf %15 : vector<16x512xf32> to vector<16x512xbf16>
    %cst_16 = arith.constant dense<0.000000e+00> : vector<16x256xf32>
    %19 = tpu.matmul %18, %16, %cst_16 {dimension_numbers = #tpu.dot_dimension_numbers<[1], [0], [0], [1], [0, 0, 1, 1], [], []>} : vector<16x512xbf16>, vector<512x256xbf16>, vector<16x256xf32> -> vector<16x256xf32>
    %20 = vector.broadcast %17 : vector<1x256xf32> to vector<16x256xf32>
    %21 = arith.addf %19, %20 : vector<16x256xf32>
    %cst_17 = arith.constant 0.000000e+00 : f32
    %22 = vector.broadcast %cst_17 : f32 to vector<16x256xf32>
    %23 = arith.maximumf %21, %22 : vector<16x256xf32>
    %c0_18 = arith.constant 0 : index
    %c0_19 = arith.constant 0 : index
    %24 = vector.load %arg9[%c0_18, %c0_19] : memref<256x128xbf16, #tpu.memory_space<vmem>>, vector<256x128xbf16>
    %c0_20 = arith.constant 0 : index
    %c0_21 = arith.constant 0 : index
    %25 = vector.load %arg10[%c0_20, %c0_21] : memref<1x128xf32, #tpu.memory_space<vmem>>, vector<1x128xf32>
    %26 = arith.truncf %23 : vector<16x256xf32> to vector<16x256xbf16>
    %cst_22 = arith.constant dense<0.000000e+00> : vector<16x128xf32>
    %27 = tpu.matmul %26, %24, %cst_22 {dimension_numbers = #tpu.dot_dimension_numbers<[1], [0], [0], [1], [0, 0, 1, 1], [], []>} : vector<16x256xbf16>, vector<256x128xbf16>, vector<16x128xf32> -> vector<16x128xf32>
    %28 = vector.broadcast %25 : vector<1x128xf32> to vector<16x128xf32>
    %29 = arith.addf %27, %28 : vector<16x128xf32>
    %cst_23 = arith.constant 0.000000e+00 : f32
    %30 = vector.broadcast %cst_23 : f32 to vector<16x128xf32>
    %31 = arith.maximumf %29, %30 : vector<16x128xf32>
    %c0_24 = arith.constant 0 : index
    %c0_25 = arith.constant 0 : index
    %32 = vector.load %arg11[%c0_24, %c0_25] : memref<128x128xbf16, #tpu.memory_space<vmem>>, vector<128x128xbf16>
    %c0_26 = arith.constant 0 : index
    %c0_27 = arith.constant 0 : index
    %33 = vector.load %arg12[%c0_26, %c0_27] : memref<1x128xf32, #tpu.memory_space<vmem>>, vector<1x128xf32>
    %34 = arith.truncf %31 : vector<16x128xf32> to vector<16x128xbf16>
    %cst_28 = arith.constant dense<0.000000e+00> : vector<16x128xf32>
    %35 = tpu.matmul %34, %32, %cst_28 {dimension_numbers = #tpu.dot_dimension_numbers<[1], [0], [0], [1], [0, 0, 1, 1], [], []>} : vector<16x128xbf16>, vector<128x128xbf16>, vector<16x128xf32> -> vector<16x128xf32>
    %36 = vector.broadcast %33 : vector<1x128xf32> to vector<16x128xf32>
    %37 = arith.addf %35, %36 : vector<16x128xf32>
    %cst_29 = arith.constant 0.000000e+00 : f32
    %38 = vector.broadcast %cst_29 : f32 to vector<16x128xf32>
    %39 = arith.maximumf %37, %38 : vector<16x128xf32>
    %c0_30 = arith.constant 0 : index
    %c0_31 = arith.constant 0 : index
    %40 = vector.load %arg13[%c0_30, %c0_31] : memref<128x128xbf16, #tpu.memory_space<vmem>>, vector<128x128xbf16>
    %c0_32 = arith.constant 0 : index
    %c0_33 = arith.constant 0 : index
    %41 = vector.load %arg14[%c0_32, %c0_33] : memref<1x128xf32, #tpu.memory_space<vmem>>, vector<1x128xf32>
    %42 = arith.truncf %39 : vector<16x128xf32> to vector<16x128xbf16>
    %cst_34 = arith.constant dense<0.000000e+00> : vector<16x128xf32>
    %43 = tpu.matmul %42, %40, %cst_34 {dimension_numbers = #tpu.dot_dimension_numbers<[1], [0], [0], [1], [0, 0, 1, 1], [], []>} : vector<16x128xbf16>, vector<128x128xbf16>, vector<16x128xf32> -> vector<16x128xf32>
    %44 = vector.broadcast %41 : vector<1x128xf32> to vector<16x128xf32>
    %45 = arith.addf %43, %44 : vector<16x128xf32>
    %c0_35 = arith.constant 0 : index
    %c0_36 = arith.constant 0 : index
    %46 = vector.load %arg15[%c0_35, %c0_36] : memref<128x128xbf16, #tpu.memory_space<vmem>>, vector<128x128xbf16>
    %c0_37 = arith.constant 0 : index
    %c0_38 = arith.constant 0 : index
    %47 = vector.load %arg16[%c0_37, %c0_38] : memref<1x128xf32, #tpu.memory_space<vmem>>, vector<1x128xf32>
    %48 = arith.truncf %45 : vector<16x128xf32> to vector<16x128xbf16>
    %cst_39 = arith.constant dense<0.000000e+00> : vector<16x128xf32>
    %49 = tpu.matmul %48, %46, %cst_39 {dimension_numbers = #tpu.dot_dimension_numbers<[1], [0], [0], [1], [0, 0, 1, 1], [], []>} : vector<16x128xbf16>, vector<128x128xbf16>, vector<16x128xf32> -> vector<16x128xf32>
    %50 = vector.broadcast %47 : vector<1x128xf32> to vector<16x128xf32>
    %51 = arith.addf %49, %50 : vector<16x128xf32>
    %cst_40 = arith.constant 0.000000e+00 : f32
    %52 = vector.broadcast %cst_40 : f32 to vector<16x128xf32>
    %53 = arith.maximumf %51, %52 : vector<16x128xf32>
    %c0_41 = arith.constant 0 : index
    %c0_42 = arith.constant 0 : index
    %54 = vector.load %arg17[%c0_41, %c0_42] : memref<128x128xbf16, #tpu.memory_space<vmem>>, vector<128x128xbf16>
    %c0_43 = arith.constant 0 : index
    %c0_44 = arith.constant 0 : index
    %55 = vector.load %arg18[%c0_43, %c0_44] : memref<1x128xf32, #tpu.memory_space<vmem>>, vector<1x128xf32>
    %56 = arith.truncf %53 : vector<16x128xf32> to vector<16x128xbf16>
    %cst_45 = arith.constant dense<0.000000e+00> : vector<16x128xf32>
    %57 = tpu.matmul %56, %54, %cst_45 {dimension_numbers = #tpu.dot_dimension_numbers<[1], [0], [0], [1], [0, 0, 1, 1], [], []>} : vector<16x128xbf16>, vector<128x128xbf16>, vector<16x128xf32> -> vector<16x128xf32>
    %58 = vector.broadcast %55 : vector<1x128xf32> to vector<16x128xf32>
    %59 = arith.addf %57, %58 : vector<16x128xf32>
    %cst_46 = arith.constant 0.000000e+00 : f32
    %60 = vector.broadcast %cst_46 : f32 to vector<16x128xf32>
    %61 = arith.maximumf %59, %60 : vector<16x128xf32>
    %c0_47 = arith.constant 0 : index
    %c0_48 = arith.constant 0 : index
    %62 = vector.load %arg19[%c0_47, %c0_48] : memref<128x256xbf16, #tpu.memory_space<vmem>>, vector<128x256xbf16>
    %c0_49 = arith.constant 0 : index
    %c0_50 = arith.constant 0 : index
    %63 = vector.load %arg20[%c0_49, %c0_50] : memref<1x256xf32, #tpu.memory_space<vmem>>, vector<1x256xf32>
    %64 = arith.truncf %61 : vector<16x128xf32> to vector<16x128xbf16>
    %cst_51 = arith.constant dense<0.000000e+00> : vector<16x256xf32>
    %65 = tpu.matmul %64, %62, %cst_51 {dimension_numbers = #tpu.dot_dimension_numbers<[1], [0], [0], [1], [0, 0, 1, 1], [], []>} : vector<16x128xbf16>, vector<128x256xbf16>, vector<16x256xf32> -> vector<16x256xf32>
    %66 = vector.broadcast %63 : vector<1x256xf32> to vector<16x256xf32>
    %67 = arith.addf %65, %66 : vector<16x256xf32>
    %cst_52 = arith.constant 0.000000e+00 : f32
    %68 = vector.broadcast %cst_52 : f32 to vector<16x256xf32>
    %69 = arith.maximumf %67, %68 : vector<16x256xf32>
    %c0_53 = arith.constant 0 : index
    %c0_54 = arith.constant 0 : index
    %70 = vector.load %arg21[%c0_53, %c0_54] : memref<256x512xbf16, #tpu.memory_space<vmem>>, vector<256x512xbf16>
    %c0_55 = arith.constant 0 : index
    %c0_56 = arith.constant 0 : index
    %71 = vector.load %arg22[%c0_55, %c0_56] : memref<1x512xf32, #tpu.memory_space<vmem>>, vector<1x512xf32>
    %72 = arith.truncf %69 : vector<16x256xf32> to vector<16x256xbf16>
    %cst_57 = arith.constant dense<0.000000e+00> : vector<16x512xf32>
    %73 = tpu.matmul %72, %70, %cst_57 {dimension_numbers = #tpu.dot_dimension_numbers<[1], [0], [0], [1], [0, 0, 1, 1], [], []>} : vector<16x256xbf16>, vector<256x512xbf16>, vector<16x512xf32> -> vector<16x512xf32>
    %74 = vector.broadcast %71 : vector<1x512xf32> to vector<16x512xf32>
    %75 = arith.addf %73, %74 : vector<16x512xf32>
    %cst_58 = arith.constant 0.000000e+00 : f32
    %76 = vector.broadcast %cst_58 : f32 to vector<16x512xf32>
    %77 = arith.maximumf %75, %76 : vector<16x512xf32>
    %c0_59 = arith.constant 0 : index
    %c0_60 = arith.constant 0 : index
    %78 = vector.load %arg23[%c0_59, %c0_60] : memref<512x256xbf16, #tpu.memory_space<vmem>>, vector<512x256xbf16>
    %c0_61 = arith.constant 0 : index
    %c0_62 = arith.constant 0 : index
    %79 = vector.load %arg24[%c0_61, %c0_62] : memref<1x256xf32, #tpu.memory_space<vmem>>, vector<1x256xf32>
    %80 = arith.truncf %77 : vector<16x512xf32> to vector<16x512xbf16>
    %cst_63 = arith.constant dense<0.000000e+00> : vector<16x256xf32>
    %81 = tpu.matmul %80, %78, %cst_63 {dimension_numbers = #tpu.dot_dimension_numbers<[1], [0], [0], [1], [0, 0, 1, 1], [], []>} : vector<16x512xbf16>, vector<512x256xbf16>, vector<16x256xf32> -> vector<16x256xf32>
    %82 = vector.broadcast %79 : vector<1x256xf32> to vector<16x256xf32>
    %83 = arith.addf %81, %82 : vector<16x256xf32>
    %84 = vector.broadcast %1 : vector<1x256xf32> to vector<16x256xf32>
    %85 = arith.mulf %83, %84 : vector<16x256xf32>
    %86 = vector.broadcast %0 : vector<1x256xf32> to vector<16x256xf32>
    %87 = arith.addf %85, %86 : vector<16x256xf32>
    %c0_64 = arith.constant 0 : index
    %c0_65 = arith.constant 0 : index
    %88 = vector.load %arg25[%c0_64, %c0_65] : memref<16x256xf32, #tpu.memory_space<vmem>>, vector<16x256xf32>
    tpu.vector_store %arg25[%c0_64, %c0_65], %87 {strides = array<i32>} : memref<16x256xf32, #tpu.memory_space<vmem>>, vector<16x256xf32>,
    return
  }
  func.func @transform_0(%arg0: i32) -> (i32, i32) {
    %c0_i32 = arith.constant 0 : i32
    %c0_i32_0 = arith.constant 0 : i32
    return %arg0, %c0_i32 : i32, i32
  }
  func.func @transform_1(%arg0: i32) -> (i32, i32) {
    %c0_i32 = arith.constant 0 : i32
    %c0_i32_0 = arith.constant 0 : i32
    %c0_i32_1 = arith.constant 0 : i32
    return %c0_i32, %c0_i32_0 : i32, i32
  }
  func.func @transform_2(%arg0: i32) -> (i32, i32) {
    %c0_i32 = arith.constant 0 : i32
    %c0_i32_0 = arith.constant 0 : i32
    %c0_i32_1 = arith.constant 0 : i32
    return %c0_i32, %c0_i32_0 : i32, i32
  }
  func.func @transform_3(%arg0: i32) -> (i32, i32) {
    %c0_i32 = arith.constant 0 : i32
    %c0_i32_0 = arith.constant 0 : i32
    %c0_i32_1 = arith.constant 0 : i32
    return %c0_i32, %c0_i32_0 : i32, i32
  }
  func.func @transform_4(%arg0: i32) -> (i32, i32) {
    %c0_i32 = arith.constant 0 : i32
    %c0_i32_0 = arith.constant 0 : i32
    %c0_i32_1 = arith.constant 0 : i32
    return %c0_i32, %c0_i32_0 : i32, i32
  }
  func.func @transform_5(%arg0: i32) -> (i32, i32) {
    %c0_i32 = arith.constant 0 : i32
    %c0_i32_0 = arith.constant 0 : i32
    %c0_i32_1 = arith.constant 0 : i32
    return %c0_i32, %c0_i32_0 : i32, i32
  }
  func.func @transform_6(%arg0: i32) -> (i32, i32) {
    %c0_i32 = arith.constant 0 : i32
    %c0_i32_0 = arith.constant 0 : i32
    %c0_i32_1 = arith.constant 0 : i32
    return %c0_i32, %c0_i32_0 : i32, i32
  }
  func.func @transform_7(%arg0: i32) -> (i32, i32) {
    %c0_i32 = arith.constant 0 : i32
    %c0_i32_0 = arith.constant 0 : i32
    %c0_i32_1 = arith.constant 0 : i32
    return %c0_i32, %c0_i32_0 : i32, i32
  }
  func.func @transform_8(%arg0: i32) -> (i32, i32) {
    %c0_i32 = arith.constant 0 : i32
    %c0_i32_0 = arith.constant 0 : i32
    %c0_i32_1 = arith.constant 0 : i32
    return %c0_i32, %c0_i32_0 : i32, i32
  }
  func.func @transform_9(%arg0: i32) -> (i32, i32) {
    %c0_i32 = arith.constant 0 : i32
    %c0_i32_0 = arith.constant 0 : i32
    %c0_i32_1 = arith.constant 0 : i32
    return %c0_i32, %c0_i32_0 : i32, i32
  }
  func.func @transform_10(%arg0: i32) -> (i32, i32) {
    %c0_i32 = arith.constant 0 : i32
    %c0_i32_0 = arith.constant 0 : i32
    %c0_i32_1 = arith.constant 0 : i32
    return %c0_i32, %c0_i32_0 : i32, i32
  }
  func.func @transform_11(%arg0: i32) -> (i32, i32) {
    %c0_i32 = arith.constant 0 : i32
    %c0_i32_0 = arith.constant 0 : i32
    %c0_i32_1 = arith.constant 0 : i32
    return %c0_i32, %c0_i32_0 : i32, i32
  }
  func.func @transform_12(%arg0: i32) -> (i32, i32) {
    %c0_i32 = arith.constant 0 : i32
    %c0_i32_0 = arith.constant 0 : i32
    %c0_i32_1 = arith.constant 0 : i32
    return %c0_i32, %c0_i32_0 : i32, i32
  }
  func.func @transform_13(%arg0: i32) -> (i32, i32) {
    %c0_i32 = arith.constant 0 : i32
    %c0_i32_0 = arith.constant 0 : i32
    %c0_i32_1 = arith.constant 0 : i32
    return %c0_i32, %c0_i32_0 : i32, i32
  }
  func.func @transform_14(%arg0: i32) -> (i32, i32) {
    %c0_i32 = arith.constant 0 : i32
    %c0_i32_0 = arith.constant 0 : i32
    %c0_i32_1 = arith.constant 0 : i32
    return %c0_i32, %c0_i32_0 : i32, i32
  }
  func.func @transform_15(%arg0: i32) -> (i32, i32) {
    %c0_i32 = arith.constant 0 : i32
    %c0_i32_0 = arith.constant 0 : i32
    %c0_i32_1 = arith.constant 0 : i32
    return %c0_i32, %c0_i32_0 : i32, i32
  }
  func.func @transform_16(%arg0: i32) -> (i32, i32) {
    %c0_i32 = arith.constant 0 : i32
    %c0_i32_0 = arith.constant 0 : i32
    %c0_i32_1 = arith.constant 0 : i32
    return %c0_i32, %c0_i32_0 : i32, i32
  }
  func.func @transform_17(%arg0: i32) -> (i32, i32) {
    %c0_i32 = arith.constant 0 : i32
    %c0_i32_0 = arith.constant 0 : i32
    %c0_i32_1 = arith.constant 0 : i32
    return %c0_i32, %c0_i32_0 : i32, i32
  }
  func.func @transform_18(%arg0: i32) -> (i32, i32) {
    %c0_i32 = arith.constant 0 : i32
    %c0_i32_0 = arith.constant 0 : i32
    %c0_i32_1 = arith.constant 0 : i32
    return %c0_i32, %c0_i32_0 : i32, i32
  }
  func.func @transform_19(%arg0: i32) -> (i32, i32) {
    %c0_i32 = arith.constant 0 : i32
    %c0_i32_0 = arith.constant 0 : i32
    %c0_i32_1 = arith.constant 0 : i32
    return %c0_i32, %c0_i32_0 : i32, i32
  }
  func.func @transform_20(%arg0: i32) -> (i32, i32) {
    %c0_i32 = arith.constant 0 : i32
    %c0_i32_0 = arith.constant 0 : i32
    %c0_i32_1 = arith.constant 0 : i32
    return %c0_i32, %c0_i32_0 : i32, i32
  }
  func.func @transform_21(%arg0: i32) -> (i32, i32) {
    %c0_i32 = arith.constant 0 : i32
    %c0_i32_0 = arith.constant 0 : i32
    %c0_i32_1 = arith.constant 0 : i32
    return %c0_i32, %c0_i32_0 : i32, i32
  }
  func.func @transform_22(%arg0: i32) -> (i32, i32) {
    %c0_i32 = arith.constant 0 : i32
    %c0_i32_0 = arith.constant 0 : i32
    %c0_i32_1 = arith.constant 0 : i32
    return %c0_i32, %c0_i32_0 : i32, i32
  }
  func.func @transform_23(%arg0: i32) -> (i32, i32) {
    %c0_i32 = arith.constant 0 : i32
    %c0_i32_0 = arith.constant 0 : i32
    %c0_i32_1 = arith.constant 0 : i32
    return %c0_i32, %c0_i32_0 : i32, i32
  }
  func.func @transform_24(%arg0: i32) -> (i32, i32) {
    %c0_i32 = arith.constant 0 : i32
    %c0_i32_0 = arith.constant 0 : i32
    return %arg0, %c0_i32 : i32, i32
  }
}

</mosaic_0001>

<llo_original>
// kernel: tpu_custom_call.1
$region0: #{tpu_custom_call.1}
  #allocation0 [shape = 'u32[]', space=smem, size = 0x4, offset = 0x4, fixed_abs, tag = 'smem constant byte address 0x4 - core index']
  #allocation1 [shape = 'u32[144,128]{1,0:T(1,128)}', space=vmem, size = 0x12000, scoped, tag = 'internal scratch']
  %s0 = inlined_call_operand.hbm [shape: f32[32,256], index: 0, kind: input, shape index: {}]
  %s1 = inlined_call_operand.hbm [shape: f32[1,256], index: 1, kind: input, shape index: {}]
  %s2 = inlined_call_operand.hbm [shape: f32[1,256], index: 2, kind: input, shape index: {}]
  %s3 = inlined_call_operand.hbm [shape: f32[1,256], index: 3, kind: input, shape index: {}]
  %s4 = inlined_call_operand.hbm [shape: bf16[256,512], index: 4, kind: input, shape index: {}]
  %s5 = inlined_call_operand.vmem [shape: f32[1,512], index: 5, kind: input, shape index: {}]
  %s6 = inlined_call_operand.hbm [shape: bf16[512,256], index: 6, kind: input, shape index: {}]
  %s7 = inlined_call_operand.vmem [shape: f32[1,256], index: 7, kind: input, shape index: {}]
  %s8 = inlined_call_operand.hbm [shape: bf16[256,128], index: 8, kind: input, shape index: {}]
  %s9 = inlined_call_operand.vmem [shape: f32[1,128], index: 9, kind: input, shape index: {}]
  %s10 = inlined_call_operand.hbm [shape: bf16[128,128], index: 10, kind: input, shape index: {}]
  %s11 = inlined_call_operand.vmem [shape: f32[1,128], index: 11, kind: input, shape index: {}]
  %s12 = inlined_call_operand.hbm [shape: bf16[128,128], index: 12, kind: input, shape index: {}]
  %s13 = inlined_call_operand.vmem [shape: f32[1,128], index: 13, kind: input, shape index: {}]
  %s14 = inlined_call_operand.hbm [shape: bf16[128,128], index: 14, kind: input, shape index: {}]
  %s15 = inlined_call_operand.vmem [shape: f32[1,128], index: 15, kind: input, shape index: {}]
  %s16 = inlined_call_operand.hbm [shape: bf16[128,128], index: 16, kind: input, shape index: {}]
  %s17 = inlined_call_operand.vmem [shape: f32[1,128], index: 17, kind: input, shape index: {}]
  %s18 = inlined_call_operand.hbm [shape: bf16[128,256], index: 18, kind: input, shape index: {}]
  %s19 = inlined_call_operand.vmem [shape: f32[1,256], index: 19, kind: input, shape index: {}]
  %s20 = inlined_call_operand.hbm [shape: bf16[256,512], index: 20, kind: input, shape index: {}]
  %s21 = inlined_call_operand.vmem [shape: f32[1,512], index: 21, kind: input, shape index: {}]
  %s22 = inlined_call_operand.hbm [shape: bf16[512,256], index: 22, kind: input, shape index: {}]
  %s23 = inlined_call_operand.vmem [shape: f32[1,256], index: 23, kind: input, shape index: {}]
  %s24 = inlined_call_operand.hbm [shape: f32[32,256], index: 24, kind: output, shape index: {}]
  %s25 = sld [smem:[#allocation0]]
  $region185: #{tpu_custom_call.1} parent=0
    _
  %s27 = ssub.s32 1, %s25
  %s28 = scalar_select 0, %s27, %s25
  $region1: #{tpu_custom_call.1} parent=0
    #allocation2 [shape = 'u8[32768]{0}', space=vmem, size = 0x8000, scoped, tag = 'input window, operand 0']
    #allocation3 [shape = 's32[2]{0}', space=sflag, size = 0x8, scoped, tag = 'scoped memory for tpu_custom_call.1']
    #allocation4 [shape = 's32[2]{0}', space=sflag, size = 0x8, scoped, tag = 'scoped memory for tpu_custom_call.1']
    #allocation5 [shape = 'u8[1024]{0}', space=vmem, size = 0x400, scoped, tag = 'input window, operand 1, single buffered']
    #allocation6 [shape = 's32[1]{0}', space=sflag, size = 0x4, scoped, tag = 'scoped memory for tpu_custom_call.1']
    #allocation7 [shape = 'u8[1024]{0}', space=vmem, size = 0x400, scoped, tag = 'input window, operand 2, single buffered']
    #allocation8 [shape = 'u8[1024]{0}', space=vmem, size = 0x400, scoped, tag = 'input window, operand 3, single buffered']
    #allocation9 [shape = 's32[1]{0}', space=sflag, size = 0x4, scoped, tag = 'scoped memory for tpu_custom_call.1']
    #allocation10 [shape = 'u8[262144]{0}', space=vmem, size = 0x40000, scoped, tag = 'input window, operand 4, single buffered']
    #allocation11 [shape = 'u8[262144]{0}', space=vmem, size = 0x40000, scoped, tag = 'input window, operand 6, single buffered']
    #allocation12 [shape = 's32[1]{0}', space=sflag, size = 0x4, scoped, tag = 'scoped memory for tpu_custom_call.1']
    #allocation13 [shape = 'u8[65536]{0}', space=vmem, size = 0x10000, scoped, tag = 'input window, operand 8, single buffered']
    #allocation14 [shape = 'u8[32768]{0}', space=vmem, size = 0x8000, scoped, tag = 'input window, operand 10, single buffered']
    #allocation15 [shape = 's32[1]{0}', space=sflag, size = 0x4, scoped, tag = 'scoped memory for tpu_custom_call.1']
    #allocation16 [shape = 'u8[32768]{0}', space=vmem, size = 0x8000, scoped, tag = 'input window, operand 12, single buffered']
    #allocation17 [shape = 'u8[32768]{0}', space=vmem, size = 0x8000, scoped, tag = 'input window, operand 14, single buffered']
    #allocation18 [shape = 's32[1]{0}', space=sflag, size = 0x4, scoped, tag = 'scoped memory for tpu_custom_call.1']
    #allocation19 [shape = 'u8[32768]{0}', space=vmem, size = 0x8000, scoped, tag = 'input window, operand 16, single buffered']
    #allocation20 [shape = 'u8[65536]{0}', space=vmem, size = 0x10000, scoped, tag = 'input window, operand 18, single buffered']
    #allocation21 [shape = 's32[1]{0}', space=sflag, size = 0x4, scoped, tag = 'scoped memory for tpu_custom_call.1']
    #allocation22 [shape = 'u8[262144]{0}', space=vmem, size = 0x40000, scoped, tag = 'input window, operand 20, single buffered']
    #allocation23 [shape = 'u8[262144]{0}', space=vmem, size = 0x40000, scoped, tag = 'input window, operand 22, single buffered']
    #allocation24 [shape = 's32[1]{0}', space=sflag, size = 0x4, scoped, tag = 'scoped memory for tpu_custom_call.1']
    #allocation25 [shape = 'u8[32768]{0}', space=vmem, size = 0x8000, scoped, tag = 'output window, operand 0']
    %29 = vsyncpa [#allocation3], 0
    %s30 = scalar_lea.sflag [#allocation3], 1
    %31 = vsyncpa %s30, 0
    %32 = vsyncpa [#allocation6], 0
    %33 = vsyncpa [#allocation9], 0
    %34 = vsyncpa [#allocation12], 0
    %35 = vsyncpa [#allocation15], 0
    %36 = vsyncpa [#allocation18], 0
    %37 = vsyncpa [#allocation21], 0
    %38 = vsyncpa [#allocation24], 0
    %39 = vsyncpa [#allocation4], 0
    %s40 = scalar_lea.sflag [#allocation4], 1
    %41 = vsyncpa %s40, 0
    loop: start=0, step=1, limit=4
    $region2: #{tpu_custom_call.1} parent=1 // loop_pre_header
      _
    $region3: #{tpu_custom_call.1} parent=1 // loop_header
      %s43 = sphi 0, %s47
      %p44 = scmp.ge.s32.totalorder %s43, 4
      %s53 = sphi 0, %s55
      %s56 = sphi 0, %s53
      %s57 = sphi 0, %s56
      %s73 = sphi 0, %s57
      %s77 = sphi 0, %s77
      %s79 = sphi 0, %s77
      %s80 = sphi 0, %s79
      %s94 = sphi 0, %s80
      %s98 = sphi 0, %s98
      %s100 = sphi 0, %s98
      %s101 = sphi 0, %s100
      %s115 = sphi 0, %s101
      %s119 = sphi 0, %s119
      %s121 = sphi 0, %s119
      %s122 = sphi 0, %s121
      %s136 = sphi 0, %s122
      %s140 = sphi 0, %s140
      %s142 = sphi 0, %s140
      %s143 = sphi 0, %s142
      %s157 = sphi 0, %s143
      %s161 = sphi 0, %s161
      %s163 = sphi 0, %s161
      %s164 = sphi 0, %s163
      %s178 = sphi 0, %s164
      %s182 = sphi 0, %s182
      %s184 = sphi 0, %s182
      %s185 = sphi 0, %s184
      %s199 = sphi 0, %s185
      %s203 = sphi 0, %s203
      %s205 = sphi 0, %s203
      %s206 = sphi 0, %s205
      %s220 = sphi 0, %s206
      %s224 = sphi 0, %s224
      %s226 = sphi 0, %s224
      %s227 = sphi 0, %s226
      %s241 = sphi 0, %s227
      %s245 = sphi 0, %s245
      %s247 = sphi 0, %s245
      %s248 = sphi 0, %s247
      %s262 = sphi 0, %s248
      %s266 = sphi 0, %s266
      %s268 = sphi 0, %s266
      %s269 = sphi 0, %s268
      %s283 = sphi 0, %s269
      %s287 = sphi 0, %s287
      %s289 = sphi 0, %s287
      %s290 = sphi 0, %s289
      %s304 = sphi 0, %s290
      %s308 = sphi 0, %s308
      %s310 = sphi 0, %s308
      %s311 = sphi 0, %s310
      %s325 = sphi 0, %s311
      %s329 = sphi 0, %s329
      %s331 = sphi 0, %s329
      %s332 = sphi 0, %s331
      %s346 = sphi 0, %s332
      %s350 = sphi 0, %s350
      %s352 = sphi 0, %s350
      %s353 = sphi 0, %s352
      %s367 = sphi 0, %s353
      %s371 = sphi 0, %s371
      %s373 = sphi 0, %s371
      %s374 = sphi 0, %s373
      %s388 = sphi 0, %s374
      %s392 = sphi 0, %s392
      %s394 = sphi 0, %s392
      %s395 = sphi 0, %s394
      %s409 = sphi 0, %s395
      %s413 = sphi 0, %s413
      %s415 = sphi 0, %s413
      %s416 = sphi 0, %s415
      %s430 = sphi 0, %s416
      %s434 = sphi 0, %s434
      %s436 = sphi 0, %s434
      %s437 = sphi 0, %s436
      %s451 = sphi 0, %s437
      %s455 = sphi 0, %s455
      %s457 = sphi 0, %s455
      %s458 = sphi 0, %s457
      %s472 = sphi 0, %s458
      %s476 = sphi 0, %s476
      %s478 = sphi 0, %s476
      %s479 = sphi 0, %s478
      %s493 = sphi 0, %s479
      %s497 = sphi 0, %s497
      %s499 = sphi 0, %s497
      %s500 = sphi 0, %s499
      %s514 = sphi 0, %s500
      %s518 = sphi 0, %s518
      %s520 = sphi 0, %s518
      %s521 = sphi 0, %s520
      %s535 = sphi 0, %s521
      %s539 = sphi 0, %s539
      %s541 = sphi 0, %s539
      %s542 = sphi 0, %s541
      %s556 = sphi 0, %s542
      %s562 = sphi 0, %s564
      %s565 = sphi 0, %s562
      %s566 = sphi 0, %s565
      %s582 = sphi 0, %s566
    $region4: #{tpu_custom_call.1} parent=1 // loop_header_branch
      %46 = sbr.rel (%p44) target = $region8
    $region5: #{tpu_custom_call.1} parent=1 // loop_body
      %s48 = ssub.s32 %s43, 1
      %s49 = ssub.s32 %s43, 2
      %s50 = sadd.s32 %s43, 1
      %s51 = ssub.s32 %s43, %s50
      %p52 = scmp.eq.s32.totalorder %s51, 0
      %s54 = sadd.s32 %s53, 1
      %s55 = scalar_select %p52, %s53, %s54
      %p58 = pneg %p52
      %p59 = scmp.eq.s32.totalorder %s43, 1
      %p60 = por %p58, %p59
      %p61 = scmp.ne.s32.totalorder %s53, %s56
      %p62 = scmp.eq.s32.totalorder %s43, 0
      %p63 = por %p61, %p62
      %p64 = scmp.ne.s32.totalorder %s53, %s56
      %p65 = scmp.eq.s32.totalorder %s48, 1
      %p66 = por %p64, %p65
      %p67 = scmp.ne.s32.totalorder %s56, %s57
      %p68 = scmp.eq.s32.totalorder %s48, 0
      %p69 = por %p67, %p68
      %p70 = scmp.ne.s32.totalorder %s56, %s57
      %p71 = scmp.eq.s32.totalorder %s49, 1
      %p72 = por %p70, %p71
      %p74 = scmp.ne.s32.totalorder %s57, %s73
      %p75 = scmp.eq.s32.totalorder %s49, 0
      %p76 = por %p74, %p75
      %s78 = sadd.s32 %s77, 1
      %p81 = scmp.eq.s32.totalorder %s43, 1
      %p82 = scmp.ne.s32.totalorder %s77, %s79
      %p83 = scmp.eq.s32.totalorder %s43, 0
      %p84 = por %p82, %p83
      %p85 = scmp.ne.s32.totalorder %s77, %s79
      %p86 = scmp.eq.s32.totalorder %s48, 1
      %p87 = por %p85, %p86
      %p88 = scmp.ne.s32.totalorder %s79, %s80
      %p89 = scmp.eq.s32.totalorder %s48, 0
      %p90 = por %p88, %p89
      %p91 = scmp.ne.s32.totalorder %s79, %s80
      %p92 = scmp.eq.s32.totalorder %s49, 1
      %p93 = por %p91, %p92
      %p95 = scmp.ne.s32.totalorder %s80, %s94
      %p96 = scmp.eq.s32.totalorder %s49, 0
      %p97 = por %p95, %p96
      %s99 = sadd.s32 %s98, 1
      %p102 = scmp.eq.s32.totalorder %s43, 1
      %p103 = scmp.ne.s32.totalorder %s98, %s100
      %p104 = scmp.eq.s32.totalorder %s43, 0
      %p105 = por %p103, %p104
      %p106 = scmp.ne.s32.totalorder %s98, %s100
      %p107 = scmp.eq.s32.totalorder %s48, 1
      %p108 = por %p106, %p107
      %p109 = scmp.ne.s32.totalorder %s100, %s101
      %p110 = scmp.eq.s32.totalorder %s48, 0
      %p111 = por %p109, %p110
      %p112 = scmp.ne.s32.totalorder %s100, %s101
      %p113 = scmp.eq.s32.totalorder %s49, 1
      %p114 = por %p112, %p113
      %p116 = scmp.ne.s32.totalorder %s101, %s115
      %p117 = scmp.eq.s32.totalorder %s49, 0
      %p118 = por %p116, %p117
      %s120 = sadd.s32 %s119, 1
      %p123 = scmp.eq.s32.totalorder %s43, 1
      %p124 = scmp.ne.s32.totalorder %s119, %s121
      %p125 = scmp.eq.s32.totalorder %s43, 0
      %p126 = por %p124, %p125
      %p127 = scmp.ne.s32.totalorder %s119, %s121
      %p128 = scmp.eq.s32.totalorder %s48, 1
      %p129 = por %p127, %p128
      %p130 = scmp.ne.s32.totalorder %s121, %s122
      %p131 = scmp.eq.s32.totalorder %s48, 0
      %p132 = por %p130, %p131
      %p133 = scmp.ne.s32.totalorder %s121, %s122
      %p134 = scmp.eq.s32.totalorder %s49, 1
      %p135 = por %p133, %p134
      %p137 = scmp.ne.s32.totalorder %s122, %s136
      %p138 = scmp.eq.s32.totalorder %s49, 0
      %p139 = por %p137, %p138
      %s141 = sadd.s32 %s140, 1
      %p144 = scmp.eq.s32.totalorder %s43, 1
      %p145 = scmp.ne.s32.totalorder %s140, %s142
      %p146 = scmp.eq.s32.totalorder %s43, 0
      %p147 = por %p145, %p146
      %p148 = scmp.ne.s32.totalorder %s140, %s142
      %p149 = scmp.eq.s32.totalorder %s48, 1
      %p150 = por %p148, %p149
      %p151 = scmp.ne.s32.totalorder %s142, %s143
      %p152 = scmp.eq.s32.totalorder %s48, 0
      %p153 = por %p151, %p152
      %p154 = scmp.ne.s32.totalorder %s142, %s143
      %p155 = scmp.eq.s32.totalorder %s49, 1
      %p156 = por %p154, %p155
      %p158 = scmp.ne.s32.totalorder %s143, %s157
      %p159 = scmp.eq.s32.totalorder %s49, 0
      %p160 = por %p158, %p159
      %s162 = sadd.s32 %s161, 1
      %p165 = scmp.eq.s32.totalorder %s43, 1
      %p166 = scmp.ne.s32.totalorder %s161, %s163
      %p167 = scmp.eq.s32.totalorder %s43, 0
      %p168 = por %p166, %p167
      %p169 = scmp.ne.s32.totalorder %s161, %s163
      %p170 = scmp.eq.s32.totalorder %s48, 1
      %p171 = por %p169, %p170
      %p172 = scmp.ne.s32.totalorder %s163, %s164
      %p173 = scmp.eq.s32.totalorder %s48, 0
      %p174 = por %p172, %p173
      %p175 = scmp.ne.s32.totalorder %s163, %s164
      %p176 = scmp.eq.s32.totalorder %s49, 1
      %p177 = por %p175, %p176
      %p179 = scmp.ne.s32.totalorder %s164, %s178
      %p180 = scmp.eq.s32.totalorder %s49, 0
      %p181 = por %p179, %p180
      %s183 = sadd.s32 %s182, 1
      %p186 = scmp.eq.s32.totalorder %s43, 1
      %p187 = scmp.ne.s32.totalorder %s182, %s184
      %p188 = scmp.eq.s32.totalorder %s43, 0
      %p189 = por %p187, %p188
      %p190 = scmp.ne.s32.totalorder %s182, %s184
      %p191 = scmp.eq.s32.totalorder %s48, 1
      %p192 = por %p190, %p191
      %p193 = scmp.ne.s32.totalorder %s184, %s185
      %p194 = scmp.eq.s32.totalorder %s48, 0
      %p195 = por %p193, %p194
      %p196 = scmp.ne.s32.totalorder %s184, %s185
      %p197 = scmp.eq.s32.totalorder %s49, 1
      %p198 = por %p196, %p197
      %p200 = scmp.ne.s32.totalorder %s185, %s199
      %p201 = scmp.eq.s32.totalorder %s49, 0
      %p202 = por %p200, %p201
      %s204 = sadd.s32 %s203, 1
      %p207 = scmp.eq.s32.totalorder %s43, 1
      %p208 = scmp.ne.s32.totalorder %s203, %s205
      %p209 = scmp.eq.s32.totalorder %s43, 0
      %p210 = por %p208, %p209
      %p211 = scmp.ne.s32.totalorder %s203, %s205
      %p212 = scmp.eq.s32.totalorder %s48, 1
      %p213 = por %p211, %p212
      %p214 = scmp.ne.s32.totalorder %s205, %s206
      %p215 = scmp.eq.s32.totalorder %s48, 0
      %p216 = por %p214, %p215
      %p217 = scmp.ne.s32.totalorder %s205, %s206
      %p218 = scmp.eq.s32.totalorder %s49, 1
      %p219 = por %p217, %p218
      %p221 = scmp.ne.s32.totalorder %s206, %s220
      %p222 = scmp.eq.s32.totalorder %s49, 0
      %p223 = por %p221, %p222
      %s225 = sadd.s32 %s224, 1
      %p228 = scmp.eq.s32.totalorder %s43, 1
      %p229 = scmp.ne.s32.totalorder %s224, %s226
      %p230 = scmp.eq.s32.totalorder %s43, 0
      %p231 = por %p229, %p230
      %p232 = scmp.ne.s32.totalorder %s224, %s226
      %p233 = scmp.eq.s32.totalorder %s48, 1
      %p234 = por %p232, %p233
      %p235 = scmp.ne.s32.totalorder %s226, %s227
      %p236 = scmp.eq.s32.totalorder %s48, 0
      %p237 = por %p235, %p236
      %p238 = scmp.ne.s32.totalorder %s226, %s227
      %p239 = scmp.eq.s32.totalorder %s49, 1
      %p240 = por %p238, %p239
      %p242 = scmp.ne.s32.totalorder %s227, %s241
      %p243 = scmp.eq.s32.totalorder %s49, 0
      %p244 = por %p242, %p243
      %s246 = sadd.s32 %s245, 1
      %p249 = scmp.eq.s32.totalorder %s43, 1
      %p250 = scmp.ne.s32.totalorder %s245, %s247
      %p251 = scmp.eq.s32.totalorder %s43, 0
      %p252 = por %p250, %p251
      %p253 = scmp.ne.s32.totalorder %s245, %s247
      %p254 = scmp.eq.s32.totalorder %s48, 1
      %p255 = por %p253, %p254
      %p256 = scmp.ne.s32.totalorder %s247, %s248
      %p257 = scmp.eq.s32.totalorder %s48, 0
      %p258 = por %p256, %p257
      %p259 = scmp.ne.s32.totalorder %s247, %s248
      %p260 = scmp.eq.s32.totalorder %s49, 1
      %p261 = por %p259, %p260
      %p263 = scmp.ne.s32.totalorder %s248, %s262
      %p264 = scmp.eq.s32.totalorder %s49, 0
      %p265 = por %p263, %p264
      %s267 = sadd.s32 %s266, 1
      %p270 = scmp.eq.s32.totalorder %s43, 1
      %p271 = scmp.ne.s32.totalorder %s266, %s268
      %p272 = scmp.eq.s32.totalorder %s43, 0
      %p273 = por %p271, %p272
      %p274 = scmp.ne.s32.totalorder %s266, %s268
      %p275 = scmp.eq.s32.totalorder %s48, 1
      %p276 = por %p274, %p275
      %p277 = scmp.ne.s32.totalorder %s268, %s269
      %p278 = scmp.eq.s32.totalorder %s48, 0
      %p279 = por %p277, %p278
      %p280 = scmp.ne.s32.totalorder %s268, %s269
      %p281 = scmp.eq.s32.totalorder %s49, 1
      %p282 = por %p280, %p281
      %p284 = scmp.ne.s32.totalorder %s269, %s283
      %p285 = scmp.eq.s32.totalorder %s49, 0
      %p286 = por %p284, %p285
      %s288 = sadd.s32 %s287, 1
      %p291 = scmp.eq.s32.totalorder %s43, 1
      %p292 = scmp.ne.s32.totalorder %s287, %s289
      %p293 = scmp.eq.s32.totalorder %s43, 0
      %p294 = por %p292, %p293
      %p295 = scmp.ne.s32.totalorder %s287, %s289
      %p296 = scmp.eq.s32.totalorder %s48, 1
      %p297 = por %p295, %p296
      %p298 = scmp.ne.s32.totalorder %s289, %s290
      %p299 = scmp.eq.s32.totalorder %s48, 0
      %p300 = por %p298, %p299
      %p301 = scmp.ne.s32.totalorder %s289, %s290
      %p302 = scmp.eq.s32.totalorder %s49, 1
      %p303 = por %p301, %p302
      %p305 = scmp.ne.s32.totalorder %s290, %s304
      %p306 = scmp.eq.s32.totalorder %s49, 0
      %p307 = por %p305, %p306
      %s309 = sadd.s32 %s308, 1
      %p312 = scmp.eq.s32.totalorder %s43, 1
      %p313 = scmp.ne.s32.totalorder %s308, %s310
      %p314 = scmp.eq.s32.totalorder %s43, 0
      %p315 = por %p313, %p314
      %p316 = scmp.ne.s32.totalorder %s308, %s310
      %p317 = scmp.eq.s32.totalorder %s48, 1
      %p318 = por %p316, %p317
      %p319 = scmp.ne.s32.totalorder %s310, %s311
      %p320 = scmp.eq.s32.totalorder %s48, 0
      %p321 = por %p319, %p320
      %p322 = scmp.ne.s32.totalorder %s310, %s311
      %p323 = scmp.eq.s32.totalorder %s49, 1
      %p324 = por %p322, %p323
      %p326 = scmp.ne.s32.totalorder %s311, %s325
      %p327 = scmp.eq.s32.totalorder %s49, 0
      %p328 = por %p326, %p327
      %s330 = sadd.s32 %s329, 1
      %p333 = scmp.eq.s32.totalorder %s43, 1
      %p334 = scmp.ne.s32.totalorder %s329, %s331
      %p335 = scmp.eq.s32.totalorder %s43, 0
      %p336 = por %p334, %p335
      %p337 = scmp.ne.s32.totalorder %s329, %s331
      %p338 = scmp.eq.s32.totalorder %s48, 1
      %p339 = por %p337, %p338
      %p340 = scmp.ne.s32.totalorder %s331, %s332
      %p341 = scmp.eq.s32.totalorder %s48, 0
      %p342 = por %p340, %p341
      %p343 = scmp.ne.s32.totalorder %s331, %s332
      %p344 = scmp.eq.s32.totalorder %s49, 1
      %p345 = por %p343, %p344
      %p347 = scmp.ne.s32.totalorder %s332, %s346
      %p348 = scmp.eq.s32.totalorder %s49, 0
      %p349 = por %p347, %p348
      %s351 = sadd.s32 %s350, 1
      %p354 = scmp.eq.s32.totalorder %s43, 1
      %p355 = scmp.ne.s32.totalorder %s350, %s352
      %p356 = scmp.eq.s32.totalorder %s43, 0
      %p357 = por %p355, %p356
      %p358 = scmp.ne.s32.totalorder %s350, %s352
      %p359 = scmp.eq.s32.totalorder %s48, 1
      %p360 = por %p358, %p359
      %p361 = scmp.ne.s32.totalorder %s352, %s353
      %p362 = scmp.eq.s32.totalorder %s48, 0
      %p363 = por %p361, %p362
      %p364 = scmp.ne.s32.totalorder %s352, %s353
      %p365 = scmp.eq.s32.totalorder %s49, 1
      %p366 = por %p364, %p365
      %p368 = scmp.ne.s32.totalorder %s353, %s367
      %p369 = scmp.eq.s32.totalorder %s49, 0
      %p370 = por %p368, %p369
      %s372 = sadd.s32 %s371, 1
      %p375 = scmp.eq.s32.totalorder %s43, 1
      %p376 = scmp.ne.s32.totalorder %s371, %s373
      %p377 = scmp.eq.s32.totalorder %s43, 0
      %p378 = por %p376, %p377
      %p379 = scmp.ne.s32.totalorder %s371, %s373
      %p380 = scmp.eq.s32.totalorder %s48, 1
      %p381 = por %p379, %p380
      %p382 = scmp.ne.s32.totalorder %s373, %s374
      %p383 = scmp.eq.s32.totalorder %s48, 0
      %p384 = por %p382, %p383
      %p385 = scmp.ne.s32.totalorder %s373, %s374
      %p386 = scmp.eq.s32.totalorder %s49, 1
      %p387 = por %p385, %p386
      %p389 = scmp.ne.s32.totalorder %s374, %s388
      %p390 = scmp.eq.s32.totalorder %s49, 0
      %p391 = por %p389, %p390
      %s393 = sadd.s32 %s392, 1
      %p396 = scmp.eq.s32.totalorder %s43, 1
      %p397 = scmp.ne.s32.totalorder %s392, %s394
      %p398 = scmp.eq.s32.totalorder %s43, 0
      %p399 = por %p397, %p398
      %p400 = scmp.ne.s32.totalorder %s392, %s394
      %p401 = scmp.eq.s32.totalorder %s48, 1
      %p402 = por %p400, %p401
      %p403 = scmp.ne.s32.totalorder %s394, %s395
      %p404 = scmp.eq.s32.totalorder %s48, 0
      %p405 = por %p403, %p404
      %p406 = scmp.ne.s32.totalorder %s394, %s395
      %p407 = scmp.eq.s32.totalorder %s49, 1
      %p408 = por %p406, %p407
      %p410 = scmp.ne.s32.totalorder %s395, %s409
      %p411 = scmp.eq.s32.totalorder %s49, 0
      %p412 = por %p410, %p411
      %s414 = sadd.s32 %s413, 1
      %p417 = scmp.eq.s32.totalorder %s43, 1
      %p418 = scmp.ne.s32.totalorder %s413, %s415
      %p419 = scmp.eq.s32.totalorder %s43, 0
      %p420 = por %p418, %p419
      %p421 = scmp.ne.s32.totalorder %s413, %s415
      %p422 = scmp.eq.s32.totalorder %s48, 1
      %p423 = por %p421, %p422
      %p424 = scmp.ne.s32.totalorder %s415, %s416
      %p425 = scmp.eq.s32.totalorder %s48, 0
      %p426 = por %p424, %p425
      %p427 = scmp.ne.s32.totalorder %s415, %s416
      %p428 = scmp.eq.s32.totalorder %s49, 1
      %p429 = por %p427, %p428
      %p431 = scmp.ne.s32.totalorder %s416, %s430
      %p432 = scmp.eq.s32.totalorder %s49, 0
      %p433 = por %p431, %p432
      %s435 = sadd.s32 %s434, 1
      %p438 = scmp.eq.s32.totalorder %s43, 1
      %p439 = scmp.ne.s32.totalorder %s434, %s436
      %p440 = scmp.eq.s32.totalorder %s43, 0
      %p441 = por %p439, %p440
      %p442 = scmp.ne.s32.totalorder %s434, %s436
      %p443 = scmp.eq.s32.totalorder %s48, 1
      %p444 = por %p442, %p443
      %p445 = scmp.ne.s32.totalorder %s436, %s437
      %p446 = scmp.eq.s32.totalorder %s48, 0
      %p447 = por %p445, %p446
      %p448 = scmp.ne.s32.totalorder %s436, %s437
      %p449 = scmp.eq.s32.totalorder %s49, 1
      %p450 = por %p448, %p449
      %p452 = scmp.ne.s32.totalorder %s437, %s451
      %p453 = scmp.eq.s32.totalorder %s49, 0
      %p454 = por %p452, %p453
      %s456 = sadd.s32 %s455, 1
      %p459 = scmp.eq.s32.totalorder %s43, 1
      %p460 = scmp.ne.s32.totalorder %s455, %s457
      %p461 = scmp.eq.s32.totalorder %s43, 0
      %p462 = por %p460, %p461
      %p463 = scmp.ne.s32.totalorder %s455, %s457
      %p464 = scmp.eq.s32.totalorder %s48, 1
      %p465 = por %p463, %p464
      %p466 = scmp.ne.s32.totalorder %s457, %s458
      %p467 = scmp.eq.s32.totalorder %s48, 0
      %p468 = por %p466, %p467
      %p469 = scmp.ne.s32.totalorder %s457, %s458
      %p470 = scmp.eq.s32.totalorder %s49, 1
      %p471 = por %p469, %p470
      %p473 = scmp.ne.s32.totalorder %s458, %s472
      %p474 = scmp.eq.s32.totalorder %s49, 0
      %p475 = por %p473, %p474
      %s477 = sadd.s32 %s476, 1
      %p480 = scmp.eq.s32.totalorder %s43, 1
      %p481 = scmp.ne.s32.totalorder %s476, %s478
      %p482 = scmp.eq.s32.totalorder %s43, 0
      %p483 = por %p481, %p482
      %p484 = scmp.ne.s32.totalorder %s476, %s478
      %p485 = scmp.eq.s32.totalorder %s48, 1
      %p486 = por %p484, %p485
      %p487 = scmp.ne.s32.totalorder %s478, %s479
      %p488 = scmp.eq.s32.totalorder %s48, 0
      %p489 = por %p487, %p488
      %p490 = scmp.ne.s32.totalorder %s478, %s479
      %p491 = scmp.eq.s32.totalorder %s49, 1
      %p492 = por %p490, %p491
      %p494 = scmp.ne.s32.totalorder %s479, %s493
      %p495 = scmp.eq.s32.totalorder %s49, 0
      %p496 = por %p494, %p495
      %s498 = sadd.s32 %s497, 1
      %p501 = scmp.eq.s32.totalorder %s43, 1
      %p502 = scmp.ne.s32.totalorder %s497, %s499
      %p503 = scmp.eq.s32.totalorder %s43, 0
      %p504 = por %p502, %p503
      %p505 = scmp.ne.s32.totalorder %s497, %s499
      %p506 = scmp.eq.s32.totalorder %s48, 1
      %p507 = por %p505, %p506
      %p508 = scmp.ne.s32.totalorder %s499, %s500
      %p509 = scmp.eq.s32.totalorder %s48, 0
      %p510 = por %p508, %p509
      %p511 = scmp.ne.s32.totalorder %s499, %s500
      %p512 = scmp.eq.s32.totalorder %s49, 1
      %p513 = por %p511, %p512
      %p515 = scmp.ne.s32.totalorder %s500, %s514
      %p516 = scmp.eq.s32.totalorder %s49, 0
      %p517 = por %p515, %p516
      %s519 = sadd.s32 %s518, 1
      %p522 = scmp.eq.s32.totalorder %s43, 1
      %p523 = scmp.ne.s32.totalorder %s518, %s520
      %p524 = scmp.eq.s32.totalorder %s43, 0
      %p525 = por %p523, %p524
      %p526 = scmp.ne.s32.totalorder %s518, %s520
      %p527 = scmp.eq.s32.totalorder %s48, 1
      %p528 = por %p526, %p527
      %p529 = scmp.ne.s32.totalorder %s520, %s521
      %p530 = scmp.eq.s32.totalorder %s48, 0
      %p531 = por %p529, %p530
      %p532 = scmp.ne.s32.totalorder %s520, %s521
      %p533 = scmp.eq.s32.totalorder %s49, 1
      %p534 = por %p532, %p533
      %p536 = scmp.ne.s32.totalorder %s521, %s535
      %p537 = scmp.eq.s32.totalorder %s49, 0
      %p538 = por %p536, %p537
      %s540 = sadd.s32 %s539, 1
      %p543 = scmp.eq.s32.totalorder %s43, 1
      %p544 = scmp.ne.s32.totalorder %s539, %s541
      %p545 = scmp.eq.s32.totalorder %s43, 0
      %p546 = por %p544, %p545
      %p547 = scmp.ne.s32.totalorder %s539, %s541
      %p548 = scmp.eq.s32.totalorder %s48, 1
      %p549 = por %p547, %p548
      %p550 = scmp.ne.s32.totalorder %s541, %s542
      %p551 = scmp.eq.s32.totalorder %s48, 0
      %p552 = por %p550, %p551
      %p553 = scmp.ne.s32.totalorder %s541, %s542
      %p554 = scmp.eq.s32.totalorder %s49, 1
      %p555 = por %p553, %p554
      %p557 = scmp.ne.s32.totalorder %s542, %s556
      %p558 = scmp.eq.s32.totalorder %s49, 0
      %p559 = por %p557, %p558
      %s560 = ssub.s32 %s43, %s50
      %p561 = scmp.eq.s32.totalorder %s560, 0
      %s563 = sadd.s32 %s562, 1
      %s564 = scalar_select %p561, %s562, %s563
      %p567 = pneg %p561
      %p568 = scmp.eq.s32.totalorder %s43, 1
      %p569 = por %p567, %p568
      %p570 = scmp.ne.s32.totalorder %s562, %s565
      %p571 = scmp.eq.s32.totalorder %s43, 0
      %p572 = por %p570, %p571
      %p573 = scmp.ne.s32.totalorder %s562, %s565
      %p574 = scmp.eq.s32.totalorder %s48, 1
      %p575 = por %p573, %p574
      %p576 = scmp.ne.s32.totalorder %s565, %s566
      %p577 = scmp.eq.s32.totalorder %s48, 0
      %p578 = por %p576, %p577
      %p579 = scmp.ne.s32.totalorder %s565, %s566
      %p580 = scmp.eq.s32.totalorder %s49, 1
      %p581 = por %p579, %p580
      %p583 = scmp.ne.s32.totalorder %s566, %s582
      %p584 = scmp.eq.s32.totalorder %s49, 0
      %p585 = por %p583, %p584
      %p586 = scmp.le.s32.totalorder 1, %s43
      %p587 = scmp.lt.s32.totalorder %s43, 3
      %p588 = pnand %p586, %p587
      %p589 = pneg %p588
      // Predicated region
      $region9: #{tpu_custom_call.1} parent=5 // pred_check
        _
      $region10: #{tpu_custom_call.1} parent=5 // pred_check_branch
        %591 = sbr.rel (%p588) target = $region12
      $region11: #{tpu_custom_call.1} parent=5 // pred_region
        %s592 = ssub.s32 %s43, 1
        // Predicated region
        $region13: #{tpu_custom_call.1} parent=11 // pred_check
          %p593 = pneg %p90
        $region14: #{tpu_custom_call.1} parent=11 // pred_check_branch
          %595 = sbr.rel (%p593) target = $region16
        $region15: #{tpu_custom_call.1} parent=11 // pred_region
          %s597 = ssub.s32 32, 32
          %598 = vsyncadd [#allocation6], %s597
          %s600 = sshll.u32 [#allocation5], 4
          %s601 = int_to_ptr.vmem [resolvable:$true] %s600
          %603 = dma.hbm_to_vmem [thread:$0]  %s1, 32, %s601, [#allocation6]
        $region16: #{tpu_custom_call.1} parent=11 // pred_fallthru
          _
        // Predicated region
        $region17: #{tpu_custom_call.1} parent=11 // pred_check
          %p604 = pneg %p111
        $region18: #{tpu_custom_call.1} parent=11 // pred_check_branch
          %606 = sbr.rel (%p604) target = $region20
        $region19: #{tpu_custom_call.1} parent=11 // pred_region
          %s608 = ssub.s32 32, 32
          %609 = vsyncadd [#allocation6], %s608
          %s611 = sshll.u32 [#allocation7], 4
          %s612 = int_to_ptr.vmem [resolvable:$true] %s611
          %614 = dma.hbm_to_vmem [thread:$0]  %s2, 32, %s612, [#allocation6]
        $region20: #{tpu_custom_call.1} parent=11 // pred_fallthru
          _
        // Predicated region
        $region21: #{tpu_custom_call.1} parent=11 // pred_check
          %p615 = pneg %p132
        $region22: #{tpu_custom_call.1} parent=11 // pred_check_branch
          %617 = sbr.rel (%p615) target = $region24
        $region23: #{tpu_custom_call.1} parent=11 // pred_region
          %s619 = ssub.s32 32, 32
          %620 = vsyncadd [#allocation9], %s619
          %s622 = sshll.u32 [#allocation8], 4
          %s623 = int_to_ptr.vmem [resolvable:$true] %s622
          %625 = dma.hbm_to_vmem [thread:$0]  %s3, 32, %s623, [#allocation9]
        $region24: #{tpu_custom_call.1} parent=11 // pred_fallthru
          _
        // Predicated region
        $region25: #{tpu_custom_call.1} parent=11 // pred_check
          %p626 = pneg %p153
        $region26: #{tpu_custom_call.1} parent=11 // pred_check_branch
          %628 = sbr.rel (%p626) target = $region28
        $region27: #{tpu_custom_call.1} parent=11 // pred_region
          %s630 = ssub.s32 8192, 8192
          %631 = vsyncadd [#allocation9], %s630
          %s632 = sshll.u32 [#allocation10], 4
          %s633 = int_to_ptr.vmem [resolvable:$true] %s632
          %638 = dma.hbm_to_vmem [thread:$0]  %s4, 8192, %s633, [#allocation9], 256, 256, 16
        $region28: #{tpu_custom_call.1} parent=11 // pred_fallthru
          _
        // Predicated region
        $region29: #{tpu_custom_call.1} parent=11 // pred_check
          %p639 = pneg %p174
        $region30: #{tpu_custom_call.1} parent=11 // pred_check_branch
          %641 = sbr.rel (%p639) target = $region32
        $region31: #{tpu_custom_call.1} parent=11 // pred_region
          _
        $region32: #{tpu_custom_call.1} parent=11 // pred_fallthru
          _
        // Predicated region
        $region33: #{tpu_custom_call.1} parent=11 // pred_check
          %p642 = pneg %p195
        $region34: #{tpu_custom_call.1} parent=11 // pred_check_branch
          %644 = sbr.rel (%p642) target = $region36
        $region35: #{tpu_custom_call.1} parent=11 // pred_region
          %s646 = ssub.s32 8192, 8192
          %647 = vsyncadd [#allocation12], %s646
          %s648 = sshll.u32 [#allocation11], 4
          %s649 = int_to_ptr.vmem [resolvable:$true] %s648
          %654 = dma.hbm_to_vmem [thread:$0]  %s6, 8192, %s649, [#allocation12], 128, 128, 8
        $region36: #{tpu_custom_call.1} parent=11 // pred_fallthru
          _
        // Predicated region
        $region37: #{tpu_custom_call.1} parent=11 // pred_check
          %p655 = pneg %p216
        $region38: #{tpu_custom_call.1} parent=11 // pred_check_branch
          %657 = sbr.rel (%p655) target = $region40
        $region39: #{tpu_custom_call.1} parent=11 // pred_region
          _
        $region40: #{tpu_custom_call.1} parent=11 // pred_fallthru
          _
        // Predicated region
        $region41: #{tpu_custom_call.1} parent=11 // pred_check
          %p658 = pneg %p237
        $region42: #{tpu_custom_call.1} parent=11 // pred_check_branch
          %660 = sbr.rel (%p658) target = $region44
        $region43: #{tpu_custom_call.1} parent=11 // pred_region
          %s662 = ssub.s32 2048, 2048
          %663 = vsyncadd [#allocation12], %s662
          %s664 = sshll.u32 [#allocation13], 4
          %s665 = int_to_ptr.vmem [resolvable:$true] %s664
          %670 = dma.hbm_to_vmem [thread:$0]  %s8, 2048, %s665, [#allocation12], 64, 64, 4
        $region44: #{tpu_custom_call.1} parent=11 // pred_fallthru
          _
        // Predicated region
        $region45: #{tpu_custom_call.1} parent=11 // pred_check
          %p671 = pneg %p258
        $region46: #{tpu_custom_call.1} parent=11 // pred_check_branch
          %673 = sbr.rel (%p671) target = $region48
        $region47: #{tpu_custom_call.1} parent=11 // pred_region
          _
        $region48: #{tpu_custom_call.1} parent=11 // pred_fallthru
          _
        // Predicated region
        $region49: #{tpu_custom_call.1} parent=11 // pred_check
          %p674 = pneg %p279
        $region50: #{tpu_custom_call.1} parent=11 // pred_check_branch
          %676 = sbr.rel (%p674) target = $region52
        $region51: #{tpu_custom_call.1} parent=11 // pred_region
          %s678 = ssub.s32 1024, 1024
          %679 = vsyncadd [#allocation15], %s678
          %s680 = sshll.u32 [#allocation14], 4
          %s681 = int_to_ptr.vmem [resolvable:$true] %s680
          %686 = dma.hbm_to_vmem [thread:$0]  %s10, 1024, %s681, [#allocation15], 64, 64, 4
        $region52: #{tpu_custom_call.1} parent=11 // pred_fallthru
          _
        // Predicated region
        $region53: #{tpu_custom_call.1} parent=11 // pred_check
          %p687 = pneg %p300
        $region54: #{tpu_custom_call.1} parent=11 // pred_check_branch
          %689 = sbr.rel (%p687) target = $region56
        $region55: #{tpu_custom_call.1} parent=11 // pred_region
          _
        $region56: #{tpu_custom_call.1} parent=11 // pred_fallthru
          _
        // Predicated region
        $region57: #{tpu_custom_call.1} parent=11 // pred_check
          %p690 = pneg %p321
        $region58: #{tpu_custom_call.1} parent=11 // pred_check_branch
          %692 = sbr.rel (%p690) target = $region60
        $region59: #{tpu_custom_call.1} parent=11 // pred_region
          %s694 = ssub.s32 1024, 1024
          %695 = vsyncadd [#allocation15], %s694
          %s696 = sshll.u32 [#allocation16], 4
          %s697 = int_to_ptr.vmem [resolvable:$true] %s696
          %702 = dma.hbm_to_vmem [thread:$0]  %s12, 1024, %s697, [#allocation15], 64, 64, 4
        $region60: #{tpu_custom_call.1} parent=11 // pred_fallthru
          _
        // Predicated region
        $region61: #{tpu_custom_call.1} parent=11 // pred_check
          %p703 = pneg %p342
        $region62: #{tpu_custom_call.1} parent=11 // pred_check_branch
          %705 = sbr.rel (%p703) target = $region64
        $region63: #{tpu_custom_call.1} parent=11 // pred_region
          _
        $region64: #{tpu_custom_call.1} parent=11 // pred_fallthru
          _
        // Predicated region
        $region65: #{tpu_custom_call.1} parent=11 // pred_check
          %p706 = pneg %p363
        $region66: #{tpu_custom_call.1} parent=11 // pred_check_branch
          %708 = sbr.rel (%p706) target = $region68
        $region67: #{tpu_custom_call.1} parent=11 // pred_region
          %s710 = ssub.s32 1024, 1024
          %711 = vsyncadd [#allocation18], %s710
          %s712 = sshll.u32 [#allocation17], 4
          %s713 = int_to_ptr.vmem [resolvable:$true] %s712
          %718 = dma.hbm_to_vmem [thread:$0]  %s14, 1024, %s713, [#allocation18], 64, 64, 4
        $region68: #{tpu_custom_call.1} parent=11 // pred_fallthru
          _
        // Predicated region
        $region69: #{tpu_custom_call.1} parent=11 // pred_check
          %p719 = pneg %p384
        $region70: #{tpu_custom_call.1} parent=11 // pred_check_branch
          %721 = sbr.rel (%p719) target = $region72
        $region71: #{tpu_custom_call.1} parent=11 // pred_region
          _
        $region72: #{tpu_custom_call.1} parent=11 // pred_fallthru
          _
        // Predicated region
        $region73: #{tpu_custom_call.1} parent=11 // pred_check
          %p722 = pneg %p405
        $region74: #{tpu_custom_call.1} parent=11 // pred_check_branch
          %724 = sbr.rel (%p722) target = $region76
        $region75: #{tpu_custom_call.1} parent=11 // pred_region
          %s726 = ssub.s32 1024, 1024
          %727 = vsyncadd [#allocation18], %s726
          %s728 = sshll.u32 [#allocation19], 4
          %s729 = int_to_ptr.vmem [resolvable:$true] %s728
          %734 = dma.hbm_to_vmem [thread:$0]  %s16, 1024, %s729, [#allocation18], 64, 64, 4
        $region76: #{tpu_custom_call.1} parent=11 // pred_fallthru
          _
        // Predicated region
        $region77: #{tpu_custom_call.1} parent=11 // pred_check
          %p735 = pneg %p426
        $region78: #{tpu_custom_call.1} parent=11 // pred_check_branch
          %737 = sbr.rel (%p735) target = $region80
        $region79: #{tpu_custom_call.1} parent=11 // pred_region
          _
        $region80: #{tpu_custom_call.1} parent=11 // pred_fallthru
          _
        // Predicated region
        $region81: #{tpu_custom_call.1} parent=11 // pred_check
          %p738 = pneg %p447
        $region82: #{tpu_custom_call.1} parent=11 // pred_check_branch
          %740 = sbr.rel (%p738) target = $region84
        $region83: #{tpu_custom_call.1} parent=11 // pred_region
          %s742 = ssub.s32 2048, 2048
          %743 = vsyncadd [#allocation21], %s742
          %s744 = sshll.u32 [#allocation20], 4
          %s745 = int_to_ptr.vmem [resolvable:$true] %s744
          %750 = dma.hbm_to_vmem [thread:$0]  %s18, 2048, %s745, [#allocation21], 128, 128, 8
        $region84: #{tpu_custom_call.1} parent=11 // pred_fallthru
          _
        // Predicated region
        $region85: #{tpu_custom_call.1} parent=11 // pred_check
          %p751 = pneg %p468
        $region86: #{tpu_custom_call.1} parent=11 // pred_check_branch
          %753 = sbr.rel (%p751) target = $region88
        $region87: #{tpu_custom_call.1} parent=11 // pred_region
          _
        $region88: #{tpu_custom_call.1} parent=11 // pred_fallthru
          _
        // Predicated region
        $region89: #{tpu_custom_call.1} parent=11 // pred_check
          %p754 = pneg %p489
        $region90: #{tpu_custom_call.1} parent=11 // pred_check_branch
          %756 = sbr.rel (%p754) target = $region92
        $region91: #{tpu_custom_call.1} parent=11 // pred_region
          %s758 = ssub.s32 8192, 8192
          %759 = vsyncadd [#allocation21], %s758
          %s760 = sshll.u32 [#allocation22], 4
          %s761 = int_to_ptr.vmem [resolvable:$true] %s760
          %766 = dma.hbm_to_vmem [thread:$0]  %s20, 8192, %s761, [#allocation21], 256, 256, 16
        $region92: #{tpu_custom_call.1} parent=11 // pred_fallthru
          _
        // Predicated region
        $region93: #{tpu_custom_call.1} parent=11 // pred_check
          %p767 = pneg %p510
        $region94: #{tpu_custom_call.1} parent=11 // pred_check_branch
          %769 = sbr.rel (%p767) target = $region96
        $region95: #{tpu_custom_call.1} parent=11 // pred_region
          _
        $region96: #{tpu_custom_call.1} parent=11 // pred_fallthru
          _
        // Predicated region
        $region97: #{tpu_custom_call.1} parent=11 // pred_check
          %p770 = pneg %p531
        $region98: #{tpu_custom_call.1} parent=11 // pred_check_branch
          %772 = sbr.rel (%p770) target = $region100
        $region99: #{tpu_custom_call.1} parent=11 // pred_region
          %s774 = ssub.s32 8192, 8192
          %775 = vsyncadd [#allocation24], %s774
          %s776 = sshll.u32 [#allocation23], 4
          %s777 = int_to_ptr.vmem [resolvable:$true] %s776
          %782 = dma.hbm_to_vmem [thread:$0]  %s22, 8192, %s777, [#allocation24], 128, 128, 8
        $region100: #{tpu_custom_call.1} parent=11 // pred_fallthru
          _
        // Predicated region
        $region101: #{tpu_custom_call.1} parent=11 // pred_check
          %p783 = pneg %p552
        $region102: #{tpu_custom_call.1} parent=11 // pred_check_branch
          %785 = sbr.rel (%p783) target = $region104
        $region103: #{tpu_custom_call.1} parent=11 // pred_region
          _
        $region104: #{tpu_custom_call.1} parent=11 // pred_fallthru
          _
      $region12: #{tpu_custom_call.1} parent=5 // pred_fallthru
        _
      %p786 = scmp.lt.s32.totalorder %s43, 2
      // Predicated region
      $region105: #{tpu_custom_call.1} parent=5 // pred_check
        %p787 = pneg %p786
      $region106: #{tpu_custom_call.1} parent=5 // pred_check_branch
        %789 = sbr.rel (%p787) target = $region108
      $region107: #{tpu_custom_call.1} parent=5 // pred_region
        // Predicated region
        $region109: #{tpu_custom_call.1} parent=107 // pred_check
          %p790 = pneg %p63
        $region110: #{tpu_custom_call.1} parent=107 // pred_check_branch
          %792 = sbr.rel (%p790) target = $region112
        $region111: #{tpu_custom_call.1} parent=107 // pred_region
          %s793 = sand.u32 %s53, 1
          %s794 = scalar_lea.sflag [#allocation3], %s793
          %s795 = sand.u32 %s53, 1
          %s796 = smul.addr %s795, 32
          %s797 = scalar_lea.vmem [#allocation2], %s796
          %s798 = smul.u32 2, %s43
          %s800 = ssub.s32 512, 512
          %801 = vsyncadd %s794, %s800
          %s802 = smul.addr %s798, 2
          %s803 = smul.addr %s802, 128
          %s804 = scalar_lea.hbm %s0, %s803
          %s805 = sshll.u32 %s797, 4
          %s806 = int_to_ptr.vmem [resolvable:$true] %s805
          %811 = dma.hbm_to_vmem [thread:$0]  %s804, 512, %s806, %s794, 256, 256, 16
        $region112: #{tpu_custom_call.1} parent=107 // pred_fallthru
          _
      $region108: #{tpu_custom_call.1} parent=5 // pred_fallthru
        _
      %p812 = scmp.le.s32.totalorder 1, %s43
      %p813 = scmp.lt.s32.totalorder %s43, 3
      %p814 = pnand %p812, %p813
      %p815 = pneg %p814
      // Predicated region
      $region113: #{tpu_custom_call.1} parent=5 // pred_check
        _
      $region114: #{tpu_custom_call.1} parent=5 // pred_check_branch
        %817 = sbr.rel (%p814) target = $region116
      $region115: #{tpu_custom_call.1} parent=5 // pred_region
        %s818 = ssub.s32 %s43, 1
        %s819 = sand.u32 %s56, 1
        %s820 = scalar_lea.sflag [#allocation3], %s819
        %s821 = sand.u32 %s56, 1
        %s822 = smul.addr %s821, 32
        %s823 = scalar_lea.vmem [#allocation2], %s822
        // Predicated region
        $region117: #{tpu_custom_call.1} parent=115 // pred_check
          %p824 = pneg %p69
        $region118: #{tpu_custom_call.1} parent=115 // pred_check_branch
          %826 = sbr.rel (%p824) target = $region120
        $region119: #{tpu_custom_call.1} parent=115 // pred_region
          %827 = dma.done %s820, 512
        $region120: #{tpu_custom_call.1} parent=115 // pred_fallthru
          _
        // Predicated region
        $region121: #{tpu_custom_call.1} parent=115 // pred_check
          %p828 = pneg %p90
        $region122: #{tpu_custom_call.1} parent=115 // pred_check_branch
          %830 = sbr.rel (%p828) target = $region124
        $region123: #{tpu_custom_call.1} parent=115 // pred_region
          %831 = dma.done [#allocation6], 32
        $region124: #{tpu_custom_call.1} parent=115 // pred_fallthru
          _
        // Predicated region
        $region125: #{tpu_custom_call.1} parent=115 // pred_check
          %p832 = pneg %p111
        $region126: #{tpu_custom_call.1} parent=115 // pred_check_branch
          %834 = sbr.rel (%p832) target = $region128
        $region127: #{tpu_custom_call.1} parent=115 // pred_region
          %835 = dma.done [#allocation6], 32
        $region128: #{tpu_custom_call.1} parent=115 // pred_fallthru
          _
        // Predicated region
        $region129: #{tpu_custom_call.1} parent=115 // pred_check
          %p836 = pneg %p132
        $region130: #{tpu_custom_call.1} parent=115 // pred_check_branch
          %838 = sbr.rel (%p836) target = $region132
        $region131: #{tpu_custom_call.1} parent=115 // pred_region
          %839 = dma.done [#allocation9], 32
        $region132: #{tpu_custom_call.1} parent=115 // pred_fallthru
          _
        // Predicated region
        $region133: #{tpu_custom_call.1} parent=115 // pred_check
          %p840 = pneg %p153
        $region134: #{tpu_custom_call.1} parent=115 // pred_check_branch
          %842 = sbr.rel (%p840) target = $region136
        $region135: #{tpu_custom_call.1} parent=115 // pred_region
          %843 = dma.done [#allocation9], 8192
        $region136: #{tpu_custom_call.1} parent=115 // pred_fallthru
          _
        // Predicated region
        $region137: #{tpu_custom_call.1} parent=115 // pred_check
          %p844 = pneg %p195
        $region138: #{tpu_custom_call.1} parent=115 // pred_check_branch
          %846 = sbr.rel (%p844) target = $region140
        $region139: #{tpu_custom_call.1} parent=115 // pred_region
          %847 = dma.done [#allocation12], 8192
        $region140: #{tpu_custom_call.1} parent=115 // pred_fallthru
          _
        // Predicated region
        $region141: #{tpu_custom_call.1} parent=115 // pred_check
          %p848 = pneg %p237
        $region142: #{tpu_custom_call.1} parent=115 // pred_check_branch
          %850 = sbr.rel (%p848) target = $region144
        $region143: #{tpu_custom_call.1} parent=115 // pred_region
          %851 = dma.done [#allocation12], 2048
        $region144: #{tpu_custom_call.1} parent=115 // pred_fallthru
          _
        // Predicated region
        $region145: #{tpu_custom_call.1} parent=115 // pred_check
          %p852 = pneg %p279
        $region146: #{tpu_custom_call.1} parent=115 // pred_check_branch
          %854 = sbr.rel (%p852) target = $region148
        $region147: #{tpu_custom_call.1} parent=115 // pred_region
          %855 = dma.done [#allocation15], 1024
        $region148: #{tpu_custom_call.1} parent=115 // pred_fallthru
          _
        // Predicated region
        $region149: #{tpu_custom_call.1} parent=115 // pred_check
          %p856 = pneg %p321
        $region150: #{tpu_custom_call.1} parent=115 // pred_check_branch
          %858 = sbr.rel (%p856) target = $region152
        $region151: #{tpu_custom_call.1} parent=115 // pred_region
          %859 = dma.done [#allocation15], 1024
        $region152: #{tpu_custom_call.1} parent=115 // pred_fallthru
          _
        // Predicated region
        $region153: #{tpu_custom_call.1} parent=115 // pred_check
          %p860 = pneg %p363
        $region154: #{tpu_custom_call.1} parent=115 // pred_check_branch
          %862 = sbr.rel (%p860) target = $region156
        $region155: #{tpu_custom_call.1} parent=115 // pred_region
          %863 = dma.done [#allocation18], 1024
        $region156: #{tpu_custom_call.1} parent=115 // pred_fallthru
          _
        // Predicated region
        $region157: #{tpu_custom_call.1} parent=115 // pred_check
          %p864 = pneg %p405
        $region158: #{tpu_custom_call.1} parent=115 // pred_check_branch
          %866 = sbr.rel (%p864) target = $region160
        $region159: #{tpu_custom_call.1} parent=115 // pred_region
          %867 = dma.done [#allocation18], 1024
        $region160: #{tpu_custom_call.1} parent=115 // pred_fallthru
          _
        // Predicated region
        $region161: #{tpu_custom_call.1} parent=115 // pred_check
          %p868 = pneg %p447
        $region162: #{tpu_custom_call.1} parent=115 // pred_check_branch
          %870 = sbr.rel (%p868) target = $region164
        $region163: #{tpu_custom_call.1} parent=115 // pred_region
          %871 = dma.done [#allocation21], 2048
        $region164: #{tpu_custom_call.1} parent=115 // pred_fallthru
          _
        // Predicated region
        $region165: #{tpu_custom_call.1} parent=115 // pred_check
          %p872 = pneg %p489
        $region166: #{tpu_custom_call.1} parent=115 // pred_check_branch
          %874 = sbr.rel (%p872) target = $region168
        $region167: #{tpu_custom_call.1} parent=115 // pred_region
          %875 = dma.done [#allocation21], 8192
        $region168: #{tpu_custom_call.1} parent=115 // pred_fallthru
          _
        // Predicated region
        $region169: #{tpu_custom_call.1} parent=115 // pred_check
          %p876 = pneg %p531
        $region170: #{tpu_custom_call.1} parent=115 // pred_check_branch
          %878 = sbr.rel (%p876) target = $region172
        $region171: #{tpu_custom_call.1} parent=115 // pred_region
          %879 = dma.done [#allocation24], 8192
        $region172: #{tpu_custom_call.1} parent=115 // pred_fallthru
          _
        %s880 = sand.u32 %s56, 1
        %s881 = scalar_lea.sflag [#allocation3], %s880
        %s882 = sand.u32 %s56, 1
        %s883 = smul.addr %s882, 32
        %s884 = scalar_lea.vmem [#allocation2], %s883
        %p885 = pneg %p69
        %p886 = pneg %p66
        %p887 = pneg %p90
        %p888 = pneg %p87
        %p889 = pneg %p111
        %p890 = pneg %p108
        %p891 = pneg %p132
        %p892 = pneg %p129
        %p893 = pneg %p153
        %p894 = pneg %p150
        %p895 = pneg %p174
        %p896 = pneg %p171
        %p897 = pneg %p195
        %p898 = pneg %p192
        %p899 = pneg %p216
        %p900 = pneg %p213
        %p901 = pneg %p237
        %p902 = pneg %p234
        %p903 = pneg %p258
        %p904 = pneg %p255
        %p905 = pneg %p279
        %p906 = pneg %p276
        %p907 = pneg %p300
        %p908 = pneg %p297
        %p909 = pneg %p321
        %p910 = pneg %p318
        %p911 = pneg %p342
        %p912 = pneg %p339
        %p913 = pneg %p363
        %p914 = pneg %p360
        %p915 = pneg %p384
        %p916 = pneg %p381
        %p917 = pneg %p405
        %p918 = pneg %p402
        %p919 = pneg %p426
        %p920 = pneg %p423
        %p921 = pneg %p447
        %p922 = pneg %p444
        %p923 = pneg %p468
        %p924 = pneg %p465
        %p925 = pneg %p489
        %p926 = pneg %p486
        %p927 = pneg %p510
        %p928 = pneg %p507
        %p929 = pneg %p531
        %p930 = pneg %p528
        %p931 = pneg %p552
        %p932 = pneg %p549
        %p933 = pneg %p578
        %p934 = pneg %p575
        %s935 = sand.u32 %s565, 1
        %s936 = scalar_lea.sflag [#allocation4], %s935
        %s937 = sand.u32 %s565, 1
        %s938 = smul.addr %s937, 32
        %s939 = scalar_lea.vmem [#allocation25], %s938
        %s940 = smul.u32 2, %s48
        %s941 = smul.u32 2, %s48
        %v943 = vld [vmem:[#allocation5] sm:$0x3]
        %v944 = vld [vmem:[#allocation7] sm:$0x3]
        %v945 = vld [vmem:[#allocation8] sm:$0x3]
        %v946 = vld [vmem:[%s823] sm:$0xff]
        %v947 = vld [vmem:[%s823 + $0x8] sm:$0xff]
        %v948 = vld [vmem:[%s823 + $0x10] sm:$0xff]
        %v949 = vld [vmem:[%s823 + $0x18] sm:$0xff]
        %v951 = vlaneseq
        %v952 = vshrl.u32 %v951, 7
        %v953 = vsub.s32 0, %v952
        %v954 = vrot.slane %v943, %v953
        %v955 = vlaneseq
        %v956 = vshrl.u32 %v955, 7
        %v957 = vsub.s32 1, %v956
        %v958 = vrot.slane %v943, %v957
        %v961 = vsub.f32 %v946, %v954
        %v962 = vsub.f32 %v947, %v958
        %v963 = vsub.f32 %v948, %v954
        %v964 = vsub.f32 %v949, %v958
        %v966 = vlaneseq
        %v967 = vshrl.u32 %v966, 7
        %v968 = vsub.s32 0, %v967
        %v969 = vrot.slane %v945, %v968
        %v970 = vlaneseq
        %v971 = vshrl.u32 %v970, 7
        %v972 = vsub.s32 1, %v971
        %v973 = vrot.slane %v945, %v972
        %v976 = vmul.f32 %v961, %v969
        %v977 = vmul.f32 %v962, %v973
        %v978 = vmul.f32 %v963, %v969
        %v979 = vmul.f32 %v964, %v973
        %v980 = vld [vmem:[#allocation10] sm:$0xff]
        %v981 = vld [vmem:[#allocation10 + $0x8] sm:$0xff]
        %v982 = vld [vmem:[#allocation10 + $0x10] sm:$0xff]
        %v983 = vld [vmem:[#allocation10 + $0x18] sm:$0xff]
        %v984 = vld [vmem:[#allocation10 + $0x20] sm:$0xff]
        %v985 = vld [vmem:[#allocation10 + $0x28] sm:$0xff]
        %v986 = vld [vmem:[#allocation10 + $0x30] sm:$0xff]
        %v987 = vld [vmem:[#allocation10 + $0x38] sm:$0xff]
        %v988 = vld [vmem:[#allocation10 + $0x40] sm:$0xff]
        %v989 = vld [vmem:[#allocation10 + $0x48] sm:$0xff]
        %v990 = vld [vmem:[#allocation10 + $0x50] sm:$0xff]
        %v991 = vld [vmem:[#allocation10 + $0x58] sm:$0xff]
        %v992 = vld [vmem:[#allocation10 + $0x60] sm:$0xff]
        %v993 = vld [vmem:[#allocation10 + $0x68] sm:$0xff]
        %v994 = vld [vmem:[#allocation10 + $0x70] sm:$0xff]
        %v995 = vld [vmem:[#allocation10 + $0x78] sm:$0xff]
        %v996 = vld [vmem:[#allocation10 + $0x80] sm:$0xff]
        %v997 = vld [vmem:[#allocation10 + $0x88] sm:$0xff]
        %v998 = vld [vmem:[#allocation10 + $0x90] sm:$0xff]
        %v999 = vld [vmem:[#allocation10 + $0x98] sm:$0xff]
        %v1000 = vld [vmem:[#allocation10 + $0xa0] sm:$0xff]
        %v1001 = vld [vmem:[#allocation10 + $0xa8] sm:$0xff]
        %v1002 = vld [vmem:[#allocation10 + $0xb0] sm:$0xff]
        %v1003 = vld [vmem:[#allocation10 + $0xb8] sm:$0xff]
        %v1004 = vld [vmem:[#allocation10 + $0xc0] sm:$0xff]
        %v1005 = vld [vmem:[#allocation10 + $0xc8] sm:$0xff]
        %v1006 = vld [vmem:[#allocation10 + $0xd0] sm:$0xff]
        %v1007 = vld [vmem:[#allocation10 + $0xd8] sm:$0xff]
        %v1008 = vld [vmem:[#allocation10 + $0xe0] sm:$0xff]
        %v1009 = vld [vmem:[#allocation10 + $0xe8] sm:$0xff]
        %v1010 = vld [vmem:[#allocation10 + $0xf0] sm:$0xff]
        %v1011 = vld [vmem:[#allocation10 + $0xf8] sm:$0xff]
        %v1012 = vld [vmem:[#allocation10 + $0x100] sm:$0xff]
        %v1013 = vld [vmem:[#allocation10 + $0x108] sm:$0xff]
        %v1014 = vld [vmem:[#allocation10 + $0x110] sm:$0xff]
        %v1015 = vld [vmem:[#allocation10 + $0x118] sm:$0xff]
        %v1016 = vld [vmem:[#allocation10 + $0x120] sm:$0xff]
        %v1017 = vld [vmem:[#allocation10 + $0x128] sm:$0xff]
        %v1018 = vld [vmem:[#allocation10 + $0x130] sm:$0xff]
        %v1019 = vld [vmem:[#allocation10 + $0x138] sm:$0xff]
        %v1020 = vld [vmem:[#allocation10 + $0x140] sm:$0xff]
        %v1021 = vld [vmem:[#allocation10 + $0x148] sm:$0xff]
        %v1022 = vld [vmem:[#allocation10 + $0x150] sm:$0xff]
        %v1023 = vld [vmem:[#allocation10 + $0x158] sm:$0xff]
        %v1024 = vld [vmem:[#allocation10 + $0x160] sm:$0xff]
        %v1025 = vld [vmem:[#allocation10 + $0x168] sm:$0xff]
        %v1026 = vld [vmem:[#allocation10 + $0x170] sm:$0xff]
        %v1027 = vld [vmem:[#allocation10 + $0x178] sm:$0xff]
        %v1028 = vld [vmem:[#allocation10 + $0x180] sm:$0xff]
        %v1029 = vld [vmem:[#allocation10 + $0x188] sm:$0xff]
        %v1030 = vld [vmem:[#allocation10 + $0x190] sm:$0xff]
        %v1031 = vld [vmem:[#allocation10 + $0x198] sm:$0xff]
        %v1032 = vld [vmem:[#allocation10 + $0x1a0] sm:$0xff]
        %v1033 = vld [vmem:[#allocation10 + $0x1a8] sm:$0xff]
        %v1034 = vld [vmem:[#allocation10 + $0x1b0] sm:$0xff]
        %v1035 = vld [vmem:[#allocation10 + $0x1b8] sm:$0xff]
        %v1036 = vld [vmem:[#allocation10 + $0x1c0] sm:$0xff]
        %v1037 = vld [vmem:[#allocation10 + $0x1c8] sm:$0xff]
        %v1038 = vld [vmem:[#allocation10 + $0x1d0] sm:$0xff]
        %v1039 = vld [vmem:[#allocation10 + $0x1d8] sm:$0xff]
        %v1040 = vld [vmem:[#allocation10 + $0x1e0] sm:$0xff]
        %v1041 = vld [vmem:[#allocation10 + $0x1e8] sm:$0xff]
        %v1042 = vld [vmem:[#allocation10 + $0x1f0] sm:$0xff]
        %v1043 = vld [vmem:[#allocation10 + $0x1f8] sm:$0xff]
        %v1044 = vld [vmem:[%s5] sm:$0xf]
        %v1045 = vpack.c.bf16 %v978, %v976
        %v1046 = vpack.c.bf16 %v979, %v977
        %v1048 = vlaneseq
        %v1049 = vshrl.u32 %v1048, 7
        %v1050 = vsub.s32 0, %v1049
        %v1051 = vrot.slane %v1044, %v1050
        %v1052 = vlaneseq
        %v1053 = vshrl.u32 %v1052, 7
        %v1054 = vsub.s32 1, %v1053
        %v1055 = vrot.slane %v1044, %v1054
        %v1056 = vlaneseq
        %v1057 = vshrl.u32 %v1056, 7
        %v1058 = vsub.s32 2, %v1057
        %v1059 = vrot.slane %v1044, %v1058
        %v1060 = vlaneseq
        %v1061 = vshrl.u32 %v1060, 7
        %v1062 = vsub.s32 3, %v1061
        %v1063 = vrot.slane %v1044, %v1062
        %v1132 = vunpack.c.l.b16 %v980
        %v1133 = vunpack.c.h.b16 %v980
        %v1134 = vunpack.c.l.b16 %v981
        %v1135 = vunpack.c.h.b16 %v981
        %v1136 = vunpack.c.l.b16 %v982
        %v1137 = vunpack.c.h.b16 %v982
        %v1138 = vunpack.c.l.b16 %v983
        %v1139 = vunpack.c.h.b16 %v983
        %v1140 = vunpack.c.l.b16 %v984
        %v1141 = vunpack.c.h.b16 %v984
        %v1142 = vunpack.c.l.b16 %v985
        %v1143 = vunpack.c.h.b16 %v985
        %v1144 = vunpack.c.l.b16 %v986
        %v1145 = vunpack.c.h.b16 %v986
        %v1146 = vunpack.c.l.b16 %v987
        %v1147 = vunpack.c.h.b16 %v987
        %v1148 = vunpack.c.l.b16 %v988
        %v1149 = vunpack.c.h.b16 %v988
        %v1150 = vunpack.c.l.b16 %v989
        %v1151 = vunpack.c.h.b16 %v989
        %v1152 = vunpack.c.l.b16 %v990
        %v1153 = vunpack.c.h.b16 %v990
        %v1154 = vunpack.c.l.b16 %v991
        %v1155 = vunpack.c.h.b16 %v991
        %v1156 = vunpack.c.l.b16 %v992
        %v1157 = vunpack.c.h.b16 %v992
        %v1158 = vunpack.c.l.b16 %v993
        %v1159 = vunpack.c.h.b16 %v993
        %v1160 = vunpack.c.l.b16 %v994
        %v1161 = vunpack.c.h.b16 %v994
        %v1162 = vunpack.c.l.b16 %v995
        %v1163 = vunpack.c.h.b16 %v995
        %v1164 = vunpack.c.l.b16 %v996
        %v1165 = vunpack.c.h.b16 %v996
        %v1166 = vunpack.c.l.b16 %v997
        %v1167 = vunpack.c.h.b16 %v997
        %v1168 = vunpack.c.l.b16 %v998
        %v1169 = vunpack.c.h.b16 %v998
        %v1170 = vunpack.c.l.b16 %v999
        %v1171 = vunpack.c.h.b16 %v999
        %v1172 = vunpack.c.l.b16 %v1000
        %v1173 = vunpack.c.h.b16 %v1000
        %v1174 = vunpack.c.l.b16 %v1001
        %v1175 = vunpack.c.h.b16 %v1001
        %v1176 = vunpack.c.l.b16 %v1002
        %v1177 = vunpack.c.h.b16 %v1002
        %v1178 = vunpack.c.l.b16 %v1003
        %v1179 = vunpack.c.h.b16 %v1003
        %v1180 = vunpack.c.l.b16 %v1004
        %v1181 = vunpack.c.h.b16 %v1004
        %v1182 = vunpack.c.l.b16 %v1005
        %v1183 = vunpack.c.h.b16 %v1005
        %v1184 = vunpack.c.l.b16 %v1006
        %v1185 = vunpack.c.h.b16 %v1006
        %v1186 = vunpack.c.l.b16 %v1007
        %v1187 = vunpack.c.h.b16 %v1007
        %v1188 = vunpack.c.l.b16 %v1008
        %v1189 = vunpack.c.h.b16 %v1008
        %v1190 = vunpack.c.l.b16 %v1009
        %v1191 = vunpack.c.h.b16 %v1009
        %v1192 = vunpack.c.l.b16 %v1010
        %v1193 = vunpack.c.h.b16 %v1010
        %v1194 = vunpack.c.l.b16 %v1011
        %v1195 = vunpack.c.h.b16 %v1011
        %v1196 = vunpack.c.l.b16 %v1012
        %v1197 = vunpack.c.h.b16 %v1012
        %v1198 = vunpack.c.l.b16 %v1013
        %v1199 = vunpack.c.h.b16 %v1013
        %v1200 = vunpack.c.l.b16 %v1014
        %v1201 = vunpack.c.h.b16 %v1014
        %v1202 = vunpack.c.l.b16 %v1015
        %v1203 = vunpack.c.h.b16 %v1015
        %v1204 = vunpack.c.l.b16 %v1016
        %v1205 = vunpack.c.h.b16 %v1016
        %v1206 = vunpack.c.l.b16 %v1017
        %v1207 = vunpack.c.h.b16 %v1017
        %v1208 = vunpack.c.l.b16 %v1018
        %v1209 = vunpack.c.h.b16 %v1018
        %v1210 = vunpack.c.l.b16 %v1019
        %v1211 = vunpack.c.h.b16 %v1019
        %v1212 = vunpack.c.l.b16 %v1020
        %v1213 = vunpack.c.h.b16 %v1020
        %v1214 = vunpack.c.l.b16 %v1021
        %v1215 = vunpack.c.h.b16 %v1021
        %v1216 = vunpack.c.l.b16 %v1022
        %v1217 = vunpack.c.h.b16 %v1022
        %v1218 = vunpack.c.l.b16 %v1023
        %v1219 = vunpack.c.h.b16 %v1023
        %v1220 = vunpack.c.l.b16 %v1024
        %v1221 = vunpack.c.h.b16 %v1024
        %v1222 = vunpack.c.l.b16 %v1025
        %v1223 = vunpack.c.h.b16 %v1025
        %v1224 = vunpack.c.l.b16 %v1026
        %v1225 = vunpack.c.h.b16 %v1026
        %v1226 = vunpack.c.l.b16 %v1027
        %v1227 = vunpack.c.h.b16 %v1027
        %v1228 = vunpack.c.l.b16 %v1028
        %v1229 = vunpack.c.h.b16 %v1028
        %v1230 = vunpack.c.l.b16 %v1029
        %v1231 = vunpack.c.h.b16 %v1029
        %v1232 = vunpack.c.l.b16 %v1030
        %v1233 = vunpack.c.h.b16 %v1030
        %v1234 = vunpack.c.l.b16 %v1031
        %v1235 = vunpack.c.h.b16 %v1031
        %v1236 = vunpack.c.l.b16 %v1032
        %v1237 = vunpack.c.h.b16 %v1032
        %v1238 = vunpack.c.l.b16 %v1033
        %v1239 = vunpack.c.h.b16 %v1033
        %v1240 = vunpack.c.l.b16 %v1034
        %v1241 = vunpack.c.h.b16 %v1034
        %v1242 = vunpack.c.l.b16 %v1035
        %v1243 = vunpack.c.h.b16 %v1035
        %v1244 = vunpack.c.l.b16 %v1036
        %v1245 = vunpack.c.h.b16 %v1036
        %v1246 = vunpack.c.l.b16 %v1037
        %v1247 = vunpack.c.h.b16 %v1037
        %v1248 = vunpack.c.l.b16 %v1038
        %v1249 = vunpack.c.h.b16 %v1038
        %v1250 = vunpack.c.l.b16 %v1039
        %v1251 = vunpack.c.h.b16 %v1039
        %v1252 = vunpack.c.l.b16 %v1040
        %v1253 = vunpack.c.h.b16 %v1040
        %v1254 = vunpack.c.l.b16 %v1041
        %v1255 = vunpack.c.h.b16 %v1041
        %v1256 = vunpack.c.l.b16 %v1042
        %v1257 = vunpack.c.h.b16 %v1042
        %v1258 = vunpack.c.l.b16 %v1043
        %v1259 = vunpack.c.h.b16 %v1043
        %v1260 = vpack.c.b16 %v1136, %v1132
        %v1261 = vpack.c.b16 %v1137, %v1133
        %v1262 = vpack.c.b16 %v1138, %v1134
        %v1263 = vpack.c.b16 %v1139, %v1135
        %v1264 = vpack.c.b16 %v1144, %v1140
        %v1265 = vpack.c.b16 %v1145, %v1141
        %v1266 = vpack.c.b16 %v1146, %v1142
        %v1267 = vpack.c.b16 %v1147, %v1143
        %v1268 = vpack.c.b16 %v1152, %v1148
        %v1269 = vpack.c.b16 %v1153, %v1149
        %v1270 = vpack.c.b16 %v1154, %v1150
        %v1271 = vpack.c.b16 %v1155, %v1151
        %v1272 = vpack.c.b16 %v1160, %v1156
        %v1273 = vpack.c.b16 %v1161, %v1157
        %v1274 = vpack.c.b16 %v1162, %v1158
        %v1275 = vpack.c.b16 %v1163, %v1159
        %v1276 = vpack.c.b16 %v1168, %v1164
        %v1277 = vpack.c.b16 %v1169, %v1165
        %v1278 = vpack.c.b16 %v1170, %v1166
        %v1279 = vpack.c.b16 %v1171, %v1167
        %v1280 = vpack.c.b16 %v1176, %v1172
        %v1281 = vpack.c.b16 %v1177, %v1173
        %v1282 = vpack.c.b16 %v1178, %v1174
        %v1283 = vpack.c.b16 %v1179, %v1175
        %v1284 = vpack.c.b16 %v1184, %v1180
        %v1285 = vpack.c.b16 %v1185, %v1181
        %v1286 = vpack.c.b16 %v1186, %v1182
        %v1287 = vpack.c.b16 %v1187, %v1183
        %v1288 = vpack.c.b16 %v1192, %v1188
        %v1289 = vpack.c.b16 %v1193, %v1189
        %v1290 = vpack.c.b16 %v1194, %v1190
        %v1291 = vpack.c.b16 %v1195, %v1191
        %v1292 = vpack.c.b16 %v1200, %v1196
        %v1293 = vpack.c.b16 %v1201, %v1197
        %v1294 = vpack.c.b16 %v1202, %v1198
        %v1295 = vpack.c.b16 %v1203, %v1199
        %v1296 = vpack.c.b16 %v1208, %v1204
        %v1297 = vpack.c.b16 %v1209, %v1205
        %v1298 = vpack.c.b16 %v1210, %v1206
        %v1299 = vpack.c.b16 %v1211, %v1207
        %v1300 = vpack.c.b16 %v1216, %v1212
        %v1301 = vpack.c.b16 %v1217, %v1213
        %v1302 = vpack.c.b16 %v1218, %v1214
        %v1303 = vpack.c.b16 %v1219, %v1215
        %v1304 = vpack.c.b16 %v1224, %v1220
        %v1305 = vpack.c.b16 %v1225, %v1221
        %v1306 = vpack.c.b16 %v1226, %v1222
        %v1307 = vpack.c.b16 %v1227, %v1223
        %v1308 = vpack.c.b16 %v1232, %v1228
        %v1309 = vpack.c.b16 %v1233, %v1229
        %v1310 = vpack.c.b16 %v1234, %v1230
        %v1311 = vpack.c.b16 %v1235, %v1231
        %v1312 = vpack.c.b16 %v1240, %v1236
        %v1313 = vpack.c.b16 %v1241, %v1237
        %v1314 = vpack.c.b16 %v1242, %v1238
        %v1315 = vpack.c.b16 %v1243, %v1239
        %v1316 = vpack.c.b16 %v1248, %v1244
        %v1317 = vpack.c.b16 %v1249, %v1245
        %v1318 = vpack.c.b16 %v1250, %v1246
        %v1319 = vpack.c.b16 %v1251, %v1247
        %v1320 = vpack.c.b16 %v1256, %v1252
        %v1321 = vpack.c.b16 %v1257, %v1253
        %v1322 = vpack.c.b16 %v1258, %v1254
        %v1323 = vpack.c.b16 %v1259, %v1255
        %1388 = vmatprep.subr.bf16.mxu0 %v1289
        %1389 = vmatpush1.bf16.msra.mxu0 %v1288
        %1390 = vmatprep.subr.bf16.mxu0 %v1285
        %1391 = vmatpush1.bf16.msra.mxu0 %v1284
        %1392 = vmatprep.subr.bf16.mxu0 %v1281
        %1393 = vmatpush1.bf16.msra.mxu0 %v1280
        %1394 = vmatprep.subr.bf16.mxu0 %v1277
        %1395 = vmatpush1.bf16.msra.mxu0 %v1276
        %1396 = vmatprep.subr.bf16.mxu0 %v1273
        %1397 = vmatpush1.bf16.msra.mxu0 %v1272
        %1398 = vmatprep.subr.bf16.mxu0 %v1269
        %1399 = vmatpush1.bf16.msra.mxu0 %v1268
        %1400 = vmatprep.subr.bf16.mxu0 %v1265
        %1401 = vmatpush1.bf16.msra.mxu0 %v1264
        %1402 = vmatprep.subr.bf16.mxu0 %v1261
        %1403 = vmatpush1.bf16.msra.mxu0 %v1260
        %1404 = vmatprep.subr.bf16.mxu0 %v1321
        %1405 = vmatpush2.bf16.msra.mxu0 %v1320
        %1406 = vmatprep.subr.bf16.mxu0 %v1317
        %1407 = vmatpush2.bf16.msra.mxu0 %v1316
        %1408 = vmatprep.subr.bf16.mxu0 %v1313
        %1409 = vmatpush2.bf16.msra.mxu0 %v1312
        %1410 = vmatprep.subr.bf16.mxu0 %v1309
        %1411 = vmatpush2.bf16.msra.mxu0 %v1308
        %1412 = vmatprep.subr.bf16.mxu0 %v1305
        %1413 = vmatpush2.bf16.msra.mxu0 %v1304
        %1414 = vmatprep.subr.bf16.mxu0 %v1301
        %1415 = vmatpush2.bf16.msra.mxu0 %v1300
        %1416 = vmatprep.subr.bf16.mxu0 %v1297
        %1417 = vmatpush2.bf16.msra.mxu0 %v1296
        %1418 = vmatprep.subr.bf16.mxu0 %v1293
        %1419 = vmatpush2.bf16.msra.mxu0 %v1292
        %1420 = vmatprep.mubr.bf16.mxu0 %v1046
        %1421 = vmatmul.mubr.bf16.gmra.mxu0 %v1045
        %v1422 = vpop.f32.mrf.mxu0
        %v1423 = vadd.f32 %v1051, %v1422
        %v1424 = vpop.f32.mrf.mxu0
        %v1425 = vadd.f32 %v1055, %v1424
        %v1426 = vpop.f32.mrf.mxu0
        %v1427 = vadd.f32 %v1051, %v1426
        %v1428 = vpop.f32.mrf.mxu0
        %v1429 = vadd.f32 %v1055, %v1428
        %1430 = vdwg.mxu0
        %1431 = vmatprep.subr.bf16.mxu0 %v1291
        %1432 = vmatpush1.bf16.msra.mxu0 %v1290
        %1433 = vmatprep.subr.bf16.mxu0 %v1287
        %1434 = vmatpush1.bf16.msra.mxu0 %v1286
        %1435 = vmatprep.subr.bf16.mxu0 %v1283
        %1436 = vmatpush1.bf16.msra.mxu0 %v1282
        %1437 = vmatprep.subr.bf16.mxu0 %v1279
        %1438 = vmatpush1.bf16.msra.mxu0 %v1278
        %1439 = vmatprep.subr.bf16.mxu0 %v1275
        %1440 = vmatpush1.bf16.msra.mxu0 %v1274
        %1441 = vmatprep.subr.bf16.mxu0 %v1271
        %1442 = vmatpush1.bf16.msra.mxu0 %v1270
        %1443 = vmatprep.subr.bf16.mxu0 %v1267
        %1444 = vmatpush1.bf16.msra.mxu0 %v1266
        %1445 = vmatprep.subr.bf16.mxu0 %v1263
        %1446 = vmatpush1.bf16.msra.mxu0 %v1262
        %1447 = vmatprep.subr.bf16.mxu0 %v1323
        %1448 = vmatpush2.bf16.msra.mxu0 %v1322
        %1449 = vmatprep.subr.bf16.mxu0 %v1319
        %1450 = vmatpush2.bf16.msra.mxu0 %v1318
        %1451 = vmatprep.subr.bf16.mxu0 %v1315
        %1452 = vmatpush2.bf16.msra.mxu0 %v1314
        %1453 = vmatprep.subr.bf16.mxu0 %v1311
        %1454 = vmatpush2.bf16.msra.mxu0 %v1310
        %1455 = vmatprep.subr.bf16.mxu0 %v1307
        %1456 = vmatpush2.bf16.msra.mxu0 %v1306
        %1457 = vmatprep.subr.bf16.mxu0 %v1303
        %1458 = vmatpush2.bf16.msra.mxu0 %v1302
        %1459 = vmatprep.subr.bf16.mxu0 %v1299
        %1460 = vmatpush2.bf16.msra.mxu0 %v1298
        %1461 = vmatprep.subr.bf16.mxu0 %v1295
        %1462 = vmatpush2.bf16.msra.mxu0 %v1294
        %1463 = vmatprep.mubr.bf16.mxu0 %v1046
        %1464 = vmatmul.mubr.bf16.gmra.mxu0 %v1045
        %v1465 = vpop.f32.mrf.mxu0
        %v1466 = vadd.f32 %v1059, %v1465
        %v1467 = vpop.f32.mrf.mxu0
        %v1468 = vadd.f32 %v1063, %v1467
        %v1469 = vpop.f32.mrf.mxu0
        %v1470 = vadd.f32 %v1059, %v1469
        %v1471 = vpop.f32.mrf.mxu0
        %v1472 = vadd.f32 %v1063, %v1471
        %1473 = vdwg.mxu0
        %v1474 = vmax.f32 %v1423, 0.0
        %v1475 = vmax.f32 %v1425, 0.0
        %v1476 = vmax.f32 %v1466, 0.0
        %v1477 = vmax.f32 %v1468, 0.0
        %v1478 = vmax.f32 %v1427, 0.0
        %v1479 = vmax.f32 %v1429, 0.0
        %v1480 = vmax.f32 %v1470, 0.0
        %v1481 = vmax.f32 %v1472, 0.0
        %v1482 = vld [vmem:[#allocation11] sm:$0xff]
        %v1483 = vld [vmem:[#allocation11 + $0x8] sm:$0xff]
        %v1484 = vld [vmem:[#allocation11 + $0x10] sm:$0xff]
        %v1485 = vld [vmem:[#allocation11 + $0x18] sm:$0xff]
        %v1486 = vld [vmem:[#allocation11 + $0x20] sm:$0xff]
        %v1487 = vld [vmem:[#allocation11 + $0x28] sm:$0xff]
        %v1488 = vld [vmem:[#allocation11 + $0x30] sm:$0xff]
        %v1489 = vld [vmem:[#allocation11 + $0x38] sm:$0xff]
        %v1490 = vld [vmem:[#allocation11 + $0x40] sm:$0xff]
        %v1491 = vld [vmem:[#allocation11 + $0x48] sm:$0xff]
        %v1492 = vld [vmem:[#allocation11 + $0x50] sm:$0xff]
        %v1493 = vld [vmem:[#allocation11 + $0x58] sm:$0xff]
        %v1494 = vld [vmem:[#allocation11 + $0x60] sm:$0xff]
        %v1495 = vld [vmem:[#allocation11 + $0x68] sm:$0xff]
        %v1496 = vld [vmem:[#allocation11 + $0x70] sm:$0xff]
        %v1497 = vld [vmem:[#allocation11 + $0x78] sm:$0xff]
        %v1498 = vld [vmem:[#allocation11 + $0x80] sm:$0xff]
        %v1499 = vld [vmem:[#allocation11 + $0x88] sm:$0xff]
        %v1500 = vld [vmem:[#allocation11 + $0x90] sm:$0xff]
        %v1501 = vld [vmem:[#allocation11 + $0x98] sm:$0xff]
        %v1502 = vld [vmem:[#allocation11 + $0xa0] sm:$0xff]
        %v1503 = vld [vmem:[#allocation11 + $0xa8] sm:$0xff]
        %v1504 = vld [vmem:[#allocation11 + $0xb0] sm:$0xff]
        %v1505 = vld [vmem:[#allocation11 + $0xb8] sm:$0xff]
        %v1506 = vld [vmem:[#allocation11 + $0xc0] sm:$0xff]
        %v1507 = vld [vmem:[#allocation11 + $0xc8] sm:$0xff]
        %v1508 = vld [vmem:[#allocation11 + $0xd0] sm:$0xff]
        %v1509 = vld [vmem:[#allocation11 + $0xd8] sm:$0xff]
        %v1510 = vld [vmem:[#allocation11 + $0xe0] sm:$0xff]
        %v1511 = vld [vmem:[#allocation11 + $0xe8] sm:$0xff]
        %v1512 = vld [vmem:[#allocation11 + $0xf0] sm:$0xff]
        %v1513 = vld [vmem:[#allocation11 + $0xf8] sm:$0xff]
        %v1514 = vld [vmem:[#allocation11 + $0x100] sm:$0xff]
        %v1515 = vld [vmem:[#allocation11 + $0x108] sm:$0xff]
        %v1516 = vld [vmem:[#allocation11 + $0x110] sm:$0xff]
        %v1517 = vld [vmem:[#allocation11 + $0x118] sm:$0xff]
        %v1518 = vld [vmem:[#allocation11 + $0x120] sm:$0xff]
        %v1519 = vld [vmem:[#allocation11 + $0x128] sm:$0xff]
        %v1520 = vld [vmem:[#allocation11 + $0x130] sm:$0xff]
        %v1521 = vld [vmem:[#allocation11 + $0x138] sm:$0xff]
        %v1522 = vld [vmem:[#allocation11 + $0x140] sm:$0xff]
        %v1523 = vld [vmem:[#allocation11 + $0x148] sm:$0xff]
        %v1524 = vld [vmem:[#allocation11 + $0x150] sm:$0xff]
        %v1525 = vld [vmem:[#allocation11 + $0x158] sm:$0xff]
        %v1526 = vld [vmem:[#allocation11 + $0x160] sm:$0xff]
        %v1527 = vld [vmem:[#allocation11 + $0x168] sm:$0xff]
        %v1528 = vld [vmem:[#allocation11 + $0x170] sm:$0xff]
        %v1529 = vld [vmem:[#allocation11 + $0x178] sm:$0xff]
        %v1530 = vld [vmem:[#allocation11 + $0x180] sm:$0xff]
        %v1531 = vld [vmem:[#allocation11 + $0x188] sm:$0xff]
        %v1532 = vld [vmem:[#allocation11 + $0x190] sm:$0xff]
        %v1533 = vld [vmem:[#allocation11 + $0x198] sm:$0xff]
        %v1534 = vld [vmem:[#allocation11 + $0x1a0] sm:$0xff]
        %v1535 = vld [vmem:[#allocation11 + $0x1a8] sm:$0xff]
        %v1536 = vld [vmem:[#allocation11 + $0x1b0] sm:$0xff]
        %v1537 = vld [vmem:[#allocation11 + $0x1b8] sm:$0xff]
        %v1538 = vld [vmem:[#allocation11 + $0x1c0] sm:$0xff]
        %v1539 = vld [vmem:[#allocation11 + $0x1c8] sm:$0xff]
        %v1540 = vld [vmem:[#allocation11 + $0x1d0] sm:$0xff]
        %v1541 = vld [vmem:[#allocation11 + $0x1d8] sm:$0xff]
        %v1542 = vld [vmem:[#allocation11 + $0x1e0] sm:$0xff]
        %v1543 = vld [vmem:[#allocation11 + $0x1e8] sm:$0xff]
        %v1544 = vld [vmem:[#allocation11 + $0x1f0] sm:$0xff]
        %v1545 = vld [vmem:[#allocation11 + $0x1f8] sm:$0xff]
        %v1546 = vld [vmem:[%s7] sm:$0x3]
        %v1547 = vpack.c.bf16 %v1478, %v1474
        %v1548 = vpack.c.bf16 %v1479, %v1475
        %v1549 = vpack.c.bf16 %v1480, %v1476
        %v1550 = vpack.c.bf16 %v1481, %v1477
        %v1552 = vlaneseq
        %v1553 = vshrl.u32 %v1552, 7
        %v1554 = vsub.s32 0, %v1553
        %v1555 = vrot.slane %v1546, %v1554
        %v1556 = vlaneseq
        %v1557 = vshrl.u32 %v1556, 7
        %v1558 = vsub.s32 1, %v1557
        %v1559 = vrot.slane %v1546, %v1558
        %v1626 = vunpack.c.l.b16 %v1482
        %v1627 = vunpack.c.h.b16 %v1482
        %v1628 = vunpack.c.l.b16 %v1483
        %v1629 = vunpack.c.h.b16 %v1483
        %v1630 = vunpack.c.l.b16 %v1484
        %v1631 = vunpack.c.h.b16 %v1484
        %v1632 = vunpack.c.l.b16 %v1485
        %v1633 = vunpack.c.h.b16 %v1485
        %v1634 = vunpack.c.l.b16 %v1486
        %v1635 = vunpack.c.h.b16 %v1486
        %v1636 = vunpack.c.l.b16 %v1487
        %v1637 = vunpack.c.h.b16 %v1487
        %v1638 = vunpack.c.l.b16 %v1488
        %v1639 = vunpack.c.h.b16 %v1488
        %v1640 = vunpack.c.l.b16 %v1489
        %v1641 = vunpack.c.h.b16 %v1489
        %v1642 = vunpack.c.l.b16 %v1490
        %v1643 = vunpack.c.h.b16 %v1490
        %v1644 = vunpack.c.l.b16 %v1491
        %v1645 = vunpack.c.h.b16 %v1491
        %v1646 = vunpack.c.l.b16 %v1492
        %v1647 = vunpack.c.h.b16 %v1492
        %v1648 = vunpack.c.l.b16 %v1493
        %v1649 = vunpack.c.h.b16 %v1493
        %v1650 = vunpack.c.l.b16 %v1494
        %v1651 = vunpack.c.h.b16 %v1494
        %v1652 = vunpack.c.l.b16 %v1495
        %v1653 = vunpack.c.h.b16 %v1495
        %v1654 = vunpack.c.l.b16 %v1496
        %v1655 = vunpack.c.h.b16 %v1496
        %v1656 = vunpack.c.l.b16 %v1497
        %v1657 = vunpack.c.h.b16 %v1497
        %v1658 = vunpack.c.l.b16 %v1498
        %v1659 = vunpack.c.h.b16 %v1498
        %v1660 = vunpack.c.l.b16 %v1499
        %v1661 = vunpack.c.h.b16 %v1499
        %v1662 = vunpack.c.l.b16 %v1500
        %v1663 = vunpack.c.h.b16 %v1500
        %v1664 = vunpack.c.l.b16 %v1501
        %v1665 = vunpack.c.h.b16 %v1501
        %v1666 = vunpack.c.l.b16 %v1502
        %v1667 = vunpack.c.h.b16 %v1502
        %v1668 = vunpack.c.l.b16 %v1503
        %v1669 = vunpack.c.h.b16 %v1503
        %v1670 = vunpack.c.l.b16 %v1504
        %v1671 = vunpack.c.h.b16 %v1504
        %v1672 = vunpack.c.l.b16 %v1505
        %v1673 = vunpack.c.h.b16 %v1505
        %v1674 = vunpack.c.l.b16 %v1506
        %v1675 = vunpack.c.h.b16 %v1506
        %v1676 = vunpack.c.l.b16 %v1507
        %v1677 = vunpack.c.h.b16 %v1507
        %v1678 = vunpack.c.l.b16 %v1508
        %v1679 = vunpack.c.h.b16 %v1508
        %v1680 = vunpack.c.l.b16 %v1509
        %v1681 = vunpack.c.h.b16 %v1509
        %v1682 = vunpack.c.l.b16 %v1510
        %v1683 = vunpack.c.h.b16 %v1510
        %v1684 = vunpack.c.l.b16 %v1511
        %v1685 = vunpack.c.h.b16 %v1511
        %v1686 = vunpack.c.l.b16 %v1512
        %v1687 = vunpack.c.h.b16 %v1512
        %v1688 = vunpack.c.l.b16 %v1513
        %v1689 = vunpack.c.h.b16 %v1513
        %v1690 = vunpack.c.l.b16 %v1514
        %v1691 = vunpack.c.h.b16 %v1514
        %v1692 = vunpack.c.l.b16 %v1515
        %v1693 = vunpack.c.h.b16 %v1515
        %v1694 = vunpack.c.l.b16 %v1516
        %v1695 = vunpack.c.h.b16 %v1516
        %v1696 = vunpack.c.l.b16 %v1517
        %v1697 = vunpack.c.h.b16 %v1517
        %v1698 = vunpack.c.l.b16 %v1518
        %v1699 = vunpack.c.h.b16 %v1518
        %v1700 = vunpack.c.l.b16 %v1519
        %v1701 = vunpack.c.h.b16 %v1519
        %v1702 = vunpack.c.l.b16 %v1520
        %v1703 = vunpack.c.h.b16 %v1520
        %v1704 = vunpack.c.l.b16 %v1521
        %v1705 = vunpack.c.h.b16 %v1521
        %v1706 = vunpack.c.l.b16 %v1522
        %v1707 = vunpack.c.h.b16 %v1522
        %v1708 = vunpack.c.l.b16 %v1523
        %v1709 = vunpack.c.h.b16 %v1523
        %v1710 = vunpack.c.l.b16 %v1524
        %v1711 = vunpack.c.h.b16 %v1524
        %v1712 = vunpack.c.l.b16 %v1525
        %v1713 = vunpack.c.h.b16 %v1525
        %v1714 = vunpack.c.l.b16 %v1526
        %v1715 = vunpack.c.h.b16 %v1526
        %v1716 = vunpack.c.l.b16 %v1527
        %v1717 = vunpack.c.h.b16 %v1527
        %v1718 = vunpack.c.l.b16 %v1528
        %v1719 = vunpack.c.h.b16 %v1528
        %v1720 = vunpack.c.l.b16 %v1529
        %v1721 = vunpack.c.h.b16 %v1529
        %v1722 = vunpack.c.l.b16 %v1530
        %v1723 = vunpack.c.h.b16 %v1530
        %v1724 = vunpack.c.l.b16 %v1531
        %v1725 = vunpack.c.h.b16 %v1531
        %v1726 = vunpack.c.l.b16 %v1532
        %v1727 = vunpack.c.h.b16 %v1532
        %v1728 = vunpack.c.l.b16 %v1533
        %v1729 = vunpack.c.h.b16 %v1533
        %v1730 = vunpack.c.l.b16 %v1534
        %v1731 = vunpack.c.h.b16 %v1534
        %v1732 = vunpack.c.l.b16 %v1535
        %v1733 = vunpack.c.h.b16 %v1535
        %v1734 = vunpack.c.l.b16 %v1536
        %v1735 = vunpack.c.h.b16 %v1536
        %v1736 = vunpack.c.l.b16 %v1537
        %v1737 = vunpack.c.h.b16 %v1537
        %v1738 = vunpack.c.l.b16 %v1538
        %v1739 = vunpack.c.h.b16 %v1538
        %v1740 = vunpack.c.l.b16 %v1539
        %v1741 = vunpack.c.h.b16 %v1539
        %v1742 = vunpack.c.l.b16 %v1540
        %v1743 = vunpack.c.h.b16 %v1540
        %v1744 = vunpack.c.l.b16 %v1541
        %v1745 = vunpack.c.h.b16 %v1541
        %v1746 = vunpack.c.l.b16 %v1542
        %v1747 = vunpack.c.h.b16 %v1542
        %v1748 = vunpack.c.l.b16 %v1543
        %v1749 = vunpack.c.h.b16 %v1543
        %v1750 = vunpack.c.l.b16 %v1544
        %v1751 = vunpack.c.h.b16 %v1544
        %v1752 = vunpack.c.l.b16 %v1545
        %v1753 = vunpack.c.h.b16 %v1545
        %v1754 = vpack.c.b16 %v1628, %v1626
        %v1755 = vpack.c.b16 %v1629, %v1627
        %v1756 = vpack.c.b16 %v1632, %v1630
        %v1757 = vpack.c.b16 %v1633, %v1631
        %v1758 = vpack.c.b16 %v1636, %v1634
        %v1759 = vpack.c.b16 %v1637, %v1635
        %v1760 = vpack.c.b16 %v1640, %v1638
        %v1761 = vpack.c.b16 %v1641, %v1639
        %v1762 = vpack.c.b16 %v1644, %v1642
        %v1763 = vpack.c.b16 %v1645, %v1643
        %v1764 = vpack.c.b16 %v1648, %v1646
        %v1765 = vpack.c.b16 %v1649, %v1647
        %v1766 = vpack.c.b16 %v1652, %v1650
        %v1767 = vpack.c.b16 %v1653, %v1651
        %v1768 = vpack.c.b16 %v1656, %v1654
        %v1769 = vpack.c.b16 %v1657, %v1655
        %v1770 = vpack.c.b16 %v1660, %v1658
        %v1771 = vpack.c.b16 %v1661, %v1659
        %v1772 = vpack.c.b16 %v1664, %v1662
        %v1773 = vpack.c.b16 %v1665, %v1663
        %v1774 = vpack.c.b16 %v1668, %v1666
        %v1775 = vpack.c.b16 %v1669, %v1667
        %v1776 = vpack.c.b16 %v1672, %v1670
        %v1777 = vpack.c.b16 %v1673, %v1671
        %v1778 = vpack.c.b16 %v1676, %v1674
        %v1779 = vpack.c.b16 %v1677, %v1675
        %v1780 = vpack.c.b16 %v1680, %v1678
        %v1781 = vpack.c.b16 %v1681, %v1679
        %v1782 = vpack.c.b16 %v1684, %v1682
        %v1783 = vpack.c.b16 %v1685, %v1683
        %v1784 = vpack.c.b16 %v1688, %v1686
        %v1785 = vpack.c.b16 %v1689, %v1687
        %v1786 = vpack.c.b16 %v1692, %v1690
        %v1787 = vpack.c.b16 %v1693, %v1691
        %v1788 = vpack.c.b16 %v1696, %v1694
        %v1789 = vpack.c.b16 %v1697, %v1695
        %v1790 = vpack.c.b16 %v1700, %v1698
        %v1791 = vpack.c.b16 %v1701, %v1699
        %v1792 = vpack.c.b16 %v1704, %v1702
        %v1793 = vpack.c.b16 %v1705, %v1703
        %v1794 = vpack.c.b16 %v1708, %v1706
        %v1795 = vpack.c.b16 %v1709, %v1707
        %v1796 = vpack.c.b16 %v1712, %v1710
        %v1797 = vpack.c.b16 %v1713, %v1711
        %v1798 = vpack.c.b16 %v1716, %v1714
        %v1799 = vpack.c.b16 %v1717, %v1715
        %v1800 = vpack.c.b16 %v1720, %v1718
        %v1801 = vpack.c.b16 %v1721, %v1719
        %v1802 = vpack.c.b16 %v1724, %v1722
        %v1803 = vpack.c.b16 %v1725, %v1723
        %v1804 = vpack.c.b16 %v1728, %v1726
        %v1805 = vpack.c.b16 %v1729, %v1727
        %v1806 = vpack.c.b16 %v1732, %v1730
        %v1807 = vpack.c.b16 %v1733, %v1731
        %v1808 = vpack.c.b16 %v1736, %v1734
        %v1809 = vpack.c.b16 %v1737, %v1735
        %v1810 = vpack.c.b16 %v1740, %v1738
        %v1811 = vpack.c.b16 %v1741, %v1739
        %v1812 = vpack.c.b16 %v1744, %v1742
        %v1813 = vpack.c.b16 %v1745, %v1743
        %v1814 = vpack.c.b16 %v1748, %v1746
        %v1815 = vpack.c.b16 %v1749, %v1747
        %v1816 = vpack.c.b16 %v1752, %v1750
        %v1817 = vpack.c.b16 %v1753, %v1751
        %1882 = vmatprep.subr.bf16.mxu0 %v1769
        %1883 = vmatpush1.bf16.msra.mxu0 %v1768
        %1884 = vmatprep.subr.bf16.mxu0 %v1767
        %1885 = vmatpush1.bf16.msra.mxu0 %v1766
        %1886 = vmatprep.subr.bf16.mxu0 %v1765
        %1887 = vmatpush1.bf16.msra.mxu0 %v1764
        %1888 = vmatprep.subr.bf16.mxu0 %v1763
        %1889 = vmatpush1.bf16.msra.mxu0 %v1762
        %1890 = vmatprep.subr.bf16.mxu0 %v1761
        %1891 = vmatpush1.bf16.msra.mxu0 %v1760
        %1892 = vmatprep.subr.bf16.mxu0 %v1759
        %1893 = vmatpush1.bf16.msra.mxu0 %v1758
        %1894 = vmatprep.subr.bf16.mxu0 %v1757
        %1895 = vmatpush1.bf16.msra.mxu0 %v1756
        %1896 = vmatprep.subr.bf16.mxu0 %v1755
        %1897 = vmatpush1.bf16.msra.mxu0 %v1754
        %1898 = vmatprep.subr.bf16.mxu0 %v1785
        %1899 = vmatpush2.bf16.msra.mxu0 %v1784
        %1900 = vmatprep.subr.bf16.mxu0 %v1783
        %1901 = vmatpush2.bf16.msra.mxu0 %v1782
        %1902 = vmatprep.subr.bf16.mxu0 %v1781
        %1903 = vmatpush2.bf16.msra.mxu0 %v1780
        %1904 = vmatprep.subr.bf16.mxu0 %v1779
        %1905 = vmatpush2.bf16.msra.mxu0 %v1778
        %1906 = vmatprep.subr.bf16.mxu0 %v1777
        %1907 = vmatpush2.bf16.msra.mxu0 %v1776
        %1908 = vmatprep.subr.bf16.mxu0 %v1775
        %1909 = vmatpush2.bf16.msra.mxu0 %v1774
        %1910 = vmatprep.subr.bf16.mxu0 %v1773
        %1911 = vmatpush2.bf16.msra.mxu0 %v1772
        %1912 = vmatprep.subr.bf16.mxu0 %v1771
        %1913 = vmatpush2.bf16.msra.mxu0 %v1770
        %1914 = vmatprep.mubr.bf16.mxu0 %v1548
        %1915 = vmatmul.mubr.bf16.gmra.mxu0 %v1547
        %v1916 = vpop.f32.mrf.mxu0
        %v1917 = vadd.f32 %v1555, %v1916
        %v1918 = vpop.f32.mrf.mxu0
        %v1919 = vadd.f32 %v1559, %v1918
        %v1920 = vpop.f32.mrf.mxu0
        %v1921 = vadd.f32 %v1555, %v1920
        %v1922 = vpop.f32.mrf.mxu0
        %v1923 = vadd.f32 %v1559, %v1922
        %1924 = vdwg.mxu0
        %1925 = vmatprep.subr.bf16.mxu0 %v1801
        %1926 = vmatpush1.bf16.msra.mxu0 %v1800
        %1927 = vmatprep.subr.bf16.mxu0 %v1799
        %1928 = vmatpush1.bf16.msra.mxu0 %v1798
        %1929 = vmatprep.subr.bf16.mxu0 %v1797
        %1930 = vmatpush1.bf16.msra.mxu0 %v1796
        %1931 = vmatprep.subr.bf16.mxu0 %v1795
        %1932 = vmatpush1.bf16.msra.mxu0 %v1794
        %1933 = vmatprep.subr.bf16.mxu0 %v1793
        %1934 = vmatpush1.bf16.msra.mxu0 %v1792
        %1935 = vmatprep.subr.bf16.mxu0 %v1791
        %1936 = vmatpush1.bf16.msra.mxu0 %v1790
        %1937 = vmatprep.subr.bf16.mxu0 %v1789
        %1938 = vmatpush1.bf16.msra.mxu0 %v1788
        %1939 = vmatprep.subr.bf16.mxu0 %v1787
        %1940 = vmatpush1.bf16.msra.mxu0 %v1786
        %1941 = vmatprep.subr.bf16.mxu0 %v1817
        %1942 = vmatpush2.bf16.msra.mxu0 %v1816
        %1943 = vmatprep.subr.bf16.mxu0 %v1815
        %1944 = vmatpush2.bf16.msra.mxu0 %v1814
        %1945 = vmatprep.subr.bf16.mxu0 %v1813
        %1946 = vmatpush2.bf16.msra.mxu0 %v1812
        %1947 = vmatprep.subr.bf16.mxu0 %v1811
        %1948 = vmatpush2.bf16.msra.mxu0 %v1810
        %1949 = vmatprep.subr.bf16.mxu0 %v1809
        %1950 = vmatpush2.bf16.msra.mxu0 %v1808
        %1951 = vmatprep.subr.bf16.mxu0 %v1807
        %1952 = vmatpush2.bf16.msra.mxu0 %v1806
        %1953 = vmatprep.subr.bf16.mxu0 %v1805
        %1954 = vmatpush2.bf16.msra.mxu0 %v1804
        %1955 = vmatprep.subr.bf16.mxu0 %v1803
        %1956 = vmatpush2.bf16.msra.mxu0 %v1802
        %1957 = vmatprep.mubr.bf16.mxu0 %v1550
        %1958 = vmatmul.mubr.bf16.gmra.mxu0 %v1549
        %v1959 = vpop.f32.mrf.mxu0
        %v1960 = vadd.f32 %v1917, %v1959
        %v1961 = vpop.f32.mrf.mxu0
        %v1962 = vadd.f32 %v1919, %v1961
        %v1963 = vpop.f32.mrf.mxu0
        %v1964 = vadd.f32 %v1921, %v1963
        %v1965 = vpop.f32.mrf.mxu0
        %v1966 = vadd.f32 %v1923, %v1965
        %1967 = vdwg.mxu0
        %v1968 = vmax.f32 %v1960, 0.0
        %v1969 = vmax.f32 %v1962, 0.0
        %v1970 = vmax.f32 %v1964, 0.0
        %v1971 = vmax.f32 %v1966, 0.0
        %v1972 = vld [vmem:[#allocation13] sm:$0xf]
        %v1973 = vld [vmem:[#allocation13 + $0x4] sm:$0xf]
        %v1974 = vld [vmem:[#allocation13 + $0x8] sm:$0xf]
        %v1975 = vld [vmem:[#allocation13 + $0xc] sm:$0xf]
        %v1976 = vld [vmem:[#allocation13 + $0x10] sm:$0xf]
        %v1977 = vld [vmem:[#allocation13 + $0x14] sm:$0xf]
        %v1978 = vld [vmem:[#allocation13 + $0x18] sm:$0xf]
        %v1979 = vld [vmem:[#allocation13 + $0x1c] sm:$0xf]
        %v1980 = vld [vmem:[#allocation13 + $0x20] sm:$0xf]
        %v1981 = vld [vmem:[#allocation13 + $0x24] sm:$0xf]
        %v1982 = vld [vmem:[#allocation13 + $0x28] sm:$0xf]
        %v1983 = vld [vmem:[#allocation13 + $0x2c] sm:$0xf]
        %v1984 = vld [vmem:[#allocation13 + $0x30] sm:$0xf]
        %v1985 = vld [vmem:[#allocation13 + $0x34] sm:$0xf]
        %v1986 = vld [vmem:[#allocation13 + $0x38] sm:$0xf]
        %v1987 = vld [vmem:[#allocation13 + $0x3c] sm:$0xf]
        %v1988 = vld [vmem:[#allocation13 + $0x40] sm:$0xf]
        %v1989 = vld [vmem:[#allocation13 + $0x44] sm:$0xf]
        %v1990 = vld [vmem:[#allocation13 + $0x48] sm:$0xf]
        %v1991 = vld [vmem:[#allocation13 + $0x4c] sm:$0xf]
        %v1992 = vld [vmem:[#allocation13 + $0x50] sm:$0xf]
        %v1993 = vld [vmem:[#allocation13 + $0x54] sm:$0xf]
        %v1994 = vld [vmem:[#allocation13 + $0x58] sm:$0xf]
        %v1995 = vld [vmem:[#allocation13 + $0x5c] sm:$0xf]
        %v1996 = vld [vmem:[#allocation13 + $0x60] sm:$0xf]
        %v1997 = vld [vmem:[#allocation13 + $0x64] sm:$0xf]
        %v1998 = vld [vmem:[#allocation13 + $0x68] sm:$0xf]
        %v1999 = vld [vmem:[#allocation13 + $0x6c] sm:$0xf]
        %v2000 = vld [vmem:[#allocation13 + $0x70] sm:$0xf]
        %v2001 = vld [vmem:[#allocation13 + $0x74] sm:$0xf]
        %v2002 = vld [vmem:[#allocation13 + $0x78] sm:$0xf]
        %v2003 = vld [vmem:[#allocation13 + $0x7c] sm:$0xf]
        %v2004 = vld [vmem:[%s9] sm:$0x1]
        %v2005 = vpack.c.bf16 %v1970, %v1968
        %v2006 = vpack.c.bf16 %v1971, %v1969
        %v2008 = vlaneseq
        %v2009 = vshrl.u32 %v2008, 7
        %v2010 = vsub.s32 0, %v2009
        %v2011 = vrot.slane %v2004, %v2010
        %v2045 = vunpack.c.l.b16 %v1972
        %v2046 = vunpack.c.l.b16 %v1973
        %v2047 = vunpack.c.l.b16 %v1974
        %v2048 = vunpack.c.l.b16 %v1975
        %v2049 = vunpack.c.l.b16 %v1976
        %v2050 = vunpack.c.l.b16 %v1977
        %v2051 = vunpack.c.l.b16 %v1978
        %v2052 = vunpack.c.l.b16 %v1979
        %v2053 = vunpack.c.l.b16 %v1980
        %v2054 = vunpack.c.l.b16 %v1981
        %v2055 = vunpack.c.l.b16 %v1982
        %v2056 = vunpack.c.l.b16 %v1983
        %v2057 = vunpack.c.l.b16 %v1984
        %v2058 = vunpack.c.l.b16 %v1985
        %v2059 = vunpack.c.l.b16 %v1986
        %v2060 = vunpack.c.l.b16 %v1987
        %v2061 = vunpack.c.l.b16 %v1988
        %v2062 = vunpack.c.l.b16 %v1989
        %v2063 = vunpack.c.l.b16 %v1990
        %v2064 = vunpack.c.l.b16 %v1991
        %v2065 = vunpack.c.l.b16 %v1992
        %v2066 = vunpack.c.l.b16 %v1993
        %v2067 = vunpack.c.l.b16 %v1994
        %v2068 = vunpack.c.l.b16 %v1995
        %v2069 = vunpack.c.l.b16 %v1996
        %v2070 = vunpack.c.l.b16 %v1997
        %v2071 = vunpack.c.l.b16 %v1998
        %v2072 = vunpack.c.l.b16 %v1999
        %v2073 = vunpack.c.l.b16 %v2000
        %v2074 = vunpack.c.l.b16 %v2001
        %v2075 = vunpack.c.l.b16 %v2002
        %v2076 = vunpack.c.l.b16 %v2003
        %v2077 = vpack.c.b16 %v2046, %v2045
        %v2078 = vpack.c.b16 %v2048, %v2047
        %v2079 = vpack.c.b16 %v2050, %v2049
        %v2080 = vpack.c.b16 %v2052, %v2051
        %v2081 = vpack.c.b16 %v2054, %v2053
        %v2082 = vpack.c.b16 %v2056, %v2055
        %v2083 = vpack.c.b16 %v2058, %v2057
        %v2084 = vpack.c.b16 %v2060, %v2059
        %v2085 = vpack.c.b16 %v2062, %v2061
        %v2086 = vpack.c.b16 %v2064, %v2063
        %v2087 = vpack.c.b16 %v2066, %v2065
        %v2088 = vpack.c.b16 %v2068, %v2067
        %v2089 = vpack.c.b16 %v2070, %v2069
        %v2090 = vpack.c.b16 %v2072, %v2071
        %v2091 = vpack.c.b16 %v2074, %v2073
        %v2092 = vpack.c.b16 %v2076, %v2075
        %2109 = vmatprep.subr.bf16.mxu0 0
        %2110 = vmatpush1.bf16.msra.mxu0 %v2084
        %2111 = vmatprep.subr.bf16.mxu0 0
        %2112 = vmatpush1.bf16.msra.mxu0 %v2083
        %2113 = vmatprep.subr.bf16.mxu0 0
        %2114 = vmatpush1.bf16.msra.mxu0 %v2082
        %2115 = vmatprep.subr.bf16.mxu0 0
        %2116 = vmatpush1.bf16.msra.mxu0 %v2081
        %2117 = vmatprep.subr.bf16.mxu0 0
        %2118 = vmatpush1.bf16.msra.mxu0 %v2080
        %2119 = vmatprep.subr.bf16.mxu0 0
        %2120 = vmatpush1.bf16.msra.mxu0 %v2079
        %2121 = vmatprep.subr.bf16.mxu0 0
        %2122 = vmatpush1.bf16.msra.mxu0 %v2078
        %2123 = vmatprep.subr.bf16.mxu0 0
        %2124 = vmatpush1.bf16.msra.mxu0 %v2077
        %2125 = vmatprep.subr.bf16.mxu0 0
        %2126 = vmatpush2.bf16.msra.mxu0 %v2092
        %2127 = vmatprep.subr.bf16.mxu0 0
        %2128 = vmatpush2.bf16.msra.mxu0 %v2091
        %2129 = vmatprep.subr.bf16.mxu0 0
        %2130 = vmatpush2.bf16.msra.mxu0 %v2090
        %2131 = vmatprep.subr.bf16.mxu0 0
        %2132 = vmatpush2.bf16.msra.mxu0 %v2089
        %2133 = vmatprep.subr.bf16.mxu0 0
        %2134 = vmatpush2.bf16.msra.mxu0 %v2088
        %2135 = vmatprep.subr.bf16.mxu0 0
        %2136 = vmatpush2.bf16.msra.mxu0 %v2087
        %2137 = vmatprep.subr.bf16.mxu0 0
        %2138 = vmatpush2.bf16.msra.mxu0 %v2086
        %2139 = vmatprep.subr.bf16.mxu0 0
        %2140 = vmatpush2.bf16.msra.mxu0 %v2085
        %2141 = vmatprep.mubr.bf16.mxu0 %v2006
        %2142 = vmatmul.mubr.bf16.gmra.mxu0 %v2005
        %v2143 = vpop.f32.mrf.mxu0
        %v2144 = vadd.f32 %v2011, %v2143
        %v2145 = vpop.f32.mrf.mxu0
        %v2146 = vpop.f32.mrf.mxu0
        %v2147 = vadd.f32 %v2011, %v2146
        %v2148 = vpop.f32.mrf.mxu0
        %2149 = vdwg.mxu0
        %v2150 = vmax.f32 %v2144, 0.0
        %v2151 = vmax.f32 %v2147, 0.0
        %v2152 = vld [vmem:[#allocation14] sm:$0xf]
        %v2153 = vld [vmem:[#allocation14 + $0x4] sm:$0xf]
        %v2154 = vld [vmem:[#allocation14 + $0x8] sm:$0xf]
        %v2155 = vld [vmem:[#allocation14 + $0xc] sm:$0xf]
        %v2156 = vld [vmem:[#allocation14 + $0x10] sm:$0xf]
        %v2157 = vld [vmem:[#allocation14 + $0x14] sm:$0xf]
        %v2158 = vld [vmem:[#allocation14 + $0x18] sm:$0xf]
        %v2159 = vld [vmem:[#allocation14 + $0x1c] sm:$0xf]
        %v2160 = vld [vmem:[#allocation14 + $0x20] sm:$0xf]
        %v2161 = vld [vmem:[#allocation14 + $0x24] sm:$0xf]
        %v2162 = vld [vmem:[#allocation14 + $0x28] sm:$0xf]
        %v2163 = vld [vmem:[#allocation14 + $0x2c] sm:$0xf]
        %v2164 = vld [vmem:[#allocation14 + $0x30] sm:$0xf]
        %v2165 = vld [vmem:[#allocation14 + $0x34] sm:$0xf]
        %v2166 = vld [vmem:[#allocation14 + $0x38] sm:$0xf]
        %v2167 = vld [vmem:[#allocation14 + $0x3c] sm:$0xf]
        %v2168 = vld [vmem:[%s11] sm:$0x1]
        %v2169 = vpack.c.bf16 %v2151, %v2150
        %v2171 = vlaneseq
        %v2172 = vshrl.u32 %v2171, 7
        %v2173 = vsub.s32 0, %v2172
        %v2174 = vrot.slane %v2168, %v2173
        %v2192 = vunpack.c.l.b16 %v2152
        %v2193 = vunpack.c.l.b16 %v2153
        %v2194 = vunpack.c.l.b16 %v2154
        %v2195 = vunpack.c.l.b16 %v2155
        %v2196 = vunpack.c.l.b16 %v2156
        %v2197 = vunpack.c.l.b16 %v2157
        %v2198 = vunpack.c.l.b16 %v2158
        %v2199 = vunpack.c.l.b16 %v2159
        %v2200 = vunpack.c.l.b16 %v2160
        %v2201 = vunpack.c.l.b16 %v2161
        %v2202 = vunpack.c.l.b16 %v2162
        %v2203 = vunpack.c.l.b16 %v2163
        %v2204 = vunpack.c.l.b16 %v2164
        %v2205 = vunpack.c.l.b16 %v2165
        %v2206 = vunpack.c.l.b16 %v2166
        %v2207 = vunpack.c.l.b16 %v2167
        %v2208 = vpack.c.b16 %v2193, %v2192
        %v2209 = vpack.c.b16 %v2195, %v2194
        %v2210 = vpack.c.b16 %v2197, %v2196
        %v2211 = vpack.c.b16 %v2199, %v2198
        %v2212 = vpack.c.b16 %v2201, %v2200
        %v2213 = vpack.c.b16 %v2203, %v2202
        %v2214 = vpack.c.b16 %v2205, %v2204
        %v2215 = vpack.c.b16 %v2207, %v2206
        %2224 = vmatprep.subr.bf16.mxu0 0
        %2225 = vmatpush1.bf16.msra.mxu0 %v2215
        %2226 = vmatprep.subr.bf16.mxu0 0
        %2227 = vmatpush1.bf16.msra.mxu0 %v2214
        %2228 = vmatprep.subr.bf16.mxu0 0
        %2229 = vmatpush1.bf16.msra.mxu0 %v2213
        %2230 = vmatprep.subr.bf16.mxu0 0
        %2231 = vmatpush1.bf16.msra.mxu0 %v2212
        %2232 = vmatprep.subr.bf16.mxu0 0
        %2233 = vmatpush1.bf16.msra.mxu0 %v2211
        %2234 = vmatprep.subr.bf16.mxu0 0
        %2235 = vmatpush1.bf16.msra.mxu0 %v2210
        %2236 = vmatprep.subr.bf16.mxu0 0
        %2237 = vmatpush1.bf16.msra.mxu0 %v2209
        %2238 = vmatprep.subr.bf16.mxu0 0
        %2239 = vmatpush1.bf16.msra.mxu0 %v2208
        %2240 = vmatprep.subr.bf16.mxu0 0
        %2241 = vmatpush2.bf16.msra.mxu0 0
        %2242 = vmatprep.subr.bf16.mxu0 0
        %2243 = vmatpush2.bf16.msra.mxu0 0
        %2244 = vmatprep.subr.bf16.mxu0 0
        %2245 = vmatpush2.bf16.msra.mxu0 0
        %2246 = vmatprep.subr.bf16.mxu0 0
        %2247 = vmatpush2.bf16.msra.mxu0 0
        %2248 = vmatprep.subr.bf16.mxu0 0
        %2249 = vmatpush2.bf16.msra.mxu0 0
        %2250 = vmatprep.subr.bf16.mxu0 0
        %2251 = vmatpush2.bf16.msra.mxu0 0
        %2252 = vmatprep.subr.bf16.mxu0 0
        %2253 = vmatpush2.bf16.msra.mxu0 0
        %2254 = vmatprep.subr.bf16.mxu0 0
        %2255 = vmatpush2.bf16.msra.mxu0 0
        %2256 = vmatprep.mubr.bf16.mxu0 0
        %2257 = vmatmul.mubr.bf16.gmra.mxu0 %v2169
        %v2258 = vpop.f32.mrf.mxu0
        %v2259 = vadd.f32 %v2174, %v2258
        %v2260 = vpop.f32.mrf.mxu0
        %v2261 = vpop.f32.mrf.mxu0
        %v2262 = vadd.f32 %v2174, %v2261
        %v2263 = vpop.f32.mrf.mxu0
        %2264 = vdwg.mxu0
        %v2265 = vmax.f32 %v2259, 0.0
        %v2266 = vmax.f32 %v2262, 0.0
        %v2267 = vld [vmem:[#allocation16] sm:$0xf]
        %v2268 = vld [vmem:[#allocation16 + $0x4] sm:$0xf]
        %v2269 = vld [vmem:[#allocation16 + $0x8] sm:$0xf]
        %v2270 = vld [vmem:[#allocation16 + $0xc] sm:$0xf]
        %v2271 = vld [vmem:[#allocation16 + $0x10] sm:$0xf]
        %v2272 = vld [vmem:[#allocation16 + $0x14] sm:$0xf]
        %v2273 = vld [vmem:[#allocation16 + $0x18] sm:$0xf]
        %v2274 = vld [vmem:[#allocation16 + $0x1c] sm:$0xf]
        %v2275 = vld [vmem:[#allocation16 + $0x20] sm:$0xf]
        %v2276 = vld [vmem:[#allocation16 + $0x24] sm:$0xf]
        %v2277 = vld [vmem:[#allocation16 + $0x28] sm:$0xf]
        %v2278 = vld [vmem:[#allocation16 + $0x2c] sm:$0xf]
        %v2279 = vld [vmem:[#allocation16 + $0x30] sm:$0xf]
        %v2280 = vld [vmem:[#allocation16 + $0x34] sm:$0xf]
        %v2281 = vld [vmem:[#allocation16 + $0x38] sm:$0xf]
        %v2282 = vld [vmem:[#allocation16 + $0x3c] sm:$0xf]
        %v2283 = vld [vmem:[%s13] sm:$0x1]
        %v2284 = vpack.c.bf16 %v2266, %v2265
        %v2286 = vlaneseq
        %v2287 = vshrl.u32 %v2286, 7
        %v2288 = vsub.s32 0, %v2287
        %v2289 = vrot.slane %v2283, %v2288
        %v2307 = vunpack.c.l.b16 %v2267
        %v2308 = vunpack.c.l.b16 %v2268
        %v2309 = vunpack.c.l.b16 %v2269
        %v2310 = vunpack.c.l.b16 %v2270
        %v2311 = vunpack.c.l.b16 %v2271
        %v2312 = vunpack.c.l.b16 %v2272
        %v2313 = vunpack.c.l.b16 %v2273
        %v2314 = vunpack.c.l.b16 %v2274
        %v2315 = vunpack.c.l.b16 %v2275
        %v2316 = vunpack.c.l.b16 %v2276
        %v2317 = vunpack.c.l.b16 %v2277
        %v2318 = vunpack.c.l.b16 %v2278
        %v2319 = vunpack.c.l.b16 %v2279
        %v2320 = vunpack.c.l.b16 %v2280
        %v2321 = vunpack.c.l.b16 %v2281
        %v2322 = vunpack.c.l.b16 %v2282
        %v2323 = vpack.c.b16 %v2308, %v2307
        %v2324 = vpack.c.b16 %v2310, %v2309
        %v2325 = vpack.c.b16 %v2312, %v2311
        %v2326 = vpack.c.b16 %v2314, %v2313
        %v2327 = vpack.c.b16 %v2316, %v2315
        %v2328 = vpack.c.b16 %v2318, %v2317
        %v2329 = vpack.c.b16 %v2320, %v2319
        %v2330 = vpack.c.b16 %v2322, %v2321
        %2339 = vmatprep.subr.bf16.mxu0 0
        %2340 = vmatpush1.bf16.msra.mxu0 %v2330
        %2341 = vmatprep.subr.bf16.mxu0 0
        %2342 = vmatpush1.bf16.msra.mxu0 %v2329
        %2343 = vmatprep.subr.bf16.mxu0 0
        %2344 = vmatpush1.bf16.msra.mxu0 %v2328
        %2345 = vmatprep.subr.bf16.mxu0 0
        %2346 = vmatpush1.bf16.msra.mxu0 %v2327
        %2347 = vmatprep.subr.bf16.mxu0 0
        %2348 = vmatpush1.bf16.msra.mxu0 %v2326
        %2349 = vmatprep.subr.bf16.mxu0 0
        %2350 = vmatpush1.bf16.msra.mxu0 %v2325
        %2351 = vmatprep.subr.bf16.mxu0 0
        %2352 = vmatpush1.bf16.msra.mxu0 %v2324
        %2353 = vmatprep.subr.bf16.mxu0 0
        %2354 = vmatpush1.bf16.msra.mxu0 %v2323
        %2355 = vmatprep.subr.bf16.mxu0 0
        %2356 = vmatpush2.bf16.msra.mxu0 0
        %2357 = vmatprep.subr.bf16.mxu0 0
        %2358 = vmatpush2.bf16.msra.mxu0 0
        %2359 = vmatprep.subr.bf16.mxu0 0
        %2360 = vmatpush2.bf16.msra.mxu0 0
        %2361 = vmatprep.subr.bf16.mxu0 0
        %2362 = vmatpush2.bf16.msra.mxu0 0
        %2363 = vmatprep.subr.bf16.mxu0 0
        %2364 = vmatpush2.bf16.msra.mxu0 0
        %2365 = vmatprep.subr.bf16.mxu0 0
        %2366 = vmatpush2.bf16.msra.mxu0 0
        %2367 = vmatprep.subr.bf16.mxu0 0
        %2368 = vmatpush2.bf16.msra.mxu0 0
        %2369 = vmatprep.subr.bf16.mxu0 0
        %2370 = vmatpush2.bf16.msra.mxu0 0
        %2371 = vmatprep.mubr.bf16.mxu0 0
        %2372 = vmatmul.mubr.bf16.gmra.mxu0 %v2284
        %v2373 = vpop.f32.mrf.mxu0
        %v2374 = vadd.f32 %v2289, %v2373
        %v2375 = vpop.f32.mrf.mxu0
        %v2376 = vpop.f32.mrf.mxu0
        %v2377 = vadd.f32 %v2289, %v2376
        %v2378 = vpop.f32.mrf.mxu0
        %2379 = vdwg.mxu0
        %v2380 = vld [vmem:[#allocation17] sm:$0xf]
        %v2381 = vld [vmem:[#allocation17 + $0x4] sm:$0xf]
        %v2382 = vld [vmem:[#allocation17 + $0x8] sm:$0xf]
        %v2383 = vld [vmem:[#allocation17 + $0xc] sm:$0xf]
        %v2384 = vld [vmem:[#allocation17 + $0x10] sm:$0xf]
        %v2385 = vld [vmem:[#allocation17 + $0x14] sm:$0xf]
        %v2386 = vld [vmem:[#allocation17 + $0x18] sm:$0xf]
        %v2387 = vld [vmem:[#allocation17 + $0x1c] sm:$0xf]
        %v2388 = vld [vmem:[#allocation17 + $0x20] sm:$0xf]
        %v2389 = vld [vmem:[#allocation17 + $0x24] sm:$0xf]
        %v2390 = vld [vmem:[#allocation17 + $0x28] sm:$0xf]
        %v2391 = vld [vmem:[#allocation17 + $0x2c] sm:$0xf]
        %v2392 = vld [vmem:[#allocation17 + $0x30] sm:$0xf]
        %v2393 = vld [vmem:[#allocation17 + $0x34] sm:$0xf]
        %v2394 = vld [vmem:[#allocation17 + $0x38] sm:$0xf]
        %v2395 = vld [vmem:[#allocation17 + $0x3c] sm:$0xf]
        %v2396 = vld [vmem:[%s15] sm:$0x1]
        %v2397 = vpack.c.bf16 %v2377, %v2374
        %v2399 = vlaneseq
        %v2400 = vshrl.u32 %v2399, 7
        %v2401 = vsub.s32 0, %v2400
        %v2402 = vrot.slane %v2396, %v2401
        %v2420 = vunpack.c.l.b16 %v2380
        %v2421 = vunpack.c.l.b16 %v2381
        %v2422 = vunpack.c.l.b16 %v2382
        %v2423 = vunpack.c.l.b16 %v2383
        %v2424 = vunpack.c.l.b16 %v2384
        %v2425 = vunpack.c.l.b16 %v2385
        %v2426 = vunpack.c.l.b16 %v2386
        %v2427 = vunpack.c.l.b16 %v2387
        %v2428 = vunpack.c.l.b16 %v2388
        %v2429 = vunpack.c.l.b16 %v2389
        %v2430 = vunpack.c.l.b16 %v2390
        %v2431 = vunpack.c.l.b16 %v2391
        %v2432 = vunpack.c.l.b16 %v2392
        %v2433 = vunpack.c.l.b16 %v2393
        %v2434 = vunpack.c.l.b16 %v2394
        %v2435 = vunpack.c.l.b16 %v2395
        %v2436 = vpack.c.b16 %v2421, %v2420
        %v2437 = vpack.c.b16 %v2423, %v2422
        %v2438 = vpack.c.b16 %v2425, %v2424
        %v2439 = vpack.c.b16 %v2427, %v2426
        %v2440 = vpack.c.b16 %v2429, %v2428
        %v2441 = vpack.c.b16 %v2431, %v2430
        %v2442 = vpack.c.b16 %v2433, %v2432
        %v2443 = vpack.c.b16 %v2435, %v2434
        %2452 = vmatprep.subr.bf16.mxu0 0
        %2453 = vmatpush1.bf16.msra.mxu0 %v2443
        %2454 = vmatprep.subr.bf16.mxu0 0
        %2455 = vmatpush1.bf16.msra.mxu0 %v2442
        %2456 = vmatprep.subr.bf16.mxu0 0
        %2457 = vmatpush1.bf16.msra.mxu0 %v2441
        %2458 = vmatprep.subr.bf16.mxu0 0
        %2459 = vmatpush1.bf16.msra.mxu0 %v2440
        %2460 = vmatprep.subr.bf16.mxu0 0
        %2461 = vmatpush1.bf16.msra.mxu0 %v2439
        %2462 = vmatprep.subr.bf16.mxu0 0
        %2463 = vmatpush1.bf16.msra.mxu0 %v2438
        %2464 = vmatprep.subr.bf16.mxu0 0
        %2465 = vmatpush1.bf16.msra.mxu0 %v2437
        %2466 = vmatprep.subr.bf16.mxu0 0
        %2467 = vmatpush1.bf16.msra.mxu0 %v2436
        %2468 = vmatprep.subr.bf16.mxu0 0
        %2469 = vmatpush2.bf16.msra.mxu0 0
        %2470 = vmatprep.subr.bf16.mxu0 0
        %2471 = vmatpush2.bf16.msra.mxu0 0
        %2472 = vmatprep.subr.bf16.mxu0 0
        %2473 = vmatpush2.bf16.msra.mxu0 0
        %2474 = vmatprep.subr.bf16.mxu0 0
        %2475 = vmatpush2.bf16.msra.mxu0 0
        %2476 = vmatprep.subr.bf16.mxu0 0
        %2477 = vmatpush2.bf16.msra.mxu0 0
        %2478 = vmatprep.subr.bf16.mxu0 0
        %2479 = vmatpush2.bf16.msra.mxu0 0
        %2480 = vmatprep.subr.bf16.mxu0 0
        %2481 = vmatpush2.bf16.msra.mxu0 0
        %2482 = vmatprep.subr.bf16.mxu0 0
        %2483 = vmatpush2.bf16.msra.mxu0 0
        %2484 = vmatprep.mubr.bf16.mxu0 0
        %2485 = vmatmul.mubr.bf16.gmra.mxu0 %v2397
        %v2486 = vpop.f32.mrf.mxu0
        %v2487 = vadd.f32 %v2402, %v2486
        %v2488 = vpop.f32.mrf.mxu0
        %v2489 = vpop.f32.mrf.mxu0
        %v2490 = vadd.f32 %v2402, %v2489
        %v2491 = vpop.f32.mrf.mxu0
        %2492 = vdwg.mxu0
        %v2493 = vmax.f32 %v2487, 0.0
        %v2494 = vmax.f32 %v2490, 0.0
        %v2495 = vld [vmem:[#allocation19] sm:$0xf]
        %v2496 = vld [vmem:[#allocation19 + $0x4] sm:$0xf]
        %v2497 = vld [vmem:[#allocation19 + $0x8] sm:$0xf]
        %v2498 = vld [vmem:[#allocation19 + $0xc] sm:$0xf]
        %v2499 = vld [vmem:[#allocation19 + $0x10] sm:$0xf]
        %v2500 = vld [vmem:[#allocation19 + $0x14] sm:$0xf]
        %v2501 = vld [vmem:[#allocation19 + $0x18] sm:$0xf]
        %v2502 = vld [vmem:[#allocation19 + $0x1c] sm:$0xf]
        %v2503 = vld [vmem:[#allocation19 + $0x20] sm:$0xf]
        %v2504 = vld [vmem:[#allocation19 + $0x24] sm:$0xf]
        %v2505 = vld [vmem:[#allocation19 + $0x28] sm:$0xf]
        %v2506 = vld [vmem:[#allocation19 + $0x2c] sm:$0xf]
        %v2507 = vld [vmem:[#allocation19 + $0x30] sm:$0xf]
        %v2508 = vld [vmem:[#allocation19 + $0x34] sm:$0xf]
        %v2509 = vld [vmem:[#allocation19 + $0x38] sm:$0xf]
        %v2510 = vld [vmem:[#allocation19 + $0x3c] sm:$0xf]
        %v2511 = vld [vmem:[%s17] sm:$0x1]
        %v2512 = vpack.c.bf16 %v2494, %v2493
        %v2514 = vlaneseq
        %v2515 = vshrl.u32 %v2514, 7
        %v2516 = vsub.s32 0, %v2515
        %v2517 = vrot.slane %v2511, %v2516
        %v2535 = vunpack.c.l.b16 %v2495
        %v2536 = vunpack.c.l.b16 %v2496
        %v2537 = vunpack.c.l.b16 %v2497
        %v2538 = vunpack.c.l.b16 %v2498
        %v2539 = vunpack.c.l.b16 %v2499
        %v2540 = vunpack.c.l.b16 %v2500
        %v2541 = vunpack.c.l.b16 %v2501
        %v2542 = vunpack.c.l.b16 %v2502
        %v2543 = vunpack.c.l.b16 %v2503
        %v2544 = vunpack.c.l.b16 %v2504
        %v2545 = vunpack.c.l.b16 %v2505
        %v2546 = vunpack.c.l.b16 %v2506
        %v2547 = vunpack.c.l.b16 %v2507
        %v2548 = vunpack.c.l.b16 %v2508
        %v2549 = vunpack.c.l.b16 %v2509
        %v2550 = vunpack.c.l.b16 %v2510
        %v2551 = vpack.c.b16 %v2536, %v2535
        %v2552 = vpack.c.b16 %v2538, %v2537
        %v2553 = vpack.c.b16 %v2540, %v2539
        %v2554 = vpack.c.b16 %v2542, %v2541
        %v2555 = vpack.c.b16 %v2544, %v2543
        %v2556 = vpack.c.b16 %v2546, %v2545
        %v2557 = vpack.c.b16 %v2548, %v2547
        %v2558 = vpack.c.b16 %v2550, %v2549
        %2567 = vmatprep.subr.bf16.mxu0 0
        %2568 = vmatpush1.bf16.msra.mxu0 %v2558
        %2569 = vmatprep.subr.bf16.mxu0 0
        %2570 = vmatpush1.bf16.msra.mxu0 %v2557
        %2571 = vmatprep.subr.bf16.mxu0 0
        %2572 = vmatpush1.bf16.msra.mxu0 %v2556
        %2573 = vmatprep.subr.bf16.mxu0 0
        %2574 = vmatpush1.bf16.msra.mxu0 %v2555
        %2575 = vmatprep.subr.bf16.mxu0 0
        %2576 = vmatpush1.bf16.msra.mxu0 %v2554
        %2577 = vmatprep.subr.bf16.mxu0 0
        %2578 = vmatpush1.bf16.msra.mxu0 %v2553
        %2579 = vmatprep.subr.bf16.mxu0 0
        %2580 = vmatpush1.bf16.msra.mxu0 %v2552
        %2581 = vmatprep.subr.bf16.mxu0 0
        %2582 = vmatpush1.bf16.msra.mxu0 %v2551
        %2583 = vmatprep.subr.bf16.mxu0 0
        %2584 = vmatpush2.bf16.msra.mxu0 0
        %2585 = vmatprep.subr.bf16.mxu0 0
        %2586 = vmatpush2.bf16.msra.mxu0 0
        %2587 = vmatprep.subr.bf16.mxu0 0
        %2588 = vmatpush2.bf16.msra.mxu0 0
        %2589 = vmatprep.subr.bf16.mxu0 0
        %2590 = vmatpush2.bf16.msra.mxu0 0
        %2591 = vmatprep.subr.bf16.mxu0 0
        %2592 = vmatpush2.bf16.msra.mxu0 0
        %2593 = vmatprep.subr.bf16.mxu0 0
        %2594 = vmatpush2.bf16.msra.mxu0 0
        %2595 = vmatprep.subr.bf16.mxu0 0
        %2596 = vmatpush2.bf16.msra.mxu0 0
        %2597 = vmatprep.subr.bf16.mxu0 0
        %2598 = vmatpush2.bf16.msra.mxu0 0
        %2599 = vmatprep.mubr.bf16.mxu0 0
        %2600 = vmatmul.mubr.bf16.gmra.mxu0 %v2512
        %v2601 = vpop.f32.mrf.mxu0
        %v2602 = vadd.f32 %v2517, %v2601
        %v2603 = vpop.f32.mrf.mxu0
        %v2604 = vpop.f32.mrf.mxu0
        %v2605 = vadd.f32 %v2517, %v2604
        %v2606 = vpop.f32.mrf.mxu0
        %2607 = vdwg.mxu0
        %v2608 = vmax.f32 %v2602, 0.0
        %v2609 = vmax.f32 %v2605, 0.0
        %v2610 = vld [vmem:[#allocation20] sm:$0xff]
        %v2611 = vld [vmem:[#allocation20 + $0x8] sm:$0xff]
        %v2612 = vld [vmem:[#allocation20 + $0x10] sm:$0xff]
        %v2613 = vld [vmem:[#allocation20 + $0x18] sm:$0xff]
        %v2614 = vld [vmem:[#allocation20 + $0x20] sm:$0xff]
        %v2615 = vld [vmem:[#allocation20 + $0x28] sm:$0xff]
        %v2616 = vld [vmem:[#allocation20 + $0x30] sm:$0xff]
        %v2617 = vld [vmem:[#allocation20 + $0x38] sm:$0xff]
        %v2618 = vld [vmem:[#allocation20 + $0x40] sm:$0xff]
        %v2619 = vld [vmem:[#allocation20 + $0x48] sm:$0xff]
        %v2620 = vld [vmem:[#allocation20 + $0x50] sm:$0xff]
        %v2621 = vld [vmem:[#allocation20 + $0x58] sm:$0xff]
        %v2622 = vld [vmem:[#allocation20 + $0x60] sm:$0xff]
        %v2623 = vld [vmem:[#allocation20 + $0x68] sm:$0xff]
        %v2624 = vld [vmem:[#allocation20 + $0x70] sm:$0xff]
        %v2625 = vld [vmem:[#allocation20 + $0x78] sm:$0xff]
        %v2626 = vld [vmem:[%s19] sm:$0x3]
        %v2627 = vpack.c.bf16 %v2609, %v2608
        %v2629 = vlaneseq
        %v2630 = vshrl.u32 %v2629, 7
        %v2631 = vsub.s32 0, %v2630
        %v2632 = vrot.slane %v2626, %v2631
        %v2633 = vlaneseq
        %v2634 = vshrl.u32 %v2633, 7
        %v2635 = vsub.s32 1, %v2634
        %v2636 = vrot.slane %v2626, %v2635
        %v2655 = vunpack.c.l.b16 %v2610
        %v2656 = vunpack.c.h.b16 %v2610
        %v2657 = vunpack.c.l.b16 %v2611
        %v2658 = vunpack.c.h.b16 %v2611
        %v2659 = vunpack.c.l.b16 %v2612
        %v2660 = vunpack.c.h.b16 %v2612
        %v2661 = vunpack.c.l.b16 %v2613
        %v2662 = vunpack.c.h.b16 %v2613
        %v2663 = vunpack.c.l.b16 %v2614
        %v2664 = vunpack.c.h.b16 %v2614
        %v2665 = vunpack.c.l.b16 %v2615
        %v2666 = vunpack.c.h.b16 %v2615
        %v2667 = vunpack.c.l.b16 %v2616
        %v2668 = vunpack.c.h.b16 %v2616
        %v2669 = vunpack.c.l.b16 %v2617
        %v2670 = vunpack.c.h.b16 %v2617
        %v2671 = vunpack.c.l.b16 %v2618
        %v2672 = vunpack.c.h.b16 %v2618
        %v2673 = vunpack.c.l.b16 %v2619
        %v2674 = vunpack.c.h.b16 %v2619
        %v2675 = vunpack.c.l.b16 %v2620
        %v2676 = vunpack.c.h.b16 %v2620
        %v2677 = vunpack.c.l.b16 %v2621
        %v2678 = vunpack.c.h.b16 %v2621
        %v2679 = vunpack.c.l.b16 %v2622
        %v2680 = vunpack.c.h.b16 %v2622
        %v2681 = vunpack.c.l.b16 %v2623
        %v2682 = vunpack.c.h.b16 %v2623
        %v2683 = vunpack.c.l.b16 %v2624
        %v2684 = vunpack.c.h.b16 %v2624
        %v2685 = vunpack.c.l.b16 %v2625
        %v2686 = vunpack.c.h.b16 %v2625
        %v2687 = vpack.c.b16 %v2657, %v2655
        %v2688 = vpack.c.b16 %v2658, %v2656
        %v2689 = vpack.c.b16 %v2661, %v2659
        %v2690 = vpack.c.b16 %v2662, %v2660
        %v2691 = vpack.c.b16 %v2665, %v2663
        %v2692 = vpack.c.b16 %v2666, %v2664
        %v2693 = vpack.c.b16 %v2669, %v2667
        %v2694 = vpack.c.b16 %v2670, %v2668
        %v2695 = vpack.c.b16 %v2673, %v2671
        %v2696 = vpack.c.b16 %v2674, %v2672
        %v2697 = vpack.c.b16 %v2677, %v2675
        %v2698 = vpack.c.b16 %v2678, %v2676
        %v2699 = vpack.c.b16 %v2681, %v2679
        %v2700 = vpack.c.b16 %v2682, %v2680
        %v2701 = vpack.c.b16 %v2685, %v2683
        %v2702 = vpack.c.b16 %v2686, %v2684
        %2719 = vmatprep.subr.bf16.mxu0 %v2702
        %2720 = vmatpush1.bf16.msra.mxu0 %v2701
        %2721 = vmatprep.subr.bf16.mxu0 %v2700
        %2722 = vmatpush1.bf16.msra.mxu0 %v2699
        %2723 = vmatprep.subr.bf16.mxu0 %v2698
        %2724 = vmatpush1.bf16.msra.mxu0 %v2697
        %2725 = vmatprep.subr.bf16.mxu0 %v2696
        %2726 = vmatpush1.bf16.msra.mxu0 %v2695
        %2727 = vmatprep.subr.bf16.mxu0 %v2694
        %2728 = vmatpush1.bf16.msra.mxu0 %v2693
        %2729 = vmatprep.subr.bf16.mxu0 %v2692
        %2730 = vmatpush1.bf16.msra.mxu0 %v2691
        %2731 = vmatprep.subr.bf16.mxu0 %v2690
        %2732 = vmatpush1.bf16.msra.mxu0 %v2689
        %2733 = vmatprep.subr.bf16.mxu0 %v2688
        %2734 = vmatpush1.bf16.msra.mxu0 %v2687
        %2735 = vmatprep.subr.bf16.mxu0 0
        %2736 = vmatpush2.bf16.msra.mxu0 0
        %2737 = vmatprep.subr.bf16.mxu0 0
        %2738 = vmatpush2.bf16.msra.mxu0 0
        %2739 = vmatprep.subr.bf16.mxu0 0
        %2740 = vmatpush2.bf16.msra.mxu0 0
        %2741 = vmatprep.subr.bf16.mxu0 0
        %2742 = vmatpush2.bf16.msra.mxu0 0
        %2743 = vmatprep.subr.bf16.mxu0 0
        %2744 = vmatpush2.bf16.msra.mxu0 0
        %2745 = vmatprep.subr.bf16.mxu0 0
        %2746 = vmatpush2.bf16.msra.mxu0 0
        %2747 = vmatprep.subr.bf16.mxu0 0
        %2748 = vmatpush2.bf16.msra.mxu0 0
        %2749 = vmatprep.subr.bf16.mxu0 0
        %2750 = vmatpush2.bf16.msra.mxu0 0
        %2751 = vmatprep.mubr.bf16.mxu0 0
        %2752 = vmatmul.mubr.bf16.gmra.mxu0 %v2627
        %v2753 = vpop.f32.mrf.mxu0
        %v2754 = vadd.f32 %v2632, %v2753
        %v2755 = vpop.f32.mrf.mxu0
        %v2756 = vadd.f32 %v2636, %v2755
        %v2757 = vpop.f32.mrf.mxu0
        %v2758 = vadd.f32 %v2632, %v2757
        %v2759 = vpop.f32.mrf.mxu0
        %v2760 = vadd.f32 %v2636, %v2759
        %2761 = vdwg.mxu0
        %v2762 = vmax.f32 %v2754, 0.0
        %v2763 = vmax.f32 %v2756, 0.0
        %v2764 = vmax.f32 %v2758, 0.0
        %v2765 = vmax.f32 %v2760, 0.0
        %v2766 = vld [vmem:[#allocation22] sm:$0xff]
        %v2767 = vld [vmem:[#allocation22 + $0x8] sm:$0xff]
        %v2768 = vld [vmem:[#allocation22 + $0x10] sm:$0xff]
        %v2769 = vld [vmem:[#allocation22 + $0x18] sm:$0xff]
        %v2770 = vld [vmem:[#allocation22 + $0x20] sm:$0xff]
        %v2771 = vld [vmem:[#allocation22 + $0x28] sm:$0xff]
        %v2772 = vld [vmem:[#allocation22 + $0x30] sm:$0xff]
        %v2773 = vld [vmem:[#allocation22 + $0x38] sm:$0xff]
        %v2774 = vld [vmem:[#allocation22 + $0x40] sm:$0xff]
        %v2775 = vld [vmem:[#allocation22 + $0x48] sm:$0xff]
        %v2776 = vld [vmem:[#allocation22 + $0x50] sm:$0xff]
        %v2777 = vld [vmem:[#allocation22 + $0x58] sm:$0xff]
        %v2778 = vld [vmem:[#allocation22 + $0x60] sm:$0xff]
        %v2779 = vld [vmem:[#allocation22 + $0x68] sm:$0xff]
        %v2780 = vld [vmem:[#allocation22 + $0x70] sm:$0xff]
        %v2781 = vld [vmem:[#allocation22 + $0x78] sm:$0xff]
        %v2782 = vld [vmem:[#allocation22 + $0x80] sm:$0xff]
        %v2783 = vld [vmem:[#allocation22 + $0x88] sm:$0xff]
        %v2784 = vld [vmem:[#allocation22 + $0x90] sm:$0xff]
        %v2785 = vld [vmem:[#allocation22 + $0x98] sm:$0xff]
        %v2786 = vld [vmem:[#allocation22 + $0xa0] sm:$0xff]
        %v2787 = vld [vmem:[#allocation22 + $0xa8] sm:$0xff]
        %v2788 = vld [vmem:[#allocation22 + $0xb0] sm:$0xff]
        %v2789 = vld [vmem:[#allocation22 + $0xb8] sm:$0xff]
        %v2790 = vld [vmem:[#allocation22 + $0xc0] sm:$0xff]
        %v2791 = vld [vmem:[#allocation22 + $0xc8] sm:$0xff]
        %v2792 = vld [vmem:[#allocation22 + $0xd0] sm:$0xff]
        %v2793 = vld [vmem:[#allocation22 + $0xd8] sm:$0xff]
        %v2794 = vld [vmem:[#allocation22 + $0xe0] sm:$0xff]
        %v2795 = vld [vmem:[#allocation22 + $0xe8] sm:$0xff]
        %v2796 = vld [vmem:[#allocation22 + $0xf0] sm:$0xff]
        %v2797 = vld [vmem:[#allocation22 + $0xf8] sm:$0xff]
        %v2798 = vld [vmem:[#allocation22 + $0x100] sm:$0xff]
        %v2799 = vld [vmem:[#allocation22 + $0x108] sm:$0xff]
        %v2800 = vld [vmem:[#allocation22 + $0x110] sm:$0xff]
        %v2801 = vld [vmem:[#allocation22 + $0x118] sm:$0xff]
        %v2802 = vld [vmem:[#allocation22 + $0x120] sm:$0xff]
        %v2803 = vld [vmem:[#allocation22 + $0x128] sm:$0xff]
        %v2804 = vld [vmem:[#allocation22 + $0x130] sm:$0xff]
        %v2805 = vld [vmem:[#allocation22 + $0x138] sm:$0xff]
        %v2806 = vld [vmem:[#allocation22 + $0x140] sm:$0xff]
        %v2807 = vld [vmem:[#allocation22 + $0x148] sm:$0xff]
        %v2808 = vld [vmem:[#allocation22 + $0x150] sm:$0xff]
        %v2809 = vld [vmem:[#allocation22 + $0x158] sm:$0xff]
        %v2810 = vld [vmem:[#allocation22 + $0x160] sm:$0xff]
        %v2811 = vld [vmem:[#allocation22 + $0x168] sm:$0xff]
        %v2812 = vld [vmem:[#allocation22 + $0x170] sm:$0xff]
        %v2813 = vld [vmem:[#allocation22 + $0x178] sm:$0xff]
        %v2814 = vld [vmem:[#allocation22 + $0x180] sm:$0xff]
        %v2815 = vld [vmem:[#allocation22 + $0x188] sm:$0xff]
        %v2816 = vld [vmem:[#allocation22 + $0x190] sm:$0xff]
        %v2817 = vld [vmem:[#allocation22 + $0x198] sm:$0xff]
        %v2818 = vld [vmem:[#allocation22 + $0x1a0] sm:$0xff]
        %v2819 = vld [vmem:[#allocation22 + $0x1a8] sm:$0xff]
        %v2820 = vld [vmem:[#allocation22 + $0x1b0] sm:$0xff]
        %v2821 = vld [vmem:[#allocation22 + $0x1b8] sm:$0xff]
        %v2822 = vld [vmem:[#allocation22 + $0x1c0] sm:$0xff]
        %v2823 = vld [vmem:[#allocation22 + $0x1c8] sm:$0xff]
        %v2824 = vld [vmem:[#allocation22 + $0x1d0] sm:$0xff]
        %v2825 = vld [vmem:[#allocation22 + $0x1d8] sm:$0xff]
        %v2826 = vld [vmem:[#allocation22 + $0x1e0] sm:$0xff]
        %v2827 = vld [vmem:[#allocation22 + $0x1e8] sm:$0xff]
        %v2828 = vld [vmem:[#allocation22 + $0x1f0] sm:$0xff]
        %v2829 = vld [vmem:[#allocation22 + $0x1f8] sm:$0xff]
        %v2830 = vld [vmem:[%s21] sm:$0xf]
        %v2831 = vpack.c.bf16 %v2764, %v2762
        %v2832 = vpack.c.bf16 %v2765, %v2763
        %v2834 = vlaneseq
        %v2835 = vshrl.u32 %v2834, 7
        %v2836 = vsub.s32 0, %v2835
        %v2837 = vrot.slane %v2830, %v2836
        %v2838 = vlaneseq
        %v2839 = vshrl.u32 %v2838, 7
        %v2840 = vsub.s32 1, %v2839
        %v2841 = vrot.slane %v2830, %v2840
        %v2842 = vlaneseq
        %v2843 = vshrl.u32 %v2842, 7
        %v2844 = vsub.s32 2, %v2843
        %v2845 = vrot.slane %v2830, %v2844
        %v2846 = vlaneseq
        %v2847 = vshrl.u32 %v2846, 7
        %v2848 = vsub.s32 3, %v2847
        %v2849 = vrot.slane %v2830, %v2848
        %v2918 = vunpack.c.l.b16 %v2766
        %v2919 = vunpack.c.h.b16 %v2766
        %v2920 = vunpack.c.l.b16 %v2767
        %v2921 = vunpack.c.h.b16 %v2767
        %v2922 = vunpack.c.l.b16 %v2768
        %v2923 = vunpack.c.h.b16 %v2768
        %v2924 = vunpack.c.l.b16 %v2769
        %v2925 = vunpack.c.h.b16 %v2769
        %v2926 = vunpack.c.l.b16 %v2770
        %v2927 = vunpack.c.h.b16 %v2770
        %v2928 = vunpack.c.l.b16 %v2771
        %v2929 = vunpack.c.h.b16 %v2771
        %v2930 = vunpack.c.l.b16 %v2772
        %v2931 = vunpack.c.h.b16 %v2772
        %v2932 = vunpack.c.l.b16 %v2773
        %v2933 = vunpack.c.h.b16 %v2773
        %v2934 = vunpack.c.l.b16 %v2774
        %v2935 = vunpack.c.h.b16 %v2774
        %v2936 = vunpack.c.l.b16 %v2775
        %v2937 = vunpack.c.h.b16 %v2775
        %v2938 = vunpack.c.l.b16 %v2776
        %v2939 = vunpack.c.h.b16 %v2776
        %v2940 = vunpack.c.l.b16 %v2777
        %v2941 = vunpack.c.h.b16 %v2777
        %v2942 = vunpack.c.l.b16 %v2778
        %v2943 = vunpack.c.h.b16 %v2778
        %v2944 = vunpack.c.l.b16 %v2779
        %v2945 = vunpack.c.h.b16 %v2779
        %v2946 = vunpack.c.l.b16 %v2780
        %v2947 = vunpack.c.h.b16 %v2780
        %v2948 = vunpack.c.l.b16 %v2781
        %v2949 = vunpack.c.h.b16 %v2781
        %v2950 = vunpack.c.l.b16 %v2782
        %v2951 = vunpack.c.h.b16 %v2782
        %v2952 = vunpack.c.l.b16 %v2783
        %v2953 = vunpack.c.h.b16 %v2783
        %v2954 = vunpack.c.l.b16 %v2784
        %v2955 = vunpack.c.h.b16 %v2784
        %v2956 = vunpack.c.l.b16 %v2785
        %v2957 = vunpack.c.h.b16 %v2785
        %v2958 = vunpack.c.l.b16 %v2786
        %v2959 = vunpack.c.h.b16 %v2786
        %v2960 = vunpack.c.l.b16 %v2787
        %v2961 = vunpack.c.h.b16 %v2787
        %v2962 = vunpack.c.l.b16 %v2788
        %v2963 = vunpack.c.h.b16 %v2788
        %v2964 = vunpack.c.l.b16 %v2789
        %v2965 = vunpack.c.h.b16 %v2789
        %v2966 = vunpack.c.l.b16 %v2790
        %v2967 = vunpack.c.h.b16 %v2790
        %v2968 = vunpack.c.l.b16 %v2791
        %v2969 = vunpack.c.h.b16 %v2791
        %v2970 = vunpack.c.l.b16 %v2792
        %v2971 = vunpack.c.h.b16 %v2792
        %v2972 = vunpack.c.l.b16 %v2793
        %v2973 = vunpack.c.h.b16 %v2793
        %v2974 = vunpack.c.l.b16 %v2794
        %v2975 = vunpack.c.h.b16 %v2794
        %v2976 = vunpack.c.l.b16 %v2795
        %v2977 = vunpack.c.h.b16 %v2795
        %v2978 = vunpack.c.l.b16 %v2796
        %v2979 = vunpack.c.h.b16 %v2796
        %v2980 = vunpack.c.l.b16 %v2797
        %v2981 = vunpack.c.h.b16 %v2797
        %v2982 = vunpack.c.l.b16 %v2798
        %v2983 = vunpack.c.h.b16 %v2798
        %v2984 = vunpack.c.l.b16 %v2799
        %v2985 = vunpack.c.h.b16 %v2799
        %v2986 = vunpack.c.l.b16 %v2800
        %v2987 = vunpack.c.h.b16 %v2800
        %v2988 = vunpack.c.l.b16 %v2801
        %v2989 = vunpack.c.h.b16 %v2801
        %v2990 = vunpack.c.l.b16 %v2802
        %v2991 = vunpack.c.h.b16 %v2802
        %v2992 = vunpack.c.l.b16 %v2803
        %v2993 = vunpack.c.h.b16 %v2803
        %v2994 = vunpack.c.l.b16 %v2804
        %v2995 = vunpack.c.h.b16 %v2804
        %v2996 = vunpack.c.l.b16 %v2805
        %v2997 = vunpack.c.h.b16 %v2805
        %v2998 = vunpack.c.l.b16 %v2806
        %v2999 = vunpack.c.h.b16 %v2806
        %v3000 = vunpack.c.l.b16 %v2807
        %v3001 = vunpack.c.h.b16 %v2807
        %v3002 = vunpack.c.l.b16 %v2808
        %v3003 = vunpack.c.h.b16 %v2808
        %v3004 = vunpack.c.l.b16 %v2809
        %v3005 = vunpack.c.h.b16 %v2809
        %v3006 = vunpack.c.l.b16 %v2810
        %v3007 = vunpack.c.h.b16 %v2810
        %v3008 = vunpack.c.l.b16 %v2811
        %v3009 = vunpack.c.h.b16 %v2811
        %v3010 = vunpack.c.l.b16 %v2812
        %v3011 = vunpack.c.h.b16 %v2812
        %v3012 = vunpack.c.l.b16 %v2813
        %v3013 = vunpack.c.h.b16 %v2813
        %v3014 = vunpack.c.l.b16 %v2814
        %v3015 = vunpack.c.h.b16 %v2814
        %v3016 = vunpack.c.l.b16 %v2815
        %v3017 = vunpack.c.h.b16 %v2815
        %v3018 = vunpack.c.l.b16 %v2816
        %v3019 = vunpack.c.h.b16 %v2816
        %v3020 = vunpack.c.l.b16 %v2817
        %v3021 = vunpack.c.h.b16 %v2817
        %v3022 = vunpack.c.l.b16 %v2818
        %v3023 = vunpack.c.h.b16 %v2818
        %v3024 = vunpack.c.l.b16 %v2819
        %v3025 = vunpack.c.h.b16 %v2819
        %v3026 = vunpack.c.l.b16 %v2820
        %v3027 = vunpack.c.h.b16 %v2820
        %v3028 = vunpack.c.l.b16 %v2821
        %v3029 = vunpack.c.h.b16 %v2821
        %v3030 = vunpack.c.l.b16 %v2822
        %v3031 = vunpack.c.h.b16 %v2822
        %v3032 = vunpack.c.l.b16 %v2823
        %v3033 = vunpack.c.h.b16 %v2823
        %v3034 = vunpack.c.l.b16 %v2824
        %v3035 = vunpack.c.h.b16 %v2824
        %v3036 = vunpack.c.l.b16 %v2825
        %v3037 = vunpack.c.h.b16 %v2825
        %v3038 = vunpack.c.l.b16 %v2826
        %v3039 = vunpack.c.h.b16 %v2826
        %v3040 = vunpack.c.l.b16 %v2827
        %v3041 = vunpack.c.h.b16 %v2827
        %v3042 = vunpack.c.l.b16 %v2828
        %v3043 = vunpack.c.h.b16 %v2828
        %v3044 = vunpack.c.l.b16 %v2829
        %v3045 = vunpack.c.h.b16 %v2829
        %v3046 = vpack.c.b16 %v2922, %v2918
        %v3047 = vpack.c.b16 %v2923, %v2919
        %v3048 = vpack.c.b16 %v2924, %v2920
        %v3049 = vpack.c.b16 %v2925, %v2921
        %v3050 = vpack.c.b16 %v2930, %v2926
        %v3051 = vpack.c.b16 %v2931, %v2927
        %v3052 = vpack.c.b16 %v2932, %v2928
        %v3053 = vpack.c.b16 %v2933, %v2929
        %v3054 = vpack.c.b16 %v2938, %v2934
        %v3055 = vpack.c.b16 %v2939, %v2935
        %v3056 = vpack.c.b16 %v2940, %v2936
        %v3057 = vpack.c.b16 %v2941, %v2937
        %v3058 = vpack.c.b16 %v2946, %v2942
        %v3059 = vpack.c.b16 %v2947, %v2943
        %v3060 = vpack.c.b16 %v2948, %v2944
        %v3061 = vpack.c.b16 %v2949, %v2945
        %v3062 = vpack.c.b16 %v2954, %v2950
        %v3063 = vpack.c.b16 %v2955, %v2951
        %v3064 = vpack.c.b16 %v2956, %v2952
        %v3065 = vpack.c.b16 %v2957, %v2953
        %v3066 = vpack.c.b16 %v2962, %v2958
        %v3067 = vpack.c.b16 %v2963, %v2959
        %v3068 = vpack.c.b16 %v2964, %v2960
        %v3069 = vpack.c.b16 %v2965, %v2961
        %v3070 = vpack.c.b16 %v2970, %v2966
        %v3071 = vpack.c.b16 %v2971, %v2967
        %v3072 = vpack.c.b16 %v2972, %v2968
        %v3073 = vpack.c.b16 %v2973, %v2969
        %v3074 = vpack.c.b16 %v2978, %v2974
        %v3075 = vpack.c.b16 %v2979, %v2975
        %v3076 = vpack.c.b16 %v2980, %v2976
        %v3077 = vpack.c.b16 %v2981, %v2977
        %v3078 = vpack.c.b16 %v2986, %v2982
        %v3079 = vpack.c.b16 %v2987, %v2983
        %v3080 = vpack.c.b16 %v2988, %v2984
        %v3081 = vpack.c.b16 %v2989, %v2985
        %v3082 = vpack.c.b16 %v2994, %v2990
        %v3083 = vpack.c.b16 %v2995, %v2991
        %v3084 = vpack.c.b16 %v2996, %v2992
        %v3085 = vpack.c.b16 %v2997, %v2993
        %v3086 = vpack.c.b16 %v3002, %v2998
        %v3087 = vpack.c.b16 %v3003, %v2999
        %v3088 = vpack.c.b16 %v3004, %v3000
        %v3089 = vpack.c.b16 %v3005, %v3001
        %v3090 = vpack.c.b16 %v3010, %v3006
        %v3091 = vpack.c.b16 %v3011, %v3007
        %v3092 = vpack.c.b16 %v3012, %v3008
        %v3093 = vpack.c.b16 %v3013, %v3009
        %v3094 = vpack.c.b16 %v3018, %v3014
        %v3095 = vpack.c.b16 %v3019, %v3015
        %v3096 = vpack.c.b16 %v3020, %v3016
        %v3097 = vpack.c.b16 %v3021, %v3017
        %v3098 = vpack.c.b16 %v3026, %v3022
        %v3099 = vpack.c.b16 %v3027, %v3023
        %v3100 = vpack.c.b16 %v3028, %v3024
        %v3101 = vpack.c.b16 %v3029, %v3025
        %v3102 = vpack.c.b16 %v3034, %v3030
        %v3103 = vpack.c.b16 %v3035, %v3031
        %v3104 = vpack.c.b16 %v3036, %v3032
        %v3105 = vpack.c.b16 %v3037, %v3033
        %v3106 = vpack.c.b16 %v3042, %v3038
        %v3107 = vpack.c.b16 %v3043, %v3039
        %v3108 = vpack.c.b16 %v3044, %v3040
        %v3109 = vpack.c.b16 %v3045, %v3041
        %3174 = vmatprep.subr.bf16.mxu0 %v3075
        %3175 = vmatpush1.bf16.msra.mxu0 %v3074
        %3176 = vmatprep.subr.bf16.mxu0 %v3071
        %3177 = vmatpush1.bf16.msra.mxu0 %v3070
        %3178 = vmatprep.subr.bf16.mxu0 %v3067
        %3179 = vmatpush1.bf16.msra.mxu0 %v3066
        %3180 = vmatprep.subr.bf16.mxu0 %v3063
        %3181 = vmatpush1.bf16.msra.mxu0 %v3062
        %3182 = vmatprep.subr.bf16.mxu0 %v3059
        %3183 = vmatpush1.bf16.msra.mxu0 %v3058
        %3184 = vmatprep.subr.bf16.mxu0 %v3055
        %3185 = vmatpush1.bf16.msra.mxu0 %v3054
        %3186 = vmatprep.subr.bf16.mxu0 %v3051
        %3187 = vmatpush1.bf16.msra.mxu0 %v3050
        %3188 = vmatprep.subr.bf16.mxu0 %v3047
        %3189 = vmatpush1.bf16.msra.mxu0 %v3046
        %3190 = vmatprep.subr.bf16.mxu0 %v3107
        %3191 = vmatpush2.bf16.msra.mxu0 %v3106
        %3192 = vmatprep.subr.bf16.mxu0 %v3103
        %3193 = vmatpush2.bf16.msra.mxu0 %v3102
        %3194 = vmatprep.subr.bf16.mxu0 %v3099
        %3195 = vmatpush2.bf16.msra.mxu0 %v3098
        %3196 = vmatprep.subr.bf16.mxu0 %v3095
        %3197 = vmatpush2.bf16.msra.mxu0 %v3094
        %3198 = vmatprep.subr.bf16.mxu0 %v3091
        %3199 = vmatpush2.bf16.msra.mxu0 %v3090
        %3200 = vmatprep.subr.bf16.mxu0 %v3087
        %3201 = vmatpush2.bf16.msra.mxu0 %v3086
        %3202 = vmatprep.subr.bf16.mxu0 %v3083
        %3203 = vmatpush2.bf16.msra.mxu0 %v3082
        %3204 = vmatprep.subr.bf16.mxu0 %v3079
        %3205 = vmatpush2.bf16.msra.mxu0 %v3078
        %3206 = vmatprep.mubr.bf16.mxu0 %v2832
        %3207 = vmatmul.mubr.bf16.gmra.mxu0 %v2831
        %v3208 = vpop.f32.mrf.mxu0
        %v3209 = vadd.f32 %v2837, %v3208
        %v3210 = vpop.f32.mrf.mxu0
        %v3211 = vadd.f32 %v2841, %v3210
        %v3212 = vpop.f32.mrf.mxu0
        %v3213 = vadd.f32 %v2837, %v3212
        %v3214 = vpop.f32.mrf.mxu0
        %v3215 = vadd.f32 %v2841, %v3214
        %3216 = vdwg.mxu0
        %3217 = vmatprep.subr.bf16.mxu0 %v3077
        %3218 = vmatpush1.bf16.msra.mxu0 %v3076
        %3219 = vmatprep.subr.bf16.mxu0 %v3073
        %3220 = vmatpush1.bf16.msra.mxu0 %v3072
        %3221 = vmatprep.subr.bf16.mxu0 %v3069
        %3222 = vmatpush1.bf16.msra.mxu0 %v3068
        %3223 = vmatprep.subr.bf16.mxu0 %v3065
        %3224 = vmatpush1.bf16.msra.mxu0 %v3064
        %3225 = vmatprep.subr.bf16.mxu0 %v3061
        %3226 = vmatpush1.bf16.msra.mxu0 %v3060
        %3227 = vmatprep.subr.bf16.mxu0 %v3057
        %3228 = vmatpush1.bf16.msra.mxu0 %v3056
        %3229 = vmatprep.subr.bf16.mxu0 %v3053
        %3230 = vmatpush1.bf16.msra.mxu0 %v3052
        %3231 = vmatprep.subr.bf16.mxu0 %v3049
        %3232 = vmatpush1.bf16.msra.mxu0 %v3048
        %3233 = vmatprep.subr.bf16.mxu0 %v3109
        %3234 = vmatpush2.bf16.msra.mxu0 %v3108
        %3235 = vmatprep.subr.bf16.mxu0 %v3105
        %3236 = vmatpush2.bf16.msra.mxu0 %v3104
        %3237 = vmatprep.subr.bf16.mxu0 %v3101
        %3238 = vmatpush2.bf16.msra.mxu0 %v3100
        %3239 = vmatprep.subr.bf16.mxu0 %v3097
        %3240 = vmatpush2.bf16.msra.mxu0 %v3096
        %3241 = vmatprep.subr.bf16.mxu0 %v3093
        %3242 = vmatpush2.bf16.msra.mxu0 %v3092
        %3243 = vmatprep.subr.bf16.mxu0 %v3089
        %3244 = vmatpush2.bf16.msra.mxu0 %v3088
        %3245 = vmatprep.subr.bf16.mxu0 %v3085
        %3246 = vmatpush2.bf16.msra.mxu0 %v3084
        %3247 = vmatprep.subr.bf16.mxu0 %v3081
        %3248 = vmatpush2.bf16.msra.mxu0 %v3080
        %3249 = vmatprep.mubr.bf16.mxu0 %v2832
        %3250 = vmatmul.mubr.bf16.gmra.mxu0 %v2831
        %v3251 = vpop.f32.mrf.mxu0
        %v3252 = vadd.f32 %v2845, %v3251
        %v3253 = vpop.f32.mrf.mxu0
        %v3254 = vadd.f32 %v2849, %v3253
        %v3255 = vpop.f32.mrf.mxu0
        %v3256 = vadd.f32 %v2845, %v3255
        %v3257 = vpop.f32.mrf.mxu0
        %v3258 = vadd.f32 %v2849, %v3257
        %3259 = vdwg.mxu0
        %v3260 = vmax.f32 %v3209, 0.0
        %v3261 = vmax.f32 %v3211, 0.0
        %v3262 = vmax.f32 %v3252, 0.0
        %v3263 = vmax.f32 %v3254, 0.0
        %v3264 = vmax.f32 %v3213, 0.0
        %v3265 = vmax.f32 %v3215, 0.0
        %v3266 = vmax.f32 %v3256, 0.0
        %v3267 = vmax.f32 %v3258, 0.0
        %v3268 = vld [vmem:[#allocation23] sm:$0xff]
        %v3269 = vld [vmem:[#allocation23 + $0x8] sm:$0xff]
        %v3270 = vld [vmem:[#allocation23 + $0x10] sm:$0xff]
        %v3271 = vld [vmem:[#allocation23 + $0x18] sm:$0xff]
        %v3272 = vld [vmem:[#allocation23 + $0x20] sm:$0xff]
        %v3273 = vld [vmem:[#allocation23 + $0x28] sm:$0xff]
        %v3274 = vld [vmem:[#allocation23 + $0x30] sm:$0xff]
        %v3275 = vld [vmem:[#allocation23 + $0x38] sm:$0xff]
        %v3276 = vld [vmem:[#allocation23 + $0x40] sm:$0xff]
        %v3277 = vld [vmem:[#allocation23 + $0x48] sm:$0xff]
        %v3278 = vld [vmem:[#allocation23 + $0x50] sm:$0xff]
        %v3279 = vld [vmem:[#allocation23 + $0x58] sm:$0xff]
        %v3280 = vld [vmem:[#allocation23 + $0x60] sm:$0xff]
        %v3281 = vld [vmem:[#allocation23 + $0x68] sm:$0xff]
        %v3282 = vld [vmem:[#allocation23 + $0x70] sm:$0xff]
        %v3283 = vld [vmem:[#allocation23 + $0x78] sm:$0xff]
        %v3284 = vld [vmem:[#allocation23 + $0x80] sm:$0xff]
        %v3285 = vld [vmem:[#allocation23 + $0x88] sm:$0xff]
        %v3286 = vld [vmem:[#allocation23 + $0x90] sm:$0xff]
        %v3287 = vld [vmem:[#allocation23 + $0x98] sm:$0xff]
        %v3288 = vld [vmem:[#allocation23 + $0xa0] sm:$0xff]
        %v3289 = vld [vmem:[#allocation23 + $0xa8] sm:$0xff]
        %v3290 = vld [vmem:[#allocation23 + $0xb0] sm:$0xff]
        %v3291 = vld [vmem:[#allocation23 + $0xb8] sm:$0xff]
        %v3292 = vld [vmem:[#allocation23 + $0xc0] sm:$0xff]
        %v3293 = vld [vmem:[#allocation23 + $0xc8] sm:$0xff]
        %v3294 = vld [vmem:[#allocation23 + $0xd0] sm:$0xff]
        %v3295 = vld [vmem:[#allocation23 + $0xd8] sm:$0xff]
        %v3296 = vld [vmem:[#allocation23 + $0xe0] sm:$0xff]
        %v3297 = vld [vmem:[#allocation23 + $0xe8] sm:$0xff]
        %v3298 = vld [vmem:[#allocation23 + $0xf0] sm:$0xff]
        %v3299 = vld [vmem:[#allocation23 + $0xf8] sm:$0xff]
        %v3300 = vld [vmem:[#allocation23 + $0x100] sm:$0xff]
        %v3301 = vld [vmem:[#allocation23 + $0x108] sm:$0xff]
        %v3302 = vld [vmem:[#allocation23 + $0x110] sm:$0xff]
        %v3303 = vld [vmem:[#allocation23 + $0x118] sm:$0xff]
        %v3304 = vld [vmem:[#allocation23 + $0x120] sm:$0xff]
        %v3305 = vld [vmem:[#allocation23 + $0x128] sm:$0xff]
        %v3306 = vld [vmem:[#allocation23 + $0x130] sm:$0xff]
        %v3307 = vld [vmem:[#allocation23 + $0x138] sm:$0xff]
        %v3308 = vld [vmem:[#allocation23 + $0x140] sm:$0xff]
        %v3309 = vld [vmem:[#allocation23 + $0x148] sm:$0xff]
        %v3310 = vld [vmem:[#allocation23 + $0x150] sm:$0xff]
        %v3311 = vld [vmem:[#allocation23 + $0x158] sm:$0xff]
        %v3312 = vld [vmem:[#allocation23 + $0x160] sm:$0xff]
        %v3313 = vld [vmem:[#allocation23 + $0x168] sm:$0xff]
        %v3314 = vld [vmem:[#allocation23 + $0x170] sm:$0xff]
        %v3315 = vld [vmem:[#allocation23 + $0x178] sm:$0xff]
        %v3316 = vld [vmem:[#allocation23 + $0x180] sm:$0xff]
        %v3317 = vld [vmem:[#allocation23 + $0x188] sm:$0xff]
        %v3318 = vld [vmem:[#allocation23 + $0x190] sm:$0xff]
        %v3319 = vld [vmem:[#allocation23 + $0x198] sm:$0xff]
        %v3320 = vld [vmem:[#allocation23 + $0x1a0] sm:$0xff]
        %v3321 = vld [vmem:[#allocation23 + $0x1a8] sm:$0xff]
        %v3322 = vld [vmem:[#allocation23 + $0x1b0] sm:$0xff]
        %v3323 = vld [vmem:[#allocation23 + $0x1b8] sm:$0xff]
        %v3324 = vld [vmem:[#allocation23 + $0x1c0] sm:$0xff]
        %v3325 = vld [vmem:[#allocation23 + $0x1c8] sm:$0xff]
        %v3326 = vld [vmem:[#allocation23 + $0x1d0] sm:$0xff]
        %v3327 = vld [vmem:[#allocation23 + $0x1d8] sm:$0xff]
        %v3328 = vld [vmem:[#allocation23 + $0x1e0] sm:$0xff]
        %v3329 = vld [vmem:[#allocation23 + $0x1e8] sm:$0xff]
        %v3330 = vld [vmem:[#allocation23 + $0x1f0] sm:$0xff]
        %v3331 = vld [vmem:[#allocation23 + $0x1f8] sm:$0xff]
        %v3332 = vld [vmem:[%s23] sm:$0x3]
        %v3333 = vpack.c.bf16 %v3264, %v3260
        %v3334 = vpack.c.bf16 %v3265, %v3261
        %v3335 = vpack.c.bf16 %v3266, %v3262
        %v3336 = vpack.c.bf16 %v3267, %v3263
        %v3338 = vlaneseq
        %v3339 = vshrl.u32 %v3338, 7
        %v3340 = vsub.s32 0, %v3339
        %v3341 = vrot.slane %v3332, %v3340
        %v3342 = vlaneseq
        %v3343 = vshrl.u32 %v3342, 7
        %v3344 = vsub.s32 1, %v3343
        %v3345 = vrot.slane %v3332, %v3344
        %v3412 = vunpack.c.l.b16 %v3268
        %v3413 = vunpack.c.h.b16 %v3268
        %v3414 = vunpack.c.l.b16 %v3269
        %v3415 = vunpack.c.h.b16 %v3269
        %v3416 = vunpack.c.l.b16 %v3270
        %v3417 = vunpack.c.h.b16 %v3270
        %v3418 = vunpack.c.l.b16 %v3271
        %v3419 = vunpack.c.h.b16 %v3271
        %v3420 = vunpack.c.l.b16 %v3272
        %v3421 = vunpack.c.h.b16 %v3272
        %v3422 = vunpack.c.l.b16 %v3273
        %v3423 = vunpack.c.h.b16 %v3273
        %v3424 = vunpack.c.l.b16 %v3274
        %v3425 = vunpack.c.h.b16 %v3274
        %v3426 = vunpack.c.l.b16 %v3275
        %v3427 = vunpack.c.h.b16 %v3275
        %v3428 = vunpack.c.l.b16 %v3276
        %v3429 = vunpack.c.h.b16 %v3276
        %v3430 = vunpack.c.l.b16 %v3277
        %v3431 = vunpack.c.h.b16 %v3277
        %v3432 = vunpack.c.l.b16 %v3278
        %v3433 = vunpack.c.h.b16 %v3278
        %v3434 = vunpack.c.l.b16 %v3279
        %v3435 = vunpack.c.h.b16 %v3279
        %v3436 = vunpack.c.l.b16 %v3280
        %v3437 = vunpack.c.h.b16 %v3280
        %v3438 = vunpack.c.l.b16 %v3281
        %v3439 = vunpack.c.h.b16 %v3281
        %v3440 = vunpack.c.l.b16 %v3282
        %v3441 = vunpack.c.h.b16 %v3282
        %v3442 = vunpack.c.l.b16 %v3283
        %v3443 = vunpack.c.h.b16 %v3283
        %v3444 = vunpack.c.l.b16 %v3284
        %v3445 = vunpack.c.h.b16 %v3284
        %v3446 = vunpack.c.l.b16 %v3285
        %v3447 = vunpack.c.h.b16 %v3285
        %v3448 = vunpack.c.l.b16 %v3286
        %v3449 = vunpack.c.h.b16 %v3286
        %v3450 = vunpack.c.l.b16 %v3287
        %v3451 = vunpack.c.h.b16 %v3287
        %v3452 = vunpack.c.l.b16 %v3288
        %v3453 = vunpack.c.h.b16 %v3288
        %v3454 = vunpack.c.l.b16 %v3289
        %v3455 = vunpack.c.h.b16 %v3289
        %v3456 = vunpack.c.l.b16 %v3290
        %v3457 = vunpack.c.h.b16 %v3290
        %v3458 = vunpack.c.l.b16 %v3291
        %v3459 = vunpack.c.h.b16 %v3291
        %v3460 = vunpack.c.l.b16 %v3292
        %v3461 = vunpack.c.h.b16 %v3292
        %v3462 = vunpack.c.l.b16 %v3293
        %v3463 = vunpack.c.h.b16 %v3293
        %v3464 = vunpack.c.l.b16 %v3294
        %v3465 = vunpack.c.h.b16 %v3294
        %v3466 = vunpack.c.l.b16 %v3295
        %v3467 = vunpack.c.h.b16 %v3295
        %v3468 = vunpack.c.l.b16 %v3296
        %v3469 = vunpack.c.h.b16 %v3296
        %v3470 = vunpack.c.l.b16 %v3297
        %v3471 = vunpack.c.h.b16 %v3297
        %v3472 = vunpack.c.l.b16 %v3298
        %v3473 = vunpack.c.h.b16 %v3298
        %v3474 = vunpack.c.l.b16 %v3299
        %v3475 = vunpack.c.h.b16 %v3299
        %v3476 = vunpack.c.l.b16 %v3300
        %v3477 = vunpack.c.h.b16 %v3300
        %v3478 = vunpack.c.l.b16 %v3301
        %v3479 = vunpack.c.h.b16 %v3301
        %v3480 = vunpack.c.l.b16 %v3302
        %v3481 = vunpack.c.h.b16 %v3302
        %v3482 = vunpack.c.l.b16 %v3303
        %v3483 = vunpack.c.h.b16 %v3303
        %v3484 = vunpack.c.l.b16 %v3304
        %v3485 = vunpack.c.h.b16 %v3304
        %v3486 = vunpack.c.l.b16 %v3305
        %v3487 = vunpack.c.h.b16 %v3305
        %v3488 = vunpack.c.l.b16 %v3306
        %v3489 = vunpack.c.h.b16 %v3306
        %v3490 = vunpack.c.l.b16 %v3307
        %v3491 = vunpack.c.h.b16 %v3307
        %v3492 = vunpack.c.l.b16 %v3308
        %v3493 = vunpack.c.h.b16 %v3308
        %v3494 = vunpack.c.l.b16 %v3309
        %v3495 = vunpack.c.h.b16 %v3309
        %v3496 = vunpack.c.l.b16 %v3310
        %v3497 = vunpack.c.h.b16 %v3310
        %v3498 = vunpack.c.l.b16 %v3311
        %v3499 = vunpack.c.h.b16 %v3311
        %v3500 = vunpack.c.l.b16 %v3312
        %v3501 = vunpack.c.h.b16 %v3312
        %v3502 = vunpack.c.l.b16 %v3313
        %v3503 = vunpack.c.h.b16 %v3313
        %v3504 = vunpack.c.l.b16 %v3314
        %v3505 = vunpack.c.h.b16 %v3314
        %v3506 = vunpack.c.l.b16 %v3315
        %v3507 = vunpack.c.h.b16 %v3315
        %v3508 = vunpack.c.l.b16 %v3316
        %v3509 = vunpack.c.h.b16 %v3316
        %v3510 = vunpack.c.l.b16 %v3317
        %v3511 = vunpack.c.h.b16 %v3317
        %v3512 = vunpack.c.l.b16 %v3318
        %v3513 = vunpack.c.h.b16 %v3318
        %v3514 = vunpack.c.l.b16 %v3319
        %v3515 = vunpack.c.h.b16 %v3319
        %v3516 = vunpack.c.l.b16 %v3320
        %v3517 = vunpack.c.h.b16 %v3320
        %v3518 = vunpack.c.l.b16 %v3321
        %v3519 = vunpack.c.h.b16 %v3321
        %v3520 = vunpack.c.l.b16 %v3322
        %v3521 = vunpack.c.h.b16 %v3322
        %v3522 = vunpack.c.l.b16 %v3323
        %v3523 = vunpack.c.h.b16 %v3323
        %v3524 = vunpack.c.l.b16 %v3324
        %v3525 = vunpack.c.h.b16 %v3324
        %v3526 = vunpack.c.l.b16 %v3325
        %v3527 = vunpack.c.h.b16 %v3325
        %v3528 = vunpack.c.l.b16 %v3326
        %v3529 = vunpack.c.h.b16 %v3326
        %v3530 = vunpack.c.l.b16 %v3327
        %v3531 = vunpack.c.h.b16 %v3327
        %v3532 = vunpack.c.l.b16 %v3328
        %v3533 = vunpack.c.h.b16 %v3328
        %v3534 = vunpack.c.l.b16 %v3329
        %v3535 = vunpack.c.h.b16 %v3329
        %v3536 = vunpack.c.l.b16 %v3330
        %v3537 = vunpack.c.h.b16 %v3330
        %v3538 = vunpack.c.l.b16 %v3331
        %v3539 = vunpack.c.h.b16 %v3331
        %v3540 = vpack.c.b16 %v3414, %v3412
        %v3541 = vpack.c.b16 %v3415, %v3413
        %v3542 = vpack.c.b16 %v3418, %v3416
        %v3543 = vpack.c.b16 %v3419, %v3417
        %v3544 = vpack.c.b16 %v3422, %v3420
        %v3545 = vpack.c.b16 %v3423, %v3421
        %v3546 = vpack.c.b16 %v3426, %v3424
        %v3547 = vpack.c.b16 %v3427, %v3425
        %v3548 = vpack.c.b16 %v3430, %v3428
        %v3549 = vpack.c.b16 %v3431, %v3429
        %v3550 = vpack.c.b16 %v3434, %v3432
        %v3551 = vpack.c.b16 %v3435, %v3433
        %v3552 = vpack.c.b16 %v3438, %v3436
        %v3553 = vpack.c.b16 %v3439, %v3437
        %v3554 = vpack.c.b16 %v3442, %v3440
        %v3555 = vpack.c.b16 %v3443, %v3441
        %v3556 = vpack.c.b16 %v3446, %v3444
        %v3557 = vpack.c.b16 %v3447, %v3445
        %v3558 = vpack.c.b16 %v3450, %v3448
        %v3559 = vpack.c.b16 %v3451, %v3449
        %v3560 = vpack.c.b16 %v3454, %v3452
        %v3561 = vpack.c.b16 %v3455, %v3453
        %v3562 = vpack.c.b16 %v3458, %v3456
        %v3563 = vpack.c.b16 %v3459, %v3457
        %v3564 = vpack.c.b16 %v3462, %v3460
        %v3565 = vpack.c.b16 %v3463, %v3461
        %v3566 = vpack.c.b16 %v3466, %v3464
        %v3567 = vpack.c.b16 %v3467, %v3465
        %v3568 = vpack.c.b16 %v3470, %v3468
        %v3569 = vpack.c.b16 %v3471, %v3469
        %v3570 = vpack.c.b16 %v3474, %v3472
        %v3571 = vpack.c.b16 %v3475, %v3473
        %v3572 = vpack.c.b16 %v3478, %v3476
        %v3573 = vpack.c.b16 %v3479, %v3477
        %v3574 = vpack.c.b16 %v3482, %v3480
        %v3575 = vpack.c.b16 %v3483, %v3481
        %v3576 = vpack.c.b16 %v3486, %v3484
        %v3577 = vpack.c.b16 %v3487, %v3485
        %v3578 = vpack.c.b16 %v3490, %v3488
        %v3579 = vpack.c.b16 %v3491, %v3489
        %v3580 = vpack.c.b16 %v3494, %v3492
        %v3581 = vpack.c.b16 %v3495, %v3493
        %v3582 = vpack.c.b16 %v3498, %v3496
        %v3583 = vpack.c.b16 %v3499, %v3497
        %v3584 = vpack.c.b16 %v3502, %v3500
        %v3585 = vpack.c.b16 %v3503, %v3501
        %v3586 = vpack.c.b16 %v3506, %v3504
        %v3587 = vpack.c.b16 %v3507, %v3505
        %v3588 = vpack.c.b16 %v3510, %v3508
        %v3589 = vpack.c.b16 %v3511, %v3509
        %v3590 = vpack.c.b16 %v3514, %v3512
        %v3591 = vpack.c.b16 %v3515, %v3513
        %v3592 = vpack.c.b16 %v3518, %v3516
        %v3593 = vpack.c.b16 %v3519, %v3517
        %v3594 = vpack.c.b16 %v3522, %v3520
        %v3595 = vpack.c.b16 %v3523, %v3521
        %v3596 = vpack.c.b16 %v3526, %v3524
        %v3597 = vpack.c.b16 %v3527, %v3525
        %v3598 = vpack.c.b16 %v3530, %v3528
        %v3599 = vpack.c.b16 %v3531, %v3529
        %v3600 = vpack.c.b16 %v3534, %v3532
        %v3601 = vpack.c.b16 %v3535, %v3533
        %v3602 = vpack.c.b16 %v3538, %v3536
        %v3603 = vpack.c.b16 %v3539, %v3537
        %3668 = vmatprep.subr.bf16.mxu0 %v3555
        %3669 = vmatpush1.bf16.msra.mxu0 %v3554
        %3670 = vmatprep.subr.bf16.mxu0 %v3553
        %3671 = vmatpush1.bf16.msra.mxu0 %v3552
        %3672 = vmatprep.subr.bf16.mxu0 %v3551
        %3673 = vmatpush1.bf16.msra.mxu0 %v3550
        %3674 = vmatprep.subr.bf16.mxu0 %v3549
        %3675 = vmatpush1.bf16.msra.mxu0 %v3548
        %3676 = vmatprep.subr.bf16.mxu0 %v3547
        %3677 = vmatpush1.bf16.msra.mxu0 %v3546
        %3678 = vmatprep.subr.bf16.mxu0 %v3545
        %3679 = vmatpush1.bf16.msra.mxu0 %v3544
        %3680 = vmatprep.subr.bf16.mxu0 %v3543
        %3681 = vmatpush1.bf16.msra.mxu0 %v3542
        %3682 = vmatprep.subr.bf16.mxu0 %v3541
        %3683 = vmatpush1.bf16.msra.mxu0 %v3540
        %3684 = vmatprep.subr.bf16.mxu0 %v3571
        %3685 = vmatpush2.bf16.msra.mxu0 %v3570
        %3686 = vmatprep.subr.bf16.mxu0 %v3569
        %3687 = vmatpush2.bf16.msra.mxu0 %v3568
        %3688 = vmatprep.subr.bf16.mxu0 %v3567
        %3689 = vmatpush2.bf16.msra.mxu0 %v3566
        %3690 = vmatprep.subr.bf16.mxu0 %v3565
        %3691 = vmatpush2.bf16.msra.mxu0 %v3564
        %3692 = vmatprep.subr.bf16.mxu0 %v3563
        %3693 = vmatpush2.bf16.msra.mxu0 %v3562
        %3694 = vmatprep.subr.bf16.mxu0 %v3561
        %3695 = vmatpush2.bf16.msra.mxu0 %v3560
        %3696 = vmatprep.subr.bf16.mxu0 %v3559
        %3697 = vmatpush2.bf16.msra.mxu0 %v3558
        %3698 = vmatprep.subr.bf16.mxu0 %v3557
        %3699 = vmatpush2.bf16.msra.mxu0 %v3556
        %3700 = vmatprep.mubr.bf16.mxu0 %v3334
        %3701 = vmatmul.mubr.bf16.gmra.mxu0 %v3333
        %v3702 = vpop.f32.mrf.mxu0
        %v3703 = vadd.f32 %v3341, %v3702
        %v3704 = vpop.f32.mrf.mxu0
        %v3705 = vadd.f32 %v3345, %v3704
        %v3706 = vpop.f32.mrf.mxu0
        %v3707 = vadd.f32 %v3341, %v3706
        %v3708 = vpop.f32.mrf.mxu0
        %v3709 = vadd.f32 %v3345, %v3708
        %3710 = vdwg.mxu0
        %3711 = vmatprep.subr.bf16.mxu0 %v3587
        %3712 = vmatpush1.bf16.msra.mxu0 %v3586
        %3713 = vmatprep.subr.bf16.mxu0 %v3585
        %3714 = vmatpush1.bf16.msra.mxu0 %v3584
        %3715 = vmatprep.subr.bf16.mxu0 %v3583
        %3716 = vmatpush1.bf16.msra.mxu0 %v3582
        %3717 = vmatprep.subr.bf16.mxu0 %v3581
        %3718 = vmatpush1.bf16.msra.mxu0 %v3580
        %3719 = vmatprep.subr.bf16.mxu0 %v3579
        %3720 = vmatpush1.bf16.msra.mxu0 %v3578
        %3721 = vmatprep.subr.bf16.mxu0 %v3577
        %3722 = vmatpush1.bf16.msra.mxu0 %v3576
        %3723 = vmatprep.subr.bf16.mxu0 %v3575
        %3724 = vmatpush1.bf16.msra.mxu0 %v3574
        %3725 = vmatprep.subr.bf16.mxu0 %v3573
        %3726 = vmatpush1.bf16.msra.mxu0 %v3572
        %3727 = vmatprep.subr.bf16.mxu0 %v3603
        %3728 = vmatpush2.bf16.msra.mxu0 %v3602
        %3729 = vmatprep.subr.bf16.mxu0 %v3601
        %3730 = vmatpush2.bf16.msra.mxu0 %v3600
        %3731 = vmatprep.subr.bf16.mxu0 %v3599
        %3732 = vmatpush2.bf16.msra.mxu0 %v3598
        %3733 = vmatprep.subr.bf16.mxu0 %v3597
        %3734 = vmatpush2.bf16.msra.mxu0 %v3596
        %3735 = vmatprep.subr.bf16.mxu0 %v3595
        %3736 = vmatpush2.bf16.msra.mxu0 %v3594
        %3737 = vmatprep.subr.bf16.mxu0 %v3593
        %3738 = vmatpush2.bf16.msra.mxu0 %v3592
        %3739 = vmatprep.subr.bf16.mxu0 %v3591
        %3740 = vmatpush2.bf16.msra.mxu0 %v3590
        %3741 = vmatprep.subr.bf16.mxu0 %v3589
        %3742 = vmatpush2.bf16.msra.mxu0 %v3588
        %3743 = vmatprep.mubr.bf16.mxu0 %v3336
        %3744 = vmatmul.mubr.bf16.gmra.mxu0 %v3335
        %v3745 = vpop.f32.mrf.mxu0
        %v3746 = vadd.f32 %v3703, %v3745
        %v3747 = vpop.f32.mrf.mxu0
        %v3748 = vadd.f32 %v3705, %v3747
        %v3749 = vpop.f32.mrf.mxu0
        %v3750 = vadd.f32 %v3707, %v3749
        %v3751 = vpop.f32.mrf.mxu0
        %v3752 = vadd.f32 %v3709, %v3751
        %3753 = vdwg.mxu0
        %v3755 = vlaneseq
        %v3756 = vshrl.u32 %v3755, 7
        %v3757 = vsub.s32 0, %v3756
        %v3758 = vrot.slane %v944, %v3757
        %v3759 = vlaneseq
        %v3760 = vshrl.u32 %v3759, 7
        %v3761 = vsub.s32 1, %v3760
        %v3762 = vrot.slane %v944, %v3761
        %v3765 = vmul.f32 %v3746, %v3758
        %v3766 = vmul.f32 %v3748, %v3762
        %v3767 = vmul.f32 %v3750, %v3758
        %v3768 = vmul.f32 %v3752, %v3762
        %v3769 = vadd.f32 %v3765, %v954
        %v3770 = vadd.f32 %v3766, %v958
        %v3771 = vadd.f32 %v3767, %v954
        %v3772 = vadd.f32 %v3768, %v958
        %3773 = vst [vmem:[%s939] sm:$0xff] %v3769
        %3774 = vst [vmem:[%s939 + $0x8] sm:$0xff] %v3770
        %3775 = vst [vmem:[%s939 + $0x10] sm:$0xff] %v3771
        %3776 = vst [vmem:[%s939 + $0x18] sm:$0xff] %v3772
        %s3777 = sand.u32 %s565, 1
        %s3778 = scalar_lea.sflag [#allocation4], %s3777
        %s3779 = sand.u32 %s565, 1
        %s3780 = smul.addr %s3779, 32
        %s3781 = scalar_lea.vmem [#allocation25], %s3780
        // Predicated region
        $region173: #{tpu_custom_call.1} parent=115 // pred_check
          %p3782 = pneg %p575
        $region174: #{tpu_custom_call.1} parent=115 // pred_check_branch
          %3784 = sbr.rel (%p3782) target = $region176
        $region175: #{tpu_custom_call.1} parent=115 // pred_region
          %s3785 = smul.u32 2, %s48
          %s3787 = ssub.s32 512, 512
          %3788 = vsyncadd %s3778, %s3787
          %s3789 = smul.addr %s3785, 2
          %s3790 = smul.addr %s3789, 128
          %s3791 = scalar_lea.hbm %s24, %s3790
          %s3792 = sshll.u32 %s3781, 4
          %s3793 = int_to_ptr.vmem [resolvable:$true] %s3792
          %3798 = dma.vmem_to_hbm [thread:$0]  %s3793, 512, %s3791, %s3778, 256, 256, 16
        $region176: #{tpu_custom_call.1} parent=115 // pred_fallthru
          _
      $region116: #{tpu_custom_call.1} parent=5 // pred_fallthru
        _
      %p3799 = scmp.le.s32.totalorder 2, %s43
      // Predicated region
      $region177: #{tpu_custom_call.1} parent=5 // pred_check
        %p3800 = pneg %p3799
      $region178: #{tpu_custom_call.1} parent=5 // pred_check_branch
        %3802 = sbr.rel (%p3800) target = $region180
      $region179: #{tpu_custom_call.1} parent=5 // pred_region
        %s3803 = ssub.s32 %s43, 2
        // Predicated region
        $region181: #{tpu_custom_call.1} parent=179 // pred_check
          %p3804 = pneg %p581
        $region182: #{tpu_custom_call.1} parent=179 // pred_check_branch
          %3806 = sbr.rel (%p3804) target = $region184
        $region183: #{tpu_custom_call.1} parent=179 // pred_region
          %s3807 = sand.u32 %s566, 1
          %s3808 = scalar_lea.sflag [#allocation4], %s3807
          %s3809 = sand.u32 %s566, 1
          %s3810 = smul.addr %s3809, 32
          %s3811 = scalar_lea.vmem [#allocation25], %s3810
          %3812 = dma.done %s3808, 512
        $region184: #{tpu_custom_call.1} parent=179 // pred_fallthru
          _
      $region180: #{tpu_custom_call.1} parent=5 // pred_fallthru
        _
    $region6: #{tpu_custom_call.1} parent=1 // loop_footer
      %s47 = sadd.s32 1, %s43
    $region7: #{tpu_custom_call.1} parent=1 // loop_footer_branch
      %42 = sbr.rel target = $region3
    $region8: #{tpu_custom_call.1} parent=1 // loop_exit
      _
    %3813 = vsyncpa [#allocation3], 1
    %s3814 = scalar_lea.sflag [#allocation3], 1
    %3815 = vsyncpa %s3814, 1
    %3816 = vsyncpa [#allocation6], 1
    %3817 = vsyncpa [#allocation9], 1
    %3818 = vsyncpa [#allocation12], 1
    %3819 = vsyncpa [#allocation15], 1
    %3820 = vsyncpa [#allocation18], 1
    %3821 = vsyncpa [#allocation21], 1
    %3822 = vsyncpa [#allocation24], 1
    %3823 = vsyncpa [#allocation4], 1
    %s3824 = scalar_lea.sflag [#allocation4], 1
    %3825 = vsyncpa %s3824, 1

// kernel: tpu_custom_call.1
$region0: #{tpu_custom_call.1}
  #allocation0 [shape = 'u32[]', space=smem, size = 0x4, offset = 0x4, fixed_abs, tag = 'smem constant byte address 0x4 - core index']
  #allocation1 [shape = 'u32[144,128]{1,0:T(1,128)}', space=vmem, size = 0x12000, scoped, tag = 'internal scratch']
  %s0 = inlined_call_operand.hbm [shape: f32[32,256], index: 0, kind: input, shape index: {}]
  %s1 = inlined_call_operand.hbm [shape: f32[1,256], index: 1, kind: input, shape index: {}]
  %s2 = inlined_call_operand.hbm [shape: f32[1,256], index: 2, kind: input, shape index: {}]
  %s3 = inlined_call_operand.hbm [shape: f32[1,256], index: 3, kind: input, shape index: {}]
  %s4 = inlined_call_operand.hbm [shape: bf16[256,512], index: 4, kind: input, shape index: {}]
  %s5 = inlined_call_operand.vmem [shape: f32[1,512], index: 5, kind: input, shape index: {}]
  %s6 = inlined_call_operand.hbm [shape: bf16[512,256], index: 6, kind: input, shape index: {}]
  %s7 = inlined_call_operand.vmem [shape: f32[1,256], index: 7, kind: input, shape index: {}]
  %s8 = inlined_call_operand.hbm [shape: bf16[256,128], index: 8, kind: input, shape index: {}]
  %s9 = inlined_call_operand.vmem [shape: f32[1,128], index: 9, kind: input, shape index: {}]
  %s10 = inlined_call_operand.hbm [shape: bf16[128,128], index: 10, kind: input, shape index: {}]
  %s11 = inlined_call_operand.vmem [shape: f32[1,128], index: 11, kind: input, shape index: {}]
  %s12 = inlined_call_operand.hbm [shape: bf16[128,128], index: 12, kind: input, shape index: {}]
  %s13 = inlined_call_operand.vmem [shape: f32[1,128], index: 13, kind: input, shape index: {}]
  %s14 = inlined_call_operand.hbm [shape: bf16[128,128], index: 14, kind: input, shape index: {}]
  %s15 = inlined_call_operand.vmem [shape: f32[1,128], index: 15, kind: input, shape index: {}]
  %s16 = inlined_call_operand.hbm [shape: bf16[128,128], index: 16, kind: input, shape index: {}]
  %s17 = inlined_call_operand.vmem [shape: f32[1,128], index: 17, kind: input, shape index: {}]
  %s18 = inlined_call_operand.hbm [shape: bf16[128,256], index: 18, kind: input, shape index: {}]
  %s19 = inlined_call_operand.vmem [shape: f32[1,256], index: 19, kind: input, shape index: {}]
  %s20 = inlined_call_operand.hbm [shape: bf16[256,512], index: 20, kind: input, shape index: {}]
  %s21 = inlined_call_operand.vmem [shape: f32[1,512], index: 21, kind: input, shape index: {}]
  %s22 = inlined_call_operand.hbm [shape: bf16[512,256], index: 22, kind: input, shape index: {}]
  %s23 = inlined_call_operand.vmem [shape: f32[1,256], index: 23, kind: input, shape index: {}]
  %s24 = inlined_call_operand.hbm [shape: f32[32,256], index: 24, kind: output, shape index: {}]
  %s25 = sld [smem:[#allocation0]]
  $region185: #{tpu_custom_call.1} parent=0
    _
  %s27 = ssub.s32 1, %s25
  %s28 = scalar_select 0, %s27, %s25
  $region1: #{tpu_custom_call.1} parent=0
    #allocation2 [shape = 'u8[32768]{0}', space=vmem, size = 0x8000, scoped, tag = 'input window, operand 0']
    #allocation3 [shape = 's32[2]{0}', space=sflag, size = 0x8, scoped, tag = 'scoped memory for tpu_custom_call.1']
    #allocation4 [shape = 's32[2]{0}', space=sflag, size = 0x8, scoped, tag = 'scoped memory for tpu_custom_call.1']
    #allocation5 [shape = 'u8[1024]{0}', space=vmem, size = 0x400, scoped, tag = 'input window, operand 1, single buffered']
    #allocation6 [shape = 's32[1]{0}', space=sflag, size = 0x4, scoped, tag = 'scoped memory for tpu_custom_call.1']
    #allocation7 [shape = 'u8[1024]{0}', space=vmem, size = 0x400, scoped, tag = 'input window, operand 2, single buffered']
    #allocation8 [shape = 'u8[1024]{0}', space=vmem, size = 0x400, scoped, tag = 'input window, operand 3, single buffered']
    #allocation9 [shape = 's32[1]{0}', space=sflag, size = 0x4, scoped, tag = 'scoped memory for tpu_custom_call.1']
    #allocation10 [shape = 'u8[262144]{0}', space=vmem, size = 0x40000, scoped, tag = 'input window, operand 4, single buffered']
    #allocation11 [shape = 'u8[262144]{0}', space=vmem, size = 0x40000, scoped, tag = 'input window, operand 6, single buffered']
    #allocation12 [shape = 's32[1]{0}', space=sflag, size = 0x4, scoped, tag = 'scoped memory for tpu_custom_call.1']
    #allocation13 [shape = 'u8[65536]{0}', space=vmem, size = 0x10000, scoped, tag = 'input window, operand 8, single buffered']
    #allocation14 [shape = 'u8[32768]{0}', space=vmem, size = 0x8000, scoped, tag = 'input window, operand 10, single buffered']
    #allocation15 [shape = 's32[1]{0}', space=sflag, size = 0x4, scoped, tag = 'scoped memory for tpu_custom_call.1']
    #allocation16 [shape = 'u8[32768]{0}', space=vmem, size = 0x8000, scoped, tag = 'input window, operand 12, single buffered']
    #allocation17 [shape = 'u8[32768]{0}', space=vmem, size = 0x8000, scoped, tag = 'input window, operand 14, single buffered']
    #allocation18 [shape = 's32[1]{0}', space=sflag, size = 0x4, scoped, tag = 'scoped memory for tpu_custom_call.1']
    #allocation19 [shape = 'u8[32768]{0}', space=vmem, size = 0x8000, scoped, tag = 'input window, operand 16, single buffered']
    #allocation20 [shape = 'u8[65536]{0}', space=vmem, size = 0x10000, scoped, tag = 'input window, operand 18, single buffered']
    #allocation21 [shape = 's32[1]{0}', space=sflag, size = 0x4, scoped, tag = 'scoped memory for tpu_custom_call.1']
    #allocation22 [shape = 'u8[262144]{0}', space=vmem, size = 0x40000, scoped, tag = 'input window, operand 20, single buffered']
    #allocation23 [shape = 'u8[262144]{0}', space=vmem, size = 0x40000, scoped, tag = 'input window, operand 22, single buffered']
    #allocation24 [shape = 's32[1]{0}', space=sflag, size = 0x4, scoped, tag = 'scoped memory for tpu_custom_call.1']
    #allocation25 [shape = 'u8[32768]{0}', space=vmem, size = 0x8000, scoped, tag = 'output window, operand 0']
    %29 = vsyncpa [#allocation3], 0
    %s30 = scalar_lea.sflag [#allocation3], 1
    %31 = vsyncpa %s30, 0
    %32 = vsyncpa [#allocation6], 0
    %33 = vsyncpa [#allocation9], 0
    %34 = vsyncpa [#allocation12], 0
    %35 = vsyncpa [#allocation15], 0
    %36 = vsyncpa [#allocation18], 0
    %37 = vsyncpa [#allocation21], 0
    %38 = vsyncpa [#allocation24], 0
    %39 = vsyncpa [#allocation4], 0
    %s40 = scalar_lea.sflag [#allocation4], 1
    %41 = vsyncpa %s40, 0
    loop: start=0, step=1, limit=4
    $region2: #{tpu_custom_call.1} parent=1 // loop_pre_header
      _
    $region3: #{tpu_custom_call.1} parent=1 // loop_header
      %s43 = sphi 0, %s47
      %p44 = scmp.ge.s32.totalorder %s43, 4
      %s53 = sphi 0, %s55
      %s56 = sphi 0, %s53
      %s57 = sphi 0, %s56
      %s73 = sphi 0, %s57
      %s77 = sphi 0, %s77
      %s79 = sphi 0, %s77
      %s80 = sphi 0, %s79
      %s94 = sphi 0, %s80
      %s98 = sphi 0, %s98
      %s100 = sphi 0, %s98
      %s101 = sphi 0, %s100
      %s115 = sphi 0, %s101
      %s119 = sphi 0, %s119
      %s121 = sphi 0, %s119
      %s122 = sphi 0, %s121
      %s136 = sphi 0, %s122
      %s140 = sphi 0, %s140
      %s142 = sphi 0, %s140
      %s143 = sphi 0, %s142
      %s157 = sphi 0, %s143
      %s161 = sphi 0, %s161
      %s163 = sphi 0, %s161
      %s164 = sphi 0, %s163
      %s178 = sphi 0, %s164
      %s182 = sphi 0, %s182
      %s184 = sphi 0, %s182
      %s185 = sphi 0, %s184
      %s199 = sphi 0, %s185
      %s203 = sphi 0, %s203
      %s205 = sphi 0, %s203
      %s206 = sphi 0, %s205
      %s220 = sphi 0, %s206
      %s224 = sphi 0, %s224
      %s226 = sphi 0, %s224
      %s227 = sphi 0, %s226
      %s241 = sphi 0, %s227
      %s245 = sphi 0, %s245
      %s247 = sphi 0, %s245
      %s248 = sphi 0, %s247
      %s262 = sphi 0, %s248
      %s266 = sphi 0, %s266
      %s268 = sphi 0, %s266
      %s269 = sphi 0, %s268
      %s283 = sphi 0, %s269
      %s287 = sphi 0, %s287
      %s289 = sphi 0, %s287
      %s290 = sphi 0, %s289
      %s304 = sphi 0, %s290
      %s308 = sphi 0, %s308
      %s310 = sphi 0, %s308
      %s311 = sphi 0, %s310
      %s325 = sphi 0, %s311
      %s329 = sphi 0, %s329
      %s331 = sphi 0, %s329
      %s332 = sphi 0, %s331
      %s346 = sphi 0, %s332
      %s350 = sphi 0, %s350
      %s352 = sphi 0, %s350
      %s353 = sphi 0, %s352
      %s367 = sphi 0, %s353
      %s371 = sphi 0, %s371
      %s373 = sphi 0, %s371
      %s374 = sphi 0, %s373
      %s388 = sphi 0, %s374
      %s392 = sphi 0, %s392
      %s394 = sphi 0, %s392
      %s395 = sphi 0, %s394
      %s409 = sphi 0, %s395
      %s413 = sphi 0, %s413
      %s415 = sphi 0, %s413
      %s416 = sphi 0, %s415
      %s430 = sphi 0, %s416
      %s434 = sphi 0, %s434
      %s436 = sphi 0, %s434
      %s437 = sphi 0, %s436
      %s451 = sphi 0, %s437
      %s455 = sphi 0, %s455
      %s457 = sphi 0, %s455
      %s458 = sphi 0, %s457
      %s472 = sphi 0, %s458
      %s476 = sphi 0, %s476
      %s478 = sphi 0, %s476
      %s479 = sphi 0, %s478
      %s493 = sphi 0, %s479
      %s497 = sphi 0, %s497
      %s499 = sphi 0, %s497
      %s500 = sphi 0, %s499
      %s514 = sphi 0, %s500
      %s518 = sphi 0, %s518
      %s520 = sphi 0, %s518
      %s521 = sphi 0, %s520
      %s535 = sphi 0, %s521
      %s539 = sphi 0, %s539
      %s541 = sphi 0, %s539
      %s542 = sphi 0, %s541
      %s556 = sphi 0, %s542
      %s562 = sphi 0, %s564
      %s565 = sphi 0, %s562
      %s566 = sphi 0, %s565
      %s582 = sphi 0, %s566
    $region4: #{tpu_custom_call.1} parent=1 // loop_header_branch
      %46 = sbr.rel (%p44) target = $region8
    $region5: #{tpu_custom_call.1} parent=1 // loop_body
      %s48 = ssub.s32 %s43, 1
      %s49 = ssub.s32 %s43, 2
      %s50 = sadd.s32 %s43, 1
      %s51 = ssub.s32 %s43, %s50
      %p52 = scmp.eq.s32.totalorder %s51, 0
      %s54 = sadd.s32 %s53, 1
      %s55 = scalar_select %p52, %s53, %s54
      %p58 = pneg %p52
      %p59 = scmp.eq.s32.totalorder %s43, 1
      %p60 = por %p58, %p59
      %p61 = scmp.ne.s32.totalorder %s53, %s56
      %p62 = scmp.eq.s32.totalorder %s43, 0
      %p63 = por %p61, %p62
      %p64 = scmp.ne.s32.totalorder %s53, %s56
      %p65 = scmp.eq.s32.totalorder %s48, 1
      %p66 = por %p64, %p65
      %p67 = scmp.ne.s32.totalorder %s56, %s57
      %p68 = scmp.eq.s32.totalorder %s48, 0
      %p69 = por %p67, %p68
      %p70 = scmp.ne.s32.totalorder %s56, %s57
      %p71 = scmp.eq.s32.totalorder %s49, 1
      %p72 = por %p70, %p71
      %p74 = scmp.ne.s32.totalorder %s57, %s73
      %p75 = scmp.eq.s32.totalorder %s49, 0
      %p76 = por %p74, %p75
      %s78 = sadd.s32 %s77, 1
      %p81 = scmp.eq.s32.totalorder %s43, 1
      %p82 = scmp.ne.s32.totalorder %s77, %s79
      %p83 = scmp.eq.s32.totalorder %s43, 0
      %p84 = por %p82, %p83
      %p85 = scmp.ne.s32.totalorder %s77, %s79
      %p86 = scmp.eq.s32.totalorder %s48, 1
      %p87 = por %p85, %p86
      %p88 = scmp.ne.s32.totalorder %s79, %s80
      %p89 = scmp.eq.s32.totalorder %s48, 0
      %p90 = por %p88, %p89
      %p91 = scmp.ne.s32.totalorder %s79, %s80
      %p92 = scmp.eq.s32.totalorder %s49, 1
      %p93 = por %p91, %p92
      %p95 = scmp.ne.s32.totalorder %s80, %s94
      %p96 = scmp.eq.s32.totalorder %s49, 0
      %p97 = por %p95, %p96
      %s99 = sadd.s32 %s98, 1
      %p102 = scmp.eq.s32.totalorder %s43, 1
      %p103 = scmp.ne.s32.totalorder %s98, %s100
      %p104 = scmp.eq.s32.totalorder %s43, 0
      %p105 = por %p103, %p104
      %p106 = scmp.ne.s32.totalorder %s98, %s100
      %p107 = scmp.eq.s32.totalorder %s48, 1
      %p108 = por %p106, %p107
      %p109 = scmp.ne.s32.totalorder %s100, %s101
      %p110 = scmp.eq.s32.totalorder %s48, 0
      %p111 = por %p109, %p110
      %p112 = scmp.ne.s32.totalorder %s100, %s101
      %p113 = scmp.eq.s32.totalorder %s49, 1
      %p114 = por %p112, %p113
      %p116 = scmp.ne.s32.totalorder %s101, %s115
      %p117 = scmp.eq.s32.totalorder %s49, 0
      %p118 = por %p116, %p117
      %s120 = sadd.s32 %s119, 1
      %p123 = scmp.eq.s32.totalorder %s43, 1
      %p124 = scmp.ne.s32.totalorder %s119, %s121
      %p125 = scmp.eq.s32.totalorder %s43, 0
      %p126 = por %p124, %p125
      %p127 = scmp.ne.s32.totalorder %s119, %s121
      %p128 = scmp.eq.s32.totalorder %s48, 1
      %p129 = por %p127, %p128
      %p130 = scmp.ne.s32.totalorder %s121, %s122
      %p131 = scmp.eq.s32.totalorder %s48, 0
      %p132 = por %p130, %p131
      %p133 = scmp.ne.s32.totalorder %s121, %s122
      %p134 = scmp.eq.s32.totalorder %s49, 1
      %p135 = por %p133, %p134
      %p137 = scmp.ne.s32.totalorder %s122, %s136
      %p138 = scmp.eq.s32.totalorder %s49, 0
      %p139 = por %p137, %p138
      %s141 = sadd.s32 %s140, 1
      %p144 = scmp.eq.s32.totalorder %s43, 1
      %p145 = scmp.ne.s32.totalorder %s140, %s142
      %p146 = scmp.eq.s32.totalorder %s43, 0
      %p147 = por %p145, %p146
      %p148 = scmp.ne.s32.totalorder %s140, %s142
      %p149 = scmp.eq.s32.totalorder %s48, 1
      %p150 = por %p148, %p149
      %p151 = scmp.ne.s32.totalorder %s142, %s143
      %p152 = scmp.eq.s32.totalorder %s48, 0
      %p153 = por %p151, %p152
      %p154 = scmp.ne.s32.totalorder %s142, %s143
      %p155 = scmp.eq.s32.totalorder %s49, 1
      %p156 = por %p154, %p155
      %p158 = scmp.ne.s32.totalorder %s143, %s157
      %p159 = scmp.eq.s32.totalorder %s49, 0
      %p160 = por %p158, %p159
      %s162 = sadd.s32 %s161, 1
      %p165 = scmp.eq.s32.totalorder %s43, 1
      %p166 = scmp.ne.s32.totalorder %s161, %s163
      %p167 = scmp.eq.s32.totalorder %s43, 0
      %p168 = por %p166, %p167
      %p169 = scmp.ne.s32.totalorder %s161, %s163
      %p170 = scmp.eq.s32.totalorder %s48, 1
      %p171 = por %p169, %p170
      %p172 = scmp.ne.s32.totalorder %s163, %s164
      %p173 = scmp.eq.s32.totalorder %s48, 0
      %p174 = por %p172, %p173
      %p175 = scmp.ne.s32.totalorder %s163, %s164
      %p176 = scmp.eq.s32.totalorder %s49, 1
      %p177 = por %p175, %p176
      %p179 = scmp.ne.s32.totalorder %s164, %s178
      %p180 = scmp.eq.s32.totalorder %s49, 0
      %p181 = por %p179, %p180
      %s183 = sadd.s32 %s182, 1
      %p186 = scmp.eq.s32.totalorder %s43, 1
      %p187 = scmp.ne.s32.totalorder %s182, %s184
      %p188 = scmp.eq.s32.totalorder %s43, 0
      %p189 = por %p187, %p188
      %p190 = scmp.ne.s32.totalorder %s182, %s184
      %p191 = scmp.eq.s32.totalorder %s48, 1
      %p192 = por %p190, %p191
      %p193 = scmp.ne.s32.totalorder %s184, %s185
      %p194 = scmp.eq.s32.totalorder %s48, 0
      %p195 = por %p193, %p194
      %p196 = scmp.ne.s32.totalorder %s184, %s185
      %p197 = scmp.eq.s32.totalorder %s49, 1
      %p198 = por %p196, %p197
      %p200 = scmp.ne.s32.totalorder %s185, %s199
      %p201 = scmp.eq.s32.totalorder %s49, 0
      %p202 = por %p200, %p201
      %s204 = sadd.s32 %s203, 1
      %p207 = scmp.eq.s32.totalorder %s43, 1
      %p208 = scmp.ne.s32.totalorder %s203, %s205
      %p209 = scmp.eq.s32.totalorder %s43, 0
      %p210 = por %p208, %p209
      %p211 = scmp.ne.s32.totalorder %s203, %s205
      %p212 = scmp.eq.s32.totalorder %s48, 1
      %p213 = por %p211, %p212
      %p214 = scmp.ne.s32.totalorder %s205, %s206
      %p215 = scmp.eq.s32.totalorder %s48, 0
      %p216 = por %p214, %p215
      %p217 = scmp.ne.s32.totalorder %s205, %s206
      %p218 = scmp.eq.s32.totalorder %s49, 1
      %p219 = por %p217, %p218
      %p221 = scmp.ne.s32.totalorder %s206, %s220
      %p222 = scmp.eq.s32.totalorder %s49, 0
      %p223 = por %p221, %p222
      %s225 = sadd.s32 %s224, 1
      %p228 = scmp.eq.s32.totalorder %s43, 1
      %p229 = scmp.ne.s32.totalorder %s224, %s226
      %p230 = scmp.eq.s32.totalorder %s43, 0
      %p231 = por %p229, %p230
      %p232 = scmp.ne.s32.totalorder %s224, %s226
      %p233 = scmp.eq.s32.totalorder %s48, 1
      %p234 = por %p232, %p233
      %p235 = scmp.ne.s32.totalorder %s226, %s227
      %p236 = scmp.eq.s32.totalorder %s48, 0
      %p237 = por %p235, %p236
      %p238 = scmp.ne.s32.totalorder %s226, %s227
      %p239 = scmp.eq.s32.totalorder %s49, 1
      %p240 = por %p238, %p239
      %p242 = scmp.ne.s32.totalorder %s227, %s241
      %p243 = scmp.eq.s32.totalorder %s49, 0
      %p244 = por %p242, %p243
      %s246 = sadd.s32 %s245, 1
      %p249 = scmp.eq.s32.totalorder %s43, 1
      %p250 = scmp.ne.s32.totalorder %s245, %s247
      %p251 = scmp.eq.s32.totalorder %s43, 0
      %p252 = por %p250, %p251
      %p253 = scmp.ne.s32.totalorder %s245, %s247
      %p254 = scmp.eq.s32.totalorder %s48, 1
      %p255 = por %p253, %p254
      %p256 = scmp.ne.s32.totalorder %s247, %s248
      %p257 = scmp.eq.s32.totalorder %s48, 0
      %p258 = por %p256, %p257
      %p259 = scmp.ne.s32.totalorder %s247, %s248
      %p260 = scmp.eq.s32.totalorder %s49, 1
      %p261 = por %p259, %p260
      %p263 = scmp.ne.s32.totalorder %s248, %s262
      %p264 = scmp.eq.s32.totalorder %s49, 0
      %p265 = por %p263, %p264
      %s267 = sadd.s32 %s266, 1
      %p270 = scmp.eq.s32.totalorder %s43, 1
      %p271 = scmp.ne.s32.totalorder %s266, %s268
      %p272 = scmp.eq.s32.totalorder %s43, 0
      %p273 = por %p271, %p272
      %p274 = scmp.ne.s32.totalorder %s266, %s268
      %p275 = scmp.eq.s32.totalorder %s48, 1
      %p276 = por %p274, %p275
      %p277 = scmp.ne.s32.totalorder %s268, %s269
      %p278 = scmp.eq.s32.totalorder %s48, 0
      %p279 = por %p277, %p278
      %p280 = scmp.ne.s32.totalorder %s268, %s269
      %p281 = scmp.eq.s32.totalorder %s49, 1
      %p282 = por %p280, %p281
      %p284 = scmp.ne.s32.totalorder %s269, %s283
      %p285 = scmp.eq.s32.totalorder %s49, 0
      %p286 = por %p284, %p285
      %s288 = sadd.s32 %s287, 1
      %p291 = scmp.eq.s32.totalorder %s43, 1
      %p292 = scmp.ne.s32.totalorder %s287, %s289
      %p293 = scmp.eq.s32.totalorder %s43, 0
      %p294 = por %p292, %p293
      %p295 = scmp.ne.s32.totalorder %s287, %s289
      %p296 = scmp.eq.s32.totalorder %s48, 1
      %p297 = por %p295, %p296
      %p298 = scmp.ne.s32.totalorder %s289, %s290
      %p299 = scmp.eq.s32.totalorder %s48, 0
      %p300 = por %p298, %p299
      %p301 = scmp.ne.s32.totalorder %s289, %s290
      %p302 = scmp.eq.s32.totalorder %s49, 1
      %p303 = por %p301, %p302
      %p305 = scmp.ne.s32.totalorder %s290, %s304
      %p306 = scmp.eq.s32.totalorder %s49, 0
      %p307 = por %p305, %p306
      %s309 = sadd.s32 %s308, 1
      %p312 = scmp.eq.s32.totalorder %s43, 1
      %p313 = scmp.ne.s32.totalorder %s308, %s310
      %p314 = scmp.eq.s32.totalorder %s43, 0
      %p315 = por %p313, %p314
      %p316 = scmp.ne.s32.totalorder %s308, %s310
      %p317 = scmp.eq.s32.totalorder %s48, 1
      %p318 = por %p316, %p317
      %p319 = scmp.ne.s32.totalorder %s310, %s311
      %p320 = scmp.eq.s32.totalorder %s48, 0
      %p321 = por %p319, %p320
      %p322 = scmp.ne.s32.totalorder %s310, %s311
      %p323 = scmp.eq.s32.totalorder %s49, 1
      %p324 = por %p322, %p323
      %p326 = scmp.ne.s32.totalorder %s311, %s325
      %p327 = scmp.eq.s32.totalorder %s49, 0
      %p328 = por %p326, %p327
      %s330 = sadd.s32 %s329, 1
      %p333 = scmp.eq.s32.totalorder %s43, 1
      %p334 = scmp.ne.s32.totalorder %s329, %s331
      %p335 = scmp.eq.s32.totalorder %s43, 0
      %p336 = por %p334, %p335
      %p337 = scmp.ne.s32.totalorder %s329, %s331
      %p338 = scmp.eq.s32.totalorder %s48, 1
      %p339 = por %p337, %p338
      %p340 = scmp.ne.s32.totalorder %s331, %s332
      %p341 = scmp.eq.s32.totalorder %s48, 0
      %p342 = por %p340, %p341
      %p343 = scmp.ne.s32.totalorder %s331, %s332
      %p344 = scmp.eq.s32.totalorder %s49, 1
      %p345 = por %p343, %p344
      %p347 = scmp.ne.s32.totalorder %s332, %s346
      %p348 = scmp.eq.s32.totalorder %s49, 0
      %p349 = por %p347, %p348
      %s351 = sadd.s32 %s350, 1
      %p354 = scmp.eq.s32.totalorder %s43, 1
      %p355 = scmp.ne.s32.totalorder %s350, %s352
      %p356 = scmp.eq.s32.totalorder %s43, 0
      %p357 = por %p355, %p356
      %p358 = scmp.ne.s32.totalorder %s350, %s352
      %p359 = scmp.eq.s32.totalorder %s48, 1
      %p360 = por %p358, %p359
      %p361 = scmp.ne.s32.totalorder %s352, %s353
      %p362 = scmp.eq.s32.totalorder %s48, 0
      %p363 = por %p361, %p362
      %p364 = scmp.ne.s32.totalorder %s352, %s353
      %p365 = scmp.eq.s32.totalorder %s49, 1
      %p366 = por %p364, %p365
      %p368 = scmp.ne.s32.totalorder %s353, %s367
      %p369 = scmp.eq.s32.totalorder %s49, 0
      %p370 = por %p368, %p369
      %s372 = sadd.s32 %s371, 1
      %p375 = scmp.eq.s32.totalorder %s43, 1
      %p376 = scmp.ne.s32.totalorder %s371, %s373
      %p377 = scmp.eq.s32.totalorder %s43, 0
      %p378 = por %p376, %p377
      %p379 = scmp.ne.s32.totalorder %s371, %s373
      %p380 = scmp.eq.s32.totalorder %s48, 1
      %p381 = por %p379, %p380
      %p382 = scmp.ne.s32.totalorder %s373, %s374
      %p383 = scmp.eq.s32.totalorder %s48, 0
      %p384 = por %p382, %p383
      %p385 = scmp.ne.s32.totalorder %s373, %s374
      %p386 = scmp.eq.s32.totalorder %s49, 1
      %p387 = por %p385, %p386
      %p389 = scmp.ne.s32.totalorder %s374, %s388
      %p390 = scmp.eq.s32.totalorder %s49, 0
      %p391 = por %p389, %p390
      %s393 = sadd.s32 %s392, 1
      %p396 = scmp.eq.s32.totalorder %s43, 1
      %p397 = scmp.ne.s32.totalorder %s392, %s394
      %p398 = scmp.eq.s32.totalorder %s43, 0
      %p399 = por %p397, %p398
      %p400 = scmp.ne.s32.totalorder %s392, %s394
      %p401 = scmp.eq.s32.totalorder %s48, 1
      %p402 = por %p400, %p401
      %p403 = scmp.ne.s32.totalorder %s394, %s395
      %p404 = scmp.eq.s32.totalorder %s48, 0
      %p405 = por %p403, %p404
      %p406 = scmp.ne.s32.totalorder %s394, %s395
      %p407 = scmp.eq.s32.totalorder %s49, 1
      %p408 = por %p406, %p407
      %p410 = scmp.ne.s32.totalorder %s395, %s409
      %p411 = scmp.eq.s32.totalorder %s49, 0
      %p412 = por %p410, %p411
      %s414 = sadd.s32 %s413, 1
      %p417 = scmp.eq.s32.totalorder %s43, 1
      %p418 = scmp.ne.s32.totalorder %s413, %s415
      %p419 = scmp.eq.s32.totalorder %s43, 0
      %p420 = por %p418, %p419
      %p421 = scmp.ne.s32.totalorder %s413, %s415
      %p422 = scmp.eq.s32.totalorder %s48, 1
      %p423 = por %p421, %p422
      %p424 = scmp.ne.s32.totalorder %s415, %s416
      %p425 = scmp.eq.s32.totalorder %s48, 0
      %p426 = por %p424, %p425
      %p427 = scmp.ne.s32.totalorder %s415, %s416
      %p428 = scmp.eq.s32.totalorder %s49, 1
      %p429 = por %p427, %p428
      %p431 = scmp.ne.s32.totalorder %s416, %s430
      %p432 = scmp.eq.s32.totalorder %s49, 0
      %p433 = por %p431, %p432
      %s435 = sadd.s32 %s434, 1
      %p438 = scmp.eq.s32.totalorder %s43, 1
      %p439 = scmp.ne.s32.totalorder %s434, %s436
      %p440 = scmp.eq.s32.totalorder %s43, 0
      %p441 = por %p439, %p440
      %p442 = scmp.ne.s32.totalorder %s434, %s436
      %p443 = scmp.eq.s32.totalorder %s48, 1
      %p444 = por %p442, %p443
      %p445 = scmp.ne.s32.totalorder %s436, %s437
      %p446 = scmp.eq.s32.totalorder %s48, 0
      %p447 = por %p445, %p446
      %p448 = scmp.ne.s32.totalorder %s436, %s437
      %p449 = scmp.eq.s32.totalorder %s49, 1
      %p450 = por %p448, %p449
      %p452 = scmp.ne.s32.totalorder %s437, %s451
      %p453 = scmp.eq.s32.totalorder %s49, 0
      %p454 = por %p452, %p453
      %s456 = sadd.s32 %s455, 1
      %p459 = scmp.eq.s32.totalorder %s43, 1
      %p460 = scmp.ne.s32.totalorder %s455, %s457
      %p461 = scmp.eq.s32.totalorder %s43, 0
      %p462 = por %p460, %p461
      %p463 = scmp.ne.s32.totalorder %s455, %s457
      %p464 = scmp.eq.s32.totalorder %s48, 1
      %p465 = por %p463, %p464
      %p466 = scmp.ne.s32.totalorder %s457, %s458
      %p467 = scmp.eq.s32.totalorder %s48, 0
      %p468 = por %p466, %p467
      %p469 = scmp.ne.s32.totalorder %s457, %s458
      %p470 = scmp.eq.s32.totalorder %s49, 1
      %p471 = por %p469, %p470
      %p473 = scmp.ne.s32.totalorder %s458, %s472
      %p474 = scmp.eq.s32.totalorder %s49, 0
      %p475 = por %p473, %p474
      %s477 = sadd.s32 %s476, 1
      %p480 = scmp.eq.s32.totalorder %s43, 1
      %p481 = scmp.ne.s32.totalorder %s476, %s478
      %p482 = scmp.eq.s32.totalorder %s43, 0
      %p483 = por %p481, %p482
      %p484 = scmp.ne.s32.totalorder %s476, %s478
      %p485 = scmp.eq.s32.totalorder %s48, 1
      %p486 = por %p484, %p485
      %p487 = scmp.ne.s32.totalorder %s478, %s479
      %p488 = scmp.eq.s32.totalorder %s48, 0
      %p489 = por %p487, %p488
      %p490 = scmp.ne.s32.totalorder %s478, %s479
      %p491 = scmp.eq.s32.totalorder %s49, 1
      %p492 = por %p490, %p491
      %p494 = scmp.ne.s32.totalorder %s479, %s493
      %p495 = scmp.eq.s32.totalorder %s49, 0
      %p496 = por %p494, %p495
      %s498 = sadd.s32 %s497, 1
      %p501 = scmp.eq.s32.totalorder %s43, 1
      %p502 = scmp.ne.s32.totalorder %s497, %s499
      %p503 = scmp.eq.s32.totalorder %s43, 0
      %p504 = por %p502, %p503
      %p505 = scmp.ne.s32.totalorder %s497, %s499
      %p506 = scmp.eq.s32.totalorder %s48, 1
      %p507 = por %p505, %p506
      %p508 = scmp.ne.s32.totalorder %s499, %s500
      %p509 = scmp.eq.s32.totalorder %s48, 0
      %p510 = por %p508, %p509
      %p511 = scmp.ne.s32.totalorder %s499, %s500
      %p512 = scmp.eq.s32.totalorder %s49, 1
      %p513 = por %p511, %p512
      %p515 = scmp.ne.s32.totalorder %s500, %s514
      %p516 = scmp.eq.s32.totalorder %s49, 0
      %p517 = por %p515, %p516
      %s519 = sadd.s32 %s518, 1
      %p522 = scmp.eq.s32.totalorder %s43, 1
      %p523 = scmp.ne.s32.totalorder %s518, %s520
      %p524 = scmp.eq.s32.totalorder %s43, 0
      %p525 = por %p523, %p524
      %p526 = scmp.ne.s32.totalorder %s518, %s520
      %p527 = scmp.eq.s32.totalorder %s48, 1
      %p528 = por %p526, %p527
      %p529 = scmp.ne.s32.totalorder %s520, %s521
      %p530 = scmp.eq.s32.totalorder %s48, 0
      %p531 = por %p529, %p530
      %p532 = scmp.ne.s32.totalorder %s520, %s521
      %p533 = scmp.eq.s32.totalorder %s49, 1
      %p534 = por %p532, %p533
      %p536 = scmp.ne.s32.totalorder %s521, %s535
      %p537 = scmp.eq.s32.totalorder %s49, 0
      %p538 = por %p536, %p537
      %s540 = sadd.s32 %s539, 1
      %p543 = scmp.eq.s32.totalorder %s43, 1
      %p544 = scmp.ne.s32.totalorder %s539, %s541
      %p545 = scmp.eq.s32.totalorder %s43, 0
      %p546 = por %p544, %p545
      %p547 = scmp.ne.s32.totalorder %s539, %s541
      %p548 = scmp.eq.s32.totalorder %s48, 1
      %p549 = por %p547, %p548
      %p550 = scmp.ne.s32.totalorder %s541, %s542
      %p551 = scmp.eq.s32.totalorder %s48, 0
      %p552 = por %p550, %p551
      %p553 = scmp.ne.s32.totalorder %s541, %s542
      %p554 = scmp.eq.s32.totalorder %s49, 1
      %p555 = por %p553, %p554
      %p557 = scmp.ne.s32.totalorder %s542, %s556
      %p558 = scmp.eq.s32.totalorder %s49, 0
      %p559 = por %p557, %p558
      %s560 = ssub.s32 %s43, %s50
      %p561 = scmp.eq.s32.totalorder %s560, 0
      %s563 = sadd.s32 %s562, 1
      %s564 = scalar_select %p561, %s562, %s563
      %p567 = pneg %p561
      %p568 = scmp.eq.s32.totalorder %s43, 1
      %p569 = por %p567, %p568
      %p570 = scmp.ne.s32.totalorder %s562, %s565
      %p571 = scmp.eq.s32.totalorder %s43, 0
      %p572 = por %p570, %p571
      %p573 = scmp.ne.s32.totalorder %s562, %s565
      %p574 = scmp.eq.s32.totalorder %s48, 1
      %p575 = por %p573, %p574
      %p576 = scmp.ne.s32.totalorder %s565, %s566
      %p577 = scmp.eq.s32.totalorder %s48, 0
      %p578 = por %p576, %p577
      %p579 = scmp.ne.s32.totalorder %s565, %s566
      %p580 = scmp.eq.s32.totalorder %s49, 1
      %p581 = por %p579, %p580
      %p583 = scmp.ne.s32.totalorder %s566, %s582
      %p584 = scmp.eq.s32.totalorder %s49, 0
      %p585 = por %p583, %p584
      %p586 = scmp.le.s32.totalorder 1, %s43
      %p587 = scmp.lt.s32.totalorder %s43, 3
      %p588 = pnand %p586, %p587
      %p589 = pneg %p588
      // Predicated region
      $region9: #{tpu_custom_call.1} parent=5 // pred_check
        _
      $region10: #{tpu_custom_call.1} parent=5 // pred_check_branch
        %591 = sbr.rel (%p588) target = $region12
      $region11: #{tpu_custom_call.1} parent=5 // pred_region
        %s592 = ssub.s32 %s43, 1
        // Predicated region
        $region13: #{tpu_custom_call.1} parent=11 // pred_check
          %p593 = pneg %p90
        $region14: #{tpu_custom_call.1} parent=11 // pred_check_branch
          %595 = sbr.rel (%p593) target = $region16
        $region15: #{tpu_custom_call.1} parent=11 // pred_region
          %s597 = ssub.s32 32, 32
          %598 = vsyncadd [#allocation6], %s597
          %s600 = sshll.u32 [#allocation5], 4
          %s601 = int_to_ptr.vmem [resolvable:$true] %s600
          %603 = dma.hbm_to_vmem [thread:$0]  %s1, 32, %s601, [#allocation6]
        $region16: #{tpu_custom_call.1} parent=11 // pred_fallthru
          _
        // Predicated region
        $region17: #{tpu_custom_call.1} parent=11 // pred_check
          %p604 = pneg %p111
        $region18: #{tpu_custom_call.1} parent=11 // pred_check_branch
          %606 = sbr.rel (%p604) target = $region20
        $region19: #{tpu_custom_call.1} parent=11 // pred_region
          %s608 = ssub.s32 32, 32
          %609 = vsyncadd [#allocation6], %s608
          %s611 = sshll.u32 [#allocation7], 4
          %s612 = int_to_ptr.vmem [resolvable:$true] %s611
          %614 = dma.hbm_to_vmem [thread:$0]  %s2, 32, %s612, [#allocation6]
        $region20: #{tpu_custom_call.1} parent=11 // pred_fallthru
          _
        // Predicated region
        $region21: #{tpu_custom_call.1} parent=11 // pred_check
          %p615 = pneg %p132
        $region22: #{tpu_custom_call.1} parent=11 // pred_check_branch
          %617 = sbr.rel (%p615) target = $region24
        $region23: #{tpu_custom_call.1} parent=11 // pred_region
          %s619 = ssub.s32 32, 32
          %620 = vsyncadd [#allocation9], %s619
          %s622 = sshll.u32 [#allocation8], 4
          %s623 = int_to_ptr.vmem [resolvable:$true] %s622
          %625 = dma.hbm_to_vmem [thread:$0]  %s3, 32, %s623, [#allocation9]
        $region24: #{tpu_custom_call.1} parent=11 // pred_fallthru
          _
        // Predicated region
        $region25: #{tpu_custom_call.1} parent=11 // pred_check
          %p626 = pneg %p153
        $region26: #{tpu_custom_call.1} parent=11 // pred_check_branch
          %628 = sbr.rel (%p626) target = $region28
        $region27: #{tpu_custom_call.1} parent=11 // pred_region
          %s630 = ssub.s32 8192, 8192
          %631 = vsyncadd [#allocation9], %s630
          %s632 = sshll.u32 [#allocation10], 4
          %s633 = int_to_ptr.vmem [resolvable:$true] %s632
          %638 = dma.hbm_to_vmem [thread:$0]  %s4, 8192, %s633, [#allocation9], 256, 256, 16
        $region28: #{tpu_custom_call.1} parent=11 // pred_fallthru
          _
        // Predicated region
        $region29: #{tpu_custom_call.1} parent=11 // pred_check
          %p639 = pneg %p174
        $region30: #{tpu_custom_call.1} parent=11 // pred_check_branch
          %641 = sbr.rel (%p639) target = $region32
        $region31: #{tpu_custom_call.1} parent=11 // pred_region
          _
        $region32: #{tpu_custom_call.1} parent=11 // pred_fallthru
          _
        // Predicated region
        $region33: #{tpu_custom_call.1} parent=11 // pred_check
          %p642 = pneg %p195
        $region34: #{tpu_custom_call.1} parent=11 // pred_check_branch
          %644 = sbr.rel (%p642) target = $region36
        $region35: #{tpu_custom_call.1} parent=11 // pred_region
          %s646 = ssub.s32 8192, 8192
          %647 = vsyncadd [#allocation12], %s646
          %s648 = sshll.u32 [#allocation11], 4
          %s649 = int_to_ptr.vmem [resolvable:$true] %s648
          %654 = dma.hbm_to_vmem [thread:$0]  %s6, 8192, %s649, [#allocation12], 128, 128, 8
        $region36: #{tpu_custom_call.1} parent=11 // pred_fallthru
          _
        // Predicated region
        $region37: #{tpu_custom_call.1} parent=11 // pred_check
          %p655 = pneg %p216
        $region38: #{tpu_custom_call.1} parent=11 // pred_check_branch
          %657 = sbr.rel (%p655) target = $region40
        $region39: #{tpu_custom_call.1} parent=11 // pred_region
          _
        $region40: #{tpu_custom_call.1} parent=11 // pred_fallthru
          _
        // Predicated region
        $region41: #{tpu_custom_call.1} parent=11 // pred_check
          %p658 = pneg %p237
        $region42: #{tpu_custom_call.1} parent=11 // pred_check_branch
          %660 = sbr.rel (%p658) target = $region44
        $region43: #{tpu_custom_call.1} parent=11 // pred_region
          %s662 = ssub.s32 2048, 2048
          %663 = vsyncadd [#allocation12], %s662
          %s664 = sshll.u32 [#allocation13], 4
          %s665 = int_to_ptr.vmem [resolvable:$true] %s664
          %670 = dma.hbm_to_vmem [thread:$0]  %s8, 2048, %s665, [#allocation12], 64, 64, 4
        $region44: #{tpu_custom_call.1} parent=11 // pred_fallthru
          _
        // Predicated region
        $region45: #{tpu_custom_call.1} parent=11 // pred_check
          %p671 = pneg %p258
        $region46: #{tpu_custom_call.1} parent=11 // pred_check_branch
          %673 = sbr.rel (%p671) target = $region48
        $region47: #{tpu_custom_call.1} parent=11 // pred_region
          _
        $region48: #{tpu_custom_call.1} parent=11 // pred_fallthru
          _
        // Predicated region
        $region49: #{tpu_custom_call.1} parent=11 // pred_check
          %p674 = pneg %p279
        $region50: #{tpu_custom_call.1} parent=11 // pred_check_branch
          %676 = sbr.rel (%p674) target = $region52
        $region51: #{tpu_custom_call.1} parent=11 // pred_region
          %s678 = ssub.s32 1024, 1024
          %679 = vsyncadd [#allocation15], %s678
          %s680 = sshll.u32 [#allocation14], 4
          %s681 = int_to_ptr.vmem [resolvable:$true] %s680
          %686 = dma.hbm_to_vmem [thread:$0]  %s10, 1024, %s681, [#allocation15], 64, 64, 4
        $region52: #{tpu_custom_call.1} parent=11 // pred_fallthru
          _
        // Predicated region
        $region53: #{tpu_custom_call.1} parent=11 // pred_check
          %p687 = pneg %p300
        $region54: #{tpu_custom_call.1} parent=11 // pred_check_branch
          %689 = sbr.rel (%p687) target = $region56
        $region55: #{tpu_custom_call.1} parent=11 // pred_region
          _
        $region56: #{tpu_custom_call.1} parent=11 // pred_fallthru
          _
        // Predicated region
        $region57: #{tpu_custom_call.1} parent=11 // pred_check
          %p690 = pneg %p321
        $region58: #{tpu_custom_call.1} parent=11 // pred_check_branch
          %692 = sbr.rel (%p690) target = $region60
        $region59: #{tpu_custom_call.1} parent=11 // pred_region
          %s694 = ssub.s32 1024, 1024
          %695 = vsyncadd [#allocation15], %s694
          %s696 = sshll.u32 [#allocation16], 4
          %s697 = int_to_ptr.vmem [resolvable:$true] %s696
          %702 = dma.hbm_to_vmem [thread:$0]  %s12, 1024, %s697, [#allocation15], 64, 64, 4
        $region60: #{tpu_custom_call.1} parent=11 // pred_fallthru
          _
        // Predicated region
        $region61: #{tpu_custom_call.1} parent=11 // pred_check
          %p703 = pneg %p342
        $region62: #{tpu_custom_call.1} parent=11 // pred_check_branch
          %705 = sbr.rel (%p703) target = $region64
        $region63: #{tpu_custom_call.1} parent=11 // pred_region
          _
        $region64: #{tpu_custom_call.1} parent=11 // pred_fallthru
          _
        // Predicated region
        $region65: #{tpu_custom_call.1} parent=11 // pred_check
          %p706 = pneg %p363
        $region66: #{tpu_custom_call.1} parent=11 // pred_check_branch
          %708 = sbr.rel (%p706) target = $region68
        $region67: #{tpu_custom_call.1} parent=11 // pred_region
          %s710 = ssub.s32 1024, 1024
          %711 = vsyncadd [#allocation18], %s710
          %s712 = sshll.u32 [#allocation17], 4
          %s713 = int_to_ptr.vmem [resolvable:$true] %s712
          %718 = dma.hbm_to_vmem [thread:$0]  %s14, 1024, %s713, [#allocation18], 64, 64, 4
        $region68: #{tpu_custom_call.1} parent=11 // pred_fallthru
          _
        // Predicated region
        $region69: #{tpu_custom_call.1} parent=11 // pred_check
          %p719 = pneg %p384
        $region70: #{tpu_custom_call.1} parent=11 // pred_check_branch
          %721 = sbr.rel (%p719) target = $region72
        $region71: #{tpu_custom_call.1} parent=11 // pred_region
          _
        $region72: #{tpu_custom_call.1} parent=11 // pred_fallthru
          _
        // Predicated region
        $region73: #{tpu_custom_call.1} parent=11 // pred_check
          %p722 = pneg %p405
        $region74: #{tpu_custom_call.1} parent=11 // pred_check_branch
          %724 = sbr.rel (%p722) target = $region76
        $region75: #{tpu_custom_call.1} parent=11 // pred_region
          %s726 = ssub.s32 1024, 1024
          %727 = vsyncadd [#allocation18], %s726
          %s728 = sshll.u32 [#allocation19], 4
          %s729 = int_to_ptr.vmem [resolvable:$true] %s728
          %734 = dma.hbm_to_vmem [thread:$0]  %s16, 1024, %s729, [#allocation18], 64, 64, 4
        $region76: #{tpu_custom_call.1} parent=11 // pred_fallthru
          _
        // Predicated region
        $region77: #{tpu_custom_call.1} parent=11 // pred_check
          %p735 = pneg %p426
        $region78: #{tpu_custom_call.1} parent=11 // pred_check_branch
          %737 = sbr.rel (%p735) target = $region80
        $region79: #{tpu_custom_call.1} parent=11 // pred_region
          _
        $region80: #{tpu_custom_call.1} parent=11 // pred_fallthru
          _
        // Predicated region
        $region81: #{tpu_custom_call.1} parent=11 // pred_check
          %p738 = pneg %p447
        $region82: #{tpu_custom_call.1} parent=11 // pred_check_branch
          %740 = sbr.rel (%p738) target = $region84
        $region83: #{tpu_custom_call.1} parent=11 // pred_region
          %s742 = ssub.s32 2048, 2048
          %743 = vsyncadd [#allocation21], %s742
          %s744 = sshll.u32 [#allocation20], 4
          %s745 = int_to_ptr.vmem [resolvable:$true] %s744
          %750 = dma.hbm_to_vmem [thread:$0]  %s18, 2048, %s745, [#allocation21], 128, 128, 8
        $region84: #{tpu_custom_call.1} parent=11 // pred_fallthru
          _
        // Predicated region
        $region85: #{tpu_custom_call.1} parent=11 // pred_check
          %p751 = pneg %p468
        $region86: #{tpu_custom_call.1} parent=11 // pred_check_branch
          %753 = sbr.rel (%p751) target = $region88
        $region87: #{tpu_custom_call.1} parent=11 // pred_region
          _
        $region88: #{tpu_custom_call.1} parent=11 // pred_fallthru
          _
        // Predicated region
        $region89: #{tpu_custom_call.1} parent=11 // pred_check
          %p754 = pneg %p489
        $region90: #{tpu_custom_call.1} parent=11 // pred_check_branch
          %756 = sbr.rel (%p754) target = $region92
        $region91: #{tpu_custom_call.1} parent=11 // pred_region
          %s758 = ssub.s32 8192, 8192
          %759 = vsyncadd [#allocation21], %s758
          %s760 = sshll.u32 [#allocation22], 4
          %s761 = int_to_ptr.vmem [resolvable:$true] %s760
          %766 = dma.hbm_to_vmem [thread:$0]  %s20, 8192, %s761, [#allocation21], 256, 256, 16
        $region92: #{tpu_custom_call.1} parent=11 // pred_fallthru
          _
        // Predicated region
        $region93: #{tpu_custom_call.1} parent=11 // pred_check
          %p767 = pneg %p510
        $region94: #{tpu_custom_call.1} parent=11 // pred_check_branch
          %769 = sbr.rel (%p767) target = $region96
        $region95: #{tpu_custom_call.1} parent=11 // pred_region
          _
        $region96: #{tpu_custom_call.1} parent=11 // pred_fallthru
          _
        // Predicated region
        $region97: #{tpu_custom_call.1} parent=11 // pred_check
          %p770 = pneg %p531
        $region98: #{tpu_custom_call.1} parent=11 // pred_check_branch
          %772 = sbr.rel (%p770) target = $region100
        $region99: #{tpu_custom_call.1} parent=11 // pred_region
          %s774 = ssub.s32 8192, 8192
          %775 = vsyncadd [#allocation24], %s774
          %s776 = sshll.u32 [#allocation23], 4
          %s777 = int_to_ptr.vmem [resolvable:$true] %s776
          %782 = dma.hbm_to_vmem [thread:$0]  %s22, 8192, %s777, [#allocation24], 128, 128, 8
        $region100: #{tpu_custom_call.1} parent=11 // pred_fallthru
          _
        // Predicated region
        $region101: #{tpu_custom_call.1} parent=11 // pred_check
          %p783 = pneg %p552
        $region102: #{tpu_custom_call.1} parent=11 // pred_check_branch
          %785 = sbr.rel (%p783) target = $region104
        $region103: #{tpu_custom_call.1} parent=11 // pred_region
          _
        $region104: #{tpu_custom_call.1} parent=11 // pred_fallthru
          _
      $region12: #{tpu_custom_call.1} parent=5 // pred_fallthru
        _
      %p786 = scmp.lt.s32.totalorder %s43, 2
      // Predicated region
      $region105: #{tpu_custom_call.1} parent=5 // pred_check
        %p787 = pneg %p786
      $region106: #{tpu_custom_call.1} parent=5 // pred_check_branch
        %789 = sbr.rel (%p787) target = $region108
      $region107: #{tpu_custom_call.1} parent=5 // pred_region
        // Predicated region
        $region109: #{tpu_custom_call.1} parent=107 // pred_check
          %p790 = pneg %p63
        $region110: #{tpu_custom_call.1} parent=107 // pred_check_branch
          %792 = sbr.rel (%p790) target = $region112
        $region111: #{tpu_custom_call.1} parent=107 // pred_region
          %s793 = sand.u32 %s53, 1
          %s794 = scalar_lea.sflag [#allocation3], %s793
          %s795 = sand.u32 %s53, 1
          %s796 = smul.addr %s795, 32
          %s797 = scalar_lea.vmem [#allocation2], %s796
          %s798 = smul.u32 2, %s43
          %s800 = ssub.s32 512, 512
          %801 = vsyncadd %s794, %s800
          %s802 = smul.addr %s798, 2
          %s803 = smul.addr %s802, 128
          %s804 = scalar_lea.hbm %s0, %s803
          %s805 = sshll.u32 %s797, 4
          %s806 = int_to_ptr.vmem [resolvable:$true] %s805
          %811 = dma.hbm_to_vmem [thread:$0]  %s804, 512, %s806, %s794, 256, 256, 16
        $region112: #{tpu_custom_call.1} parent=107 // pred_fallthru
          _
      $region108: #{tpu_custom_call.1} parent=5 // pred_fallthru
        _
      %p812 = scmp.le.s32.totalorder 1, %s43
      %p813 = scmp.lt.s32.totalorder %s43, 3
      %p814 = pnand %p812, %p813
      %p815 = pneg %p814
      // Predicated region
      $region113: #{tpu_custom_call.1} parent=5 // pred_check
        _
      $region114: #{tpu_custom_call.1} parent=5 // pred_check_branch
        %817 = sbr.rel (%p814) target = $region116
      $region115: #{tpu_custom_call.1} parent=5 // pred_region
        %s818 = ssub.s32 %s43, 1
        %s819 = sand.u32 %s56, 1
        %s820 = scalar_lea.sflag [#allocation3], %s819
        %s821 = sand.u32 %s56, 1
        %s822 = smul.addr %s821, 32
        %s823 = scalar_lea.vmem [#allocation2], %s822
        // Predicated region
        $region117: #{tpu_custom_call.1} parent=115 // pred_check
          %p824 = pneg %p69
        $region118: #{tpu_custom_call.1} parent=115 // pred_check_branch
          %826 = sbr.rel (%p824) target = $region120
        $region119: #{tpu_custom_call.1} parent=115 // pred_region
          %827 = dma.done %s820, 512
        $region120: #{tpu_custom_call.1} parent=115 // pred_fallthru
          _
        // Predicated region
        $region121: #{tpu_custom_call.1} parent=115 // pred_check
          %p828 = pneg %p90
        $region122: #{tpu_custom_call.1} parent=115 // pred_check_branch
          %830 = sbr.rel (%p828) target = $region124
        $region123: #{tpu_custom_call.1} parent=115 // pred_region
          %831 = dma.done [#allocation6], 32
        $region124: #{tpu_custom_call.1} parent=115 // pred_fallthru
          _
        // Predicated region
        $region125: #{tpu_custom_call.1} parent=115 // pred_check
          %p832 = pneg %p111
        $region126: #{tpu_custom_call.1} parent=115 // pred_check_branch
          %834 = sbr.rel (%p832) target = $region128
        $region127: #{tpu_custom_call.1} parent=115 // pred_region
          %835 = dma.done [#allocation6], 32
        $region128: #{tpu_custom_call.1} parent=115 // pred_fallthru
          _
        // Predicated region
        $region129: #{tpu_custom_call.1} parent=115 // pred_check
          %p836 = pneg %p132
        $region130: #{tpu_custom_call.1} parent=115 // pred_check_branch
          %838 = sbr.rel (%p836) target = $region132
        $region131: #{tpu_custom_call.1} parent=115 // pred_region
          %839 = dma.done [#allocation9], 32
        $region132: #{tpu_custom_call.1} parent=115 // pred_fallthru
          _
        // Predicated region
        $region133: #{tpu_custom_call.1} parent=115 // pred_check
          %p840 = pneg %p153
        $region134: #{tpu_custom_call.1} parent=115 // pred_check_branch
          %842 = sbr.rel (%p840) target = $region136
        $region135: #{tpu_custom_call.1} parent=115 // pred_region
          %843 = dma.done [#allocation9], 8192
        $region136: #{tpu_custom_call.1} parent=115 // pred_fallthru
          _
        // Predicated region
        $region137: #{tpu_custom_call.1} parent=115 // pred_check
          %p844 = pneg %p195
        $region138: #{tpu_custom_call.1} parent=115 // pred_check_branch
          %846 = sbr.rel (%p844) target = $region140
        $region139: #{tpu_custom_call.1} parent=115 // pred_region
          %847 = dma.done [#allocation12], 8192
        $region140: #{tpu_custom_call.1} parent=115 // pred_fallthru
          _
        // Predicated region
        $region141: #{tpu_custom_call.1} parent=115 // pred_check
          %p848 = pneg %p237
        $region142: #{tpu_custom_call.1} parent=115 // pred_check_branch
          %850 = sbr.rel (%p848) target = $region144
        $region143: #{tpu_custom_call.1} parent=115 // pred_region
          %851 = dma.done [#allocation12], 2048
        $region144: #{tpu_custom_call.1} parent=115 // pred_fallthru
          _
        // Predicated region
        $region145: #{tpu_custom_call.1} parent=115 // pred_check
          %p852 = pneg %p279
        $region146: #{tpu_custom_call.1} parent=115 // pred_check_branch
          %854 = sbr.rel (%p852) target = $region148
        $region147: #{tpu_custom_call.1} parent=115 // pred_region
          %855 = dma.done [#allocation15], 1024
        $region148: #{tpu_custom_call.1} parent=115 // pred_fallthru
          _
        // Predicated region
        $region149: #{tpu_custom_call.1} parent=115 // pred_check
          %p856 = pneg %p321
        $region150: #{tpu_custom_call.1} parent=115 // pred_check_branch
          %858 = sbr.rel (%p856) target = $region152
        $region151: #{tpu_custom_call.1} parent=115 // pred_region
          %859 = dma.done [#allocation15], 1024
        $region152: #{tpu_custom_call.1} parent=115 // pred_fallthru
          _
        // Predicated region
        $region153: #{tpu_custom_call.1} parent=115 // pred_check
          %p860 = pneg %p363
        $region154: #{tpu_custom_call.1} parent=115 // pred_check_branch
          %862 = sbr.rel (%p860) target = $region156
        $region155: #{tpu_custom_call.1} parent=115 // pred_region
          %863 = dma.done [#allocation18], 1024
        $region156: #{tpu_custom_call.1} parent=115 // pred_fallthru
          _
        // Predicated region
        $region157: #{tpu_custom_call.1} parent=115 // pred_check
          %p864 = pneg %p405
        $region158: #{tpu_custom_call.1} parent=115 // pred_check_branch
          %866 = sbr.rel (%p864) target = $region160
        $region159: #{tpu_custom_call.1} parent=115 // pred_region
          %867 = dma.done [#allocation18], 1024
        $region160: #{tpu_custom_call.1} parent=115 // pred_fallthru
          _
        // Predicated region
        $region161: #{tpu_custom_call.1} parent=115 // pred_check
          %p868 = pneg %p447
        $region162: #{tpu_custom_call.1} parent=115 // pred_check_branch
          %870 = sbr.rel (%p868) target = $region164
        $region163: #{tpu_custom_call.1} parent=115 // pred_region
          %871 = dma.done [#allocation21], 2048
        $region164: #{tpu_custom_call.1} parent=115 // pred_fallthru
          _
        // Predicated region
        $region165: #{tpu_custom_call.1} parent=115 // pred_check
          %p872 = pneg %p489
        $region166: #{tpu_custom_call.1} parent=115 // pred_check_branch
          %874 = sbr.rel (%p872) target = $region168
        $region167: #{tpu_custom_call.1} parent=115 // pred_region
          %875 = dma.done [#allocation21], 8192
        $region168: #{tpu_custom_call.1} parent=115 // pred_fallthru
          _
        // Predicated region
        $region169: #{tpu_custom_call.1} parent=115 // pred_check
          %p876 = pneg %p531
        $region170: #{tpu_custom_call.1} parent=115 // pred_check_branch
          %878 = sbr.rel (%p876) target = $region172
        $region171: #{tpu_custom_call.1} parent=115 // pred_region
          %879 = dma.done [#allocation24], 8192
        $region172: #{tpu_custom_call.1} parent=115 // pred_fallthru
          _
        %s880 = sand.u32 %s56, 1
        %s881 = scalar_lea.sflag [#allocation3], %s880
        %s882 = sand.u32 %s56, 1
        %s883 = smul.addr %s882, 32
        %s884 = scalar_lea.vmem [#allocation2], %s883
        %p885 = pneg %p69
        %p886 = pneg %p66
        %p887 = pneg %p90
        %p888 = pneg %p87
        %p889 = pneg %p111
        %p890 = pneg %p108
        %p891 = pneg %p132
        %p892 = pneg %p129
        %p893 = pneg %p153
        %p894 = pneg %p150
        %p895 = pneg %p174
        %p896 = pneg %p171
        %p897 = pneg %p195
        %p898 = pneg %p192
        %p899 = pneg %p216
        %p900 = pneg %p213
        %p901 = pneg %p237
        %p902 = pneg %p234
        %p903 = pneg %p258
        %p904 = pneg %p255
        %p905 = pneg %p279
        %p906 = pneg %p276
        %p907 = pneg %p300
        %p908 = pneg %p297
        %p909 = pneg %p321
        %p910 = pneg %p318
        %p911 = pneg %p342
        %p912 = pneg %p339
        %p913 = pneg %p363
        %p914 = pneg %p360
        %p915 = pneg %p384
        %p916 = pneg %p381
        %p917 = pneg %p405
        %p918 = pneg %p402
        %p919 = pneg %p426
        %p920 = pneg %p423
        %p921 = pneg %p447
        %p922 = pneg %p444
        %p923 = pneg %p468
        %p924 = pneg %p465
        %p925 = pneg %p489
        %p926 = pneg %p486
        %p927 = pneg %p510
        %p928 = pneg %p507
        %p929 = pneg %p531
        %p930 = pneg %p528
        %p931 = pneg %p552
        %p932 = pneg %p549
        %p933 = pneg %p578
        %p934 = pneg %p575
        %s935 = sand.u32 %s565, 1
        %s936 = scalar_lea.sflag [#allocation4], %s935
        %s937 = sand.u32 %s565, 1
        %s938 = smul.addr %s937, 32
        %s939 = scalar_lea.vmem [#allocation25], %s938
        %s940 = smul.u32 2, %s48
        %s941 = smul.u32 2, %s48
        %v943 = vld [vmem:[#allocation5] sm:$0x3]
        %v944 = vld [vmem:[#allocation7] sm:$0x3]
        %v945 = vld [vmem:[#allocation8] sm:$0x3]
        %v946 = vld [vmem:[%s823] sm:$0xff]
        %v947 = vld [vmem:[%s823 + $0x8] sm:$0xff]
        %v948 = vld [vmem:[%s823 + $0x10] sm:$0xff]
        %v949 = vld [vmem:[%s823 + $0x18] sm:$0xff]
        %v951 = vlaneseq
        %v952 = vshrl.u32 %v951, 7
        %v953 = vsub.s32 0, %v952
        %v954 = vrot.slane %v943, %v953
        %v955 = vlaneseq
        %v956 = vshrl.u32 %v955, 7
        %v957 = vsub.s32 1, %v956
        %v958 = vrot.slane %v943, %v957
        %v961 = vsub.f32 %v946, %v954
        %v962 = vsub.f32 %v947, %v958
        %v963 = vsub.f32 %v948, %v954
        %v964 = vsub.f32 %v949, %v958
        %v966 = vlaneseq
        %v967 = vshrl.u32 %v966, 7
        %v968 = vsub.s32 0, %v967
        %v969 = vrot.slane %v945, %v968
        %v970 = vlaneseq
        %v971 = vshrl.u32 %v970, 7
        %v972 = vsub.s32 1, %v971
        %v973 = vrot.slane %v945, %v972
        %v976 = vmul.f32 %v961, %v969
        %v977 = vmul.f32 %v962, %v973
        %v978 = vmul.f32 %v963, %v969
        %v979 = vmul.f32 %v964, %v973
        %v980 = vld [vmem:[#allocation10] sm:$0xff]
        %v981 = vld [vmem:[#allocation10 + $0x8] sm:$0xff]
        %v982 = vld [vmem:[#allocation10 + $0x10] sm:$0xff]
        %v983 = vld [vmem:[#allocation10 + $0x18] sm:$0xff]
        %v984 = vld [vmem:[#allocation10 + $0x20] sm:$0xff]
        %v985 = vld [vmem:[#allocation10 + $0x28] sm:$0xff]
        %v986 = vld [vmem:[#allocation10 + $0x30] sm:$0xff]
        %v987 = vld [vmem:[#allocation10 + $0x38] sm:$0xff]
        %v988 = vld [vmem:[#allocation10 + $0x40] sm:$0xff]
        %v989 = vld [vmem:[#allocation10 + $0x48] sm:$0xff]
        %v990 = vld [vmem:[#allocation10 + $0x50] sm:$0xff]
        %v991 = vld [vmem:[#allocation10 + $0x58] sm:$0xff]
        %v992 = vld [vmem:[#allocation10 + $0x60] sm:$0xff]
        %v993 = vld [vmem:[#allocation10 + $0x68] sm:$0xff]
        %v994 = vld [vmem:[#allocation10 + $0x70] sm:$0xff]
        %v995 = vld [vmem:[#allocation10 + $0x78] sm:$0xff]
        %v996 = vld [vmem:[#allocation10 + $0x80] sm:$0xff]
        %v997 = vld [vmem:[#allocation10 + $0x88] sm:$0xff]
        %v998 = vld [vmem:[#allocation10 + $0x90] sm:$0xff]
        %v999 = vld [vmem:[#allocation10 + $0x98] sm:$0xff]
        %v1000 = vld [vmem:[#allocation10 + $0xa0] sm:$0xff]
        %v1001 = vld [vmem:[#allocation10 + $0xa8] sm:$0xff]
        %v1002 = vld [vmem:[#allocation10 + $0xb0] sm:$0xff]
        %v1003 = vld [vmem:[#allocation10 + $0xb8] sm:$0xff]
        %v1004 = vld [vmem:[#allocation10 + $0xc0] sm:$0xff]
        %v1005 = vld [vmem:[#allocation10 + $0xc8] sm:$0xff]
        %v1006 = vld [vmem:[#allocation10 + $0xd0] sm:$0xff]
        %v1007 = vld [vmem:[#allocation10 + $0xd8] sm:$0xff]
        %v1008 = vld [vmem:[#allocation10 + $0xe0] sm:$0xff]
        %v1009 = vld [vmem:[#allocation10 + $0xe8] sm:$0xff]
        %v1010 = vld [vmem:[#allocation10 + $0xf0] sm:$0xff]
        %v1011 = vld [vmem:[#allocation10 + $0xf8] sm:$0xff]
        %v1012 = vld [vmem:[#allocation10 + $0x100] sm:$0xff]
        %v1013 = vld [vmem:[#allocation10 + $0x108] sm:$0xff]
        %v1014 = vld [vmem:[#allocation10 + $0x110] sm:$0xff]
        %v1015 = vld [vmem:[#allocation10 + $0x118] sm:$0xff]
        %v1016 = vld [vmem:[#allocation10 + $0x120] sm:$0xff]
        %v1017 = vld [vmem:[#allocation10 + $0x128] sm:$0xff]
        %v1018 = vld [vmem:[#allocation10 + $0x130] sm:$0xff]
        %v1019 = vld [vmem:[#allocation10 + $0x138] sm:$0xff]
        %v1020 = vld [vmem:[#allocation10 + $0x140] sm:$0xff]
        %v1021 = vld [vmem:[#allocation10 + $0x148] sm:$0xff]
        %v1022 = vld [vmem:[#allocation10 + $0x150] sm:$0xff]
        %v1023 = vld [vmem:[#allocation10 + $0x158] sm:$0xff]
        %v1024 = vld [vmem:[#allocation10 + $0x160] sm:$0xff]
        %v1025 = vld [vmem:[#allocation10 + $0x168] sm:$0xff]
        %v1026 = vld [vmem:[#allocation10 + $0x170] sm:$0xff]
        %v1027 = vld [vmem:[#allocation10 + $0x178] sm:$0xff]
        %v1028 = vld [vmem:[#allocation10 + $0x180] sm:$0xff]
        %v1029 = vld [vmem:[#allocation10 + $0x188] sm:$0xff]
        %v1030 = vld [vmem:[#allocation10 + $0x190] sm:$0xff]
        %v1031 = vld [vmem:[#allocation10 + $0x198] sm:$0xff]
        %v1032 = vld [vmem:[#allocation10 + $0x1a0] sm:$0xff]
        %v1033 = vld [vmem:[#allocation10 + $0x1a8] sm:$0xff]
        %v1034 = vld [vmem:[#allocation10 + $0x1b0] sm:$0xff]
        %v1035 = vld [vmem:[#allocation10 + $0x1b8] sm:$0xff]
        %v1036 = vld [vmem:[#allocation10 + $0x1c0] sm:$0xff]
        %v1037 = vld [vmem:[#allocation10 + $0x1c8] sm:$0xff]
        %v1038 = vld [vmem:[#allocation10 + $0x1d0] sm:$0xff]
        %v1039 = vld [vmem:[#allocation10 + $0x1d8] sm:$0xff]
        %v1040 = vld [vmem:[#allocation10 + $0x1e0] sm:$0xff]
        %v1041 = vld [vmem:[#allocation10 + $0x1e8] sm:$0xff]
        %v1042 = vld [vmem:[#allocation10 + $0x1f0] sm:$0xff]
        %v1043 = vld [vmem:[#allocation10 + $0x1f8] sm:$0xff]
        %v1044 = vld [vmem:[%s5] sm:$0xf]
        %v1045 = vpack.c.bf16 %v978, %v976
        %v1046 = vpack.c.bf16 %v979, %v977
        %v1048 = vlaneseq
        %v1049 = vshrl.u32 %v1048, 7
        %v1050 = vsub.s32 0, %v1049
        %v1051 = vrot.slane %v1044, %v1050
        %v1052 = vlaneseq
        %v1053 = vshrl.u32 %v1052, 7
        %v1054 = vsub.s32 1, %v1053
        %v1055 = vrot.slane %v1044, %v1054
        %v1056 = vlaneseq
        %v1057 = vshrl.u32 %v1056, 7
        %v1058 = vsub.s32 2, %v1057
        %v1059 = vrot.slane %v1044, %v1058
        %v1060 = vlaneseq
        %v1061 = vshrl.u32 %v1060, 7
        %v1062 = vsub.s32 3, %v1061
        %v1063 = vrot.slane %v1044, %v1062
        %v1132 = vunpack.c.l.b16 %v980
        %v1133 = vunpack.c.h.b16 %v980
        %v1134 = vunpack.c.l.b16 %v981
        %v1135 = vunpack.c.h.b16 %v981
        %v1136 = vunpack.c.l.b16 %v982
        %v1137 = vunpack.c.h.b16 %v982
        %v1138 = vunpack.c.l.b16 %v983
        %v1139 = vunpack.c.h.b16 %v983
        %v1140 = vunpack.c.l.b16 %v984
        %v1141 = vunpack.c.h.b16 %v984
        %v1142 = vunpack.c.l.b16 %v985
        %v1143 = vunpack.c.h.b16 %v985
        %v1144 = vunpack.c.l.b16 %v986
        %v1145 = vunpack.c.h.b16 %v986
        %v1146 = vunpack.c.l.b16 %v987
        %v1147 = vunpack.c.h.b16 %v987
        %v1148 = vunpack.c.l.b16 %v988
        %v1149 = vunpack.c.h.b16 %v988
        %v1150 = vunpack.c.l.b16 %v989
        %v1151 = vunpack.c.h.b16 %v989
        %v1152 = vunpack.c.l.b16 %v990
        %v1153 = vunpack.c.h.b16 %v990
        %v1154 = vunpack.c.l.b16 %v991
        %v1155 = vunpack.c.h.b16 %v991
        %v1156 = vunpack.c.l.b16 %v992
        %v1157 = vunpack.c.h.b16 %v992
        %v1158 = vunpack.c.l.b16 %v993
        %v1159 = vunpack.c.h.b16 %v993
        %v1160 = vunpack.c.l.b16 %v994
        %v1161 = vunpack.c.h.b16 %v994
        %v1162 = vunpack.c.l.b16 %v995
        %v1163 = vunpack.c.h.b16 %v995
        %v1164 = vunpack.c.l.b16 %v996
        %v1165 = vunpack.c.h.b16 %v996
        %v1166 = vunpack.c.l.b16 %v997
        %v1167 = vunpack.c.h.b16 %v997
        %v1168 = vunpack.c.l.b16 %v998
        %v1169 = vunpack.c.h.b16 %v998
        %v1170 = vunpack.c.l.b16 %v999
        %v1171 = vunpack.c.h.b16 %v999
        %v1172 = vunpack.c.l.b16 %v1000
        %v1173 = vunpack.c.h.b16 %v1000
        %v1174 = vunpack.c.l.b16 %v1001
        %v1175 = vunpack.c.h.b16 %v1001
        %v1176 = vunpack.c.l.b16 %v1002
        %v1177 = vunpack.c.h.b16 %v1002
        %v1178 = vunpack.c.l.b16 %v1003
        %v1179 = vunpack.c.h.b16 %v1003
        %v1180 = vunpack.c.l.b16 %v1004
        %v1181 = vunpack.c.h.b16 %v1004
        %v1182 = vunpack.c.l.b16 %v1005
        %v1183 = vunpack.c.h.b16 %v1005
        %v1184 = vunpack.c.l.b16 %v1006
        %v1185 = vunpack.c.h.b16 %v1006
        %v1186 = vunpack.c.l.b16 %v1007
        %v1187 = vunpack.c.h.b16 %v1007
        %v1188 = vunpack.c.l.b16 %v1008
        %v1189 = vunpack.c.h.b16 %v1008
        %v1190 = vunpack.c.l.b16 %v1009
        %v1191 = vunpack.c.h.b16 %v1009
        %v1192 = vunpack.c.l.b16 %v1010
        %v1193 = vunpack.c.h.b16 %v1010
        %v1194 = vunpack.c.l.b16 %v1011
        %v1195 = vunpack.c.h.b16 %v1011
        %v1196 = vunpack.c.l.b16 %v1012
        %v1197 = vunpack.c.h.b16 %v1012
        %v1198 = vunpack.c.l.b16 %v1013
        %v1199 = vunpack.c.h.b16 %v1013
        %v1200 = vunpack.c.l.b16 %v1014
        %v1201 = vunpack.c.h.b16 %v1014
        %v1202 = vunpack.c.l.b16 %v1015
        %v1203 = vunpack.c.h.b16 %v1015
        %v1204 = vunpack.c.l.b16 %v1016
        %v1205 = vunpack.c.h.b16 %v1016
        %v1206 = vunpack.c.l.b16 %v1017
        %v1207 = vunpack.c.h.b16 %v1017
        %v1208 = vunpack.c.l.b16 %v1018
        %v1209 = vunpack.c.h.b16 %v1018
        %v1210 = vunpack.c.l.b16 %v1019
        %v1211 = vunpack.c.h.b16 %v1019
        %v1212 = vunpack.c.l.b16 %v1020
        %v1213 = vunpack.c.h.b16 %v1020
        %v1214 = vunpack.c.l.b16 %v1021
        %v1215 = vunpack.c.h.b16 %v1021
        %v1216 = vunpack.c.l.b16 %v1022
        %v1217 = vunpack.c.h.b16 %v1022
        %v1218 = vunpack.c.l.b16 %v1023
        %v1219 = vunpack.c.h.b16 %v1023
        %v1220 = vunpack.c.l.b16 %v1024
        %v1221 = vunpack.c.h.b16 %v1024
        %v1222 = vunpack.c.l.b16 %v1025
        %v1223 = vunpack.c.h.b16 %v1025
        %v1224 = vunpack.c.l.b16 %v1026
        %v1225 = vunpack.c.h.b16 %v1026
        %v1226 = vunpack.c.l.b16 %v1027
        %v1227 = vunpack.c.h.b16 %v1027
        %v1228 = vunpack.c.l.b16 %v1028
        %v1229 = vunpack.c.h.b16 %v1028
        %v1230 = vunpack.c.l.b16 %v1029
        %v1231 = vunpack.c.h.b16 %v1029
        %v1232 = vunpack.c.l.b16 %v1030
        %v1233 = vunpack.c.h.b16 %v1030
        %v1234 = vunpack.c.l.b16 %v1031
        %v1235 = vunpack.c.h.b16 %v1031
        %v1236 = vunpack.c.l.b16 %v1032
        %v1237 = vunpack.c.h.b16 %v1032
        %v1238 = vunpack.c.l.b16 %v1033
        %v1239 = vunpack.c.h.b16 %v1033
        %v1240 = vunpack.c.l.b16 %v1034
        %v1241 = vunpack.c.h.b16 %v1034
        %v1242 = vunpack.c.l.b16 %v1035
        %v1243 = vunpack.c.h.b16 %v1035
        %v1244 = vunpack.c.l.b16 %v1036
        %v1245 = vunpack.c.h.b16 %v1036
        %v1246 = vunpack.c.l.b16 %v1037
        %v1247 = vunpack.c.h.b16 %v1037
        %v1248 = vunpack.c.l.b16 %v1038
        %v1249 = vunpack.c.h.b16 %v1038
        %v1250 = vunpack.c.l.b16 %v1039
        %v1251 = vunpack.c.h.b16 %v1039
        %v1252 = vunpack.c.l.b16 %v1040
        %v1253 = vunpack.c.h.b16 %v1040
        %v1254 = vunpack.c.l.b16 %v1041
        %v1255 = vunpack.c.h.b16 %v1041
        %v1256 = vunpack.c.l.b16 %v1042
        %v1257 = vunpack.c.h.b16 %v1042
        %v1258 = vunpack.c.l.b16 %v1043
        %v1259 = vunpack.c.h.b16 %v1043
        %v1260 = vpack.c.b16 %v1136, %v1132
        %v1261 = vpack.c.b16 %v1137, %v1133
        %v1262 = vpack.c.b16 %v1138, %v1134
        %v1263 = vpack.c.b16 %v1139, %v1135
        %v1264 = vpack.c.b16 %v1144, %v1140
        %v1265 = vpack.c.b16 %v1145, %v1141
        %v1266 = vpack.c.b16 %v1146, %v1142
        %v1267 = vpack.c.b16 %v1147, %v1143
        %v1268 = vpack.c.b16 %v1152, %v1148
        %v1269 = vpack.c.b16 %v1153, %v1149
        %v1270 = vpack.c.b16 %v1154, %v1150
        %v1271 = vpack.c.b16 %v1155, %v1151
        %v1272 = vpack.c.b16 %v1160, %v1156
        %v1273 = vpack.c.b16 %v1161, %v1157
        %v1274 = vpack.c.b16 %v1162, %v1158
        %v1275 = vpack.c.b16 %v1163, %v1159
        %v1276 = vpack.c.b16 %v1168, %v1164
        %v1277 = vpack.c.b16 %v1169, %v1165
        %v1278 = vpack.c.b16 %v1170, %v1166
        %v1279 = vpack.c.b16 %v1171, %v1167
        %v1280 = vpack.c.b16 %v1176, %v1172
        %v1281 = vpack.c.b16 %v1177, %v1173
        %v1282 = vpack.c.b16 %v1178, %v1174
        %v1283 = vpack.c.b16 %v1179, %v1175
        %v1284 = vpack.c.b16 %v1184, %v1180
        %v1285 = vpack.c.b16 %v1185, %v1181
        %v1286 = vpack.c.b16 %v1186, %v1182
        %v1287 = vpack.c.b16 %v1187, %v1183
        %v1288 = vpack.c.b16 %v1192, %v1188
        %v1289 = vpack.c.b16 %v1193, %v1189
        %v1290 = vpack.c.b16 %v1194, %v1190
        %v1291 = vpack.c.b16 %v1195, %v1191
        %v1292 = vpack.c.b16 %v1200, %v1196
        %v1293 = vpack.c.b16 %v1201, %v1197
        %v1294 = vpack.c.b16 %v1202, %v1198
        %v1295 = vpack.c.b16 %v1203, %v1199
        %v1296 = vpack.c.b16 %v1208, %v1204
        %v1297 = vpack.c.b16 %v1209, %v1205
        %v1298 = vpack.c.b16 %v1210, %v1206
        %v1299 = vpack.c.b16 %v1211, %v1207
        %v1300 = vpack.c.b16 %v1216, %v1212
        %v1301 = vpack.c.b16 %v1217, %v1213
        %v1302 = vpack.c.b16 %v1218, %v1214
        %v1303 = vpack.c.b16 %v1219, %v1215
        %v1304 = vpack.c.b16 %v1224, %v1220
        %v1305 = vpack.c.b16 %v1225, %v1221
        %v1306 = vpack.c.b16 %v1226, %v1222
        %v1307 = vpack.c.b16 %v1227, %v1223
        %v1308 = vpack.c.b16 %v1232, %v1228
        %v1309 = vpack.c.b16 %v1233, %v1229
        %v1310 = vpack.c.b16 %v1234, %v1230
        %v1311 = vpack.c.b16 %v1235, %v1231
        %v1312 = vpack.c.b16 %v1240, %v1236
        %v1313 = vpack.c.b16 %v1241, %v1237
        %v1314 = vpack.c.b16 %v1242, %v1238
        %v1315 = vpack.c.b16 %v1243, %v1239
        %v1316 = vpack.c.b16 %v1248, %v1244
        %v1317 = vpack.c.b16 %v1249, %v1245
        %v1318 = vpack.c.b16 %v1250, %v1246
        %v1319 = vpack.c.b16 %v1251, %v1247
        %v1320 = vpack.c.b16 %v1256, %v1252
        %v1321 = vpack.c.b16 %v1257, %v1253
        %v1322 = vpack.c.b16 %v1258, %v1254
        %v1323 = vpack.c.b16 %v1259, %v1255
        %1388 = vmatprep.subr.bf16.mxu0 %v1289
        %1389 = vmatpush1.bf16.msra.mxu0 %v1288
        %1390 = vmatprep.subr.bf16.mxu0 %v1285
        %1391 = vmatpush1.bf16.msra.mxu0 %v1284
        %1392 = vmatprep.subr.bf16.mxu0 %v1281
        %1393 = vmatpush1.bf16.msra.mxu0 %v1280
        %1394 = vmatprep.subr.bf16.mxu0 %v1277
        %1395 = vmatpush1.bf16.msra.mxu0 %v1276
        %1396 = vmatprep.subr.bf16.mxu0 %v1273
        %1397 = vmatpush1.bf16.msra.mxu0 %v1272
        %1398 = vmatprep.subr.bf16.mxu0 %v1269
        %1399 = vmatpush1.bf16.msra.mxu0 %v1268
        %1400 = vmatprep.subr.bf16.mxu0 %v1265
        %1401 = vmatpush1.bf16.msra.mxu0 %v1264
        %1402 = vmatprep.subr.bf16.mxu0 %v1261
        %1403 = vmatpush1.bf16.msra.mxu0 %v1260
        %1404 = vmatprep.subr.bf16.mxu0 %v1321
        %1405 = vmatpush2.bf16.msra.mxu0 %v1320
        %1406 = vmatprep.subr.bf16.mxu0 %v1317
        %1407 = vmatpush2.bf16.msra.mxu0 %v1316
        %1408 = vmatprep.subr.bf16.mxu0 %v1313
        %1409 = vmatpush2.bf16.msra.mxu0 %v1312
        %1410 = vmatprep.subr.bf16.mxu0 %v1309
        %1411 = vmatpush2.bf16.msra.mxu0 %v1308
        %1412 = vmatprep.subr.bf16.mxu0 %v1305
        %1413 = vmatpush2.bf16.msra.mxu0 %v1304
        %1414 = vmatprep.subr.bf16.mxu0 %v1301
        %1415 = vmatpush2.bf16.msra.mxu0 %v1300
        %1416 = vmatprep.subr.bf16.mxu0 %v1297
        %1417 = vmatpush2.bf16.msra.mxu0 %v1296
        %1418 = vmatprep.subr.bf16.mxu0 %v1293
        %1419 = vmatpush2.bf16.msra.mxu0 %v1292
        %1420 = vmatprep.mubr.bf16.mxu0 %v1046
        %1421 = vmatmul.mubr.bf16.gmra.mxu0 %v1045
        %v1422 = vpop.f32.mrf.mxu0
        %v1423 = vadd.f32 %v1051, %v1422
        %v1424 = vpop.f32.mrf.mxu0
        %v1425 = vadd.f32 %v1055, %v1424
        %v1426 = vpop.f32.mrf.mxu0
        %v1427 = vadd.f32 %v1051, %v1426
        %v1428 = vpop.f32.mrf.mxu0
        %v1429 = vadd.f32 %v1055, %v1428
        %1430 = vdwg.mxu0
        %1431 = vmatprep.subr.bf16.mxu0 %v1291
        %1432 = vmatpush1.bf16.msra.mxu0 %v1290
        %1433 = vmatprep.subr.bf16.mxu0 %v1287
        %1434 = vmatpush1.bf16.msra.mxu0 %v1286
        %1435 = vmatprep.subr.bf16.mxu0 %v1283
        %1436 = vmatpush1.bf16.msra.mxu0 %v1282
        %1437 = vmatprep.subr.bf16.mxu0 %v1279
        %1438 = vmatpush1.bf16.msra.mxu0 %v1278
        %1439 = vmatprep.subr.bf16.mxu0 %v1275
        %1440 = vmatpush1.bf16.msra.mxu0 %v1274
        %1441 = vmatprep.subr.bf16.mxu0 %v1271
        %1442 = vmatpush1.bf16.msra.mxu0 %v1270
        %1443 = vmatprep.subr.bf16.mxu0 %v1267
        %1444 = vmatpush1.bf16.msra.mxu0 %v1266
        %1445 = vmatprep.subr.bf16.mxu0 %v1263
        %1446 = vmatpush1.bf16.msra.mxu0 %v1262
        %1447 = vmatprep.subr.bf16.mxu0 %v1323
        %1448 = vmatpush2.bf16.msra.mxu0 %v1322
        %1449 = vmatprep.subr.bf16.mxu0 %v1319
        %1450 = vmatpush2.bf16.msra.mxu0 %v1318
        %1451 = vmatprep.subr.bf16.mxu0 %v1315
        %1452 = vmatpush2.bf16.msra.mxu0 %v1314
        %1453 = vmatprep.subr.bf16.mxu0 %v1311
        %1454 = vmatpush2.bf16.msra.mxu0 %v1310
        %1455 = vmatprep.subr.bf16.mxu0 %v1307
        %1456 = vmatpush2.bf16.msra.mxu0 %v1306
        %1457 = vmatprep.subr.bf16.mxu0 %v1303
        %1458 = vmatpush2.bf16.msra.mxu0 %v1302
        %1459 = vmatprep.subr.bf16.mxu0 %v1299
        %1460 = vmatpush2.bf16.msra.mxu0 %v1298
        %1461 = vmatprep.subr.bf16.mxu0 %v1295
        %1462 = vmatpush2.bf16.msra.mxu0 %v1294
        %1463 = vmatprep.mubr.bf16.mxu0 %v1046
        %1464 = vmatmul.mubr.bf16.gmra.mxu0 %v1045
        %v1465 = vpop.f32.mrf.mxu0
        %v1466 = vadd.f32 %v1059, %v1465
        %v1467 = vpop.f32.mrf.mxu0
        %v1468 = vadd.f32 %v1063, %v1467
        %v1469 = vpop.f32.mrf.mxu0
        %v1470 = vadd.f32 %v1059, %v1469
        %v1471 = vpop.f32.mrf.mxu0
        %v1472 = vadd.f32 %v1063, %v1471
        %1473 = vdwg.mxu0
        %v1474 = vmax.f32 %v1423, 0.0
        %v1475 = vmax.f32 %v1425, 0.0
        %v1476 = vmax.f32 %v1466, 0.0
        %v1477 = vmax.f32 %v1468, 0.0
        %v1478 = vmax.f32 %v1427, 0.0
        %v1479 = vmax.f32 %v1429, 0.0
        %v1480 = vmax.f32 %v1470, 0.0
        %v1481 = vmax.f32 %v1472, 0.0
        %v1482 = vld [vmem:[#allocation11] sm:$0xff]
        %v1483 = vld [vmem:[#allocation11 + $0x8] sm:$0xff]
        %v1484 = vld [vmem:[#allocation11 + $0x10] sm:$0xff]
        %v1485 = vld [vmem:[#allocation11 + $0x18] sm:$0xff]
        %v1486 = vld [vmem:[#allocation11 + $0x20] sm:$0xff]
        %v1487 = vld [vmem:[#allocation11 + $0x28] sm:$0xff]
        %v1488 = vld [vmem:[#allocation11 + $0x30] sm:$0xff]
        %v1489 = vld [vmem:[#allocation11 + $0x38] sm:$0xff]
        %v1490 = vld [vmem:[#allocation11 + $0x40] sm:$0xff]
        %v1491 = vld [vmem:[#allocation11 + $0x48] sm:$0xff]
        %v1492 = vld [vmem:[#allocation11 + $0x50] sm:$0xff]
        %v1493 = vld [vmem:[#allocation11 + $0x58] sm:$0xff]
        %v1494 = vld [vmem:[#allocation11 + $0x60] sm:$0xff]
        %v1495 = vld [vmem:[#allocation11 + $0x68] sm:$0xff]
        %v1496 = vld [vmem:[#allocation11 + $0x70] sm:$0xff]
        %v1497 = vld [vmem:[#allocation11 + $0x78] sm:$0xff]
        %v1498 = vld [vmem:[#allocation11 + $0x80] sm:$0xff]
        %v1499 = vld [vmem:[#allocation11 + $0x88] sm:$0xff]
        %v1500 = vld [vmem:[#allocation11 + $0x90] sm:$0xff]
        %v1501 = vld [vmem:[#allocation11 + $0x98] sm:$0xff]
        %v1502 = vld [vmem:[#allocation11 + $0xa0] sm:$0xff]
        %v1503 = vld [vmem:[#allocation11 + $0xa8] sm:$0xff]
        %v1504 = vld [vmem:[#allocation11 + $0xb0] sm:$0xff]
        %v1505 = vld [vmem:[#allocation11 + $0xb8] sm:$0xff]
        %v1506 = vld [vmem:[#allocation11 + $0xc0] sm:$0xff]
        %v1507 = vld [vmem:[#allocation11 + $0xc8] sm:$0xff]
        %v1508 = vld [vmem:[#allocation11 + $0xd0] sm:$0xff]
        %v1509 = vld [vmem:[#allocation11 + $0xd8] sm:$0xff]
        %v1510 = vld [vmem:[#allocation11 + $0xe0] sm:$0xff]
        %v1511 = vld [vmem:[#allocation11 + $0xe8] sm:$0xff]
        %v1512 = vld [vmem:[#allocation11 + $0xf0] sm:$0xff]
        %v1513 = vld [vmem:[#allocation11 + $0xf8] sm:$0xff]
        %v1514 = vld [vmem:[#allocation11 + $0x100] sm:$0xff]
        %v1515 = vld [vmem:[#allocation11 + $0x108] sm:$0xff]
        %v1516 = vld [vmem:[#allocation11 + $0x110] sm:$0xff]
        %v1517 = vld [vmem:[#allocation11 + $0x118] sm:$0xff]
        %v1518 = vld [vmem:[#allocation11 + $0x120] sm:$0xff]
        %v1519 = vld [vmem:[#allocation11 + $0x128] sm:$0xff]
        %v1520 = vld [vmem:[#allocation11 + $0x130] sm:$0xff]
        %v1521 = vld [vmem:[#allocation11 + $0x138] sm:$0xff]
        %v1522 = vld [vmem:[#allocation11 + $0x140] sm:$0xff]
        %v1523 = vld [vmem:[#allocation11 + $0x148] sm:$0xff]
        %v1524 = vld [vmem:[#allocation11 + $0x150] sm:$0xff]
        %v1525 = vld [vmem:[#allocation11 + $0x158] sm:$0xff]
        %v1526 = vld [vmem:[#allocation11 + $0x160] sm:$0xff]
        %v1527 = vld [vmem:[#allocation11 + $0x168] sm:$0xff]
        %v1528 = vld [vmem:[#allocation11 + $0x170] sm:$0xff]
        %v1529 = vld [vmem:[#allocation11 + $0x178] sm:$0xff]
        %v1530 = vld [vmem:[#allocation11 + $0x180] sm:$0xff]
        %v1531 = vld [vmem:[#allocation11 + $0x188] sm:$0xff]
        %v1532 = vld [vmem:[#allocation11 + $0x190] sm:$0xff]
        %v1533 = vld [vmem:[#allocation11 + $0x198] sm:$0xff]
        %v1534 = vld [vmem:[#allocation11 + $0x1a0] sm:$0xff]
        %v1535 = vld [vmem:[#allocation11 + $0x1a8] sm:$0xff]
        %v1536 = vld [vmem:[#allocation11 + $0x1b0] sm:$0xff]
        %v1537 = vld [vmem:[#allocation11 + $0x1b8] sm:$0xff]
        %v1538 = vld [vmem:[#allocation11 + $0x1c0] sm:$0xff]
        %v1539 = vld [vmem:[#allocation11 + $0x1c8] sm:$0xff]
        %v1540 = vld [vmem:[#allocation11 + $0x1d0] sm:$0xff]
        %v1541 = vld [vmem:[#allocation11 + $0x1d8] sm:$0xff]
        %v1542 = vld [vmem:[#allocation11 + $0x1e0] sm:$0xff]
        %v1543 = vld [vmem:[#allocation11 + $0x1e8] sm:$0xff]
        %v1544 = vld [vmem:[#allocation11 + $0x1f0] sm:$0xff]
        %v1545 = vld [vmem:[#allocation11 + $0x1f8] sm:$0xff]
        %v1546 = vld [vmem:[%s7] sm:$0x3]
        %v1547 = vpack.c.bf16 %v1478, %v1474
        %v1548 = vpack.c.bf16 %v1479, %v1475
        %v1549 = vpack.c.bf16 %v1480, %v1476
        %v1550 = vpack.c.bf16 %v1481, %v1477
        %v1552 = vlaneseq
        %v1553 = vshrl.u32 %v1552, 7
        %v1554 = vsub.s32 0, %v1553
        %v1555 = vrot.slane %v1546, %v1554
        %v1556 = vlaneseq
        %v1557 = vshrl.u32 %v1556, 7
        %v1558 = vsub.s32 1, %v1557
        %v1559 = vrot.slane %v1546, %v1558
        %v1626 = vunpack.c.l.b16 %v1482
        %v1627 = vunpack.c.h.b16 %v1482
        %v1628 = vunpack.c.l.b16 %v1483
        %v1629 = vunpack.c.h.b16 %v1483
        %v1630 = vunpack.c.l.b16 %v1484
        %v1631 = vunpack.c.h.b16 %v1484
        %v1632 = vunpack.c.l.b16 %v1485
        %v1633 = vunpack.c.h.b16 %v1485
        %v1634 = vunpack.c.l.b16 %v1486
        %v1635 = vunpack.c.h.b16 %v1486
        %v1636 = vunpack.c.l.b16 %v1487
        %v1637 = vunpack.c.h.b16 %v1487
        %v1638 = vunpack.c.l.b16 %v1488
        %v1639 = vunpack.c.h.b16 %v1488
        %v1640 = vunpack.c.l.b16 %v1489
        %v1641 = vunpack.c.h.b16 %v1489
        %v1642 = vunpack.c.l.b16 %v1490
        %v1643 = vunpack.c.h.b16 %v1490
        %v1644 = vunpack.c.l.b16 %v1491
        %v1645 = vunpack.c.h.b16 %v1491
        %v1646 = vunpack.c.l.b16 %v1492
        %v1647 = vunpack.c.h.b16 %v1492
        %v1648 = vunpack.c.l.b16 %v1493
        %v1649 = vunpack.c.h.b16 %v1493
        %v1650 = vunpack.c.l.b16 %v1494
        %v1651 = vunpack.c.h.b16 %v1494
        %v1652 = vunpack.c.l.b16 %v1495
        %v1653 = vunpack.c.h.b16 %v1495
        %v1654 = vunpack.c.l.b16 %v1496
        %v1655 = vunpack.c.h.b16 %v1496
        %v1656 = vunpack.c.l.b16 %v1497
        %v1657 = vunpack.c.h.b16 %v1497
        %v1658 = vunpack.c.l.b16 %v1498
        %v1659 = vunpack.c.h.b16 %v1498
        %v1660 = vunpack.c.l.b16 %v1499
        %v1661 = vunpack.c.h.b16 %v1499
        %v1662 = vunpack.c.l.b16 %v1500
        %v1663 = vunpack.c.h.b16 %v1500
        %v1664 = vunpack.c.l.b16 %v1501
        %v1665 = vunpack.c.h.b16 %v1501
        %v1666 = vunpack.c.l.b16 %v1502
        %v1667 = vunpack.c.h.b16 %v1502
        %v1668 = vunpack.c.l.b16 %v1503
        %v1669 = vunpack.c.h.b16 %v1503
        %v1670 = vunpack.c.l.b16 %v1504
        %v1671 = vunpack.c.h.b16 %v1504
        %v1672 = vunpack.c.l.b16 %v1505
        %v1673 = vunpack.c.h.b16 %v1505
        %v1674 = vunpack.c.l.b16 %v1506
        %v1675 = vunpack.c.h.b16 %v1506
        %v1676 = vunpack.c.l.b16 %v1507
        %v1677 = vunpack.c.h.b16 %v1507
        %v1678 = vunpack.c.l.b16 %v1508
        %v1679 = vunpack.c.h.b16 %v1508
        %v1680 = vunpack.c.l.b16 %v1509
        %v1681 = vunpack.c.h.b16 %v1509
        %v1682 = vunpack.c.l.b16 %v1510
        %v1683 = vunpack.c.h.b16 %v1510
        %v1684 = vunpack.c.l.b16 %v1511
        %v1685 = vunpack.c.h.b16 %v1511
        %v1686 = vunpack.c.l.b16 %v1512
        %v1687 = vunpack.c.h.b16 %v1512
        %v1688 = vunpack.c.l.b16 %v1513
        %v1689 = vunpack.c.h.b16 %v1513
        %v1690 = vunpack.c.l.b16 %v1514
        %v1691 = vunpack.c.h.b16 %v1514
        %v1692 = vunpack.c.l.b16 %v1515
        %v1693 = vunpack.c.h.b16 %v1515
        %v1694 = vunpack.c.l.b16 %v1516
        %v1695 = vunpack.c.h.b16 %v1516
        %v1696 = vunpack.c.l.b16 %v1517
        %v1697 = vunpack.c.h.b16 %v1517
        %v1698 = vunpack.c.l.b16 %v1518
        %v1699 = vunpack.c.h.b16 %v1518
        %v1700 = vunpack.c.l.b16 %v1519
        %v1701 = vunpack.c.h.b16 %v1519
        %v1702 = vunpack.c.l.b16 %v1520
        %v1703 = vunpack.c.h.b16 %v1520
        %v1704 = vunpack.c.l.b16 %v1521
        %v1705 = vunpack.c.h.b16 %v1521
        %v1706 = vunpack.c.l.b16 %v1522
        %v1707 = vunpack.c.h.b16 %v1522
        %v1708 = vunpack.c.l.b16 %v1523
        %v1709 = vunpack.c.h.b16 %v1523
        %v1710 = vunpack.c.l.b16 %v1524
        %v1711 = vunpack.c.h.b16 %v1524
        %v1712 = vunpack.c.l.b16 %v1525
        %v1713 = vunpack.c.h.b16 %v1525
        %v1714 = vunpack.c.l.b16 %v1526
        %v1715 = vunpack.c.h.b16 %v1526
        %v1716 = vunpack.c.l.b16 %v1527
        %v1717 = vunpack.c.h.b16 %v1527
        %v1718 = vunpack.c.l.b16 %v1528
        %v1719 = vunpack.c.h.b16 %v1528
        %v1720 = vunpack.c.l.b16 %v1529
        %v1721 = vunpack.c.h.b16 %v1529
        %v1722 = vunpack.c.l.b16 %v1530
        %v1723 = vunpack.c.h.b16 %v1530
        %v1724 = vunpack.c.l.b16 %v1531
        %v1725 = vunpack.c.h.b16 %v1531
        %v1726 = vunpack.c.l.b16 %v1532
        %v1727 = vunpack.c.h.b16 %v1532
        %v1728 = vunpack.c.l.b16 %v1533
        %v1729 = vunpack.c.h.b16 %v1533
        %v1730 = vunpack.c.l.b16 %v1534
        %v1731 = vunpack.c.h.b16 %v1534
        %v1732 = vunpack.c.l.b16 %v1535
        %v1733 = vunpack.c.h.b16 %v1535
        %v1734 = vunpack.c.l.b16 %v1536
        %v1735 = vunpack.c.h.b16 %v1536
        %v1736 = vunpack.c.l.b16 %v1537
        %v1737 = vunpack.c.h.b16 %v1537
        %v1738 = vunpack.c.l.b16 %v1538
        %v1739 = vunpack.c.h.b16 %v1538
        %v1740 = vunpack.c.l.b16 %v1539
        %v1741 = vunpack.c.h.b16 %v1539
        %v1742 = vunpack.c.l.b16 %v1540
        %v1743 = vunpack.c.h.b16 %v1540
        %v1744 = vunpack.c.l.b16 %v1541
        %v1745 = vunpack.c.h.b16 %v1541
        %v1746 = vunpack.c.l.b16 %v1542
        %v1747 = vunpack.c.h.b16 %v1542
        %v1748 = vunpack.c.l.b16 %v1543
        %v1749 = vunpack.c.h.b16 %v1543
        %v1750 = vunpack.c.l.b16 %v1544
        %v1751 = vunpack.c.h.b16 %v1544
        %v1752 = vunpack.c.l.b16 %v1545
        %v1753 = vunpack.c.h.b16 %v1545
        %v1754 = vpack.c.b16 %v1628, %v1626
        %v1755 = vpack.c.b16 %v1629, %v1627
        %v1756 = vpack.c.b16 %v1632, %v1630
        %v1757 = vpack.c.b16 %v1633, %v1631
        %v1758 = vpack.c.b16 %v1636, %v1634
        %v1759 = vpack.c.b16 %v1637, %v1635
        %v1760 = vpack.c.b16 %v1640, %v1638
        %v1761 = vpack.c.b16 %v1641, %v1639
        %v1762 = vpack.c.b16 %v1644, %v1642
        %v1763 = vpack.c.b16 %v1645, %v1643
        %v1764 = vpack.c.b16 %v1648, %v1646
        %v1765 = vpack.c.b16 %v1649, %v1647
        %v1766 = vpack.c.b16 %v1652, %v1650
        %v1767 = vpack.c.b16 %v1653, %v1651
        %v1768 = vpack.c.b16 %v1656, %v1654
        %v1769 = vpack.c.b16 %v1657, %v1655
        %v1770 = vpack.c.b16 %v1660, %v1658
        %v1771 = vpack.c.b16 %v1661, %v1659
        %v1772 = vpack.c.b16 %v1664, %v1662
        %v1773 = vpack.c.b16 %v1665, %v1663
        %v1774 = vpack.c.b16 %v1668, %v1666
        %v1775 = vpack.c.b16 %v1669, %v1667
        %v1776 = vpack.c.b16 %v1672, %v1670
        %v1777 = vpack.c.b16 %v1673, %v1671
        %v1778 = vpack.c.b16 %v1676, %v1674
        %v1779 = vpack.c.b16 %v1677, %v1675
        %v1780 = vpack.c.b16 %v1680, %v1678
        %v1781 = vpack.c.b16 %v1681, %v1679
        %v1782 = vpack.c.b16 %v1684, %v1682
        %v1783 = vpack.c.b16 %v1685, %v1683
        %v1784 = vpack.c.b16 %v1688, %v1686
        %v1785 = vpack.c.b16 %v1689, %v1687
        %v1786 = vpack.c.b16 %v1692, %v1690
        %v1787 = vpack.c.b16 %v1693, %v1691
        %v1788 = vpack.c.b16 %v1696, %v1694
        %v1789 = vpack.c.b16 %v1697, %v1695
        %v1790 = vpack.c.b16 %v1700, %v1698
        %v1791 = vpack.c.b16 %v1701, %v1699
        %v1792 = vpack.c.b16 %v1704, %v1702
        %v1793 = vpack.c.b16 %v1705, %v1703
        %v1794 = vpack.c.b16 %v1708, %v1706
        %v1795 = vpack.c.b16 %v1709, %v1707
        %v1796 = vpack.c.b16 %v1712, %v1710
        %v1797 = vpack.c.b16 %v1713, %v1711
        %v1798 = vpack.c.b16 %v1716, %v1714
        %v1799 = vpack.c.b16 %v1717, %v1715
        %v1800 = vpack.c.b16 %v1720, %v1718
        %v1801 = vpack.c.b16 %v1721, %v1719
        %v1802 = vpack.c.b16 %v1724, %v1722
        %v1803 = vpack.c.b16 %v1725, %v1723
        %v1804 = vpack.c.b16 %v1728, %v1726
        %v1805 = vpack.c.b16 %v1729, %v1727
        %v1806 = vpack.c.b16 %v1732, %v1730
        %v1807 = vpack.c.b16 %v1733, %v1731
        %v1808 = vpack.c.b16 %v1736, %v1734
        %v1809 = vpack.c.b16 %v1737, %v1735
        %v1810 = vpack.c.b16 %v1740, %v1738
        %v1811 = vpack.c.b16 %v1741, %v1739
        %v1812 = vpack.c.b16 %v1744, %v1742
        %v1813 = vpack.c.b16 %v1745, %v1743
        %v1814 = vpack.c.b16 %v1748, %v1746
        %v1815 = vpack.c.b16 %v1749, %v1747
        %v1816 = vpack.c.b16 %v1752, %v1750
        %v1817 = vpack.c.b16 %v1753, %v1751
        %1882 = vmatprep.subr.bf16.mxu0 %v1769
        %1883 = vmatpush1.bf16.msra.mxu0 %v1768
        %1884 = vmatprep.subr.bf16.mxu0 %v1767
        %1885 = vmatpush1.bf16.msra.mxu0 %v1766
        %1886 = vmatprep.subr.bf16.mxu0 %v1765
        %1887 = vmatpush1.bf16.msra.mxu0 %v1764
        %1888 = vmatprep.subr.bf16.mxu0 %v1763
        %1889 = vmatpush1.bf16.msra.mxu0 %v1762
        %1890 = vmatprep.subr.bf16.mxu0 %v1761
        %1891 = vmatpush1.bf16.msra.mxu0 %v1760
        %1892 = vmatprep.subr.bf16.mxu0 %v1759
        %1893 = vmatpush1.bf16.msra.mxu0 %v1758
        %1894 = vmatprep.subr.bf16.mxu0 %v1757
        %1895 = vmatpush1.bf16.msra.mxu0 %v1756
        %1896 = vmatprep.subr.bf16.mxu0 %v1755
        %1897 = vmatpush1.bf16.msra.mxu0 %v1754
        %1898 = vmatprep.subr.bf16.mxu0 %v1785
        %1899 = vmatpush2.bf16.msra.mxu0 %v1784
        %1900 = vmatprep.subr.bf16.mxu0 %v1783
        %1901 = vmatpush2.bf16.msra.mxu0 %v1782
        %1902 = vmatprep.subr.bf16.mxu0 %v1781
        %1903 = vmatpush2.bf16.msra.mxu0 %v1780
        %1904 = vmatprep.subr.bf16.mxu0 %v1779
        %1905 = vmatpush2.bf16.msra.mxu0 %v1778
        %1906 = vmatprep.subr.bf16.mxu0 %v1777
        %1907 = vmatpush2.bf16.msra.mxu0 %v1776
        %1908 = vmatprep.subr.bf16.mxu0 %v1775
        %1909 = vmatpush2.bf16.msra.mxu0 %v1774
        %1910 = vmatprep.subr.bf16.mxu0 %v1773
        %1911 = vmatpush2.bf16.msra.mxu0 %v1772
        %1912 = vmatprep.subr.bf16.mxu0 %v1771
        %1913 = vmatpush2.bf16.msra.mxu0 %v1770
        %1914 = vmatprep.mubr.bf16.mxu0 %v1548
        %1915 = vmatmul.mubr.bf16.gmra.mxu0 %v1547
        %v1916 = vpop.f32.mrf.mxu0
        %v1917 = vadd.f32 %v1555, %v1916
        %v1918 = vpop.f32.mrf.mxu0
        %v1919 = vadd.f32 %v1559, %v1918
        %v1920 = vpop.f32.mrf.mxu0
        %v1921 = vadd.f32 %v1555, %v1920
        %v1922 = vpop.f32.mrf.mxu0
        %v1923 = vadd.f32 %v1559, %v1922
        %1924 = vdwg.mxu0
        %1925 = vmatprep.subr.bf16.mxu0 %v1801
        %1926 = vmatpush1.bf16.msra.mxu0 %v1800
        %1927 = vmatprep.subr.bf16.mxu0 %v1799
        %1928 = vmatpush1.bf16.msra.mxu0 %v1798
        %1929 = vmatprep.subr.bf16.mxu0 %v1797
        %1930 = vmatpush1.bf16.msra.mxu0 %v1796
        %1931 = vmatprep.subr.bf16.mxu0 %v1795
        %1932 = vmatpush1.bf16.msra.mxu0 %v1794
        %1933 = vmatprep.subr.bf16.mxu0 %v1793
        %1934 = vmatpush1.bf16.msra.mxu0 %v1792
        %1935 = vmatprep.subr.bf16.mxu0 %v1791
        %1936 = vmatpush1.bf16.msra.mxu0 %v1790
        %1937 = vmatprep.subr.bf16.mxu0 %v1789
        %1938 = vmatpush1.bf16.msra.mxu0 %v1788
        %1939 = vmatprep.subr.bf16.mxu0 %v1787
        %1940 = vmatpush1.bf16.msra.mxu0 %v1786
        %1941 = vmatprep.subr.bf16.mxu0 %v1817
        %1942 = vmatpush2.bf16.msra.mxu0 %v1816
        %1943 = vmatprep.subr.bf16.mxu0 %v1815
        %1944 = vmatpush2.bf16.msra.mxu0 %v1814
        %1945 = vmatprep.subr.bf16.mxu0 %v1813
        %1946 = vmatpush2.bf16.msra.mxu0 %v1812
        %1947 = vmatprep.subr.bf16.mxu0 %v1811
        %1948 = vmatpush2.bf16.msra.mxu0 %v1810
        %1949 = vmatprep.subr.bf16.mxu0 %v1809
        %1950 = vmatpush2.bf16.msra.mxu0 %v1808
        %1951 = vmatprep.subr.bf16.mxu0 %v1807
        %1952 = vmatpush2.bf16.msra.mxu0 %v1806
        %1953 = vmatprep.subr.bf16.mxu0 %v1805
        %1954 = vmatpush2.bf16.msra.mxu0 %v1804
        %1955 = vmatprep.subr.bf16.mxu0 %v1803
        %1956 = vmatpush2.bf16.msra.mxu0 %v1802
        %1957 = vmatprep.mubr.bf16.mxu0 %v1550
        %1958 = vmatmul.mubr.bf16.gmra.mxu0 %v1549
        %v1959 = vpop.f32.mrf.mxu0
        %v1960 = vadd.f32 %v1917, %v1959
        %v1961 = vpop.f32.mrf.mxu0
        %v1962 = vadd.f32 %v1919, %v1961
        %v1963 = vpop.f32.mrf.mxu0
        %v1964 = vadd.f32 %v1921, %v1963
        %v1965 = vpop.f32.mrf.mxu0
        %v1966 = vadd.f32 %v1923, %v1965
        %1967 = vdwg.mxu0
        %v1968 = vmax.f32 %v1960, 0.0
        %v1969 = vmax.f32 %v1962, 0.0
        %v1970 = vmax.f32 %v1964, 0.0
        %v1971 = vmax.f32 %v1966, 0.0
        %v1972 = vld [vmem:[#allocation13] sm:$0xf]
        %v1973 = vld [vmem:[#allocation13 + $0x4] sm:$0xf]
        %v1974 = vld [vmem:[#allocation13 + $0x8] sm:$0xf]
        %v1975 = vld [vmem:[#allocation13 + $0xc] sm:$0xf]
        %v1976 = vld [vmem:[#allocation13 + $0x10] sm:$0xf]
        %v1977 = vld [vmem:[#allocation13 + $0x14] sm:$0xf]
        %v1978 = vld [vmem:[#allocation13 + $0x18] sm:$0xf]
        %v1979 = vld [vmem:[#allocation13 + $0x1c] sm:$0xf]
        %v1980 = vld [vmem:[#allocation13 + $0x20] sm:$0xf]
        %v1981 = vld [vmem:[#allocation13 + $0x24] sm:$0xf]
        %v1982 = vld [vmem:[#allocation13 + $0x28] sm:$0xf]
        %v1983 = vld [vmem:[#allocation13 + $0x2c] sm:$0xf]
        %v1984 = vld [vmem:[#allocation13 + $0x30] sm:$0xf]
        %v1985 = vld [vmem:[#allocation13 + $0x34] sm:$0xf]
        %v1986 = vld [vmem:[#allocation13 + $0x38] sm:$0xf]
        %v1987 = vld [vmem:[#allocation13 + $0x3c] sm:$0xf]
        %v1988 = vld [vmem:[#allocation13 + $0x40] sm:$0xf]
        %v1989 = vld [vmem:[#allocation13 + $0x44] sm:$0xf]
        %v1990 = vld [vmem:[#allocation13 + $0x48] sm:$0xf]
        %v1991 = vld [vmem:[#allocation13 + $0x4c] sm:$0xf]
        %v1992 = vld [vmem:[#allocation13 + $0x50] sm:$0xf]
        %v1993 = vld [vmem:[#allocation13 + $0x54] sm:$0xf]
        %v1994 = vld [vmem:[#allocation13 + $0x58] sm:$0xf]
        %v1995 = vld [vmem:[#allocation13 + $0x5c] sm:$0xf]
        %v1996 = vld [vmem:[#allocation13 + $0x60] sm:$0xf]
        %v1997 = vld [vmem:[#allocation13 + $0x64] sm:$0xf]
        %v1998 = vld [vmem:[#allocation13 + $0x68] sm:$0xf]
        %v1999 = vld [vmem:[#allocation13 + $0x6c] sm:$0xf]
        %v2000 = vld [vmem:[#allocation13 + $0x70] sm:$0xf]
        %v2001 = vld [vmem:[#allocation13 + $0x74] sm:$0xf]
        %v2002 = vld [vmem:[#allocation13 + $0x78] sm:$0xf]
        %v2003 = vld [vmem:[#allocation13 + $0x7c] sm:$0xf]
        %v2004 = vld [vmem:[%s9] sm:$0x1]
        %v2005 = vpack.c.bf16 %v1970, %v1968
        %v2006 = vpack.c.bf16 %v1971, %v1969
        %v2008 = vlaneseq
        %v2009 = vshrl.u32 %v2008, 7
        %v2010 = vsub.s32 0, %v2009
        %v2011 = vrot.slane %v2004, %v2010
        %v2045 = vunpack.c.l.b16 %v1972
        %v2046 = vunpack.c.l.b16 %v1973
        %v2047 = vunpack.c.l.b16 %v1974
        %v2048 = vunpack.c.l.b16 %v1975
        %v2049 = vunpack.c.l.b16 %v1976
        %v2050 = vunpack.c.l.b16 %v1977
        %v2051 = vunpack.c.l.b16 %v1978
        %v2052 = vunpack.c.l.b16 %v1979
        %v2053 = vunpack.c.l.b16 %v1980
        %v2054 = vunpack.c.l.b16 %v1981
        %v2055 = vunpack.c.l.b16 %v1982
        %v2056 = vunpack.c.l.b16 %v1983
        %v2057 = vunpack.c.l.b16 %v1984
        %v2058 = vunpack.c.l.b16 %v1985
        %v2059 = vunpack.c.l.b16 %v1986
        %v2060 = vunpack.c.l.b16 %v1987
        %v2061 = vunpack.c.l.b16 %v1988
        %v2062 = vunpack.c.l.b16 %v1989
        %v2063 = vunpack.c.l.b16 %v1990
        %v2064 = vunpack.c.l.b16 %v1991
        %v2065 = vunpack.c.l.b16 %v1992
        %v2066 = vunpack.c.l.b16 %v1993
        %v2067 = vunpack.c.l.b16 %v1994
        %v2068 = vunpack.c.l.b16 %v1995
        %v2069 = vunpack.c.l.b16 %v1996
        %v2070 = vunpack.c.l.b16 %v1997
        %v2071 = vunpack.c.l.b16 %v1998
        %v2072 = vunpack.c.l.b16 %v1999
        %v2073 = vunpack.c.l.b16 %v2000
        %v2074 = vunpack.c.l.b16 %v2001
        %v2075 = vunpack.c.l.b16 %v2002
        %v2076 = vunpack.c.l.b16 %v2003
        %v2077 = vpack.c.b16 %v2046, %v2045
        %v2078 = vpack.c.b16 %v2048, %v2047
        %v2079 = vpack.c.b16 %v2050, %v2049
        %v2080 = vpack.c.b16 %v2052, %v2051
        %v2081 = vpack.c.b16 %v2054, %v2053
        %v2082 = vpack.c.b16 %v2056, %v2055
        %v2083 = vpack.c.b16 %v2058, %v2057
        %v2084 = vpack.c.b16 %v2060, %v2059
        %v2085 = vpack.c.b16 %v2062, %v2061
        %v2086 = vpack.c.b16 %v2064, %v2063
        %v2087 = vpack.c.b16 %v2066, %v2065
        %v2088 = vpack.c.b16 %v2068, %v2067
        %v2089 = vpack.c.b16 %v2070, %v2069
        %v2090 = vpack.c.b16 %v2072, %v2071
        %v2091 = vpack.c.b16 %v2074, %v2073
        %v2092 = vpack.c.b16 %v2076, %v2075
        %2109 = vmatprep.subr.bf16.mxu0 0
        %2110 = vmatpush1.bf16.msra.mxu0 %v2084
        %2111 = vmatprep.subr.bf16.mxu0 0
        %2112 = vmatpush1.bf16.msra.mxu0 %v2083
        %2113 = vmatprep.subr.bf16.mxu0 0
        %2114 = vmatpush1.bf16.msra.mxu0 %v2082
        %2115 = vmatprep.subr.bf16.mxu0 0
        %2116 = vmatpush1.bf16.msra.mxu0 %v2081
        %2117 = vmatprep.subr.bf16.mxu0 0
        %2118 = vmatpush1.bf16.msra.mxu0 %v2080
        %2119 = vmatprep.subr.bf16.mxu0 0
        %2120 = vmatpush1.bf16.msra.mxu0 %v2079
        %2121 = vmatprep.subr.bf16.mxu0 0
        %2122 = vmatpush1.bf16.msra.mxu0 %v2078
        %2123 = vmatprep.subr.bf16.mxu0 0
        %2124 = vmatpush1.bf16.msra.mxu0 %v2077
        %2125 = vmatprep.subr.bf16.mxu0 0
        %2126 = vmatpush2.bf16.msra.mxu0 %v2092
        %2127 = vmatprep.subr.bf16.mxu0 0
        %2128 = vmatpush2.bf16.msra.mxu0 %v2091
        %2129 = vmatprep.subr.bf16.mxu0 0
        %2130 = vmatpush2.bf16.msra.mxu0 %v2090
        %2131 = vmatprep.subr.bf16.mxu0 0
        %2132 = vmatpush2.bf16.msra.mxu0 %v2089
        %2133 = vmatprep.subr.bf16.mxu0 0
        %2134 = vmatpush2.bf16.msra.mxu0 %v2088
        %2135 = vmatprep.subr.bf16.mxu0 0
        %2136 = vmatpush2.bf16.msra.mxu0 %v2087
        %2137 = vmatprep.subr.bf16.mxu0 0
        %2138 = vmatpush2.bf16.msra.mxu0 %v2086
        %2139 = vmatprep.subr.bf16.mxu0 0
        %2140 = vmatpush2.bf16.msra.mxu0 %v2085
        %2141 = vmatprep.mubr.bf16.mxu0 %v2006
        %2142 = vmatmul.mubr.bf16.gmra.mxu0 %v2005
        %v2143 = vpop.f32.mrf.mxu0
        %v2144 = vadd.f32 %v2011, %v2143
        %v2145 = vpop.f32.mrf.mxu0
        %v2146 = vpop.f32.mrf.mxu0
        %v2147 = vadd.f32 %v2011, %v2146
        %v2148 = vpop.f32.mrf.mxu0
        %2149 = vdwg.mxu0
        %v2150 = vmax.f32 %v2144, 0.0
        %v2151 = vmax.f32 %v2147, 0.0
        %v2152 = vld [vmem:[#allocation14] sm:$0xf]
        %v2153 = vld [vmem:[#allocation14 + $0x4] sm:$0xf]
        %v2154 = vld [vmem:[#allocation14 + $0x8] sm:$0xf]
        %v2155 = vld [vmem:[#allocation14 + $0xc] sm:$0xf]
        %v2156 = vld [vmem:[#allocation14 + $0x10] sm:$0xf]
        %v2157 = vld [vmem:[#allocation14 + $0x14] sm:$0xf]
        %v2158 = vld [vmem:[#allocation14 + $0x18] sm:$0xf]
        %v2159 = vld [vmem:[#allocation14 + $0x1c] sm:$0xf]
        %v2160 = vld [vmem:[#allocation14 + $0x20] sm:$0xf]
        %v2161 = vld [vmem:[#allocation14 + $0x24] sm:$0xf]
        %v2162 = vld [vmem:[#allocation14 + $0x28] sm:$0xf]
        %v2163 = vld [vmem:[#allocation14 + $0x2c] sm:$0xf]
        %v2164 = vld [vmem:[#allocation14 + $0x30] sm:$0xf]
        %v2165 = vld [vmem:[#allocation14 + $0x34] sm:$0xf]
        %v2166 = vld [vmem:[#allocation14 + $0x38] sm:$0xf]
        %v2167 = vld [vmem:[#allocation14 + $0x3c] sm:$0xf]
        %v2168 = vld [vmem:[%s11] sm:$0x1]
        %v2169 = vpack.c.bf16 %v2151, %v2150
        %v2171 = vlaneseq
        %v2172 = vshrl.u32 %v2171, 7
        %v2173 = vsub.s32 0, %v2172
        %v2174 = vrot.slane %v2168, %v2173
        %v2192 = vunpack.c.l.b16 %v2152
        %v2193 = vunpack.c.l.b16 %v2153
        %v2194 = vunpack.c.l.b16 %v2154
        %v2195 = vunpack.c.l.b16 %v2155
        %v2196 = vunpack.c.l.b16 %v2156
        %v2197 = vunpack.c.l.b16 %v2157
        %v2198 = vunpack.c.l.b16 %v2158
        %v2199 = vunpack.c.l.b16 %v2159
        %v2200 = vunpack.c.l.b16 %v2160
        %v2201 = vunpack.c.l.b16 %v2161
        %v2202 = vunpack.c.l.b16 %v2162
        %v2203 = vunpack.c.l.b16 %v2163
        %v2204 = vunpack.c.l.b16 %v2164
        %v2205 = vunpack.c.l.b16 %v2165
        %v2206 = vunpack.c.l.b16 %v2166
        %v2207 = vunpack.c.l.b16 %v2167
        %v2208 = vpack.c.b16 %v2193, %v2192
        %v2209 = vpack.c.b16 %v2195, %v2194
        %v2210 = vpack.c.b16 %v2197, %v2196
        %v2211 = vpack.c.b16 %v2199, %v2198
        %v2212 = vpack.c.b16 %v2201, %v2200
        %v2213 = vpack.c.b16 %v2203, %v2202
        %v2214 = vpack.c.b16 %v2205, %v2204
        %v2215 = vpack.c.b16 %v2207, %v2206
        %2224 = vmatprep.subr.bf16.mxu0 0
        %2225 = vmatpush1.bf16.msra.mxu0 %v2215
        %2226 = vmatprep.subr.bf16.mxu0 0
        %2227 = vmatpush1.bf16.msra.mxu0 %v2214
        %2228 = vmatprep.subr.bf16.mxu0 0
        %2229 = vmatpush1.bf16.msra.mxu0 %v2213
        %2230 = vmatprep.subr.bf16.mxu0 0
        %2231 = vmatpush1.bf16.msra.mxu0 %v2212
        %2232 = vmatprep.subr.bf16.mxu0 0
        %2233 = vmatpush1.bf16.msra.mxu0 %v2211
        %2234 = vmatprep.subr.bf16.mxu0 0
        %2235 = vmatpush1.bf16.msra.mxu0 %v2210
        %2236 = vmatprep.subr.bf16.mxu0 0
        %2237 = vmatpush1.bf16.msra.mxu0 %v2209
        %2238 = vmatprep.subr.bf16.mxu0 0
        %2239 = vmatpush1.bf16.msra.mxu0 %v2208
        %2240 = vmatprep.subr.bf16.mxu0 0
        %2241 = vmatpush2.bf16.msra.mxu0 0
        %2242 = vmatprep.subr.bf16.mxu0 0
        %2243 = vmatpush2.bf16.msra.mxu0 0
        %2244 = vmatprep.subr.bf16.mxu0 0
        %2245 = vmatpush2.bf16.msra.mxu0 0
        %2246 = vmatprep.subr.bf16.mxu0 0
        %2247 = vmatpush2.bf16.msra.mxu0 0
        %2248 = vmatprep.subr.bf16.mxu0 0
        %2249 = vmatpush2.bf16.msra.mxu0 0
        %2250 = vmatprep.subr.bf16.mxu0 0
        %2251 = vmatpush2.bf16.msra.mxu0 0
        %2252 = vmatprep.subr.bf16.mxu0 0
        %2253 = vmatpush2.bf16.msra.mxu0 0
        %2254 = vmatprep.subr.bf16.mxu0 0
        %2255 = vmatpush2.bf16.msra.mxu0 0
        %2256 = vmatprep.mubr.bf16.mxu0 0
        %2257 = vmatmul.mubr.bf16.gmra.mxu0 %v2169
        %v2258 = vpop.f32.mrf.mxu0
        %v2259 = vadd.f32 %v2174, %v2258
        %v2260 = vpop.f32.mrf.mxu0
        %v2261 = vpop.f32.mrf.mxu0
        %v2262 = vadd.f32 %v2174, %v2261
        %v2263 = vpop.f32.mrf.mxu0
        %2264 = vdwg.mxu0
        %v2265 = vmax.f32 %v2259, 0.0
        %v2266 = vmax.f32 %v2262, 0.0
        %v2267 = vld [vmem:[#allocation16] sm:$0xf]
        %v2268 = vld [vmem:[#allocation16 + $0x4] sm:$0xf]
        %v2269 = vld [vmem:[#allocation16 + $0x8] sm:$0xf]
        %v2270 = vld [vmem:[#allocation16 + $0xc] sm:$0xf]
        %v2271 = vld [vmem:[#allocation16 + $0x10] sm:$0xf]
        %v2272 = vld [vmem:[#allocation16 + $0x14] sm:$0xf]
        %v2273 = vld [vmem:[#allocation16 + $0x18] sm:$0xf]
        %v2274 = vld [vmem:[#allocation16 + $0x1c] sm:$0xf]
        %v2275 = vld [vmem:[#allocation16 + $0x20] sm:$0xf]
        %v2276 = vld [vmem:[#allocation16 + $0x24] sm:$0xf]
        %v2277 = vld [vmem:[#allocation16 + $0x28] sm:$0xf]
        %v2278 = vld [vmem:[#allocation16 + $0x2c] sm:$0xf]
        %v2279 = vld [vmem:[#allocation16 + $0x30] sm:$0xf]
        %v2280 = vld [vmem:[#allocation16 + $0x34] sm:$0xf]
        %v2281 = vld [vmem:[#allocation16 + $0x38] sm:$0xf]
        %v2282 = vld [vmem:[#allocation16 + $0x3c] sm:$0xf]
        %v2283 = vld [vmem:[%s13] sm:$0x1]
        %v2284 = vpack.c.bf16 %v2266, %v2265
        %v2286 = vlaneseq
        %v2287 = vshrl.u32 %v2286, 7
        %v2288 = vsub.s32 0, %v2287
        %v2289 = vrot.slane %v2283, %v2288
        %v2307 = vunpack.c.l.b16 %v2267
        %v2308 = vunpack.c.l.b16 %v2268
        %v2309 = vunpack.c.l.b16 %v2269
        %v2310 = vunpack.c.l.b16 %v2270
        %v2311 = vunpack.c.l.b16 %v2271
        %v2312 = vunpack.c.l.b16 %v2272
        %v2313 = vunpack.c.l.b16 %v2273
        %v2314 = vunpack.c.l.b16 %v2274
        %v2315 = vunpack.c.l.b16 %v2275
        %v2316 = vunpack.c.l.b16 %v2276
        %v2317 = vunpack.c.l.b16 %v2277
        %v2318 = vunpack.c.l.b16 %v2278
        %v2319 = vunpack.c.l.b16 %v2279
        %v2320 = vunpack.c.l.b16 %v2280
        %v2321 = vunpack.c.l.b16 %v2281
        %v2322 = vunpack.c.l.b16 %v2282
        %v2323 = vpack.c.b16 %v2308, %v2307
        %v2324 = vpack.c.b16 %v2310, %v2309
        %v2325 = vpack.c.b16 %v2312, %v2311
        %v2326 = vpack.c.b16 %v2314, %v2313
        %v2327 = vpack.c.b16 %v2316, %v2315
        %v2328 = vpack.c.b16 %v2318, %v2317
        %v2329 = vpack.c.b16 %v2320, %v2319
        %v2330 = vpack.c.b16 %v2322, %v2321
        %2339 = vmatprep.subr.bf16.mxu0 0
        %2340 = vmatpush1.bf16.msra.mxu0 %v2330
        %2341 = vmatprep.subr.bf16.mxu0 0
        %2342 = vmatpush1.bf16.msra.mxu0 %v2329
        %2343 = vmatprep.subr.bf16.mxu0 0
        %2344 = vmatpush1.bf16.msra.mxu0 %v2328
        %2345 = vmatprep.subr.bf16.mxu0 0
        %2346 = vmatpush1.bf16.msra.mxu0 %v2327
        %2347 = vmatprep.subr.bf16.mxu0 0
        %2348 = vmatpush1.bf16.msra.mxu0 %v2326
        %2349 = vmatprep.subr.bf16.mxu0 0
        %2350 = vmatpush1.bf16.msra.mxu0 %v2325
        %2351 = vmatprep.subr.bf16.mxu0 0
        %2352 = vmatpush1.bf16.msra.mxu0 %v2324
        %2353 = vmatprep.subr.bf16.mxu0 0
        %2354 = vmatpush1.bf16.msra.mxu0 %v2323
        %2355 = vmatprep.subr.bf16.mxu0 0
        %2356 = vmatpush2.bf16.msra.mxu0 0
        %2357 = vmatprep.subr.bf16.mxu0 0
        %2358 = vmatpush2.bf16.msra.mxu0 0
        %2359 = vmatprep.subr.bf16.mxu0 0
        %2360 = vmatpush2.bf16.msra.mxu0 0
        %2361 = vmatprep.subr.bf16.mxu0 0
        %2362 = vmatpush2.bf16.msra.mxu0 0
        %2363 = vmatprep.subr.bf16.mxu0 0
        %2364 = vmatpush2.bf16.msra.mxu0 0
        %2365 = vmatprep.subr.bf16.mxu0 0
        %2366 = vmatpush2.bf16.msra.mxu0 0
        %2367 = vmatprep.subr.bf16.mxu0 0
        %2368 = vmatpush2.bf16.msra.mxu0 0
        %2369 = vmatprep.subr.bf16.mxu0 0
        %2370 = vmatpush2.bf16.msra.mxu0 0
        %2371 = vmatprep.mubr.bf16.mxu0 0
        %2372 = vmatmul.mubr.bf16.gmra.mxu0 %v2284
        %v2373 = vpop.f32.mrf.mxu0
        %v2374 = vadd.f32 %v2289, %v2373
        %v2375 = vpop.f32.mrf.mxu0
        %v2376 = vpop.f32.mrf.mxu0
        %v2377 = vadd.f32 %v2289, %v2376
        %v2378 = vpop.f32.mrf.mxu0
        %2379 = vdwg.mxu0
        %v2380 = vld [vmem:[#allocation17] sm:$0xf]
        %v2381 = vld [vmem:[#allocation17 + $0x4] sm:$0xf]
        %v2382 = vld [vmem:[#allocation17 + $0x8] sm:$0xf]
        %v2383 = vld [vmem:[#allocation17 + $0xc] sm:$0xf]
        %v2384 = vld [vmem:[#allocation17 + $0x10] sm:$0xf]
        %v2385 = vld [vmem:[#allocation17 + $0x14] sm:$0xf]
        %v2386 = vld [vmem:[#allocation17 + $0x18] sm:$0xf]
        %v2387 = vld [vmem:[#allocation17 + $0x1c] sm:$0xf]
        %v2388 = vld [vmem:[#allocation17 + $0x20] sm:$0xf]
        %v2389 = vld [vmem:[#allocation17 + $0x24] sm:$0xf]
        %v2390 = vld [vmem:[#allocation17 + $0x28] sm:$0xf]
        %v2391 = vld [vmem:[#allocation17 + $0x2c] sm:$0xf]
        %v2392 = vld [vmem:[#allocation17 + $0x30] sm:$0xf]
        %v2393 = vld [vmem:[#allocation17 + $0x34] sm:$0xf]
        %v2394 = vld [vmem:[#allocation17 + $0x38] sm:$0xf]
        %v2395 = vld [vmem:[#allocation17 + $0x3c] sm:$0xf]
        %v2396 = vld [vmem:[%s15] sm:$0x1]
        %v2397 = vpack.c.bf16 %v2377, %v2374
        %v2399 = vlaneseq
        %v2400 = vshrl.u32 %v2399, 7
        %v2401 = vsub.s32 0, %v2400
        %v2402 = vrot.slane %v2396, %v2401
        %v2420 = vunpack.c.l.b16 %v2380
        %v2421 = vunpack.c.l.b16 %v2381
        %v2422 = vunpack.c.l.b16 %v2382
        %v2423 = vunpack.c.l.b16 %v2383
        %v2424 = vunpack.c.l.b16 %v2384
        %v2425 = vunpack.c.l.b16 %v2385
        %v2426 = vunpack.c.l.b16 %v2386
        %v2427 = vunpack.c.l.b16 %v2387
        %v2428 = vunpack.c.l.b16 %v2388
        %v2429 = vunpack.c.l.b16 %v2389
        %v2430 = vunpack.c.l.b16 %v2390
        %v2431 = vunpack.c.l.b16 %v2391
        %v2432 = vunpack.c.l.b16 %v2392
        %v2433 = vunpack.c.l.b16 %v2393
        %v2434 = vunpack.c.l.b16 %v2394
        %v2435 = vunpack.c.l.b16 %v2395
        %v2436 = vpack.c.b16 %v2421, %v2420
        %v2437 = vpack.c.b16 %v2423, %v2422
        %v2438 = vpack.c.b16 %v2425, %v2424
        %v2439 = vpack.c.b16 %v2427, %v2426
        %v2440 = vpack.c.b16 %v2429, %v2428
        %v2441 = vpack.c.b16 %v2431, %v2430
        %v2442 = vpack.c.b16 %v2433, %v2432
        %v2443 = vpack.c.b16 %v2435, %v2434
        %2452 = vmatprep.subr.bf16.mxu0 0
        %2453 = vmatpush1.bf16.msra.mxu0 %v2443
        %2454 = vmatprep.subr.bf16.mxu0 0
        %2455 = vmatpush1.bf16.msra.mxu0 %v2442
        %2456 = vmatprep.subr.bf16.mxu0 0
        %2457 = vmatpush1.bf16.msra.mxu0 %v2441
        %2458 = vmatprep.subr.bf16.mxu0 0
        %2459 = vmatpush1.bf16.msra.mxu0 %v2440
        %2460 = vmatprep.subr.bf16.mxu0 0
        %2461 = vmatpush1.bf16.msra.mxu0 %v2439
        %2462 = vmatprep.subr.bf16.mxu0 0
        %2463 = vmatpush1.bf16.msra.mxu0 %v2438
        %2464 = vmatprep.subr.bf16.mxu0 0
        %2465 = vmatpush1.bf16.msra.mxu0 %v2437
        %2466 = vmatprep.subr.bf16.mxu0 0
        %2467 = vmatpush1.bf16.msra.mxu0 %v2436
        %2468 = vmatprep.subr.bf16.mxu0 0
        %2469 = vmatpush2.bf16.msra.mxu0 0
        %2470 = vmatprep.subr.bf16.mxu0 0
        %2471 = vmatpush2.bf16.msra.mxu0 0
        %2472 = vmatprep.subr.bf16.mxu0 0
        %2473 = vmatpush2.bf16.msra.mxu0 0
        %2474 = vmatprep.subr.bf16.mxu0 0
        %2475 = vmatpush2.bf16.msra.mxu0 0
        %2476 = vmatprep.subr.bf16.mxu0 0
        %2477 = vmatpush2.bf16.msra.mxu0 0
        %2478 = vmatprep.subr.bf16.mxu0 0
        %2479 = vmatpush2.bf16.msra.mxu0 0
        %2480 = vmatprep.subr.bf16.mxu0 0
        %2481 = vmatpush2.bf16.msra.mxu0 0
        %2482 = vmatprep.subr.bf16.mxu0 0
        %2483 = vmatpush2.bf16.msra.mxu0 0
        %2484 = vmatprep.mubr.bf16.mxu0 0
        %2485 = vmatmul.mubr.bf16.gmra.mxu0 %v2397
        %v2486 = vpop.f32.mrf.mxu0
        %v2487 = vadd.f32 %v2402, %v2486
        %v2488 = vpop.f32.mrf.mxu0
        %v2489 = vpop.f32.mrf.mxu0
        %v2490 = vadd.f32 %v2402, %v2489
        %v2491 = vpop.f32.mrf.mxu0
        %2492 = vdwg.mxu0
        %v2493 = vmax.f32 %v2487, 0.0
        %v2494 = vmax.f32 %v2490, 0.0
        %v2495 = vld [vmem:[#allocation19] sm:$0xf]
        %v2496 = vld [vmem:[#allocation19 + $0x4] sm:$0xf]
        %v2497 = vld [vmem:[#allocation19 + $0x8] sm:$0xf]
        %v2498 = vld [vmem:[#allocation19 + $0xc] sm:$0xf]
        %v2499 = vld [vmem:[#allocation19 + $0x10] sm:$0xf]
        %v2500 = vld [vmem:[#allocation19 + $0x14] sm:$0xf]
        %v2501 = vld [vmem:[#allocation19 + $0x18] sm:$0xf]
        %v2502 = vld [vmem:[#allocation19 + $0x1c] sm:$0xf]
        %v2503 = vld [vmem:[#allocation19 + $0x20] sm:$0xf]
        %v2504 = vld [vmem:[#allocation19 + $0x24] sm:$0xf]
        %v2505 = vld [vmem:[#allocation19 + $0x28] sm:$0xf]
        %v2506 = vld [vmem:[#allocation19 + $0x2c] sm:$0xf]
        %v2507 = vld [vmem:[#allocation19 + $0x30] sm:$0xf]
        %v2508 = vld [vmem:[#allocation19 + $0x34] sm:$0xf]
        %v2509 = vld [vmem:[#allocation19 + $0x38] sm:$0xf]
        %v2510 = vld [vmem:[#allocation19 + $0x3c] sm:$0xf]
        %v2511 = vld [vmem:[%s17] sm:$0x1]
        %v2512 = vpack.c.bf16 %v2494, %v2493
        %v2514 = vlaneseq
        %v2515 = vshrl.u32 %v2514, 7
        %v2516 = vsub.s32 0, %v2515
        %v2517 = vrot.slane %v2511, %v2516
        %v2535 = vunpack.c.l.b16 %v2495
        %v2536 = vunpack.c.l.b16 %v2496
        %v2537 = vunpack.c.l.b16 %v2497
        %v2538 = vunpack.c.l.b16 %v2498
        %v2539 = vunpack.c.l.b16 %v2499
        %v2540 = vunpack.c.l.b16 %v2500
        %v2541 = vunpack.c.l.b16 %v2501
        %v2542 = vunpack.c.l.b16 %v2502
        %v2543 = vunpack.c.l.b16 %v2503
        %v2544 = vunpack.c.l.b16 %v2504
        %v2545 = vunpack.c.l.b16 %v2505
        %v2546 = vunpack.c.l.b16 %v2506
        %v2547 = vunpack.c.l.b16 %v2507
        %v2548 = vunpack.c.l.b16 %v2508
        %v2549 = vunpack.c.l.b16 %v2509
        %v2550 = vunpack.c.l.b16 %v2510
        %v2551 = vpack.c.b16 %v2536, %v2535
        %v2552 = vpack.c.b16 %v2538, %v2537
        %v2553 = vpack.c.b16 %v2540, %v2539
        %v2554 = vpack.c.b16 %v2542, %v2541
        %v2555 = vpack.c.b16 %v2544, %v2543
        %v2556 = vpack.c.b16 %v2546, %v2545
        %v2557 = vpack.c.b16 %v2548, %v2547
        %v2558 = vpack.c.b16 %v2550, %v2549
        %2567 = vmatprep.subr.bf16.mxu0 0
        %2568 = vmatpush1.bf16.msra.mxu0 %v2558
        %2569 = vmatprep.subr.bf16.mxu0 0
        %2570 = vmatpush1.bf16.msra.mxu0 %v2557
        %2571 = vmatprep.subr.bf16.mxu0 0
        %2572 = vmatpush1.bf16.msra.mxu0 %v2556
        %2573 = vmatprep.subr.bf16.mxu0 0
        %2574 = vmatpush1.bf16.msra.mxu0 %v2555
        %2575 = vmatprep.subr.bf16.mxu0 0
        %2576 = vmatpush1.bf16.msra.mxu0 %v2554
        %2577 = vmatprep.subr.bf16.mxu0 0
        %2578 = vmatpush1.bf16.msra.mxu0 %v2553
        %2579 = vmatprep.subr.bf16.mxu0 0
        %2580 = vmatpush1.bf16.msra.mxu0 %v2552
        %2581 = vmatprep.subr.bf16.mxu0 0
        %2582 = vmatpush1.bf16.msra.mxu0 %v2551
        %2583 = vmatprep.subr.bf16.mxu0 0
        %2584 = vmatpush2.bf16.msra.mxu0 0
        %2585 = vmatprep.subr.bf16.mxu0 0
        %2586 = vmatpush2.bf16.msra.mxu0 0
        %2587 = vmatprep.subr.bf16.mxu0 0
        %2588 = vmatpush2.bf16.msra.mxu0 0
        %2589 = vmatprep.subr.bf16.mxu0 0
        %2590 = vmatpush2.bf16.msra.mxu0 0
        %2591 = vmatprep.subr.bf16.mxu0 0
        %2592 = vmatpush2.bf16.msra.mxu0 0
        %2593 = vmatprep.subr.bf16.mxu0 0
        %2594 = vmatpush2.bf16.msra.mxu0 0
        %2595 = vmatprep.subr.bf16.mxu0 0
        %2596 = vmatpush2.bf16.msra.mxu0 0
        %2597 = vmatprep.subr.bf16.mxu0 0
        %2598 = vmatpush2.bf16.msra.mxu0 0
        %2599 = vmatprep.mubr.bf16.mxu0 0
        %2600 = vmatmul.mubr.bf16.gmra.mxu0 %v2512
        %v2601 = vpop.f32.mrf.mxu0
        %v2602 = vadd.f32 %v2517, %v2601
        %v2603 = vpop.f32.mrf.mxu0
        %v2604 = vpop.f32.mrf.mxu0
        %v2605 = vadd.f32 %v2517, %v2604
        %v2606 = vpop.f32.mrf.mxu0
        %2607 = vdwg.mxu0
        %v2608 = vmax.f32 %v2602, 0.0
        %v2609 = vmax.f32 %v2605, 0.0
        %v2610 = vld [vmem:[#allocation20] sm:$0xff]
        %v2611 = vld [vmem:[#allocation20 + $0x8] sm:$0xff]
        %v2612 = vld [vmem:[#allocation20 + $0x10] sm:$0xff]
        %v2613 = vld [vmem:[#allocation20 + $0x18] sm:$0xff]
        %v2614 = vld [vmem:[#allocation20 + $0x20] sm:$0xff]
        %v2615 = vld [vmem:[#allocation20 + $0x28] sm:$0xff]
        %v2616 = vld [vmem:[#allocation20 + $0x30] sm:$0xff]
        %v2617 = vld [vmem:[#allocation20 + $0x38] sm:$0xff]
        %v2618 = vld [vmem:[#allocation20 + $0x40] sm:$0xff]
        %v2619 = vld [vmem:[#allocation20 + $0x48] sm:$0xff]
        %v2620 = vld [vmem:[#allocation20 + $0x50] sm:$0xff]
        %v2621 = vld [vmem:[#allocation20 + $0x58] sm:$0xff]
        %v2622 = vld [vmem:[#allocation20 + $0x60] sm:$0xff]
        %v2623 = vld [vmem:[#allocation20 + $0x68] sm:$0xff]
        %v2624 = vld [vmem:[#allocation20 + $0x70] sm:$0xff]
        %v2625 = vld [vmem:[#allocation20 + $0x78] sm:$0xff]
        %v2626 = vld [vmem:[%s19] sm:$0x3]
        %v2627 = vpack.c.bf16 %v2609, %v2608
        %v2629 = vlaneseq
        %v2630 = vshrl.u32 %v2629, 7
        %v2631 = vsub.s32 0, %v2630
        %v2632 = vrot.slane %v2626, %v2631
        %v2633 = vlaneseq
        %v2634 = vshrl.u32 %v2633, 7
        %v2635 = vsub.s32 1, %v2634
        %v2636 = vrot.slane %v2626, %v2635
        %v2655 = vunpack.c.l.b16 %v2610
        %v2656 = vunpack.c.h.b16 %v2610
        %v2657 = vunpack.c.l.b16 %v2611
        %v2658 = vunpack.c.h.b16 %v2611
        %v2659 = vunpack.c.l.b16 %v2612
        %v2660 = vunpack.c.h.b16 %v2612
        %v2661 = vunpack.c.l.b16 %v2613
        %v2662 = vunpack.c.h.b16 %v2613
        %v2663 = vunpack.c.l.b16 %v2614
        %v2664 = vunpack.c.h.b16 %v2614
        %v2665 = vunpack.c.l.b16 %v2615
        %v2666 = vunpack.c.h.b16 %v2615
        %v2667 = vunpack.c.l.b16 %v2616
        %v2668 = vunpack.c.h.b16 %v2616
        %v2669 = vunpack.c.l.b16 %v2617
        %v2670 = vunpack.c.h.b16 %v2617
        %v2671 = vunpack.c.l.b16 %v2618
        %v2672 = vunpack.c.h.b16 %v2618
        %v2673 = vunpack.c.l.b16 %v2619
        %v2674 = vunpack.c.h.b16 %v2619
        %v2675 = vunpack.c.l.b16 %v2620
        %v2676 = vunpack.c.h.b16 %v2620
        %v2677 = vunpack.c.l.b16 %v2621
        %v2678 = vunpack.c.h.b16 %v2621
        %v2679 = vunpack.c.l.b16 %v2622
        %v2680 = vunpack.c.h.b16 %v2622
        %v2681 = vunpack.c.l.b16 %v2623
        %v2682 = vunpack.c.h.b16 %v2623
        %v2683 = vunpack.c.l.b16 %v2624
        %v2684 = vunpack.c.h.b16 %v2624
        %v2685 = vunpack.c.l.b16 %v2625
        %v2686 = vunpack.c.h.b16 %v2625
        %v2687 = vpack.c.b16 %v2657, %v2655
        %v2688 = vpack.c.b16 %v2658, %v2656
        %v2689 = vpack.c.b16 %v2661, %v2659
        %v2690 = vpack.c.b16 %v2662, %v2660
        %v2691 = vpack.c.b16 %v2665, %v2663
        %v2692 = vpack.c.b16 %v2666, %v2664
        %v2693 = vpack.c.b16 %v2669, %v2667
        %v2694 = vpack.c.b16 %v2670, %v2668
        %v2695 = vpack.c.b16 %v2673, %v2671
        %v2696 = vpack.c.b16 %v2674, %v2672
        %v2697 = vpack.c.b16 %v2677, %v2675
        %v2698 = vpack.c.b16 %v2678, %v2676
        %v2699 = vpack.c.b16 %v2681, %v2679
        %v2700 = vpack.c.b16 %v2682, %v2680
        %v2701 = vpack.c.b16 %v2685, %v2683
        %v2702 = vpack.c.b16 %v2686, %v2684
        %2719 = vmatprep.subr.bf16.mxu0 %v2702
        %2720 = vmatpush1.bf16.msra.mxu0 %v2701
        %2721 = vmatprep.subr.bf16.mxu0 %v2700
        %2722 = vmatpush1.bf16.msra.mxu0 %v2699
        %2723 = vmatprep.subr.bf16.mxu0 %v2698
        %2724 = vmatpush1.bf16.msra.mxu0 %v2697
        %2725 = vmatprep.subr.bf16.mxu0 %v2696
        %2726 = vmatpush1.bf16.msra.mxu0 %v2695
        %2727 = vmatprep.subr.bf16.mxu0 %v2694
        %2728 = vmatpush1.bf16.msra.mxu0 %v2693
        %2729 = vmatprep.subr.bf16.mxu0 %v2692
        %2730 = vmatpush1.bf16.msra.mxu0 %v2691
        %2731 = vmatprep.subr.bf16.mxu0 %v2690
        %2732 = vmatpush1.bf16.msra.mxu0 %v2689
        %2733 = vmatprep.subr.bf16.mxu0 %v2688
        %2734 = vmatpush1.bf16.msra.mxu0 %v2687
        %2735 = vmatprep.subr.bf16.mxu0 0
        %2736 = vmatpush2.bf16.msra.mxu0 0
        %2737 = vmatprep.subr.bf16.mxu0 0
        %2738 = vmatpush2.bf16.msra.mxu0 0
        %2739 = vmatprep.subr.bf16.mxu0 0
        %2740 = vmatpush2.bf16.msra.mxu0 0
        %2741 = vmatprep.subr.bf16.mxu0 0
        %2742 = vmatpush2.bf16.msra.mxu0 0
        %2743 = vmatprep.subr.bf16.mxu0 0
        %2744 = vmatpush2.bf16.msra.mxu0 0
        %2745 = vmatprep.subr.bf16.mxu0 0
        %2746 = vmatpush2.bf16.msra.mxu0 0
        %2747 = vmatprep.subr.bf16.mxu0 0
        %2748 = vmatpush2.bf16.msra.mxu0 0
        %2749 = vmatprep.subr.bf16.mxu0 0
        %2750 = vmatpush2.bf16.msra.mxu0 0
        %2751 = vmatprep.mubr.bf16.mxu0 0
        %2752 = vmatmul.mubr.bf16.gmra.mxu0 %v2627
        %v2753 = vpop.f32.mrf.mxu0
        %v2754 = vadd.f32 %v2632, %v2753
        %v2755 = vpop.f32.mrf.mxu0
        %v2756 = vadd.f32 %v2636, %v2755
        %v2757 = vpop.f32.mrf.mxu0
        %v2758 = vadd.f32 %v2632, %v2757
        %v2759 = vpop.f32.mrf.mxu0
        %v2760 = vadd.f32 %v2636, %v2759
        %2761 = vdwg.mxu0
        %v2762 = vmax.f32 %v2754, 0.0
        %v2763 = vmax.f32 %v2756, 0.0
        %v2764 = vmax.f32 %v2758, 0.0
        %v2765 = vmax.f32 %v2760, 0.0
        %v2766 = vld [vmem:[#allocation22] sm:$0xff]
        %v2767 = vld [vmem:[#allocation22 + $0x8] sm:$0xff]
        %v2768 = vld [vmem:[#allocation22 + $0x10] sm:$0xff]
        %v2769 = vld [vmem:[#allocation22 + $0x18] sm:$0xff]
        %v2770 = vld [vmem:[#allocation22 + $0x20] sm:$0xff]
        %v2771 = vld [vmem:[#allocation22 + $0x28] sm:$0xff]
        %v2772 = vld [vmem:[#allocation22 + $0x30] sm:$0xff]
        %v2773 = vld [vmem:[#allocation22 + $0x38] sm:$0xff]
        %v2774 = vld [vmem:[#allocation22 + $0x40] sm:$0xff]
        %v2775 = vld [vmem:[#allocation22 + $0x48] sm:$0xff]
        %v2776 = vld [vmem:[#allocation22 + $0x50] sm:$0xff]
        %v2777 = vld [vmem:[#allocation22 + $0x58] sm:$0xff]
        %v2778 = vld [vmem:[#allocation22 + $0x60] sm:$0xff]
        %v2779 = vld [vmem:[#allocation22 + $0x68] sm:$0xff]
        %v2780 = vld [vmem:[#allocation22 + $0x70] sm:$0xff]
        %v2781 = vld [vmem:[#allocation22 + $0x78] sm:$0xff]
        %v2782 = vld [vmem:[#allocation22 + $0x80] sm:$0xff]
        %v2783 = vld [vmem:[#allocation22 + $0x88] sm:$0xff]
        %v2784 = vld [vmem:[#allocation22 + $0x90] sm:$0xff]
        %v2785 = vld [vmem:[#allocation22 + $0x98] sm:$0xff]
        %v2786 = vld [vmem:[#allocation22 + $0xa0] sm:$0xff]
        %v2787 = vld [vmem:[#allocation22 + $0xa8] sm:$0xff]
        %v2788 = vld [vmem:[#allocation22 + $0xb0] sm:$0xff]
        %v2789 = vld [vmem:[#allocation22 + $0xb8] sm:$0xff]
        %v2790 = vld [vmem:[#allocation22 + $0xc0] sm:$0xff]
        %v2791 = vld [vmem:[#allocation22 + $0xc8] sm:$0xff]
        %v2792 = vld [vmem:[#allocation22 + $0xd0] sm:$0xff]
        %v2793 = vld [vmem:[#allocation22 + $0xd8] sm:$0xff]
        %v2794 = vld [vmem:[#allocation22 + $0xe0] sm:$0xff]
        %v2795 = vld [vmem:[#allocation22 + $0xe8] sm:$0xff]
        %v2796 = vld [vmem:[#allocation22 + $0xf0] sm:$0xff]
        %v2797 = vld [vmem:[#allocation22 + $0xf8] sm:$0xff]
        %v2798 = vld [vmem:[#allocation22 + $0x100] sm:$0xff]
        %v2799 = vld [vmem:[#allocation22 + $0x108] sm:$0xff]
        %v2800 = vld [vmem:[#allocation22 + $0x110] sm:$0xff]
        %v2801 = vld [vmem:[#allocation22 + $0x118] sm:$0xff]
        %v2802 = vld [vmem:[#allocation22 + $0x120] sm:$0xff]
        %v2803 = vld [vmem:[#allocation22 + $0x128] sm:$0xff]
        %v2804 = vld [vmem:[#allocation22 + $0x130] sm:$0xff]
        %v2805 = vld [vmem:[#allocation22 + $0x138] sm:$0xff]
        %v2806 = vld [vmem:[#allocation22 + $0x140] sm:$0xff]
        %v2807 = vld [vmem:[#allocation22 + $0x148] sm:$0xff]
        %v2808 = vld [vmem:[#allocation22 + $0x150] sm:$0xff]
        %v2809 = vld [vmem:[#allocation22 + $0x158] sm:$0xff]
        %v2810 = vld [vmem:[#allocation22 + $0x160] sm:$0xff]
        %v2811 = vld [vmem:[#allocation22 + $0x168] sm:$0xff]
        %v2812 = vld [vmem:[#allocation22 + $0x170] sm:$0xff]
        %v2813 = vld [vmem:[#allocation22 + $0x178] sm:$0xff]
        %v2814 = vld [vmem:[#allocation22 + $0x180] sm:$0xff]
        %v2815 = vld [vmem:[#allocation22 + $0x188] sm:$0xff]
        %v2816 = vld [vmem:[#allocation22 + $0x190] sm:$0xff]
        %v2817 = vld [vmem:[#allocation22 + $0x198] sm:$0xff]
        %v2818 = vld [vmem:[#allocation22 + $0x1a0] sm:$0xff]
        %v2819 = vld [vmem:[#allocation22 + $0x1a8] sm:$0xff]
        %v2820 = vld [vmem:[#allocation22 + $0x1b0] sm:$0xff]
        %v2821 = vld [vmem:[#allocation22 + $0x1b8] sm:$0xff]
        %v2822 = vld [vmem:[#allocation22 + $0x1c0] sm:$0xff]
        %v2823 = vld [vmem:[#allocation22 + $0x1c8] sm:$0xff]
        %v2824 = vld [vmem:[#allocation22 + $0x1d0] sm:$0xff]
        %v2825 = vld [vmem:[#allocation22 + $0x1d8] sm:$0xff]
        %v2826 = vld [vmem:[#allocation22 + $0x1e0] sm:$0xff]
        %v2827 = vld [vmem:[#allocation22 + $0x1e8] sm:$0xff]
        %v2828 = vld [vmem:[#allocation22 + $0x1f0] sm:$0xff]
        %v2829 = vld [vmem:[#allocation22 + $0x1f8] sm:$0xff]
        %v2830 = vld [vmem:[%s21] sm:$0xf]
        %v2831 = vpack.c.bf16 %v2764, %v2762
        %v2832 = vpack.c.bf16 %v2765, %v2763
        %v2834 = vlaneseq
        %v2835 = vshrl.u32 %v2834, 7
        %v2836 = vsub.s32 0, %v2835
        %v2837 = vrot.slane %v2830, %v2836
        %v2838 = vlaneseq
        %v2839 = vshrl.u32 %v2838, 7
        %v2840 = vsub.s32 1, %v2839
        %v2841 = vrot.slane %v2830, %v2840
        %v2842 = vlaneseq
        %v2843 = vshrl.u32 %v2842, 7
        %v2844 = vsub.s32 2, %v2843
        %v2845 = vrot.slane %v2830, %v2844
        %v2846 = vlaneseq
        %v2847 = vshrl.u32 %v2846, 7
        %v2848 = vsub.s32 3, %v2847
        %v2849 = vrot.slane %v2830, %v2848
        %v2918 = vunpack.c.l.b16 %v2766
        %v2919 = vunpack.c.h.b16 %v2766
        %v2920 = vunpack.c.l.b16 %v2767
        %v2921 = vunpack.c.h.b16 %v2767
        %v2922 = vunpack.c.l.b16 %v2768
        %v2923 = vunpack.c.h.b16 %v2768
        %v2924 = vunpack.c.l.b16 %v2769
        %v2925 = vunpack.c.h.b16 %v2769
        %v2926 = vunpack.c.l.b16 %v2770
        %v2927 = vunpack.c.h.b16 %v2770
        %v2928 = vunpack.c.l.b16 %v2771
        %v2929 = vunpack.c.h.b16 %v2771
        %v2930 = vunpack.c.l.b16 %v2772
        %v2931 = vunpack.c.h.b16 %v2772
        %v2932 = vunpack.c.l.b16 %v2773
        %v2933 = vunpack.c.h.b16 %v2773
        %v2934 = vunpack.c.l.b16 %v2774
        %v2935 = vunpack.c.h.b16 %v2774
        %v2936 = vunpack.c.l.b16 %v2775
        %v2937 = vunpack.c.h.b16 %v2775
        %v2938 = vunpack.c.l.b16 %v2776
        %v2939 = vunpack.c.h.b16 %v2776
        %v2940 = vunpack.c.l.b16 %v2777
        %v2941 = vunpack.c.h.b16 %v2777
        %v2942 = vunpack.c.l.b16 %v2778
        %v2943 = vunpack.c.h.b16 %v2778
        %v2944 = vunpack.c.l.b16 %v2779
        %v2945 = vunpack.c.h.b16 %v2779
        %v2946 = vunpack.c.l.b16 %v2780
        %v2947 = vunpack.c.h.b16 %v2780
        %v2948 = vunpack.c.l.b16 %v2781
        %v2949 = vunpack.c.h.b16 %v2781
        %v2950 = vunpack.c.l.b16 %v2782
        %v2951 = vunpack.c.h.b16 %v2782
        %v2952 = vunpack.c.l.b16 %v2783
        %v2953 = vunpack.c.h.b16 %v2783
        %v2954 = vunpack.c.l.b16 %v2784
        %v2955 = vunpack.c.h.b16 %v2784
        %v2956 = vunpack.c.l.b16 %v2785
        %v2957 = vunpack.c.h.b16 %v2785
        %v2958 = vunpack.c.l.b16 %v2786
        %v2959 = vunpack.c.h.b16 %v2786
        %v2960 = vunpack.c.l.b16 %v2787
        %v2961 = vunpack.c.h.b16 %v2787
        %v2962 = vunpack.c.l.b16 %v2788
        %v2963 = vunpack.c.h.b16 %v2788
        %v2964 = vunpack.c.l.b16 %v2789
        %v2965 = vunpack.c.h.b16 %v2789
        %v2966 = vunpack.c.l.b16 %v2790
        %v2967 = vunpack.c.h.b16 %v2790
        %v2968 = vunpack.c.l.b16 %v2791
        %v2969 = vunpack.c.h.b16 %v2791
        %v2970 = vunpack.c.l.b16 %v2792
        %v2971 = vunpack.c.h.b16 %v2792
        %v2972 = vunpack.c.l.b16 %v2793
        %v2973 = vunpack.c.h.b16 %v2793
        %v2974 = vunpack.c.l.b16 %v2794
        %v2975 = vunpack.c.h.b16 %v2794
        %v2976 = vunpack.c.l.b16 %v2795
        %v2977 = vunpack.c.h.b16 %v2795
        %v2978 = vunpack.c.l.b16 %v2796
        %v2979 = vunpack.c.h.b16 %v2796
        %v2980 = vunpack.c.l.b16 %v2797
        %v2981 = vunpack.c.h.b16 %v2797
        %v2982 = vunpack.c.l.b16 %v2798
        %v2983 = vunpack.c.h.b16 %v2798
        %v2984 = vunpack.c.l.b16 %v2799
        %v2985 = vunpack.c.h.b16 %v2799
        %v2986 = vunpack.c.l.b16 %v2800
        %v2987 = vunpack.c.h.b16 %v2800
        %v2988 = vunpack.c.l.b16 %v2801
        %v2989 = vunpack.c.h.b16 %v2801
        %v2990 = vunpack.c.l.b16 %v2802
        %v2991 = vunpack.c.h.b16 %v2802
        %v2992 = vunpack.c.l.b16 %v2803
        %v2993 = vunpack.c.h.b16 %v2803
        %v2994 = vunpack.c.l.b16 %v2804
        %v2995 = vunpack.c.h.b16 %v2804
        %v2996 = vunpack.c.l.b16 %v2805
        %v2997 = vunpack.c.h.b16 %v2805
        %v2998 = vunpack.c.l.b16 %v2806
        %v2999 = vunpack.c.h.b16 %v2806
        %v3000 = vunpack.c.l.b16 %v2807
        %v3001 = vunpack.c.h.b16 %v2807
        %v3002 = vunpack.c.l.b16 %v2808
        %v3003 = vunpack.c.h.b16 %v2808
        %v3004 = vunpack.c.l.b16 %v2809
        %v3005 = vunpack.c.h.b16 %v2809
        %v3006 = vunpack.c.l.b16 %v2810
        %v3007 = vunpack.c.h.b16 %v2810
        %v3008 = vunpack.c.l.b16 %v2811
        %v3009 = vunpack.c.h.b16 %v2811
        %v3010 = vunpack.c.l.b16 %v2812
        %v3011 = vunpack.c.h.b16 %v2812
        %v3012 = vunpack.c.l.b16 %v2813
        %v3013 = vunpack.c.h.b16 %v2813
        %v3014 = vunpack.c.l.b16 %v2814
        %v3015 = vunpack.c.h.b16 %v2814
        %v3016 = vunpack.c.l.b16 %v2815
        %v3017 = vunpack.c.h.b16 %v2815
        %v3018 = vunpack.c.l.b16 %v2816
        %v3019 = vunpack.c.h.b16 %v2816
        %v3020 = vunpack.c.l.b16 %v2817
        %v3021 = vunpack.c.h.b16 %v2817
        %v3022 = vunpack.c.l.b16 %v2818
        %v3023 = vunpack.c.h.b16 %v2818
        %v3024 = vunpack.c.l.b16 %v2819
        %v3025 = vunpack.c.h.b16 %v2819
        %v3026 = vunpack.c.l.b16 %v2820
        %v3027 = vunpack.c.h.b16 %v2820
        %v3028 = vunpack.c.l.b16 %v2821
        %v3029 = vunpack.c.h.b16 %v2821
        %v3030 = vunpack.c.l.b16 %v2822
        %v3031 = vunpack.c.h.b16 %v2822
        %v3032 = vunpack.c.l.b16 %v2823
        %v3033 = vunpack.c.h.b16 %v2823
        %v3034 = vunpack.c.l.b16 %v2824
        %v3035 = vunpack.c.h.b16 %v2824
        %v3036 = vunpack.c.l.b16 %v2825
        %v3037 = vunpack.c.h.b16 %v2825
        %v3038 = vunpack.c.l.b16 %v2826
        %v3039 = vunpack.c.h.b16 %v2826
        %v3040 = vunpack.c.l.b16 %v2827
        %v3041 = vunpack.c.h.b16 %v2827
        %v3042 = vunpack.c.l.b16 %v2828
        %v3043 = vunpack.c.h.b16 %v2828
        %v3044 = vunpack.c.l.b16 %v2829
        %v3045 = vunpack.c.h.b16 %v2829
        %v3046 = vpack.c.b16 %v2922, %v2918
        %v3047 = vpack.c.b16 %v2923, %v2919
        %v3048 = vpack.c.b16 %v2924, %v2920
        %v3049 = vpack.c.b16 %v2925, %v2921
        %v3050 = vpack.c.b16 %v2930, %v2926
        %v3051 = vpack.c.b16 %v2931, %v2927
        %v3052 = vpack.c.b16 %v2932, %v2928
        %v3053 = vpack.c.b16 %v2933, %v2929
        %v3054 = vpack.c.b16 %v2938, %v2934
        %v3055 = vpack.c.b16 %v2939, %v2935
        %v3056 = vpack.c.b16 %v2940, %v2936
        %v3057 = vpack.c.b16 %v2941, %v2937
        %v3058 = vpack.c.b16 %v2946, %v2942
        %v3059 = vpack.c.b16 %v2947, %v2943
        %v3060 = vpack.c.b16 %v2948, %v2944
        %v3061 = vpack.c.b16 %v2949, %v2945
        %v3062 = vpack.c.b16 %v2954, %v2950
        %v3063 = vpack.c.b16 %v2955, %v2951
        %v3064 = vpack.c.b16 %v2956, %v2952
        %v3065 = vpack.c.b16 %v2957, %v2953
        %v3066 = vpack.c.b16 %v2962, %v2958
        %v3067 = vpack.c.b16 %v2963, %v2959
        %v3068 = vpack.c.b16 %v2964, %v2960
        %v3069 = vpack.c.b16 %v2965, %v2961
        %v3070 = vpack.c.b16 %v2970, %v2966
        %v3071 = vpack.c.b16 %v2971, %v2967
        %v3072 = vpack.c.b16 %v2972, %v2968
        %v3073 = vpack.c.b16 %v2973, %v2969
        %v3074 = vpack.c.b16 %v2978, %v2974
        %v3075 = vpack.c.b16 %v2979, %v2975
        %v3076 = vpack.c.b16 %v2980, %v2976
        %v3077 = vpack.c.b16 %v2981, %v2977
        %v3078 = vpack.c.b16 %v2986, %v2982
        %v3079 = vpack.c.b16 %v2987, %v2983
        %v3080 = vpack.c.b16 %v2988, %v2984
        %v3081 = vpack.c.b16 %v2989, %v2985
        %v3082 = vpack.c.b16 %v2994, %v2990
        %v3083 = vpack.c.b16 %v2995, %v2991
        %v3084 = vpack.c.b16 %v2996, %v2992
        %v3085 = vpack.c.b16 %v2997, %v2993
        %v3086 = vpack.c.b16 %v3002, %v2998
        %v3087 = vpack.c.b16 %v3003, %v2999
        %v3088 = vpack.c.b16 %v3004, %v3000
        %v3089 = vpack.c.b16 %v3005, %v3001
        %v3090 = vpack.c.b16 %v3010, %v3006
        %v3091 = vpack.c.b16 %v3011, %v3007
        %v3092 = vpack.c.b16 %v3012, %v3008
        %v3093 = vpack.c.b16 %v3013, %v3009
        %v3094 = vpack.c.b16 %v3018, %v3014
        %v3095 = vpack.c.b16 %v3019, %v3015
        %v3096 = vpack.c.b16 %v3020, %v3016
        %v3097 = vpack.c.b16 %v3021, %v3017
        %v3098 = vpack.c.b16 %v3026, %v3022
        %v3099 = vpack.c.b16 %v3027, %v3023
        %v3100 = vpack.c.b16 %v3028, %v3024
        %v3101 = vpack.c.b16 %v3029, %v3025
        %v3102 = vpack.c.b16 %v3034, %v3030
        %v3103 = vpack.c.b16 %v3035, %v3031
        %v3104 = vpack.c.b16 %v3036, %v3032
        %v3105 = vpack.c.b16 %v3037, %v3033
        %v3106 = vpack.c.b16 %v3042, %v3038
        %v3107 = vpack.c.b16 %v3043, %v3039
        %v3108 = vpack.c.b16 %v3044, %v3040
        %v3109 = vpack.c.b16 %v3045, %v3041
        %3174 = vmatprep.subr.bf16.mxu0 %v3075
        %3175 = vmatpush1.bf16.msra.mxu0 %v3074
        %3176 = vmatprep.subr.bf16.mxu0 %v3071
        %3177 = vmatpush1.bf16.msra.mxu0 %v3070
        %3178 = vmatprep.subr.bf16.mxu0 %v3067
        %3179 = vmatpush1.bf16.msra.mxu0 %v3066
        %3180 = vmatprep.subr.bf16.mxu0 %v3063
        %3181 = vmatpush1.bf16.msra.mxu0 %v3062
        %3182 = vmatprep.subr.bf16.mxu0 %v3059
        %3183 = vmatpush1.bf16.msra.mxu0 %v3058
        %3184 = vmatprep.subr.bf16.mxu0 %v3055
        %3185 = vmatpush1.bf16.msra.mxu0 %v3054
        %3186 = vmatprep.subr.bf16.mxu0 %v3051
        %3187 = vmatpush1.bf16.msra.mxu0 %v3050
        %3188 = vmatprep.subr.bf16.mxu0 %v3047
        %3189 = vmatpush1.bf16.msra.mxu0 %v3046
        %3190 = vmatprep.subr.bf16.mxu0 %v3107
        %3191 = vmatpush2.bf16.msra.mxu0 %v3106
        %3192 = vmatprep.subr.bf16.mxu0 %v3103
        %3193 = vmatpush2.bf16.msra.mxu0 %v3102
        %3194 = vmatprep.subr.bf16.mxu0 %v3099
        %3195 = vmatpush2.bf16.msra.mxu0 %v3098
        %3196 = vmatprep.subr.bf16.mxu0 %v3095
        %3197 = vmatpush2.bf16.msra.mxu0 %v3094
        %3198 = vmatprep.subr.bf16.mxu0 %v3091
        %3199 = vmatpush2.bf16.msra.mxu0 %v3090
        %3200 = vmatprep.subr.bf16.mxu0 %v3087
        %3201 = vmatpush2.bf16.msra.mxu0 %v3086
        %3202 = vmatprep.subr.bf16.mxu0 %v3083
        %3203 = vmatpush2.bf16.msra.mxu0 %v3082
        %3204 = vmatprep.subr.bf16.mxu0 %v3079
        %3205 = vmatpush2.bf16.msra.mxu0 %v3078
        %3206 = vmatprep.mubr.bf16.mxu0 %v2832
        %3207 = vmatmul.mubr.bf16.gmra.mxu0 %v2831
        %v3208 = vpop.f32.mrf.mxu0
        %v3209 = vadd.f32 %v2837, %v3208
        %v3210 = vpop.f32.mrf.mxu0
        %v3211 = vadd.f32 %v2841, %v3210
        %v3212 = vpop.f32.mrf.mxu0
        %v3213 = vadd.f32 %v2837, %v3212
        %v3214 = vpop.f32.mrf.mxu0
        %v3215 = vadd.f32 %v2841, %v3214
        %3216 = vdwg.mxu0
        %3217 = vmatprep.subr.bf16.mxu0 %v3077
        %3218 = vmatpush1.bf16.msra.mxu0 %v3076
        %3219 = vmatprep.subr.bf16.mxu0 %v3073
        %3220 = vmatpush1.bf16.msra.mxu0 %v3072
        %3221 = vmatprep.subr.bf16.mxu0 %v3069
        %3222 = vmatpush1.bf16.msra.mxu0 %v3068
        %3223 = vmatprep.subr.bf16.mxu0 %v3065
        %3224 = vmatpush1.bf16.msra.mxu0 %v3064
        %3225 = vmatprep.subr.bf16.mxu0 %v3061
        %3226 = vmatpush1.bf16.msra.mxu0 %v3060
        %3227 = vmatprep.subr.bf16.mxu0 %v3057
        %3228 = vmatpush1.bf16.msra.mxu0 %v3056
        %3229 = vmatprep.subr.bf16.mxu0 %v3053
        %3230 = vmatpush1.bf16.msra.mxu0 %v3052
        %3231 = vmatprep.subr.bf16.mxu0 %v3049
        %3232 = vmatpush1.bf16.msra.mxu0 %v3048
        %3233 = vmatprep.subr.bf16.mxu0 %v3109
        %3234 = vmatpush2.bf16.msra.mxu0 %v3108
        %3235 = vmatprep.subr.bf16.mxu0 %v3105
        %3236 = vmatpush2.bf16.msra.mxu0 %v3104
        %3237 = vmatprep.subr.bf16.mxu0 %v3101
        %3238 = vmatpush2.bf16.msra.mxu0 %v3100
        %3239 = vmatprep.subr.bf16.mxu0 %v3097
        %3240 = vmatpush2.bf16.msra.mxu0 %v3096
        %3241 = vmatprep.subr.bf16.mxu0 %v3093
        %3242 = vmatpush2.bf16.msra.mxu0 %v3092
        %3243 = vmatprep.subr.bf16.mxu0 %v3089
        %3244 = vmatpush2.bf16.msra.mxu0 %v3088
        %3245 = vmatprep.subr.bf16.mxu0 %v3085
        %3246 = vmatpush2.bf16.msra.mxu0 %v3084
        %3247 = vmatprep.subr.bf16.mxu0 %v3081
        %3248 = vmatpush2.bf16.msra.mxu0 %v3080
        %3249 = vmatprep.mubr.bf16.mxu0 %v2832
        %3250 = vmatmul.mubr.bf16.gmra.mxu0 %v2831
        %v3251 = vpop.f32.mrf.mxu0
        %v3252 = vadd.f32 %v2845, %v3251
        %v3253 = vpop.f32.mrf.mxu0
        %v3254 = vadd.f32 %v2849, %v3253
        %v3255 = vpop.f32.mrf.mxu0
        %v3256 = vadd.f32 %v2845, %v3255
        %v3257 = vpop.f32.mrf.mxu0
        %v3258 = vadd.f32 %v2849, %v3257
        %3259 = vdwg.mxu0
        %v3260 = vmax.f32 %v3209, 0.0
        %v3261 = vmax.f32 %v3211, 0.0
        %v3262 = vmax.f32 %v3252, 0.0
        %v3263 = vmax.f32 %v3254, 0.0
        %v3264 = vmax.f32 %v3213, 0.0
        %v3265 = vmax.f32 %v3215, 0.0
        %v3266 = vmax.f32 %v3256, 0.0
        %v3267 = vmax.f32 %v3258, 0.0
        %v3268 = vld [vmem:[#allocation23] sm:$0xff]
        %v3269 = vld [vmem:[#allocation23 + $0x8] sm:$0xff]
        %v3270 = vld [vmem:[#allocation23 + $0x10] sm:$0xff]
        %v3271 = vld [vmem:[#allocation23 + $0x18] sm:$0xff]
        %v3272 = vld [vmem:[#allocation23 + $0x20] sm:$0xff]
        %v3273 = vld [vmem:[#allocation23 + $0x28] sm:$0xff]
        %v3274 = vld [vmem:[#allocation23 + $0x30] sm:$0xff]
        %v3275 = vld [vmem:[#allocation23 + $0x38] sm:$0xff]
        %v3276 = vld [vmem:[#allocation23 + $0x40] sm:$0xff]
        %v3277 = vld [vmem:[#allocation23 + $0x48] sm:$0xff]
        %v3278 = vld [vmem:[#allocation23 + $0x50] sm:$0xff]
        %v3279 = vld [vmem:[#allocation23 + $0x58] sm:$0xff]
        %v3280 = vld [vmem:[#allocation23 + $0x60] sm:$0xff]
        %v3281 = vld [vmem:[#allocation23 + $0x68] sm:$0xff]
        %v3282 = vld [vmem:[#allocation23 + $0x70] sm:$0xff]
        %v3283 = vld [vmem:[#allocation23 + $0x78] sm:$0xff]
        %v3284 = vld [vmem:[#allocation23 + $0x80] sm:$0xff]
        %v3285 = vld [vmem:[#allocation23 + $0x88] sm:$0xff]
        %v3286 = vld [vmem:[#allocation23 + $0x90] sm:$0xff]
        %v3287 = vld [vmem:[#allocation23 + $0x98] sm:$0xff]
        %v3288 = vld [vmem:[#allocation23 + $0xa0] sm:$0xff]
        %v3289 = vld [vmem:[#allocation23 + $0xa8] sm:$0xff]
        %v3290 = vld [vmem:[#allocation23 + $0xb0] sm:$0xff]
        %v3291 = vld [vmem:[#allocation23 + $0xb8] sm:$0xff]
        %v3292 = vld [vmem:[#allocation23 + $0xc0] sm:$0xff]
        %v3293 = vld [vmem:[#allocation23 + $0xc8] sm:$0xff]
        %v3294 = vld [vmem:[#allocation23 + $0xd0] sm:$0xff]
        %v3295 = vld [vmem:[#allocation23 + $0xd8] sm:$0xff]
        %v3296 = vld [vmem:[#allocation23 + $0xe0] sm:$0xff]
        %v3297 = vld [vmem:[#allocation23 + $0xe8] sm:$0xff]
        %v3298 = vld [vmem:[#allocation23 + $0xf0] sm:$0xff]
        %v3299 = vld [vmem:[#allocation23 + $0xf8] sm:$0xff]
        %v3300 = vld [vmem:[#allocation23 + $0x100] sm:$0xff]
        %v3301 = vld [vmem:[#allocation23 + $0x108] sm:$0xff]
        %v3302 = vld [vmem:[#allocation23 + $0x110] sm:$0xff]
        %v3303 = vld [vmem:[#allocation23 + $0x118] sm:$0xff]
        %v3304 = vld [vmem:[#allocation23 + $0x120] sm:$0xff]
        %v3305 = vld [vmem:[#allocation23 + $0x128] sm:$0xff]
        %v3306 = vld [vmem:[#allocation23 + $0x130] sm:$0xff]
        %v3307 = vld [vmem:[#allocation23 + $0x138] sm:$0xff]
        %v3308 = vld [vmem:[#allocation23 + $0x140] sm:$0xff]
        %v3309 = vld [vmem:[#allocation23 + $0x148] sm:$0xff]
        %v3310 = vld [vmem:[#allocation23 + $0x150] sm:$0xff]
        %v3311 = vld [vmem:[#allocation23 + $0x158] sm:$0xff]
        %v3312 = vld [vmem:[#allocation23 + $0x160] sm:$0xff]
        %v3313 = vld [vmem:[#allocation23 + $0x168] sm:$0xff]
        %v3314 = vld [vmem:[#allocation23 + $0x170] sm:$0xff]
        %v3315 = vld [vmem:[#allocation23 + $0x178] sm:$0xff]
        %v3316 = vld [vmem:[#allocation23 + $0x180] sm:$0xff]
        %v3317 = vld [vmem:[#allocation23 + $0x188] sm:$0xff]
        %v3318 = vld [vmem:[#allocation23 + $0x190] sm:$0xff]
        %v3319 = vld [vmem:[#allocation23 + $0x198] sm:$0xff]
        %v3320 = vld [vmem:[#allocation23 + $0x1a0] sm:$0xff]
        %v3321 = vld [vmem:[#allocation23 + $0x1a8] sm:$0xff]
        %v3322 = vld [vmem:[#allocation23 + $0x1b0] sm:$0xff]
        %v3323 = vld [vmem:[#allocation23 + $0x1b8] sm:$0xff]
        %v3324 = vld [vmem:[#allocation23 + $0x1c0] sm:$0xff]
        %v3325 = vld [vmem:[#allocation23 + $0x1c8] sm:$0xff]
        %v3326 = vld [vmem:[#allocation23 + $0x1d0] sm:$0xff]
        %v3327 = vld [vmem:[#allocation23 + $0x1d8] sm:$0xff]
        %v3328 = vld [vmem:[#allocation23 + $0x1e0] sm:$0xff]
        %v3329 = vld [vmem:[#allocation23 + $0x1e8] sm:$0xff]
        %v3330 = vld [vmem:[#allocation23 + $0x1f0] sm:$0xff]
        %v3331 = vld [vmem:[#allocation23 + $0x1f8] sm:$0xff]
        %v3332 = vld [vmem:[%s23] sm:$0x3]
        %v3333 = vpack.c.bf16 %v3264, %v3260
        %v3334 = vpack.c.bf16 %v3265, %v3261
        %v3335 = vpack.c.bf16 %v3266, %v3262
        %v3336 = vpack.c.bf16 %v3267, %v3263
        %v3338 = vlaneseq
        %v3339 = vshrl.u32 %v3338, 7
        %v3340 = vsub.s32 0, %v3339
        %v3341 = vrot.slane %v3332, %v3340
        %v3342 = vlaneseq
        %v3343 = vshrl.u32 %v3342, 7
        %v3344 = vsub.s32 1, %v3343
        %v3345 = vrot.slane %v3332, %v3344
        %v3412 = vunpack.c.l.b16 %v3268
        %v3413 = vunpack.c.h.b16 %v3268
        %v3414 = vunpack.c.l.b16 %v3269
        %v3415 = vunpack.c.h.b16 %v3269
        %v3416 = vunpack.c.l.b16 %v3270
        %v3417 = vunpack.c.h.b16 %v3270
        %v3418 = vunpack.c.l.b16 %v3271
        %v3419 = vunpack.c.h.b16 %v3271
        %v3420 = vunpack.c.l.b16 %v3272
        %v3421 = vunpack.c.h.b16 %v3272
        %v3422 = vunpack.c.l.b16 %v3273
        %v3423 = vunpack.c.h.b16 %v3273
        %v3424 = vunpack.c.l.b16 %v3274
        %v3425 = vunpack.c.h.b16 %v3274
        %v3426 = vunpack.c.l.b16 %v3275
        %v3427 = vunpack.c.h.b16 %v3275
        %v3428 = vunpack.c.l.b16 %v3276
        %v3429 = vunpack.c.h.b16 %v3276
        %v3430 = vunpack.c.l.b16 %v3277
        %v3431 = vunpack.c.h.b16 %v3277
        %v3432 = vunpack.c.l.b16 %v3278
        %v3433 = vunpack.c.h.b16 %v3278
        %v3434 = vunpack.c.l.b16 %v3279
        %v3435 = vunpack.c.h.b16 %v3279
        %v3436 = vunpack.c.l.b16 %v3280
        %v3437 = vunpack.c.h.b16 %v3280
        %v3438 = vunpack.c.l.b16 %v3281
        %v3439 = vunpack.c.h.b16 %v3281
        %v3440 = vunpack.c.l.b16 %v3282
        %v3441 = vunpack.c.h.b16 %v3282
        %v3442 = vunpack.c.l.b16 %v3283
        %v3443 = vunpack.c.h.b16 %v3283
        %v3444 = vunpack.c.l.b16 %v3284
        %v3445 = vunpack.c.h.b16 %v3284
        %v3446 = vunpack.c.l.b16 %v3285
        %v3447 = vunpack.c.h.b16 %v3285
        %v3448 = vunpack.c.l.b16 %v3286
        %v3449 = vunpack.c.h.b16 %v3286
        %v3450 = vunpack.c.l.b16 %v3287
        %v3451 = vunpack.c.h.b16 %v3287
        %v3452 = vunpack.c.l.b16 %v3288
        %v3453 = vunpack.c.h.b16 %v3288
        %v3454 = vunpack.c.l.b16 %v3289
        %v3455 = vunpack.c.h.b16 %v3289
        %v3456 = vunpack.c.l.b16 %v3290
        %v3457 = vunpack.c.h.b16 %v3290
        %v3458 = vunpack.c.l.b16 %v3291
        %v3459 = vunpack.c.h.b16 %v3291
        %v3460 = vunpack.c.l.b16 %v3292
        %v3461 = vunpack.c.h.b16 %v3292
        %v3462 = vunpack.c.l.b16 %v3293
        %v3463 = vunpack.c.h.b16 %v3293
        %v3464 = vunpack.c.l.b16 %v3294
        %v3465 = vunpack.c.h.b16 %v3294
        %v3466 = vunpack.c.l.b16 %v3295
        %v3467 = vunpack.c.h.b16 %v3295
        %v3468 = vunpack.c.l.b16 %v3296
        %v3469 = vunpack.c.h.b16 %v3296
        %v3470 = vunpack.c.l.b16 %v3297
        %v3471 = vunpack.c.h.b16 %v3297
        %v3472 = vunpack.c.l.b16 %v3298
        %v3473 = vunpack.c.h.b16 %v3298
        %v3474 = vunpack.c.l.b16 %v3299
        %v3475 = vunpack.c.h.b16 %v3299
        %v3476 = vunpack.c.l.b16 %v3300
        %v3477 = vunpack.c.h.b16 %v3300
        %v3478 = vunpack.c.l.b16 %v3301
        %v3479 = vunpack.c.h.b16 %v3301
        %v3480 = vunpack.c.l.b16 %v3302
        %v3481 = vunpack.c.h.b16 %v3302
        %v3482 = vunpack.c.l.b16 %v3303
        %v3483 = vunpack.c.h.b16 %v3303
        %v3484 = vunpack.c.l.b16 %v3304
        %v3485 = vunpack.c.h.b16 %v3304
        %v3486 = vunpack.c.l.b16 %v3305
        %v3487 = vunpack.c.h.b16 %v3305
        %v3488 = vunpack.c.l.b16 %v3306
        %v3489 = vunpack.c.h.b16 %v3306
        %v3490 = vunpack.c.l.b16 %v3307
        %v3491 = vunpack.c.h.b16 %v3307
        %v3492 = vunpack.c.l.b16 %v3308
        %v3493 = vunpack.c.h.b16 %v3308
        %v3494 = vunpack.c.l.b16 %v3309
        %v3495 = vunpack.c.h.b16 %v3309
        %v3496 = vunpack.c.l.b16 %v3310
        %v3497 = vunpack.c.h.b16 %v3310
        %v3498 = vunpack.c.l.b16 %v3311
        %v3499 = vunpack.c.h.b16 %v3311
        %v3500 = vunpack.c.l.b16 %v3312
        %v3501 = vunpack.c.h.b16 %v3312
        %v3502 = vunpack.c.l.b16 %v3313
        %v3503 = vunpack.c.h.b16 %v3313
        %v3504 = vunpack.c.l.b16 %v3314
        %v3505 = vunpack.c.h.b16 %v3314
        %v3506 = vunpack.c.l.b16 %v3315
        %v3507 = vunpack.c.h.b16 %v3315
        %v3508 = vunpack.c.l.b16 %v3316
        %v3509 = vunpack.c.h.b16 %v3316
        %v3510 = vunpack.c.l.b16 %v3317
        %v3511 = vunpack.c.h.b16 %v3317
        %v3512 = vunpack.c.l.b16 %v3318
        %v3513 = vunpack.c.h.b16 %v3318
        %v3514 = vunpack.c.l.b16 %v3319
        %v3515 = vunpack.c.h.b16 %v3319
        %v3516 = vunpack.c.l.b16 %v3320
        %v3517 = vunpack.c.h.b16 %v3320
        %v3518 = vunpack.c.l.b16 %v3321
        %v3519 = vunpack.c.h.b16 %v3321
        %v3520 = vunpack.c.l.b16 %v3322
        %v3521 = vunpack.c.h.b16 %v3322
        %v3522 = vunpack.c.l.b16 %v3323
        %v3523 = vunpack.c.h.b16 %v3323
        %v3524 = vunpack.c.l.b16 %v3324
        %v3525 = vunpack.c.h.b16 %v3324
        %v3526 = vunpack.c.l.b16 %v3325
        %v3527 = vunpack.c.h.b16 %v3325
        %v3528 = vunpack.c.l.b16 %v3326
        %v3529 = vunpack.c.h.b16 %v3326
        %v3530 = vunpack.c.l.b16 %v3327
        %v3531 = vunpack.c.h.b16 %v3327
        %v3532 = vunpack.c.l.b16 %v3328
        %v3533 = vunpack.c.h.b16 %v3328
        %v3534 = vunpack.c.l.b16 %v3329
        %v3535 = vunpack.c.h.b16 %v3329
        %v3536 = vunpack.c.l.b16 %v3330
        %v3537 = vunpack.c.h.b16 %v3330
        %v3538 = vunpack.c.l.b16 %v3331
        %v3539 = vunpack.c.h.b16 %v3331
        %v3540 = vpack.c.b16 %v3414, %v3412
        %v3541 = vpack.c.b16 %v3415, %v3413
        %v3542 = vpack.c.b16 %v3418, %v3416
        %v3543 = vpack.c.b16 %v3419, %v3417
        %v3544 = vpack.c.b16 %v3422, %v3420
        %v3545 = vpack.c.b16 %v3423, %v3421
        %v3546 = vpack.c.b16 %v3426, %v3424
        %v3547 = vpack.c.b16 %v3427, %v3425
        %v3548 = vpack.c.b16 %v3430, %v3428
        %v3549 = vpack.c.b16 %v3431, %v3429
        %v3550 = vpack.c.b16 %v3434, %v3432
        %v3551 = vpack.c.b16 %v3435, %v3433
        %v3552 = vpack.c.b16 %v3438, %v3436
        %v3553 = vpack.c.b16 %v3439, %v3437
        %v3554 = vpack.c.b16 %v3442, %v3440
        %v3555 = vpack.c.b16 %v3443, %v3441
        %v3556 = vpack.c.b16 %v3446, %v3444
        %v3557 = vpack.c.b16 %v3447, %v3445
        %v3558 = vpack.c.b16 %v3450, %v3448
        %v3559 = vpack.c.b16 %v3451, %v3449
        %v3560 = vpack.c.b16 %v3454, %v3452
        %v3561 = vpack.c.b16 %v3455, %v3453
        %v3562 = vpack.c.b16 %v3458, %v3456
        %v3563 = vpack.c.b16 %v3459, %v3457
        %v3564 = vpack.c.b16 %v3462, %v3460
        %v3565 = vpack.c.b16 %v3463, %v3461
        %v3566 = vpack.c.b16 %v3466, %v3464
        %v3567 = vpack.c.b16 %v3467, %v3465
        %v3568 = vpack.c.b16 %v3470, %v3468
        %v3569 = vpack.c.b16 %v3471, %v3469
        %v3570 = vpack.c.b16 %v3474, %v3472
        %v3571 = vpack.c.b16 %v3475, %v3473
        %v3572 = vpack.c.b16 %v3478, %v3476
        %v3573 = vpack.c.b16 %v3479, %v3477
        %v3574 = vpack.c.b16 %v3482, %v3480
        %v3575 = vpack.c.b16 %v3483, %v3481
        %v3576 = vpack.c.b16 %v3486, %v3484
        %v3577 = vpack.c.b16 %v3487, %v3485
        %v3578 = vpack.c.b16 %v3490, %v3488
        %v3579 = vpack.c.b16 %v3491, %v3489
        %v3580 = vpack.c.b16 %v3494, %v3492
        %v3581 = vpack.c.b16 %v3495, %v3493
        %v3582 = vpack.c.b16 %v3498, %v3496
        %v3583 = vpack.c.b16 %v3499, %v3497
        %v3584 = vpack.c.b16 %v3502, %v3500
        %v3585 = vpack.c.b16 %v3503, %v3501
        %v3586 = vpack.c.b16 %v3506, %v3504
        %v3587 = vpack.c.b16 %v3507, %v3505
        %v3588 = vpack.c.b16 %v3510, %v3508
        %v3589 = vpack.c.b16 %v3511, %v3509
        %v3590 = vpack.c.b16 %v3514, %v3512
        %v3591 = vpack.c.b16 %v3515, %v3513
        %v3592 = vpack.c.b16 %v3518, %v3516
        %v3593 = vpack.c.b16 %v3519, %v3517
        %v3594 = vpack.c.b16 %v3522, %v3520
        %v3595 = vpack.c.b16 %v3523, %v3521
        %v3596 = vpack.c.b16 %v3526, %v3524
        %v3597 = vpack.c.b16 %v3527, %v3525
        %v3598 = vpack.c.b16 %v3530, %v3528
        %v3599 = vpack.c.b16 %v3531, %v3529
        %v3600 = vpack.c.b16 %v3534, %v3532
        %v3601 = vpack.c.b16 %v3535, %v3533
        %v3602 = vpack.c.b16 %v3538, %v3536
        %v3603 = vpack.c.b16 %v3539, %v3537
        %3668 = vmatprep.subr.bf16.mxu0 %v3555
        %3669 = vmatpush1.bf16.msra.mxu0 %v3554
        %3670 = vmatprep.subr.bf16.mxu0 %v3553
        %3671 = vmatpush1.bf16.msra.mxu0 %v3552
        %3672 = vmatprep.subr.bf16.mxu0 %v3551
        %3673 = vmatpush1.bf16.msra.mxu0 %v3550
        %3674 = vmatprep.subr.bf16.mxu0 %v3549
        %3675 = vmatpush1.bf16.msra.mxu0 %v3548
        %3676 = vmatprep.subr.bf16.mxu0 %v3547
        %3677 = vmatpush1.bf16.msra.mxu0 %v3546
        %3678 = vmatprep.subr.bf16.mxu0 %v3545
        %3679 = vmatpush1.bf16.msra.mxu0 %v3544
        %3680 = vmatprep.subr.bf16.mxu0 %v3543
        %3681 = vmatpush1.bf16.msra.mxu0 %v3542
        %3682 = vmatprep.subr.bf16.mxu0 %v3541
        %3683 = vmatpush1.bf16.msra.mxu0 %v3540
        %3684 = vmatprep.subr.bf16.mxu0 %v3571
        %3685 = vmatpush2.bf16.msra.mxu0 %v3570
        %3686 = vmatprep.subr.bf16.mxu0 %v3569
        %3687 = vmatpush2.bf16.msra.mxu0 %v3568
        %3688 = vmatprep.subr.bf16.mxu0 %v3567
        %3689 = vmatpush2.bf16.msra.mxu0 %v3566
        %3690 = vmatprep.subr.bf16.mxu0 %v3565
        %3691 = vmatpush2.bf16.msra.mxu0 %v3564
        %3692 = vmatprep.subr.bf16.mxu0 %v3563
        %3693 = vmatpush2.bf16.msra.mxu0 %v3562
        %3694 = vmatprep.subr.bf16.mxu0 %v3561
        %3695 = vmatpush2.bf16.msra.mxu0 %v3560
        %3696 = vmatprep.subr.bf16.mxu0 %v3559
        %3697 = vmatpush2.bf16.msra.mxu0 %v3558
        %3698 = vmatprep.subr.bf16.mxu0 %v3557
        %3699 = vmatpush2.bf16.msra.mxu0 %v3556
        %3700 = vmatprep.mubr.bf16.mxu0 %v3334
        %3701 = vmatmul.mubr.bf16.gmra.mxu0 %v3333
        %v3702 = vpop.f32.mrf.mxu0
        %v3703 = vadd.f32 %v3341, %v3702
        %v3704 = vpop.f32.mrf.mxu0
        %v3705 = vadd.f32 %v3345, %v3704
        %v3706 = vpop.f32.mrf.mxu0
        %v3707 = vadd.f32 %v3341, %v3706
        %v3708 = vpop.f32.mrf.mxu0
        %v3709 = vadd.f32 %v3345, %v3708
        %3710 = vdwg.mxu0
        %3711 = vmatprep.subr.bf16.mxu0 %v3587
        %3712 = vmatpush1.bf16.msra.mxu0 %v3586
        %3713 = vmatprep.subr.bf16.mxu0 %v3585
        %3714 = vmatpush1.bf16.msra.mxu0 %v3584
        %3715 = vmatprep.subr.bf16.mxu0 %v3583
        %3716 = vmatpush1.bf16.msra.mxu0 %v3582
        %3717 = vmatprep.subr.bf16.mxu0 %v3581
        %3718 = vmatpush1.bf16.msra.mxu0 %v3580
        %3719 = vmatprep.subr.bf16.mxu0 %v3579
        %3720 = vmatpush1.bf16.msra.mxu0 %v3578
        %3721 = vmatprep.subr.bf16.mxu0 %v3577
        %3722 = vmatpush1.bf16.msra.mxu0 %v3576
        %3723 = vmatprep.subr.bf16.mxu0 %v3575
        %3724 = vmatpush1.bf16.msra.mxu0 %v3574
        %3725 = vmatprep.subr.bf16.mxu0 %v3573
        %3726 = vmatpush1.bf16.msra.mxu0 %v3572
        %3727 = vmatprep.subr.bf16.mxu0 %v3603
        %3728 = vmatpush2.bf16.msra.mxu0 %v3602
        %3729 = vmatprep.subr.bf16.mxu0 %v3601
        %3730 = vmatpush2.bf16.msra.mxu0 %v3600
        %3731 = vmatprep.subr.bf16.mxu0 %v3599
        %3732 = vmatpush2.bf16.msra.mxu0 %v3598
        %3733 = vmatprep.subr.bf16.mxu0 %v3597
        %3734 = vmatpush2.bf16.msra.mxu0 %v3596
        %3735 = vmatprep.subr.bf16.mxu0 %v3595
        %3736 = vmatpush2.bf16.msra.mxu0 %v3594
        %3737 = vmatprep.subr.bf16.mxu0 %v3593
        %3738 = vmatpush2.bf16.msra.mxu0 %v3592
        %3739 = vmatprep.subr.bf16.mxu0 %v3591
        %3740 = vmatpush2.bf16.msra.mxu0 %v3590
        %3741 = vmatprep.subr.bf16.mxu0 %v3589
        %3742 = vmatpush2.bf16.msra.mxu0 %v3588
        %3743 = vmatprep.mubr.bf16.mxu0 %v3336
        %3744 = vmatmul.mubr.bf16.gmra.mxu0 %v3335
        %v3745 = vpop.f32.mrf.mxu0
        %v3746 = vadd.f32 %v3703, %v3745
        %v3747 = vpop.f32.mrf.mxu0
        %v3748 = vadd.f32 %v3705, %v3747
        %v3749 = vpop.f32.mrf.mxu0
        %v3750 = vadd.f32 %v3707, %v3749
        %v3751 = vpop.f32.mrf.mxu0
        %v3752 = vadd.f32 %v3709, %v3751
        %3753 = vdwg.mxu0
        %v3755 = vlaneseq
        %v3756 = vshrl.u32 %v3755, 7
        %v3757 = vsub.s32 0, %v3756
        %v3758 = vrot.slane %v944, %v3757
        %v3759 = vlaneseq
        %v3760 = vshrl.u32 %v3759, 7
        %v3761 = vsub.s32 1, %v3760
        %v3762 = vrot.slane %v944, %v3761
        %v3765 = vmul.f32 %v3746, %v3758
        %v3766 = vmul.f32 %v3748, %v3762
        %v3767 = vmul.f32 %v3750, %v3758
        %v3768 = vmul.f32 %v3752, %v3762
        %v3769 = vadd.f32 %v3765, %v954
        %v3770 = vadd.f32 %v3766, %v958
        %v3771 = vadd.f32 %v3767, %v954
        %v3772 = vadd.f32 %v3768, %v958
        %3773 = vst [vmem:[%s939] sm:$0xff] %v3769
        %3774 = vst [vmem:[%s939 + $0x8] sm:$0xff] %v3770
        %3775 = vst [vmem:[%s939 + $0x10] sm:$0xff] %v3771
        %3776 = vst [vmem:[%s939 + $0x18] sm:$0xff] %v3772
        %s3777 = sand.u32 %s565, 1
        %s3778 = scalar_lea.sflag [#allocation4], %s3777
        %s3779 = sand.u32 %s565, 1
        %s3780 = smul.addr %s3779, 32
        %s3781 = scalar_lea.vmem [#allocation25], %s3780
        // Predicated region
        $region173: #{tpu_custom_call.1} parent=115 // pred_check
          %p3782 = pneg %p575
        $region174: #{tpu_custom_call.1} parent=115 // pred_check_branch
          %3784 = sbr.rel (%p3782) target = $region176
        $region175: #{tpu_custom_call.1} parent=115 // pred_region
          %s3785 = smul.u32 2, %s48
          %s3787 = ssub.s32 512, 512
          %3788 = vsyncadd %s3778, %s3787
          %s3789 = smul.addr %s3785, 2
          %s3790 = smul.addr %s3789, 128
          %s3791 = scalar_lea.hbm %s24, %s3790
          %s3792 = sshll.u32 %s3781, 4
          %s3793 = int_to_ptr.vmem [resolvable:$true] %s3792
          %3798 = dma.vmem_to_hbm [thread:$0]  %s3793, 512, %s3791, %s3778, 256, 256, 16
        $region176: #{tpu_custom_call.1} parent=115 // pred_fallthru
          _
      $region116: #{tpu_custom_call.1} parent=5 // pred_fallthru
        _
      %p3799 = scmp.le.s32.totalorder 2, %s43
      // Predicated region
      $region177: #{tpu_custom_call.1} parent=5 // pred_check
        %p3800 = pneg %p3799
      $region178: #{tpu_custom_call.1} parent=5 // pred_check_branch
        %3802 = sbr.rel (%p3800) target = $region180
      $region179: #{tpu_custom_call.1} parent=5 // pred_region
        %s3803 = ssub.s32 %s43, 2
        // Predicated region
        $region181: #{tpu_custom_call.1} parent=179 // pred_check
          %p3804 = pneg %p581
        $region182: #{tpu_custom_call.1} parent=179 // pred_check_branch
          %3806 = sbr.rel (%p3804) target = $region184
        $region183: #{tpu_custom_call.1} parent=179 // pred_region
          %s3807 = sand.u32 %s566, 1
          %s3808 = scalar_lea.sflag [#allocation4], %s3807
          %s3809 = sand.u32 %s566, 1
          %s3810 = smul.addr %s3809, 32
          %s3811 = scalar_lea.vmem [#allocation25], %s3810
          %3812 = dma.done %s3808, 512
        $region184: #{tpu_custom_call.1} parent=179 // pred_fallthru
          _
      $region180: #{tpu_custom_call.1} parent=5 // pred_fallthru
        _
    $region6: #{tpu_custom_call.1} parent=1 // loop_footer
      %s47 = sadd.s32 1, %s43
    $region7: #{tpu_custom_call.1} parent=1 // loop_footer_branch
      %42 = sbr.rel target = $region3
    $region8: #{tpu_custom_call.1} parent=1 // loop_exit
      _
    %3813 = vsyncpa [#allocation3], 1
    %s3814 = scalar_lea.sflag [#allocation3], 1
    %3815 = vsyncpa %s3814, 1
    %3816 = vsyncpa [#allocation6], 1
    %3817 = vsyncpa [#allocation9], 1
    %3818 = vsyncpa [#allocation12], 1
    %3819 = vsyncpa [#allocation15], 1
    %3820 = vsyncpa [#allocation18], 1
    %3821 = vsyncpa [#allocation21], 1
    %3822 = vsyncpa [#allocation24], 1
    %3823 = vsyncpa [#allocation4], 1
    %s3824 = scalar_lea.sflag [#allocation4], 1
    %3825 = vsyncpa %s3824, 1

</llo_original>
